<compile_context>
chip_gen: v7x
topology: tpu7x:2x2x1
jax: 0.10.0
libtpu: 0.0.40
codegen_flags: <defaults>
</compile_context>

<pallas_src>
import functools

import jax
import jax.numpy as jnp
import numpy as np
from jax.experimental import pallas as pl
from jax.experimental.pallas import tpu as pltpu


def _round_up(a, b):
    return (a + b - 1) // b * b


def _pick_row_tile(N, F, W, L):
    """Largest row tile whose per-buffer blocks (signal + packed outputs +
    filters) stay around 6 MiB, so double buffering fits every generation."""
    per_row_bytes = 4 * (N + F * W + 2 * F * L)
    budget = 6 * 1024 * 1024
    bt = max(8, min(512, budget // max(per_row_bytes, 1)))
    return (int(bt) // 8) * 8


def _selection_matrices(N, J, order):
    """Per-level one-hot polyphase decimation matrices.

    Level j (input length M = N >> j, output length T = M // 2, K = order-1):
      SE[i, s] = 1  iff  i == (2s)   mod M     (even phase, periodically extended)
      SO[i, s] = 1  iff  i == (2s+1) mod M     (odd  phase, periodically extended)
    with s in [0, T+K).  Then e_ext = cur @ SE, o_ext = cur @ SO and
      a[t] = sum_n h[n] * (e_ext if n even else o_ext)[t + n//2].
    """
    K = order - 1
    mats = []
    for j in range(J):
        M = N >> j
        T = M // 2
        cols = T + K
        for parity in (0, 1):
            idx = (2 * np.arange(cols) + parity) % M
            S = np.zeros((M, cols), np.float32)
            S[idx, np.arange(cols)] = 1.0
            mats.append(jnp.asarray(S))
    return mats


def _make_wavelet_kernel(F, L, J, N):
    """Fused multi-level DWT kernel on one [row_tile, N] block.

    refs = (x, w_lo, w_hi, SE_0, SO_0, ..., SE_{J-1}, SO_{J-1},
            a_0, d_0, ..., a_{J-1}, d_{J-1})
      x            : [BT, N]          input rows (row = (b, c) flattened)
      w_lo / w_hi  : [BT, F*L]        per-row low / high pass taps (f-major)
      SE_j / SO_j  : [M_j, T_j + K]   one-hot decimation matrices (grid-resident)
      a_j / d_j    : [BT, F*T_j]      per-level outputs, lane-packed over F
    """

    def kernel(*refs):
        x_ref, wlo_ref, whi_ref = refs[:3]
        sel_refs = refs[3:3 + 2 * J]
        out_refs = refs[3 + 2 * J:]

        dot = functools.partial(jnp.dot,
                                precision=jax.lax.Precision.HIGHEST,
                                preferred_element_type=jnp.float32)

        x = x_ref[...]                                     # [BT, N]
        # Level-0 extended polyphase components do not depend on the filter.
        e0 = dot(x, sel_refs[0][...])                      # [BT, N/2 + K]
        o0 = dot(x, sel_refs[1][...])

        for f in range(F):                                 # static unroll
            e, o = e0, o0
            for j in range(J):                             # static unroll
                T = (N >> j) // 2
                acc_a = None
                acc_d = None
                for n in range(L):                         # static unroll
                    m, parity = divmod(n, 2)
                    seg = (e if parity == 0 else o)[:, m:m + T]
                    wl = wlo_ref[:, f * L + n:f * L + n + 1]   # [BT, 1]
                    wh = whi_ref[:, f * L + n:f * L + n + 1]
                    ta = wl * seg
                    td = wh * seg
                    acc_a = ta if acc_a is None else acc_a + ta
                    acc_d = td if acc_d is None else acc_d + td
                out_refs[2 * j][:, f * T:(f + 1) * T] = acc_a
                out_refs[2 * j + 1][:, f * T:(f + 1) * T] = acc_d
                if j + 1 < J:
                    # re-decimate the approximation for the next level (idle MXU)
                    e = dot(acc_a, sel_refs[2 * (j + 1)][...])
                    o = dot(acc_a, sel_refs[2 * (j + 1) + 1][...])

    return kernel


@functools.partial(jax.jit, static_argnums=(2, 3, 4, 5))
def wavelet_layer1d_forward(x, lpf, order, num_levels_down,
                            num_filters_per_channel, row_tile=None):
    """WaveletLayer1d.forward (periodic signal).

    x   : [B, C, 2^k] float32
    lpf : [C * num_filters_per_channel, 2*order - 1]
    Returns (approx, detail): lists of length num_levels_down with shapes
    [B, C, num_filters_per_channel, 2^k / 2^(j+1)].
    """
    x = x.astype(jnp.float32)
    B, C, N = x.shape
    F = num_filters_per_channel
    J = num_levels_down
    L = 2 * order - 1
    assert N % (1 << J) == 0, "signal length must be divisible by 2^num_levels_down"

    # ----- filters (group_lpfs + quadrature mirror high pass) ---------------
    g_lo = lpf.reshape(C, F, L).astype(jnp.float32)
    sign = jnp.where(jnp.arange(L) % 2 == 0, 1.0, -1.0).astype(jnp.float32)
    g_hi = sign * g_lo[..., ::-1]

    R = B * C                                         # rows = (b, c) flattened
    x2d = x.reshape(R, N)
    # tiny per-row filter tables (F*L lanes per row), f-major along lanes
    w_lo = jnp.broadcast_to(g_lo.reshape(1, C, F * L), (B, C, F * L)).reshape(R, F * L)
    w_hi = jnp.broadcast_to(g_hi.reshape(1, C, F * L), (B, C, F * L)).reshape(R, F * L)

    # ----- row tiling --------------------------------------------------------
    W = sum(2 * (N >> (j + 1)) for j in range(J))     # packed coeffs per filter
    bt = _pick_row_tile(N, F, W, L) if row_tile is None else int(row_tile)
    if R <= bt:
        BT, Rp = R, R                                  # single full-height tile
    else:
        BT = max(8, (bt // 8) * 8)
        Rp = _round_up(R, BT)
    if Rp > R:
        pad = ((0, Rp - R), (0, 0))
        x2d = jnp.pad(x2d, pad)
        w_lo = jnp.pad(w_lo, pad)
        w_hi = jnp.pad(w_hi, pad)

    sels = _selection_matrices(N, J, order)           # trace-time constants

    grid = (Rp // BT,)
    in_specs = [
        pl.BlockSpec((BT, N), lambda i: (i, 0)),
        pl.BlockSpec((BT, F * L), lambda i: (i, 0)),
        pl.BlockSpec((BT, F * L), lambda i: (i, 0)),
    ]
    for s in sels:                                    # grid-resident whole blocks
        in_specs.append(pl.BlockSpec(s.shape, lambda i: (0, 0)))

    out_shape = []
    out_specs = []
    for j in range(J):
        T = N >> (j + 1)
        for _ in range(2):                            # approx_j, detail_j
            out_shape.append(jax.ShapeDtypeStruct((Rp, F * T), jnp.float32))
            out_specs.append(pl.BlockSpec((BT, F * T), lambda i: (i, 0)))

    outs = pl.pallas_call(
        _make_wavelet_kernel(F=F, L=L, J=J, N=N),
        grid=grid,
        in_specs=in_specs,
        out_specs=tuple(out_specs),
        out_shape=tuple(out_shape),
        compiler_params=pltpu.CompilerParams(
            dimension_semantics=("parallel",),
            vmem_limit_bytes=32 * 1024 * 1024,
        ),
    )(x2d, w_lo, w_hi, *sels)

    approx, detail = [], []
    for j in range(J):
        T = N >> (j + 1)
        approx.append(outs[2 * j][:R].reshape(B, C, F, T))
        detail.append(outs[2 * j + 1][:R].reshape(B, C, F, T))
    return approx, detail


def _reference_forward(x, lpf, order, num_levels_down, F):
    """Pure-JAX reference of the same semantics (for sanity check)."""
    B, C, N = x.shape
    L = 2 * order - 1
    g_lo = lpf.reshape(C, F, L)
    sign = jnp.where(jnp.arange(L) % 2 == 0, 1.0, -1.0).astype(jnp.float32)
    g_hi = sign * g_lo[..., ::-1]
    w_lo = jnp.broadcast_to(g_lo[None], (B, C, F, L)).reshape(B * C * F, L)
    w_hi = jnp.broadcast_to(g_hi[None], (B, C, F, L)).reshape(B * C * F, L)
    xr = jnp.broadcast_to(x[:, :, None, :], (B, C, F, N)).reshape(B * C * F, N)
    approx, detail = [], []
    for _ in range(num_levels_down):
        R, M = xr.shape
        T = M // 2
        idx = (2 * jnp.arange(T)[:, None] + jnp.arange(L)[None, :]) % M
        patches = xr[:, idx]                                   # [R, T, L]
        a = jnp.einsum("rtl,rl->rt", patches, w_lo)
        d = jnp.einsum("rtl,rl->rt", patches, w_hi)
        approx.append(a.reshape(B, C, F, T))
        detail.append(d.reshape(B, C, F, T))
        xr = a
    return approx, detail


if __name__ == "__main__":
    key = jax.random.PRNGKey(0)

    configs = [
        # (order, num_levels_down, num_filters_per_channel, C, B, N, row_tile)
        (3, 3, 3, 2, 2, 16, None),   # WaveletLayer1d demo config
        (2, 2, 2, 3, 5, 32, 8),      # exercises row padding / multi-tile path
    ]

    for order, J, F, C, B, N, row_tile in configs:
        key, kx, kw = jax.random.split(key, 3)
        x = jax.random.normal(kx, (B, C, N), dtype=jnp.float32)

        L = 2 * order - 1
        # well-conditioned synthetic low-pass parameter, normalized to sum sqrt(2)
        lpf = 0.25 * jax.random.normal(kw, (C * F, L), dtype=jnp.float32) + 0.5
        lpf = lpf * (jnp.sqrt(2.0) / jnp.sum(lpf, axis=-1, keepdims=True))

        approx, detail = wavelet_layer1d_forward(x, lpf, order, J, F, row_tile)
        jax.block_until_ready((approx, detail))

        approx_ref, detail_ref = _reference_forward(x, lpf, order, J, F)
        for a, ar, d, dr in zip(approx, approx_ref, detail, detail_ref):
            np.testing.assert_allclose(np.asarray(a), np.asarray(ar),
                                       rtol=1e-4, atol=1e-5)
            np.testing.assert_allclose(np.asarray(d), np.asarray(dr),
                                       rtol=1e-4, atol=1e-5)

    print("KERNEL_OK")
</pallas_src>

<mosaic_0001>
module attributes {stable_mosaic.version = 11 : i64} {
  func.func @kernel(%arg0: i32, %arg1: memref<4x16xf32, #tpu.memory_space<vmem>>, %arg2: memref<4x15xf32, #tpu.memory_space<vmem>>, %arg3: memref<4x15xf32, #tpu.memory_space<vmem>>, %arg4: memref<16x10xf32, #tpu.memory_space<vmem>>, %arg5: memref<16x10xf32, #tpu.memory_space<vmem>>, %arg6: memref<8x6xf32, #tpu.memory_space<vmem>>, %arg7: memref<8x6xf32, #tpu.memory_space<vmem>>, %arg8: memref<4x4xf32, #tpu.memory_space<vmem>>, %arg9: memref<4x4xf32, #tpu.memory_space<vmem>>, %arg10: memref<4x24xf32, #tpu.memory_space<vmem>>, %arg11: memref<4x24xf32, #tpu.memory_space<vmem>>, %arg12: memref<4x12xf32, #tpu.memory_space<vmem>>, %arg13: memref<4x12xf32, #tpu.memory_space<vmem>>, %arg14: memref<4x6xf32, #tpu.memory_space<vmem>>, %arg15: memref<4x6xf32, #tpu.memory_space<vmem>>) attributes {dimension_semantics = [#tpu.dimension_semantics<parallel>], iteration_bounds = array<i64: 1>, scalar_prefetch = 0 : i64, scratch_operands = 0 : i64, tpu.core_type = #tpu.core_type<tc>, window_params = [{transform_indices = @transform_0, window_bounds = array<i64: 4, 16>}, {transform_indices = @transform_1, window_bounds = array<i64: 4, 15>}, {transform_indices = @transform_2, window_bounds = array<i64: 4, 15>}, {pipeline_mode = #tpu.pipeline_mode<synchronous>, transform_indices = @transform_3, window_bounds = array<i64: 16, 10>}, {pipeline_mode = #tpu.pipeline_mode<synchronous>, transform_indices = @transform_4, window_bounds = array<i64: 16, 10>}, {pipeline_mode = #tpu.pipeline_mode<synchronous>, transform_indices = @transform_5, window_bounds = array<i64: 8, 6>}, {pipeline_mode = #tpu.pipeline_mode<synchronous>, transform_indices = @transform_6, window_bounds = array<i64: 8, 6>}, {pipeline_mode = #tpu.pipeline_mode<synchronous>, transform_indices = @transform_7, window_bounds = array<i64: 4, 4>}, {pipeline_mode = #tpu.pipeline_mode<synchronous>, transform_indices = @transform_8, window_bounds = array<i64: 4, 4>}, {transform_indices = @transform_9, window_bounds = array<i64: 4, 24>}, {transform_indices = @transform_10, window_bounds = array<i64: 4, 24>}, {transform_indices = @transform_11, window_bounds = array<i64: 4, 12>}, {transform_indices = @transform_12, window_bounds = array<i64: 4, 12>}, {transform_indices = @transform_13, window_bounds = array<i64: 4, 6>}, {transform_indices = @transform_14, window_bounds = array<i64: 4, 6>}]} {
    %c0 = arith.constant 0 : index
    %c0_0 = arith.constant 0 : index
    %0 = vector.load %arg1[%c0, %c0_0] : memref<4x16xf32, #tpu.memory_space<vmem>>, vector<4x16xf32>
    %c0_1 = arith.constant 0 : index
    %c0_2 = arith.constant 0 : index
    %1 = vector.load %arg4[%c0_1, %c0_2] : memref<16x10xf32, #tpu.memory_space<vmem>>, vector<16x10xf32>
    %cst = arith.constant dense<0.000000e+00> : vector<4x10xf32>
    %2 = tpu.matmul %0, %1, %cst {dimension_numbers = #tpu.dot_dimension_numbers<[1], [0], [0], [1], [0, 0, 1, 1], [], []>, precision = #tpu.contract_precision<fp32>} : vector<4x16xf32>, vector<16x10xf32>, vector<4x10xf32> -> vector<4x10xf32>
    %c0_3 = arith.constant 0 : index
    %c0_4 = arith.constant 0 : index
    %3 = vector.load %arg5[%c0_3, %c0_4] : memref<16x10xf32, #tpu.memory_space<vmem>>, vector<16x10xf32>
    %cst_5 = arith.constant dense<0.000000e+00> : vector<4x10xf32>
    %4 = tpu.matmul %0, %3, %cst_5 {dimension_numbers = #tpu.dot_dimension_numbers<[1], [0], [0], [1], [0, 0, 1, 1], [], []>, precision = #tpu.contract_precision<fp32>} : vector<4x16xf32>, vector<16x10xf32>, vector<4x10xf32> -> vector<4x10xf32>
    %5 = vector.extract_strided_slice %2 {offsets = [0, 0], sizes = [4, 8], strides = [1, 1]} : vector<4x10xf32> to vector<4x8xf32>
    %c0_6 = arith.constant 0 : index
    %c0_7 = arith.constant 0 : index
    %6 = vector.load %arg2[%c0_6, %c0_7] : memref<4x15xf32, #tpu.memory_space<vmem>>, vector<4x1xf32>
    %c0_8 = arith.constant 0 : index
    %c0_9 = arith.constant 0 : index
    %7 = vector.load %arg3[%c0_8, %c0_9] : memref<4x15xf32, #tpu.memory_space<vmem>>, vector<4x1xf32>
    %8 = vector.broadcast %6 : vector<4x1xf32> to vector<4x8xf32>
    %9 = arith.mulf %8, %5 : vector<4x8xf32>
    %10 = vector.broadcast %7 : vector<4x1xf32> to vector<4x8xf32>
    %11 = arith.mulf %10, %5 : vector<4x8xf32>
    %12 = vector.extract_strided_slice %4 {offsets = [0, 0], sizes = [4, 8], strides = [1, 1]} : vector<4x10xf32> to vector<4x8xf32>
    %c0_10 = arith.constant 0 : index
    %c1 = arith.constant 1 : index
    %13 = vector.load %arg2[%c0_10, %c1] : memref<4x15xf32, #tpu.memory_space<vmem>>, vector<4x1xf32>
    %c0_11 = arith.constant 0 : index
    %c1_12 = arith.constant 1 : index
    %14 = vector.load %arg3[%c0_11, %c1_12] : memref<4x15xf32, #tpu.memory_space<vmem>>, vector<4x1xf32>
    %15 = vector.broadcast %13 : vector<4x1xf32> to vector<4x8xf32>
    %16 = arith.mulf %15, %12 : vector<4x8xf32>
    %17 = vector.broadcast %14 : vector<4x1xf32> to vector<4x8xf32>
    %18 = arith.mulf %17, %12 : vector<4x8xf32>
    %19 = arith.addf %9, %16 : vector<4x8xf32>
    %20 = arith.addf %11, %18 : vector<4x8xf32>
    %21 = vector.extract_strided_slice %2 {offsets = [0, 1], sizes = [4, 8], strides = [1, 1]} : vector<4x10xf32> to vector<4x8xf32>
    %c0_13 = arith.constant 0 : index
    %c2 = arith.constant 2 : index
    %22 = vector.load %arg2[%c0_13, %c2] : memref<4x15xf32, #tpu.memory_space<vmem>>, vector<4x1xf32>
    %c0_14 = arith.constant 0 : index
    %c2_15 = arith.constant 2 : index
    %23 = vector.load %arg3[%c0_14, %c2_15] : memref<4x15xf32, #tpu.memory_space<vmem>>, vector<4x1xf32>
    %24 = vector.broadcast %22 : vector<4x1xf32> to vector<4x8xf32>
    %25 = arith.mulf %24, %21 : vector<4x8xf32>
    %26 = vector.broadcast %23 : vector<4x1xf32> to vector<4x8xf32>
    %27 = arith.mulf %26, %21 : vector<4x8xf32>
    %28 = arith.addf %19, %25 : vector<4x8xf32>
    %29 = arith.addf %20, %27 : vector<4x8xf32>
    %30 = vector.extract_strided_slice %4 {offsets = [0, 1], sizes = [4, 8], strides = [1, 1]} : vector<4x10xf32> to vector<4x8xf32>
    %c0_16 = arith.constant 0 : index
    %c3 = arith.constant 3 : index
    %31 = vector.load %arg2[%c0_16, %c3] : memref<4x15xf32, #tpu.memory_space<vmem>>, vector<4x1xf32>
    %c0_17 = arith.constant 0 : index
    %c3_18 = arith.constant 3 : index
    %32 = vector.load %arg3[%c0_17, %c3_18] : memref<4x15xf32, #tpu.memory_space<vmem>>, vector<4x1xf32>
    %33 = vector.broadcast %31 : vector<4x1xf32> to vector<4x8xf32>
    %34 = arith.mulf %33, %30 : vector<4x8xf32>
    %35 = vector.broadcast %32 : vector<4x1xf32> to vector<4x8xf32>
    %36 = arith.mulf %35, %30 : vector<4x8xf32>
    %37 = arith.addf %28, %34 : vector<4x8xf32>
    %38 = arith.addf %29, %36 : vector<4x8xf32>
    %39 = vector.extract_strided_slice %2 {offsets = [0, 2], sizes = [4, 8], strides = [1, 1]} : vector<4x10xf32> to vector<4x8xf32>
    %c0_19 = arith.constant 0 : index
    %c4 = arith.constant 4 : index
    %40 = vector.load %arg2[%c0_19, %c4] : memref<4x15xf32, #tpu.memory_space<vmem>>, vector<4x1xf32>
    %c0_20 = arith.constant 0 : index
    %c4_21 = arith.constant 4 : index
    %41 = vector.load %arg3[%c0_20, %c4_21] : memref<4x15xf32, #tpu.memory_space<vmem>>, vector<4x1xf32>
    %42 = vector.broadcast %40 : vector<4x1xf32> to vector<4x8xf32>
    %43 = arith.mulf %42, %39 : vector<4x8xf32>
    %44 = vector.broadcast %41 : vector<4x1xf32> to vector<4x8xf32>
    %45 = arith.mulf %44, %39 : vector<4x8xf32>
    %46 = arith.addf %37, %43 : vector<4x8xf32>
    %47 = arith.addf %38, %45 : vector<4x8xf32>
    %c0_22 = arith.constant 0 : index
    %c0_23 = arith.constant 0 : index
    %48 = vector.load %arg10[%c0_22, %c0_23] : memref<4x24xf32, #tpu.memory_space<vmem>>, vector<4x8xf32>
    tpu.vector_store %arg10[%c0_22, %c0_23], %46 {strides = array<i32>} : memref<4x24xf32, #tpu.memory_space<vmem>>, vector<4x8xf32>,
    %c0_24 = arith.constant 0 : index
    %c0_25 = arith.constant 0 : index
    %49 = vector.load %arg11[%c0_24, %c0_25] : memref<4x24xf32, #tpu.memory_space<vmem>>, vector<4x8xf32>
    tpu.vector_store %arg11[%c0_24, %c0_25], %47 {strides = array<i32>} : memref<4x24xf32, #tpu.memory_space<vmem>>, vector<4x8xf32>,
    %c0_26 = arith.constant 0 : index
    %c0_27 = arith.constant 0 : index
    %50 = vector.load %arg6[%c0_26, %c0_27] : memref<8x6xf32, #tpu.memory_space<vmem>>, vector<8x6xf32>
    %cst_28 = arith.constant dense<0.000000e+00> : vector<4x6xf32>
    %51 = tpu.matmul %46, %50, %cst_28 {dimension_numbers = #tpu.dot_dimension_numbers<[1], [0], [0], [1], [0, 0, 1, 1], [], []>, precision = #tpu.contract_precision<fp32>} : vector<4x8xf32>, vector<8x6xf32>, vector<4x6xf32> -> vector<4x6xf32>
    %c0_29 = arith.constant 0 : index
    %c0_30 = arith.constant 0 : index
    %52 = vector.load %arg7[%c0_29, %c0_30] : memref<8x6xf32, #tpu.memory_space<vmem>>, vector<8x6xf32>
    %cst_31 = arith.constant dense<0.000000e+00> : vector<4x6xf32>
    %53 = tpu.matmul %46, %52, %cst_31 {dimension_numbers = #tpu.dot_dimension_numbers<[1], [0], [0], [1], [0, 0, 1, 1], [], []>, precision = #tpu.contract_precision<fp32>} : vector<4x8xf32>, vector<8x6xf32>, vector<4x6xf32> -> vector<4x6xf32>
    %54 = vector.extract_strided_slice %51 {offsets = [0, 0], sizes = [4, 4], strides = [1, 1]} : vector<4x6xf32> to vector<4x4xf32>
    %c0_32 = arith.constant 0 : index
    %c0_33 = arith.constant 0 : index
    %55 = vector.load %arg2[%c0_32, %c0_33] : memref<4x15xf32, #tpu.memory_space<vmem>>, vector<4x1xf32>
    %c0_34 = arith.constant 0 : index
    %c0_35 = arith.constant 0 : index
    %56 = vector.load %arg3[%c0_34, %c0_35] : memref<4x15xf32, #tpu.memory_space<vmem>>, vector<4x1xf32>
    %57 = vector.broadcast %55 : vector<4x1xf32> to vector<4x4xf32>
    %58 = arith.mulf %57, %54 : vector<4x4xf32>
    %59 = vector.broadcast %56 : vector<4x1xf32> to vector<4x4xf32>
    %60 = arith.mulf %59, %54 : vector<4x4xf32>
    %61 = vector.extract_strided_slice %53 {offsets = [0, 0], sizes = [4, 4], strides = [1, 1]} : vector<4x6xf32> to vector<4x4xf32>
    %c0_36 = arith.constant 0 : index
    %c1_37 = arith.constant 1 : index
    %62 = vector.load %arg2[%c0_36, %c1_37] : memref<4x15xf32, #tpu.memory_space<vmem>>, vector<4x1xf32>
    %c0_38 = arith.constant 0 : index
    %c1_39 = arith.constant 1 : index
    %63 = vector.load %arg3[%c0_38, %c1_39] : memref<4x15xf32, #tpu.memory_space<vmem>>, vector<4x1xf32>
    %64 = vector.broadcast %62 : vector<4x1xf32> to vector<4x4xf32>
    %65 = arith.mulf %64, %61 : vector<4x4xf32>
    %66 = vector.broadcast %63 : vector<4x1xf32> to vector<4x4xf32>
    %67 = arith.mulf %66, %61 : vector<4x4xf32>
    %68 = arith.addf %58, %65 : vector<4x4xf32>
    %69 = arith.addf %60, %67 : vector<4x4xf32>
    %70 = vector.extract_strided_slice %51 {offsets = [0, 1], sizes = [4, 4], strides = [1, 1]} : vector<4x6xf32> to vector<4x4xf32>
    %c0_40 = arith.constant 0 : index
    %c2_41 = arith.constant 2 : index
    %71 = vector.load %arg2[%c0_40, %c2_41] : memref<4x15xf32, #tpu.memory_space<vmem>>, vector<4x1xf32>
    %c0_42 = arith.constant 0 : index
    %c2_43 = arith.constant 2 : index
    %72 = vector.load %arg3[%c0_42, %c2_43] : memref<4x15xf32, #tpu.memory_space<vmem>>, vector<4x1xf32>
    %73 = vector.broadcast %71 : vector<4x1xf32> to vector<4x4xf32>
    %74 = arith.mulf %73, %70 : vector<4x4xf32>
    %75 = vector.broadcast %72 : vector<4x1xf32> to vector<4x4xf32>
    %76 = arith.mulf %75, %70 : vector<4x4xf32>
    %77 = arith.addf %68, %74 : vector<4x4xf32>
    %78 = arith.addf %69, %76 : vector<4x4xf32>
    %79 = vector.extract_strided_slice %53 {offsets = [0, 1], sizes = [4, 4], strides = [1, 1]} : vector<4x6xf32> to vector<4x4xf32>
    %c0_44 = arith.constant 0 : index
    %c3_45 = arith.constant 3 : index
    %80 = vector.load %arg2[%c0_44, %c3_45] : memref<4x15xf32, #tpu.memory_space<vmem>>, vector<4x1xf32>
    %c0_46 = arith.constant 0 : index
    %c3_47 = arith.constant 3 : index
    %81 = vector.load %arg3[%c0_46, %c3_47] : memref<4x15xf32, #tpu.memory_space<vmem>>, vector<4x1xf32>
    %82 = vector.broadcast %80 : vector<4x1xf32> to vector<4x4xf32>
    %83 = arith.mulf %82, %79 : vector<4x4xf32>
    %84 = vector.broadcast %81 : vector<4x1xf32> to vector<4x4xf32>
    %85 = arith.mulf %84, %79 : vector<4x4xf32>
    %86 = arith.addf %77, %83 : vector<4x4xf32>
    %87 = arith.addf %78, %85 : vector<4x4xf32>
    %88 = vector.extract_strided_slice %51 {offsets = [0, 2], sizes = [4, 4], strides = [1, 1]} : vector<4x6xf32> to vector<4x4xf32>
    %c0_48 = arith.constant 0 : index
    %c4_49 = arith.constant 4 : index
    %89 = vector.load %arg2[%c0_48, %c4_49] : memref<4x15xf32, #tpu.memory_space<vmem>>, vector<4x1xf32>
    %c0_50 = arith.constant 0 : index
    %c4_51 = arith.constant 4 : index
    %90 = vector.load %arg3[%c0_50, %c4_51] : memref<4x15xf32, #tpu.memory_space<vmem>>, vector<4x1xf32>
    %91 = vector.broadcast %89 : vector<4x1xf32> to vector<4x4xf32>
    %92 = arith.mulf %91, %88 : vector<4x4xf32>
    %93 = vector.broadcast %90 : vector<4x1xf32> to vector<4x4xf32>
    %94 = arith.mulf %93, %88 : vector<4x4xf32>
    %95 = arith.addf %86, %92 : vector<4x4xf32>
    %96 = arith.addf %87, %94 : vector<4x4xf32>
    %c0_52 = arith.constant 0 : index
    %c0_53 = arith.constant 0 : index
    %97 = vector.load %arg12[%c0_52, %c0_53] : memref<4x12xf32, #tpu.memory_space<vmem>>, vector<4x4xf32>
    tpu.vector_store %arg12[%c0_52, %c0_53], %95 {strides = array<i32>} : memref<4x12xf32, #tpu.memory_space<vmem>>, vector<4x4xf32>,
    %c0_54 = arith.constant 0 : index
    %c0_55 = arith.constant 0 : index
    %98 = vector.load %arg13[%c0_54, %c0_55] : memref<4x12xf32, #tpu.memory_space<vmem>>, vector<4x4xf32>
    tpu.vector_store %arg13[%c0_54, %c0_55], %96 {strides = array<i32>} : memref<4x12xf32, #tpu.memory_space<vmem>>, vector<4x4xf32>,
    %c0_56 = arith.constant 0 : index
    %c0_57 = arith.constant 0 : index
    %99 = vector.load %arg8[%c0_56, %c0_57] : memref<4x4xf32, #tpu.memory_space<vmem>>, vector<4x4xf32>
    %cst_58 = arith.constant dense<0.000000e+00> : vector<4x4xf32>
    %100 = tpu.matmul %95, %99, %cst_58 {dimension_numbers = #tpu.dot_dimension_numbers<[1], [0], [0], [1], [0, 0, 1, 1], [], []>, precision = #tpu.contract_precision<fp32>} : vector<4x4xf32>, vector<4x4xf32>, vector<4x4xf32> -> vector<4x4xf32>
    %c0_59 = arith.constant 0 : index
    %c0_60 = arith.constant 0 : index
    %101 = vector.load %arg9[%c0_59, %c0_60] : memref<4x4xf32, #tpu.memory_space<vmem>>, vector<4x4xf32>
    %cst_61 = arith.constant dense<0.000000e+00> : vector<4x4xf32>
    %102 = tpu.matmul %95, %101, %cst_61 {dimension_numbers = #tpu.dot_dimension_numbers<[1], [0], [0], [1], [0, 0, 1, 1], [], []>, precision = #tpu.contract_precision<fp32>} : vector<4x4xf32>, vector<4x4xf32>, vector<4x4xf32> -> vector<4x4xf32>
    %103 = vector.extract_strided_slice %100 {offsets = [0, 0], sizes = [4, 2], strides = [1, 1]} : vector<4x4xf32> to vector<4x2xf32>
    %c0_62 = arith.constant 0 : index
    %c0_63 = arith.constant 0 : index
    %104 = vector.load %arg2[%c0_62, %c0_63] : memref<4x15xf32, #tpu.memory_space<vmem>>, vector<4x1xf32>
    %c0_64 = arith.constant 0 : index
    %c0_65 = arith.constant 0 : index
    %105 = vector.load %arg3[%c0_64, %c0_65] : memref<4x15xf32, #tpu.memory_space<vmem>>, vector<4x1xf32>
    %106 = vector.broadcast %104 : vector<4x1xf32> to vector<4x2xf32>
    %107 = arith.mulf %106, %103 : vector<4x2xf32>
    %108 = vector.broadcast %105 : vector<4x1xf32> to vector<4x2xf32>
    %109 = arith.mulf %108, %103 : vector<4x2xf32>
    %110 = vector.extract_strided_slice %102 {offsets = [0, 0], sizes = [4, 2], strides = [1, 1]} : vector<4x4xf32> to vector<4x2xf32>
    %c0_66 = arith.constant 0 : index
    %c1_67 = arith.constant 1 : index
    %111 = vector.load %arg2[%c0_66, %c1_67] : memref<4x15xf32, #tpu.memory_space<vmem>>, vector<4x1xf32>
    %c0_68 = arith.constant 0 : index
    %c1_69 = arith.constant 1 : index
    %112 = vector.load %arg3[%c0_68, %c1_69] : memref<4x15xf32, #tpu.memory_space<vmem>>, vector<4x1xf32>
    %113 = vector.broadcast %111 : vector<4x1xf32> to vector<4x2xf32>
    %114 = arith.mulf %113, %110 : vector<4x2xf32>
    %115 = vector.broadcast %112 : vector<4x1xf32> to vector<4x2xf32>
    %116 = arith.mulf %115, %110 : vector<4x2xf32>
    %117 = arith.addf %107, %114 : vector<4x2xf32>
    %118 = arith.addf %109, %116 : vector<4x2xf32>
    %119 = vector.extract_strided_slice %100 {offsets = [0, 1], sizes = [4, 2], strides = [1, 1]} : vector<4x4xf32> to vector<4x2xf32>
    %c0_70 = arith.constant 0 : index
    %c2_71 = arith.constant 2 : index
    %120 = vector.load %arg2[%c0_70, %c2_71] : memref<4x15xf32, #tpu.memory_space<vmem>>, vector<4x1xf32>
    %c0_72 = arith.constant 0 : index
    %c2_73 = arith.constant 2 : index
    %121 = vector.load %arg3[%c0_72, %c2_73] : memref<4x15xf32, #tpu.memory_space<vmem>>, vector<4x1xf32>
    %122 = vector.broadcast %120 : vector<4x1xf32> to vector<4x2xf32>
    %123 = arith.mulf %122, %119 : vector<4x2xf32>
    %124 = vector.broadcast %121 : vector<4x1xf32> to vector<4x2xf32>
    %125 = arith.mulf %124, %119 : vector<4x2xf32>
    %126 = arith.addf %117, %123 : vector<4x2xf32>
    %127 = arith.addf %118, %125 : vector<4x2xf32>
    %128 = vector.extract_strided_slice %102 {offsets = [0, 1], sizes = [4, 2], strides = [1, 1]} : vector<4x4xf32> to vector<4x2xf32>
    %c0_74 = arith.constant 0 : index
    %c3_75 = arith.constant 3 : index
    %129 = vector.load %arg2[%c0_74, %c3_75] : memref<4x15xf32, #tpu.memory_space<vmem>>, vector<4x1xf32>
    %c0_76 = arith.constant 0 : index
    %c3_77 = arith.constant 3 : index
    %130 = vector.load %arg3[%c0_76, %c3_77] : memref<4x15xf32, #tpu.memory_space<vmem>>, vector<4x1xf32>
    %131 = vector.broadcast %129 : vector<4x1xf32> to vector<4x2xf32>
    %132 = arith.mulf %131, %128 : vector<4x2xf32>
    %133 = vector.broadcast %130 : vector<4x1xf32> to vector<4x2xf32>
    %134 = arith.mulf %133, %128 : vector<4x2xf32>
    %135 = arith.addf %126, %132 : vector<4x2xf32>
    %136 = arith.addf %127, %134 : vector<4x2xf32>
    %137 = vector.extract_strided_slice %100 {offsets = [0, 2], sizes = [4, 2], strides = [1, 1]} : vector<4x4xf32> to vector<4x2xf32>
    %c0_78 = arith.constant 0 : index
    %c4_79 = arith.constant 4 : index
    %138 = vector.load %arg2[%c0_78, %c4_79] : memref<4x15xf32, #tpu.memory_space<vmem>>, vector<4x1xf32>
    %c0_80 = arith.constant 0 : index
    %c4_81 = arith.constant 4 : index
    %139 = vector.load %arg3[%c0_80, %c4_81] : memref<4x15xf32, #tpu.memory_space<vmem>>, vector<4x1xf32>
    %140 = vector.broadcast %138 : vector<4x1xf32> to vector<4x2xf32>
    %141 = arith.mulf %140, %137 : vector<4x2xf32>
    %142 = vector.broadcast %139 : vector<4x1xf32> to vector<4x2xf32>
    %143 = arith.mulf %142, %137 : vector<4x2xf32>
    %144 = arith.addf %135, %141 : vector<4x2xf32>
    %145 = arith.addf %136, %143 : vector<4x2xf32>
    %c0_82 = arith.constant 0 : index
    %c0_83 = arith.constant 0 : index
    %146 = vector.load %arg14[%c0_82, %c0_83] : memref<4x6xf32, #tpu.memory_space<vmem>>, vector<4x2xf32>
    tpu.vector_store %arg14[%c0_82, %c0_83], %144 {strides = array<i32>} : memref<4x6xf32, #tpu.memory_space<vmem>>, vector<4x2xf32>,
    %c0_84 = arith.constant 0 : index
    %c0_85 = arith.constant 0 : index
    %147 = vector.load %arg15[%c0_84, %c0_85] : memref<4x6xf32, #tpu.memory_space<vmem>>, vector<4x2xf32>
    tpu.vector_store %arg15[%c0_84, %c0_85], %145 {strides = array<i32>} : memref<4x6xf32, #tpu.memory_space<vmem>>, vector<4x2xf32>,
    %148 = vector.extract_strided_slice %2 {offsets = [0, 0], sizes = [4, 8], strides = [1, 1]} : vector<4x10xf32> to vector<4x8xf32>
    %c0_86 = arith.constant 0 : index
    %c5 = arith.constant 5 : index
    %149 = vector.load %arg2[%c0_86, %c5] : memref<4x15xf32, #tpu.memory_space<vmem>>, vector<4x1xf32>
    %c0_87 = arith.constant 0 : index
    %c5_88 = arith.constant 5 : index
    %150 = vector.load %arg3[%c0_87, %c5_88] : memref<4x15xf32, #tpu.memory_space<vmem>>, vector<4x1xf32>
    %151 = vector.broadcast %149 : vector<4x1xf32> to vector<4x8xf32>
    %152 = arith.mulf %151, %148 : vector<4x8xf32>
    %153 = vector.broadcast %150 : vector<4x1xf32> to vector<4x8xf32>
    %154 = arith.mulf %153, %148 : vector<4x8xf32>
    %155 = vector.extract_strided_slice %4 {offsets = [0, 0], sizes = [4, 8], strides = [1, 1]} : vector<4x10xf32> to vector<4x8xf32>
    %c0_89 = arith.constant 0 : index
    %c6 = arith.constant 6 : index
    %156 = vector.load %arg2[%c0_89, %c6] : memref<4x15xf32, #tpu.memory_space<vmem>>, vector<4x1xf32>
    %c0_90 = arith.constant 0 : index
    %c6_91 = arith.constant 6 : index
    %157 = vector.load %arg3[%c0_90, %c6_91] : memref<4x15xf32, #tpu.memory_space<vmem>>, vector<4x1xf32>
    %158 = vector.broadcast %156 : vector<4x1xf32> to vector<4x8xf32>
    %159 = arith.mulf %158, %155 : vector<4x8xf32>
    %160 = vector.broadcast %157 : vector<4x1xf32> to vector<4x8xf32>
    %161 = arith.mulf %160, %155 : vector<4x8xf32>
    %162 = arith.addf %152, %159 : vector<4x8xf32>
    %163 = arith.addf %154, %161 : vector<4x8xf32>
    %164 = vector.extract_strided_slice %2 {offsets = [0, 1], sizes = [4, 8], strides = [1, 1]} : vector<4x10xf32> to vector<4x8xf32>
    %c0_92 = arith.constant 0 : index
    %c7 = arith.constant 7 : index
    %165 = vector.load %arg2[%c0_92, %c7] : memref<4x15xf32, #tpu.memory_space<vmem>>, vector<4x1xf32>
    %c0_93 = arith.constant 0 : index
    %c7_94 = arith.constant 7 : index
    %166 = vector.load %arg3[%c0_93, %c7_94] : memref<4x15xf32, #tpu.memory_space<vmem>>, vector<4x1xf32>
    %167 = vector.broadcast %165 : vector<4x1xf32> to vector<4x8xf32>
    %168 = arith.mulf %167, %164 : vector<4x8xf32>
    %169 = vector.broadcast %166 : vector<4x1xf32> to vector<4x8xf32>
    %170 = arith.mulf %169, %164 : vector<4x8xf32>
    %171 = arith.addf %162, %168 : vector<4x8xf32>
    %172 = arith.addf %163, %170 : vector<4x8xf32>
    %173 = vector.extract_strided_slice %4 {offsets = [0, 1], sizes = [4, 8], strides = [1, 1]} : vector<4x10xf32> to vector<4x8xf32>
    %c0_95 = arith.constant 0 : index
    %c8 = arith.constant 8 : index
    %174 = vector.load %arg2[%c0_95, %c8] : memref<4x15xf32, #tpu.memory_space<vmem>>, vector<4x1xf32>
    %c0_96 = arith.constant 0 : index
    %c8_97 = arith.constant 8 : index
    %175 = vector.load %arg3[%c0_96, %c8_97] : memref<4x15xf32, #tpu.memory_space<vmem>>, vector<4x1xf32>
    %176 = vector.broadcast %174 : vector<4x1xf32> to vector<4x8xf32>
    %177 = arith.mulf %176, %173 : vector<4x8xf32>
    %178 = vector.broadcast %175 : vector<4x1xf32> to vector<4x8xf32>
    %179 = arith.mulf %178, %173 : vector<4x8xf32>
    %180 = arith.addf %171, %177 : vector<4x8xf32>
    %181 = arith.addf %172, %179 : vector<4x8xf32>
    %182 = vector.extract_strided_slice %2 {offsets = [0, 2], sizes = [4, 8], strides = [1, 1]} : vector<4x10xf32> to vector<4x8xf32>
    %c0_98 = arith.constant 0 : index
    %c9 = arith.constant 9 : index
    %183 = vector.load %arg2[%c0_98, %c9] : memref<4x15xf32, #tpu.memory_space<vmem>>, vector<4x1xf32>
    %c0_99 = arith.constant 0 : index
    %c9_100 = arith.constant 9 : index
    %184 = vector.load %arg3[%c0_99, %c9_100] : memref<4x15xf32, #tpu.memory_space<vmem>>, vector<4x1xf32>
    %185 = vector.broadcast %183 : vector<4x1xf32> to vector<4x8xf32>
    %186 = arith.mulf %185, %182 : vector<4x8xf32>
    %187 = vector.broadcast %184 : vector<4x1xf32> to vector<4x8xf32>
    %188 = arith.mulf %187, %182 : vector<4x8xf32>
    %189 = arith.addf %180, %186 : vector<4x8xf32>
    %190 = arith.addf %181, %188 : vector<4x8xf32>
    %c0_101 = arith.constant 0 : index
    %c8_102 = arith.constant 8 : index
    %191 = vector.load %arg10[%c0_101, %c8_102] : memref<4x24xf32, #tpu.memory_space<vmem>>, vector<4x8xf32>
    tpu.vector_store %arg10[%c0_101, %c8_102], %189 {strides = array<i32>} : memref<4x24xf32, #tpu.memory_space<vmem>>, vector<4x8xf32>,
    %c0_103 = arith.constant 0 : index
    %c8_104 = arith.constant 8 : index
    %192 = vector.load %arg11[%c0_103, %c8_104] : memref<4x24xf32, #tpu.memory_space<vmem>>, vector<4x8xf32>
    tpu.vector_store %arg11[%c0_103, %c8_104], %190 {strides = array<i32>} : memref<4x24xf32, #tpu.memory_space<vmem>>, vector<4x8xf32>,
    %c0_105 = arith.constant 0 : index
    %c0_106 = arith.constant 0 : index
    %193 = vector.load %arg6[%c0_105, %c0_106] : memref<8x6xf32, #tpu.memory_space<vmem>>, vector<8x6xf32>
    %cst_107 = arith.constant dense<0.000000e+00> : vector<4x6xf32>
    %194 = tpu.matmul %189, %193, %cst_107 {dimension_numbers = #tpu.dot_dimension_numbers<[1], [0], [0], [1], [0, 0, 1, 1], [], []>, precision = #tpu.contract_precision<fp32>} : vector<4x8xf32>, vector<8x6xf32>, vector<4x6xf32> -> vector<4x6xf32>
    %c0_108 = arith.constant 0 : index
    %c0_109 = arith.constant 0 : index
    %195 = vector.load %arg7[%c0_108, %c0_109] : memref<8x6xf32, #tpu.memory_space<vmem>>, vector<8x6xf32>
    %cst_110 = arith.constant dense<0.000000e+00> : vector<4x6xf32>
    %196 = tpu.matmul %189, %195, %cst_110 {dimension_numbers = #tpu.dot_dimension_numbers<[1], [0], [0], [1], [0, 0, 1, 1], [], []>, precision = #tpu.contract_precision<fp32>} : vector<4x8xf32>, vector<8x6xf32>, vector<4x6xf32> -> vector<4x6xf32>
    %197 = vector.extract_strided_slice %194 {offsets = [0, 0], sizes = [4, 4], strides = [1, 1]} : vector<4x6xf32> to vector<4x4xf32>
    %c0_111 = arith.constant 0 : index
    %c5_112 = arith.constant 5 : index
    %198 = vector.load %arg2[%c0_111, %c5_112] : memref<4x15xf32, #tpu.memory_space<vmem>>, vector<4x1xf32>
    %c0_113 = arith.constant 0 : index
    %c5_114 = arith.constant 5 : index
    %199 = vector.load %arg3[%c0_113, %c5_114] : memref<4x15xf32, #tpu.memory_space<vmem>>, vector<4x1xf32>
    %200 = vector.broadcast %198 : vector<4x1xf32> to vector<4x4xf32>
    %201 = arith.mulf %200, %197 : vector<4x4xf32>
    %202 = vector.broadcast %199 : vector<4x1xf32> to vector<4x4xf32>
    %203 = arith.mulf %202, %197 : vector<4x4xf32>
    %204 = vector.extract_strided_slice %196 {offsets = [0, 0], sizes = [4, 4], strides = [1, 1]} : vector<4x6xf32> to vector<4x4xf32>
    %c0_115 = arith.constant 0 : index
    %c6_116 = arith.constant 6 : index
    %205 = vector.load %arg2[%c0_115, %c6_116] : memref<4x15xf32, #tpu.memory_space<vmem>>, vector<4x1xf32>
    %c0_117 = arith.constant 0 : index
    %c6_118 = arith.constant 6 : index
    %206 = vector.load %arg3[%c0_117, %c6_118] : memref<4x15xf32, #tpu.memory_space<vmem>>, vector<4x1xf32>
    %207 = vector.broadcast %205 : vector<4x1xf32> to vector<4x4xf32>
    %208 = arith.mulf %207, %204 : vector<4x4xf32>
    %209 = vector.broadcast %206 : vector<4x1xf32> to vector<4x4xf32>
    %210 = arith.mulf %209, %204 : vector<4x4xf32>
    %211 = arith.addf %201, %208 : vector<4x4xf32>
    %212 = arith.addf %203, %210 : vector<4x4xf32>
    %213 = vector.extract_strided_slice %194 {offsets = [0, 1], sizes = [4, 4], strides = [1, 1]} : vector<4x6xf32> to vector<4x4xf32>
    %c0_119 = arith.constant 0 : index
    %c7_120 = arith.constant 7 : index
    %214 = vector.load %arg2[%c0_119, %c7_120] : memref<4x15xf32, #tpu.memory_space<vmem>>, vector<4x1xf32>
    %c0_121 = arith.constant 0 : index
    %c7_122 = arith.constant 7 : index
    %215 = vector.load %arg3[%c0_121, %c7_122] : memref<4x15xf32, #tpu.memory_space<vmem>>, vector<4x1xf32>
    %216 = vector.broadcast %214 : vector<4x1xf32> to vector<4x4xf32>
    %217 = arith.mulf %216, %213 : vector<4x4xf32>
    %218 = vector.broadcast %215 : vector<4x1xf32> to vector<4x4xf32>
    %219 = arith.mulf %218, %213 : vector<4x4xf32>
    %220 = arith.addf %211, %217 : vector<4x4xf32>
    %221 = arith.addf %212, %219 : vector<4x4xf32>
    %222 = vector.extract_strided_slice %196 {offsets = [0, 1], sizes = [4, 4], strides = [1, 1]} : vector<4x6xf32> to vector<4x4xf32>
    %c0_123 = arith.constant 0 : index
    %c8_124 = arith.constant 8 : index
    %223 = vector.load %arg2[%c0_123, %c8_124] : memref<4x15xf32, #tpu.memory_space<vmem>>, vector<4x1xf32>
    %c0_125 = arith.constant 0 : index
    %c8_126 = arith.constant 8 : index
    %224 = vector.load %arg3[%c0_125, %c8_126] : memref<4x15xf32, #tpu.memory_space<vmem>>, vector<4x1xf32>
    %225 = vector.broadcast %223 : vector<4x1xf32> to vector<4x4xf32>
    %226 = arith.mulf %225, %222 : vector<4x4xf32>
    %227 = vector.broadcast %224 : vector<4x1xf32> to vector<4x4xf32>
    %228 = arith.mulf %227, %222 : vector<4x4xf32>
    %229 = arith.addf %220, %226 : vector<4x4xf32>
    %230 = arith.addf %221, %228 : vector<4x4xf32>
    %231 = vector.extract_strided_slice %194 {offsets = [0, 2], sizes = [4, 4], strides = [1, 1]} : vector<4x6xf32> to vector<4x4xf32>
    %c0_127 = arith.constant 0 : index
    %c9_128 = arith.constant 9 : index
    %232 = vector.load %arg2[%c0_127, %c9_128] : memref<4x15xf32, #tpu.memory_space<vmem>>, vector<4x1xf32>
    %c0_129 = arith.constant 0 : index
    %c9_130 = arith.constant 9 : index
    %233 = vector.load %arg3[%c0_129, %c9_130] : memref<4x15xf32, #tpu.memory_space<vmem>>, vector<4x1xf32>
    %234 = vector.broadcast %232 : vector<4x1xf32> to vector<4x4xf32>
    %235 = arith.mulf %234, %231 : vector<4x4xf32>
    %236 = vector.broadcast %233 : vector<4x1xf32> to vector<4x4xf32>
    %237 = arith.mulf %236, %231 : vector<4x4xf32>
    %238 = arith.addf %229, %235 : vector<4x4xf32>
    %239 = arith.addf %230, %237 : vector<4x4xf32>
    %c0_131 = arith.constant 0 : index
    %c4_132 = arith.constant 4 : index
    %240 = vector.load %arg12[%c0_131, %c4_132] : memref<4x12xf32, #tpu.memory_space<vmem>>, vector<4x4xf32>
    tpu.vector_store %arg12[%c0_131, %c4_132], %238 {strides = array<i32>} : memref<4x12xf32, #tpu.memory_space<vmem>>, vector<4x4xf32>,
    %c0_133 = arith.constant 0 : index
    %c4_134 = arith.constant 4 : index
    %241 = vector.load %arg13[%c0_133, %c4_134] : memref<4x12xf32, #tpu.memory_space<vmem>>, vector<4x4xf32>
    tpu.vector_store %arg13[%c0_133, %c4_134], %239 {strides = array<i32>} : memref<4x12xf32, #tpu.memory_space<vmem>>, vector<4x4xf32>,
    %c0_135 = arith.constant 0 : index
    %c0_136 = arith.constant 0 : index
    %242 = vector.load %arg8[%c0_135, %c0_136] : memref<4x4xf32, #tpu.memory_space<vmem>>, vector<4x4xf32>
    %cst_137 = arith.constant dense<0.000000e+00> : vector<4x4xf32>
    %243 = tpu.matmul %238, %242, %cst_137 {dimension_numbers = #tpu.dot_dimension_numbers<[1], [0], [0], [1], [0, 0, 1, 1], [], []>, precision = #tpu.contract_precision<fp32>} : vector<4x4xf32>, vector<4x4xf32>, vector<4x4xf32> -> vector<4x4xf32>
    %c0_138 = arith.constant 0 : index
    %c0_139 = arith.constant 0 : index
    %244 = vector.load %arg9[%c0_138, %c0_139] : memref<4x4xf32, #tpu.memory_space<vmem>>, vector<4x4xf32>
    %cst_140 = arith.constant dense<0.000000e+00> : vector<4x4xf32>
    %245 = tpu.matmul %238, %244, %cst_140 {dimension_numbers = #tpu.dot_dimension_numbers<[1], [0], [0], [1], [0, 0, 1, 1], [], []>, precision = #tpu.contract_precision<fp32>} : vector<4x4xf32>, vector<4x4xf32>, vector<4x4xf32> -> vector<4x4xf32>
    %246 = vector.extract_strided_slice %243 {offsets = [0, 0], sizes = [4, 2], strides = [1, 1]} : vector<4x4xf32> to vector<4x2xf32>
    %c0_141 = arith.constant 0 : index
    %c5_142 = arith.constant 5 : index
    %247 = vector.load %arg2[%c0_141, %c5_142] : memref<4x15xf32, #tpu.memory_space<vmem>>, vector<4x1xf32>
    %c0_143 = arith.constant 0 : index
    %c5_144 = arith.constant 5 : index
    %248 = vector.load %arg3[%c0_143, %c5_144] : memref<4x15xf32, #tpu.memory_space<vmem>>, vector<4x1xf32>
    %249 = vector.broadcast %247 : vector<4x1xf32> to vector<4x2xf32>
    %250 = arith.mulf %249, %246 : vector<4x2xf32>
    %251 = vector.broadcast %248 : vector<4x1xf32> to vector<4x2xf32>
    %252 = arith.mulf %251, %246 : vector<4x2xf32>
    %253 = vector.extract_strided_slice %245 {offsets = [0, 0], sizes = [4, 2], strides = [1, 1]} : vector<4x4xf32> to vector<4x2xf32>
    %c0_145 = arith.constant 0 : index
    %c6_146 = arith.constant 6 : index
    %254 = vector.load %arg2[%c0_145, %c6_146] : memref<4x15xf32, #tpu.memory_space<vmem>>, vector<4x1xf32>
    %c0_147 = arith.constant 0 : index
    %c6_148 = arith.constant 6 : index
    %255 = vector.load %arg3[%c0_147, %c6_148] : memref<4x15xf32, #tpu.memory_space<vmem>>, vector<4x1xf32>
    %256 = vector.broadcast %254 : vector<4x1xf32> to vector<4x2xf32>
    %257 = arith.mulf %256, %253 : vector<4x2xf32>
    %258 = vector.broadcast %255 : vector<4x1xf32> to vector<4x2xf32>
    %259 = arith.mulf %258, %253 : vector<4x2xf32>
    %260 = arith.addf %250, %257 : vector<4x2xf32>
    %261 = arith.addf %252, %259 : vector<4x2xf32>
    %262 = vector.extract_strided_slice %243 {offsets = [0, 1], sizes = [4, 2], strides = [1, 1]} : vector<4x4xf32> to vector<4x2xf32>
    %c0_149 = arith.constant 0 : index
    %c7_150 = arith.constant 7 : index
    %263 = vector.load %arg2[%c0_149, %c7_150] : memref<4x15xf32, #tpu.memory_space<vmem>>, vector<4x1xf32>
    %c0_151 = arith.constant 0 : index
    %c7_152 = arith.constant 7 : index
    %264 = vector.load %arg3[%c0_151, %c7_152] : memref<4x15xf32, #tpu.memory_space<vmem>>, vector<4x1xf32>
    %265 = vector.broadcast %263 : vector<4x1xf32> to vector<4x2xf32>
    %266 = arith.mulf %265, %262 : vector<4x2xf32>
    %267 = vector.broadcast %264 : vector<4x1xf32> to vector<4x2xf32>
    %268 = arith.mulf %267, %262 : vector<4x2xf32>
    %269 = arith.addf %260, %266 : vector<4x2xf32>
    %270 = arith.addf %261, %268 : vector<4x2xf32>
    %271 = vector.extract_strided_slice %245 {offsets = [0, 1], sizes = [4, 2], strides = [1, 1]} : vector<4x4xf32> to vector<4x2xf32>
    %c0_153 = arith.constant 0 : index
    %c8_154 = arith.constant 8 : index
    %272 = vector.load %arg2[%c0_153, %c8_154] : memref<4x15xf32, #tpu.memory_space<vmem>>, vector<4x1xf32>
    %c0_155 = arith.constant 0 : index
    %c8_156 = arith.constant 8 : index
    %273 = vector.load %arg3[%c0_155, %c8_156] : memref<4x15xf32, #tpu.memory_space<vmem>>, vector<4x1xf32>
    %274 = vector.broadcast %272 : vector<4x1xf32> to vector<4x2xf32>
    %275 = arith.mulf %274, %271 : vector<4x2xf32>
    %276 = vector.broadcast %273 : vector<4x1xf32> to vector<4x2xf32>
    %277 = arith.mulf %276, %271 : vector<4x2xf32>
    %278 = arith.addf %269, %275 : vector<4x2xf32>
    %279 = arith.addf %270, %277 : vector<4x2xf32>
    %280 = vector.extract_strided_slice %243 {offsets = [0, 2], sizes = [4, 2], strides = [1, 1]} : vector<4x4xf32> to vector<4x2xf32>
    %c0_157 = arith.constant 0 : index
    %c9_158 = arith.constant 9 : index
    %281 = vector.load %arg2[%c0_157, %c9_158] : memref<4x15xf32, #tpu.memory_space<vmem>>, vector<4x1xf32>
    %c0_159 = arith.constant 0 : index
    %c9_160 = arith.constant 9 : index
    %282 = vector.load %arg3[%c0_159, %c9_160] : memref<4x15xf32, #tpu.memory_space<vmem>>, vector<4x1xf32>
    %283 = vector.broadcast %281 : vector<4x1xf32> to vector<4x2xf32>
    %284 = arith.mulf %283, %280 : vector<4x2xf32>
    %285 = vector.broadcast %282 : vector<4x1xf32> to vector<4x2xf32>
    %286 = arith.mulf %285, %280 : vector<4x2xf32>
    %287 = arith.addf %278, %284 : vector<4x2xf32>
    %288 = arith.addf %279, %286 : vector<4x2xf32>
    %c0_161 = arith.constant 0 : index
    %c2_162 = arith.constant 2 : index
    %289 = vector.load %arg14[%c0_161, %c2_162] : memref<4x6xf32, #tpu.memory_space<vmem>>, vector<4x2xf32>
    tpu.vector_store %arg14[%c0_161, %c2_162], %287 {strides = array<i32>} : memref<4x6xf32, #tpu.memory_space<vmem>>, vector<4x2xf32>,
    %c0_163 = arith.constant 0 : index
    %c2_164 = arith.constant 2 : index
    %290 = vector.load %arg15[%c0_163, %c2_164] : memref<4x6xf32, #tpu.memory_space<vmem>>, vector<4x2xf32>
    tpu.vector_store %arg15[%c0_163, %c2_164], %288 {strides = array<i32>} : memref<4x6xf32, #tpu.memory_space<vmem>>, vector<4x2xf32>,
    %291 = vector.extract_strided_slice %2 {offsets = [0, 0], sizes = [4, 8], strides = [1, 1]} : vector<4x10xf32> to vector<4x8xf32>
    %c0_165 = arith.constant 0 : index
    %c10 = arith.constant 10 : index
    %292 = vector.load %arg2[%c0_165, %c10] : memref<4x15xf32, #tpu.memory_space<vmem>>, vector<4x1xf32>
    %c0_166 = arith.constant 0 : index
    %c10_167 = arith.constant 10 : index
    %293 = vector.load %arg3[%c0_166, %c10_167] : memref<4x15xf32, #tpu.memory_space<vmem>>, vector<4x1xf32>
    %294 = vector.broadcast %292 : vector<4x1xf32> to vector<4x8xf32>
    %295 = arith.mulf %294, %291 : vector<4x8xf32>
    %296 = vector.broadcast %293 : vector<4x1xf32> to vector<4x8xf32>
    %297 = arith.mulf %296, %291 : vector<4x8xf32>
    %298 = vector.extract_strided_slice %4 {offsets = [0, 0], sizes = [4, 8], strides = [1, 1]} : vector<4x10xf32> to vector<4x8xf32>
    %c0_168 = arith.constant 0 : index
    %c11 = arith.constant 11 : index
    %299 = vector.load %arg2[%c0_168, %c11] : memref<4x15xf32, #tpu.memory_space<vmem>>, vector<4x1xf32>
    %c0_169 = arith.constant 0 : index
    %c11_170 = arith.constant 11 : index
    %300 = vector.load %arg3[%c0_169, %c11_170] : memref<4x15xf32, #tpu.memory_space<vmem>>, vector<4x1xf32>
    %301 = vector.broadcast %299 : vector<4x1xf32> to vector<4x8xf32>
    %302 = arith.mulf %301, %298 : vector<4x8xf32>
    %303 = vector.broadcast %300 : vector<4x1xf32> to vector<4x8xf32>
    %304 = arith.mulf %303, %298 : vector<4x8xf32>
    %305 = arith.addf %295, %302 : vector<4x8xf32>
    %306 = arith.addf %297, %304 : vector<4x8xf32>
    %307 = vector.extract_strided_slice %2 {offsets = [0, 1], sizes = [4, 8], strides = [1, 1]} : vector<4x10xf32> to vector<4x8xf32>
    %c0_171 = arith.constant 0 : index
    %c12 = arith.constant 12 : index
    %308 = vector.load %arg2[%c0_171, %c12] : memref<4x15xf32, #tpu.memory_space<vmem>>, vector<4x1xf32>
    %c0_172 = arith.constant 0 : index
    %c12_173 = arith.constant 12 : index
    %309 = vector.load %arg3[%c0_172, %c12_173] : memref<4x15xf32, #tpu.memory_space<vmem>>, vector<4x1xf32>
    %310 = vector.broadcast %308 : vector<4x1xf32> to vector<4x8xf32>
    %311 = arith.mulf %310, %307 : vector<4x8xf32>
    %312 = vector.broadcast %309 : vector<4x1xf32> to vector<4x8xf32>
    %313 = arith.mulf %312, %307 : vector<4x8xf32>
    %314 = arith.addf %305, %311 : vector<4x8xf32>
    %315 = arith.addf %306, %313 : vector<4x8xf32>
    %316 = vector.extract_strided_slice %4 {offsets = [0, 1], sizes = [4, 8], strides = [1, 1]} : vector<4x10xf32> to vector<4x8xf32>
    %c0_174 = arith.constant 0 : index
    %c13 = arith.constant 13 : index
    %317 = vector.load %arg2[%c0_174, %c13] : memref<4x15xf32, #tpu.memory_space<vmem>>, vector<4x1xf32>
    %c0_175 = arith.constant 0 : index
    %c13_176 = arith.constant 13 : index
    %318 = vector.load %arg3[%c0_175, %c13_176] : memref<4x15xf32, #tpu.memory_space<vmem>>, vector<4x1xf32>
    %319 = vector.broadcast %317 : vector<4x1xf32> to vector<4x8xf32>
    %320 = arith.mulf %319, %316 : vector<4x8xf32>
    %321 = vector.broadcast %318 : vector<4x1xf32> to vector<4x8xf32>
    %322 = arith.mulf %321, %316 : vector<4x8xf32>
    %323 = arith.addf %314, %320 : vector<4x8xf32>
    %324 = arith.addf %315, %322 : vector<4x8xf32>
    %325 = vector.extract_strided_slice %2 {offsets = [0, 2], sizes = [4, 8], strides = [1, 1]} : vector<4x10xf32> to vector<4x8xf32>
    %c0_177 = arith.constant 0 : index
    %c14 = arith.constant 14 : index
    %326 = vector.load %arg2[%c0_177, %c14] : memref<4x15xf32, #tpu.memory_space<vmem>>, vector<4x1xf32>
    %c0_178 = arith.constant 0 : index
    %c14_179 = arith.constant 14 : index
    %327 = vector.load %arg3[%c0_178, %c14_179] : memref<4x15xf32, #tpu.memory_space<vmem>>, vector<4x1xf32>
    %328 = vector.broadcast %326 : vector<4x1xf32> to vector<4x8xf32>
    %329 = arith.mulf %328, %325 : vector<4x8xf32>
    %330 = vector.broadcast %327 : vector<4x1xf32> to vector<4x8xf32>
    %331 = arith.mulf %330, %325 : vector<4x8xf32>
    %332 = arith.addf %323, %329 : vector<4x8xf32>
    %333 = arith.addf %324, %331 : vector<4x8xf32>
    %c0_180 = arith.constant 0 : index
    %c16 = arith.constant 16 : index
    %334 = vector.load %arg10[%c0_180, %c16] : memref<4x24xf32, #tpu.memory_space<vmem>>, vector<4x8xf32>
    tpu.vector_store %arg10[%c0_180, %c16], %332 {strides = array<i32>} : memref<4x24xf32, #tpu.memory_space<vmem>>, vector<4x8xf32>,
    %c0_181 = arith.constant 0 : index
    %c16_182 = arith.constant 16 : index
    %335 = vector.load %arg11[%c0_181, %c16_182] : memref<4x24xf32, #tpu.memory_space<vmem>>, vector<4x8xf32>
    tpu.vector_store %arg11[%c0_181, %c16_182], %333 {strides = array<i32>} : memref<4x24xf32, #tpu.memory_space<vmem>>, vector<4x8xf32>,
    %c0_183 = arith.constant 0 : index
    %c0_184 = arith.constant 0 : index
    %336 = vector.load %arg6[%c0_183, %c0_184] : memref<8x6xf32, #tpu.memory_space<vmem>>, vector<8x6xf32>
    %cst_185 = arith.constant dense<0.000000e+00> : vector<4x6xf32>
    %337 = tpu.matmul %332, %336, %cst_185 {dimension_numbers = #tpu.dot_dimension_numbers<[1], [0], [0], [1], [0, 0, 1, 1], [], []>, precision = #tpu.contract_precision<fp32>} : vector<4x8xf32>, vector<8x6xf32>, vector<4x6xf32> -> vector<4x6xf32>
    %c0_186 = arith.constant 0 : index
    %c0_187 = arith.constant 0 : index
    %338 = vector.load %arg7[%c0_186, %c0_187] : memref<8x6xf32, #tpu.memory_space<vmem>>, vector<8x6xf32>
    %cst_188 = arith.constant dense<0.000000e+00> : vector<4x6xf32>
    %339 = tpu.matmul %332, %338, %cst_188 {dimension_numbers = #tpu.dot_dimension_numbers<[1], [0], [0], [1], [0, 0, 1, 1], [], []>, precision = #tpu.contract_precision<fp32>} : vector<4x8xf32>, vector<8x6xf32>, vector<4x6xf32> -> vector<4x6xf32>
    %340 = vector.extract_strided_slice %337 {offsets = [0, 0], sizes = [4, 4], strides = [1, 1]} : vector<4x6xf32> to vector<4x4xf32>
    %c0_189 = arith.constant 0 : index
    %c10_190 = arith.constant 10 : index
    %341 = vector.load %arg2[%c0_189, %c10_190] : memref<4x15xf32, #tpu.memory_space<vmem>>, vector<4x1xf32>
    %c0_191 = arith.constant 0 : index
    %c10_192 = arith.constant 10 : index
    %342 = vector.load %arg3[%c0_191, %c10_192] : memref<4x15xf32, #tpu.memory_space<vmem>>, vector<4x1xf32>
    %343 = vector.broadcast %341 : vector<4x1xf32> to vector<4x4xf32>
    %344 = arith.mulf %343, %340 : vector<4x4xf32>
    %345 = vector.broadcast %342 : vector<4x1xf32> to vector<4x4xf32>
    %346 = arith.mulf %345, %340 : vector<4x4xf32>
    %347 = vector.extract_strided_slice %339 {offsets = [0, 0], sizes = [4, 4], strides = [1, 1]} : vector<4x6xf32> to vector<4x4xf32>
    %c0_193 = arith.constant 0 : index
    %c11_194 = arith.constant 11 : index
    %348 = vector.load %arg2[%c0_193, %c11_194] : memref<4x15xf32, #tpu.memory_space<vmem>>, vector<4x1xf32>
    %c0_195 = arith.constant 0 : index
    %c11_196 = arith.constant 11 : index
    %349 = vector.load %arg3[%c0_195, %c11_196] : memref<4x15xf32, #tpu.memory_space<vmem>>, vector<4x1xf32>
    %350 = vector.broadcast %348 : vector<4x1xf32> to vector<4x4xf32>
    %351 = arith.mulf %350, %347 : vector<4x4xf32>
    %352 = vector.broadcast %349 : vector<4x1xf32> to vector<4x4xf32>
    %353 = arith.mulf %352, %347 : vector<4x4xf32>
    %354 = arith.addf %344, %351 : vector<4x4xf32>
    %355 = arith.addf %346, %353 : vector<4x4xf32>
    %356 = vector.extract_strided_slice %337 {offsets = [0, 1], sizes = [4, 4], strides = [1, 1]} : vector<4x6xf32> to vector<4x4xf32>
    %c0_197 = arith.constant 0 : index
    %c12_198 = arith.constant 12 : index
    %357 = vector.load %arg2[%c0_197, %c12_198] : memref<4x15xf32, #tpu.memory_space<vmem>>, vector<4x1xf32>
    %c0_199 = arith.constant 0 : index
    %c12_200 = arith.constant 12 : index
    %358 = vector.load %arg3[%c0_199, %c12_200] : memref<4x15xf32, #tpu.memory_space<vmem>>, vector<4x1xf32>
    %359 = vector.broadcast %357 : vector<4x1xf32> to vector<4x4xf32>
    %360 = arith.mulf %359, %356 : vector<4x4xf32>
    %361 = vector.broadcast %358 : vector<4x1xf32> to vector<4x4xf32>
    %362 = arith.mulf %361, %356 : vector<4x4xf32>
    %363 = arith.addf %354, %360 : vector<4x4xf32>
    %364 = arith.addf %355, %362 : vector<4x4xf32>
    %365 = vector.extract_strided_slice %339 {offsets = [0, 1], sizes = [4, 4], strides = [1, 1]} : vector<4x6xf32> to vector<4x4xf32>
    %c0_201 = arith.constant 0 : index
    %c13_202 = arith.constant 13 : index
    %366 = vector.load %arg2[%c0_201, %c13_202] : memref<4x15xf32, #tpu.memory_space<vmem>>, vector<4x1xf32>
    %c0_203 = arith.constant 0 : index
    %c13_204 = arith.constant 13 : index
    %367 = vector.load %arg3[%c0_203, %c13_204] : memref<4x15xf32, #tpu.memory_space<vmem>>, vector<4x1xf32>
    %368 = vector.broadcast %366 : vector<4x1xf32> to vector<4x4xf32>
    %369 = arith.mulf %368, %365 : vector<4x4xf32>
    %370 = vector.broadcast %367 : vector<4x1xf32> to vector<4x4xf32>
    %371 = arith.mulf %370, %365 : vector<4x4xf32>
    %372 = arith.addf %363, %369 : vector<4x4xf32>
    %373 = arith.addf %364, %371 : vector<4x4xf32>
    %374 = vector.extract_strided_slice %337 {offsets = [0, 2], sizes = [4, 4], strides = [1, 1]} : vector<4x6xf32> to vector<4x4xf32>
    %c0_205 = arith.constant 0 : index
    %c14_206 = arith.constant 14 : index
    %375 = vector.load %arg2[%c0_205, %c14_206] : memref<4x15xf32, #tpu.memory_space<vmem>>, vector<4x1xf32>
    %c0_207 = arith.constant 0 : index
    %c14_208 = arith.constant 14 : index
    %376 = vector.load %arg3[%c0_207, %c14_208] : memref<4x15xf32, #tpu.memory_space<vmem>>, vector<4x1xf32>
    %377 = vector.broadcast %375 : vector<4x1xf32> to vector<4x4xf32>
    %378 = arith.mulf %377, %374 : vector<4x4xf32>
    %379 = vector.broadcast %376 : vector<4x1xf32> to vector<4x4xf32>
    %380 = arith.mulf %379, %374 : vector<4x4xf32>
    %381 = arith.addf %372, %378 : vector<4x4xf32>
    %382 = arith.addf %373, %380 : vector<4x4xf32>
    %c0_209 = arith.constant 0 : index
    %c8_210 = arith.constant 8 : index
    %383 = vector.load %arg12[%c0_209, %c8_210] : memref<4x12xf32, #tpu.memory_space<vmem>>, vector<4x4xf32>
    tpu.vector_store %arg12[%c0_209, %c8_210], %381 {strides = array<i32>} : memref<4x12xf32, #tpu.memory_space<vmem>>, vector<4x4xf32>,
    %c0_211 = arith.constant 0 : index
    %c8_212 = arith.constant 8 : index
    %384 = vector.load %arg13[%c0_211, %c8_212] : memref<4x12xf32, #tpu.memory_space<vmem>>, vector<4x4xf32>
    tpu.vector_store %arg13[%c0_211, %c8_212], %382 {strides = array<i32>} : memref<4x12xf32, #tpu.memory_space<vmem>>, vector<4x4xf32>,
    %c0_213 = arith.constant 0 : index
    %c0_214 = arith.constant 0 : index
    %385 = vector.load %arg8[%c0_213, %c0_214] : memref<4x4xf32, #tpu.memory_space<vmem>>, vector<4x4xf32>
    %cst_215 = arith.constant dense<0.000000e+00> : vector<4x4xf32>
    %386 = tpu.matmul %381, %385, %cst_215 {dimension_numbers = #tpu.dot_dimension_numbers<[1], [0], [0], [1], [0, 0, 1, 1], [], []>, precision = #tpu.contract_precision<fp32>} : vector<4x4xf32>, vector<4x4xf32>, vector<4x4xf32> -> vector<4x4xf32>
    %c0_216 = arith.constant 0 : index
    %c0_217 = arith.constant 0 : index
    %387 = vector.load %arg9[%c0_216, %c0_217] : memref<4x4xf32, #tpu.memory_space<vmem>>, vector<4x4xf32>
    %cst_218 = arith.constant dense<0.000000e+00> : vector<4x4xf32>
    %388 = tpu.matmul %381, %387, %cst_218 {dimension_numbers = #tpu.dot_dimension_numbers<[1], [0], [0], [1], [0, 0, 1, 1], [], []>, precision = #tpu.contract_precision<fp32>} : vector<4x4xf32>, vector<4x4xf32>, vector<4x4xf32> -> vector<4x4xf32>
    %389 = vector.extract_strided_slice %386 {offsets = [0, 0], sizes = [4, 2], strides = [1, 1]} : vector<4x4xf32> to vector<4x2xf32>
    %c0_219 = arith.constant 0 : index
    %c10_220 = arith.constant 10 : index
    %390 = vector.load %arg2[%c0_219, %c10_220] : memref<4x15xf32, #tpu.memory_space<vmem>>, vector<4x1xf32>
    %c0_221 = arith.constant 0 : index
    %c10_222 = arith.constant 10 : index
    %391 = vector.load %arg3[%c0_221, %c10_222] : memref<4x15xf32, #tpu.memory_space<vmem>>, vector<4x1xf32>
    %392 = vector.broadcast %390 : vector<4x1xf32> to vector<4x2xf32>
    %393 = arith.mulf %392, %389 : vector<4x2xf32>
    %394 = vector.broadcast %391 : vector<4x1xf32> to vector<4x2xf32>
    %395 = arith.mulf %394, %389 : vector<4x2xf32>
    %396 = vector.extract_strided_slice %388 {offsets = [0, 0], sizes = [4, 2], strides = [1, 1]} : vector<4x4xf32> to vector<4x2xf32>
    %c0_223 = arith.constant 0 : index
    %c11_224 = arith.constant 11 : index
    %397 = vector.load %arg2[%c0_223, %c11_224] : memref<4x15xf32, #tpu.memory_space<vmem>>, vector<4x1xf32>
    %c0_225 = arith.constant 0 : index
    %c11_226 = arith.constant 11 : index
    %398 = vector.load %arg3[%c0_225, %c11_226] : memref<4x15xf32, #tpu.memory_space<vmem>>, vector<4x1xf32>
    %399 = vector.broadcast %397 : vector<4x1xf32> to vector<4x2xf32>
    %400 = arith.mulf %399, %396 : vector<4x2xf32>
    %401 = vector.broadcast %398 : vector<4x1xf32> to vector<4x2xf32>
    %402 = arith.mulf %401, %396 : vector<4x2xf32>
    %403 = arith.addf %393, %400 : vector<4x2xf32>
    %404 = arith.addf %395, %402 : vector<4x2xf32>
    %405 = vector.extract_strided_slice %386 {offsets = [0, 1], sizes = [4, 2], strides = [1, 1]} : vector<4x4xf32> to vector<4x2xf32>
    %c0_227 = arith.constant 0 : index
    %c12_228 = arith.constant 12 : index
    %406 = vector.load %arg2[%c0_227, %c12_228] : memref<4x15xf32, #tpu.memory_space<vmem>>, vector<4x1xf32>
    %c0_229 = arith.constant 0 : index
    %c12_230 = arith.constant 12 : index
    %407 = vector.load %arg3[%c0_229, %c12_230] : memref<4x15xf32, #tpu.memory_space<vmem>>, vector<4x1xf32>
    %408 = vector.broadcast %406 : vector<4x1xf32> to vector<4x2xf32>
    %409 = arith.mulf %408, %405 : vector<4x2xf32>
    %410 = vector.broadcast %407 : vector<4x1xf32> to vector<4x2xf32>
    %411 = arith.mulf %410, %405 : vector<4x2xf32>
    %412 = arith.addf %403, %409 : vector<4x2xf32>
    %413 = arith.addf %404, %411 : vector<4x2xf32>
    %414 = vector.extract_strided_slice %388 {offsets = [0, 1], sizes = [4, 2], strides = [1, 1]} : vector<4x4xf32> to vector<4x2xf32>
    %c0_231 = arith.constant 0 : index
    %c13_232 = arith.constant 13 : index
    %415 = vector.load %arg2[%c0_231, %c13_232] : memref<4x15xf32, #tpu.memory_space<vmem>>, vector<4x1xf32>
    %c0_233 = arith.constant 0 : index
    %c13_234 = arith.constant 13 : index
    %416 = vector.load %arg3[%c0_233, %c13_234] : memref<4x15xf32, #tpu.memory_space<vmem>>, vector<4x1xf32>
    %417 = vector.broadcast %415 : vector<4x1xf32> to vector<4x2xf32>
    %418 = arith.mulf %417, %414 : vector<4x2xf32>
    %419 = vector.broadcast %416 : vector<4x1xf32> to vector<4x2xf32>
    %420 = arith.mulf %419, %414 : vector<4x2xf32>
    %421 = arith.addf %412, %418 : vector<4x2xf32>
    %422 = arith.addf %413, %420 : vector<4x2xf32>
    %423 = vector.extract_strided_slice %386 {offsets = [0, 2], sizes = [4, 2], strides = [1, 1]} : vector<4x4xf32> to vector<4x2xf32>
    %c0_235 = arith.constant 0 : index
    %c14_236 = arith.constant 14 : index
    %424 = vector.load %arg2[%c0_235, %c14_236] : memref<4x15xf32, #tpu.memory_space<vmem>>, vector<4x1xf32>
    %c0_237 = arith.constant 0 : index
    %c14_238 = arith.constant 14 : index
    %425 = vector.load %arg3[%c0_237, %c14_238] : memref<4x15xf32, #tpu.memory_space<vmem>>, vector<4x1xf32>
    %426 = vector.broadcast %424 : vector<4x1xf32> to vector<4x2xf32>
    %427 = arith.mulf %426, %423 : vector<4x2xf32>
    %428 = vector.broadcast %425 : vector<4x1xf32> to vector<4x2xf32>
    %429 = arith.mulf %428, %423 : vector<4x2xf32>
    %430 = arith.addf %421, %427 : vector<4x2xf32>
    %431 = arith.addf %422, %429 : vector<4x2xf32>
    %c0_239 = arith.constant 0 : index
    %c4_240 = arith.constant 4 : index
    %432 = vector.load %arg14[%c0_239, %c4_240] : memref<4x6xf32, #tpu.memory_space<vmem>>, vector<4x2xf32>
    tpu.vector_store %arg14[%c0_239, %c4_240], %430 {strides = array<i32>} : memref<4x6xf32, #tpu.memory_space<vmem>>, vector<4x2xf32>,
    %c0_241 = arith.constant 0 : index
    %c4_242 = arith.constant 4 : index
    %433 = vector.load %arg15[%c0_241, %c4_242] : memref<4x6xf32, #tpu.memory_space<vmem>>, vector<4x2xf32>
    tpu.vector_store %arg15[%c0_241, %c4_242], %431 {strides = array<i32>} : memref<4x6xf32, #tpu.memory_space<vmem>>, vector<4x2xf32>,
    return
  }
  func.func @transform_0(%arg0: i32) -> (i32, i32) {
    %c0_i32 = arith.constant 0 : i32
    %c0_i32_0 = arith.constant 0 : i32
    return %arg0, %c0_i32 : i32, i32
  }
  func.func @transform_1(%arg0: i32) -> (i32, i32) {
    %c0_i32 = arith.constant 0 : i32
    %c0_i32_0 = arith.constant 0 : i32
    return %arg0, %c0_i32 : i32, i32
  }
  func.func @transform_2(%arg0: i32) -> (i32, i32) {
    %c0_i32 = arith.constant 0 : i32
    %c0_i32_0 = arith.constant 0 : i32
    return %arg0, %c0_i32 : i32, i32
  }
  func.func @transform_3(%arg0: i32) -> (i32, i32) {
    %c0_i32 = arith.constant 0 : i32
    %c0_i32_0 = arith.constant 0 : i32
    %c0_i32_1 = arith.constant 0 : i32
    return %c0_i32, %c0_i32_0 : i32, i32
  }
  func.func @transform_4(%arg0: i32) -> (i32, i32) {
    %c0_i32 = arith.constant 0 : i32
    %c0_i32_0 = arith.constant 0 : i32
    %c0_i32_1 = arith.constant 0 : i32
    return %c0_i32, %c0_i32_0 : i32, i32
  }
  func.func @transform_5(%arg0: i32) -> (i32, i32) {
    %c0_i32 = arith.constant 0 : i32
    %c0_i32_0 = arith.constant 0 : i32
    %c0_i32_1 = arith.constant 0 : i32
    return %c0_i32, %c0_i32_0 : i32, i32
  }
  func.func @transform_6(%arg0: i32) -> (i32, i32) {
    %c0_i32 = arith.constant 0 : i32
    %c0_i32_0 = arith.constant 0 : i32
    %c0_i32_1 = arith.constant 0 : i32
    return %c0_i32, %c0_i32_0 : i32, i32
  }
  func.func @transform_7(%arg0: i32) -> (i32, i32) {
    %c0_i32 = arith.constant 0 : i32
    %c0_i32_0 = arith.constant 0 : i32
    %c0_i32_1 = arith.constant 0 : i32
    return %c0_i32, %c0_i32_0 : i32, i32
  }
  func.func @transform_8(%arg0: i32) -> (i32, i32) {
    %c0_i32 = arith.constant 0 : i32
    %c0_i32_0 = arith.constant 0 : i32
    %c0_i32_1 = arith.constant 0 : i32
    return %c0_i32, %c0_i32_0 : i32, i32
  }
  func.func @transform_9(%arg0: i32) -> (i32, i32) {
    %c0_i32 = arith.constant 0 : i32
    %c0_i32_0 = arith.constant 0 : i32
    return %arg0, %c0_i32 : i32, i32
  }
  func.func @transform_10(%arg0: i32) -> (i32, i32) {
    %c0_i32 = arith.constant 0 : i32
    %c0_i32_0 = arith.constant 0 : i32
    return %arg0, %c0_i32 : i32, i32
  }
  func.func @transform_11(%arg0: i32) -> (i32, i32) {
    %c0_i32 = arith.constant 0 : i32
    %c0_i32_0 = arith.constant 0 : i32
    return %arg0, %c0_i32 : i32, i32
  }
  func.func @transform_12(%arg0: i32) -> (i32, i32) {
    %c0_i32 = arith.constant 0 : i32
    %c0_i32_0 = arith.constant 0 : i32
    return %arg0, %c0_i32 : i32, i32
  }
  func.func @transform_13(%arg0: i32) -> (i32, i32) {
    %c0_i32 = arith.constant 0 : i32
    %c0_i32_0 = arith.constant 0 : i32
    return %arg0, %c0_i32 : i32, i32
  }
  func.func @transform_14(%arg0: i32) -> (i32, i32) {
    %c0_i32 = arith.constant 0 : i32
    %c0_i32_0 = arith.constant 0 : i32
    return %arg0, %c0_i32 : i32, i32
  }
}

</mosaic_0001>

<llo_original>
// kernel: wavelet_layer1d_forward.1
$region0: #{wavelet_layer1d_forward.1}
  #allocation0 [shape = 'u32[]', space=smem, size = 0x4, offset = 0x4, fixed_abs, tag = 'smem constant byte address 0x4 - core index']
  #allocation1 [shape = 'u32[144,128]{1,0:T(1,128)}', space=vmem, size = 0x12000, scoped, tag = 'internal scratch']
  %s0 = inlined_call_operand.vmem [shape: f32[4,16], index: 0, kind: input, shape index: {}]
  %s1 = inlined_call_operand.vmem [shape: f32[4,15], index: 1, kind: input, shape index: {}]
  %s2 = inlined_call_operand.vmem [shape: f32[4,15], index: 2, kind: input, shape index: {}]
  %s3 = inlined_call_operand.vmem [shape: f32[16,10], index: 3, kind: input, shape index: {}]
  %s4 = inlined_call_operand.vmem [shape: f32[16,10], index: 4, kind: input, shape index: {}]
  %s5 = inlined_call_operand.vmem [shape: f32[8,6], index: 5, kind: input, shape index: {}]
  %s6 = inlined_call_operand.vmem [shape: f32[8,6], index: 6, kind: input, shape index: {}]
  %s7 = inlined_call_operand.vmem [shape: f32[4,4], index: 7, kind: input, shape index: {}]
  %s8 = inlined_call_operand.vmem [shape: f32[4,4], index: 8, kind: input, shape index: {}]
  %s9 = inlined_call_operand.vmem [shape: f32[4,24], index: 9, kind: output, shape index: {0}]
  %s10 = inlined_call_operand.vmem [shape: f32[4,24], index: 10, kind: output, shape index: {1}]
  %s11 = inlined_call_operand.vmem [shape: f32[4,12], index: 11, kind: output, shape index: {2}]
  %s12 = inlined_call_operand.vmem [shape: f32[4,12], index: 12, kind: output, shape index: {3}]
  %s13 = inlined_call_operand.vmem [shape: f32[4,6], index: 13, kind: output, shape index: {4}]
  %s14 = inlined_call_operand.vmem [shape: f32[4,6], index: 14, kind: output, shape index: {5}]
  %15 = xla_tuple %s9, %s10, %s11, %s12, %s13, %s14
  %s16 = sld [smem:[#allocation0]]
  $region86: #{wavelet_layer1d_forward.1} parent=0
    _
  %s18 = ssub.s32 1, %s16
  %s19 = scalar_select 0, %s18, %s16
  // Predicated region
  $region2: #{wavelet_layer1d_forward.1} parent=0 // pred_check
    _
  $region3: #{wavelet_layer1d_forward.1} parent=0 // pred_check_branch
    %21 = sbr.rel (0) target = $region5
  $region4: #{wavelet_layer1d_forward.1} parent=0 // pred_region
    _
  $region5: #{wavelet_layer1d_forward.1} parent=0 // pred_fallthru
    _
  // Predicated region
  $region6: #{wavelet_layer1d_forward.1} parent=0 // pred_check
    _
  $region7: #{wavelet_layer1d_forward.1} parent=0 // pred_check_branch
    %23 = sbr.rel (0) target = $region9
  $region8: #{wavelet_layer1d_forward.1} parent=0 // pred_region
    _
  $region9: #{wavelet_layer1d_forward.1} parent=0 // pred_fallthru
    _
  // Predicated region
  $region10: #{wavelet_layer1d_forward.1} parent=0 // pred_check
    _
  $region11: #{wavelet_layer1d_forward.1} parent=0 // pred_check_branch
    %25 = sbr.rel (0) target = $region13
  $region12: #{wavelet_layer1d_forward.1} parent=0 // pred_region
    _
  $region13: #{wavelet_layer1d_forward.1} parent=0 // pred_fallthru
    _
  // Predicated region
  $region14: #{wavelet_layer1d_forward.1} parent=0 // pred_check
    _
  $region15: #{wavelet_layer1d_forward.1} parent=0 // pred_check_branch
    %27 = sbr.rel (0) target = $region17
  $region16: #{wavelet_layer1d_forward.1} parent=0 // pred_region
    _
  $region17: #{wavelet_layer1d_forward.1} parent=0 // pred_fallthru
    _
  // Predicated region
  $region18: #{wavelet_layer1d_forward.1} parent=0 // pred_check
    _
  $region19: #{wavelet_layer1d_forward.1} parent=0 // pred_check_branch
    %29 = sbr.rel (0) target = $region21
  $region20: #{wavelet_layer1d_forward.1} parent=0 // pred_region
    _
  $region21: #{wavelet_layer1d_forward.1} parent=0 // pred_fallthru
    _
  // Predicated region
  $region22: #{wavelet_layer1d_forward.1} parent=0 // pred_check
    _
  $region23: #{wavelet_layer1d_forward.1} parent=0 // pred_check_branch
    %31 = sbr.rel (0) target = $region25
  $region24: #{wavelet_layer1d_forward.1} parent=0 // pred_region
    _
  $region25: #{wavelet_layer1d_forward.1} parent=0 // pred_fallthru
    _
  // Predicated region
  $region26: #{wavelet_layer1d_forward.1} parent=0 // pred_check
    _
  $region27: #{wavelet_layer1d_forward.1} parent=0 // pred_check_branch
    %33 = sbr.rel (0) target = $region29
  $region28: #{wavelet_layer1d_forward.1} parent=0 // pred_region
    _
  $region29: #{wavelet_layer1d_forward.1} parent=0 // pred_fallthru
    _
  // Predicated region
  $region30: #{wavelet_layer1d_forward.1} parent=0 // pred_check
    _
  $region31: #{wavelet_layer1d_forward.1} parent=0 // pred_check_branch
    %35 = sbr.rel (0) target = $region33
  $region32: #{wavelet_layer1d_forward.1} parent=0 // pred_region
    _
  $region33: #{wavelet_layer1d_forward.1} parent=0 // pred_fallthru
    _
  // Predicated region
  $region34: #{wavelet_layer1d_forward.1} parent=0 // pred_check
    _
  $region35: #{wavelet_layer1d_forward.1} parent=0 // pred_check_branch
    %37 = sbr.rel (0) target = $region37
  $region36: #{wavelet_layer1d_forward.1} parent=0 // pred_region
    _
  $region37: #{wavelet_layer1d_forward.1} parent=0 // pred_fallthru
    _
  %v38 = vld [vmem:[%s0] sm:$0xf]
  %v39 = vld [vmem:[%s3] sm:$0xff]
  %v40 = vld [vmem:[%s3 + $0x8] sm:$0xff]
  %vm41 = vcmask 130048
  %v43 = vsel %vm41, %v38, 0
  %45 = vmatprep.subr.mxu0 0.0
  %v46 = vand.u32 %v39, 4294901760
  %47 = vmatpush1.msra.mxu0 %v46
  %48 = vmatprep.subr.mxu0 0.0
  %v49 = vand.u32 %v40, 4294901760
  %50 = vmatpush1.msra.mxu0 %v49
  %51 = vmatprep.subr.mxu0 0.0
  %52 = vmatpush1.msra.mxu0 0.0
  %53 = vmatprep.subr.mxu0 0.0
  %54 = vmatpush1.msra.mxu0 0.0
  %55 = vmatprep.subr.mxu0 0.0
  %56 = vmatpush1.msra.mxu0 0.0
  %57 = vmatprep.subr.mxu0 0.0
  %58 = vmatpush1.msra.mxu0 0.0
  %59 = vmatprep.subr.mxu0 0.0
  %60 = vmatpush1.msra.mxu0 0.0
  %61 = vmatprep.subr.mxu0 0.0
  %62 = vmatpush1.msra.mxu0 0.0
  %63 = vmatprep.subr.mxu0 0.0
  %64 = vmatpush1.msra.mxu0 0.0
  %65 = vmatprep.subr.mxu0 0.0
  %66 = vmatpush1.msra.mxu0 0.0
  %67 = vmatprep.subr.mxu0 0.0
  %68 = vmatpush1.msra.mxu0 0.0
  %69 = vmatprep.subr.mxu0 0.0
  %70 = vmatpush1.msra.mxu0 0.0
  %71 = vmatprep.subr.mxu0 0.0
  %72 = vmatpush1.msra.mxu0 0.0
  %73 = vmatprep.subr.mxu0 0.0
  %74 = vmatpush1.msra.mxu0 0.0
  %75 = vmatprep.subr.mxu0 0.0
  %76 = vmatpush1.msra.mxu0 0.0
  %77 = vmatprep.subr.mxu0 0.0
  %78 = vmatpush1.msra.mxu0 0.0
  %79 = vmatprep.subr.mxu0 0.0
  %80 = vmatpush1.msra.mxu0 0.0
  %81 = vmatprep.subr.mxu0 0.0
  %82 = vmatpush1.msra.mxu0 0.0
  %83 = vmatprep.subr.mxu0 0.0
  %84 = vmatpush1.msra.mxu0 0.0
  %85 = vmatprep.subr.mxu0 0.0
  %86 = vmatpush1.msra.mxu0 0.0
  %87 = vmatprep.subr.mxu0 0.0
  %88 = vmatpush1.msra.mxu0 0.0
  %89 = vmatprep.subr.mxu0 0.0
  %90 = vmatpush1.msra.mxu0 0.0
  %91 = vmatprep.subr.mxu0 0.0
  %92 = vmatpush1.msra.mxu0 0.0
  %93 = vmatprep.subr.mxu0 0.0
  %94 = vmatpush1.msra.mxu0 0.0
  %95 = vmatprep.subr.mxu0 0.0
  %96 = vmatpush1.msra.mxu0 0.0
  %97 = vmatprep.subr.mxu0 0.0
  %98 = vmatpush1.msra.mxu0 0.0
  %99 = vmatprep.subr.mxu0 0.0
  %100 = vmatpush1.msra.mxu0 0.0
  %101 = vmatprep.subr.mxu0 0.0
  %102 = vmatpush1.msra.mxu0 0.0
  %103 = vmatprep.subr.mxu0 0.0
  %104 = vmatpush1.msra.mxu0 0.0
  %105 = vmatprep.subr.mxu0 0.0
  %106 = vmatpush1.msra.mxu0 0.0
  %107 = vmatprep.subr.mxu0 0.0
  %108 = vmatpush1.msra.mxu0 0.0
  %109 = vmatprep.subr.mxu0 0.0
  %110 = vmatpush1.msra.mxu0 0.0
  %111 = vmatprep.mubr.f32.mxu0 0.0
  %v112 = vand.u32 %v43, 4294901760
  %v113 = vsub.f32 %v43, %v112
  %v114 = vand.u32 %v113, 4294901760
  %v115 = vsub.f32 %v113, %v114
  %v116 = vand.u32 %v115, 4294901760
  %117 = vmatmul.mubr.f32.gmra.mrb[0].mxu0 %v116
  %v118 = vpop.f32.mrb[0].mxu0
  %v119 = vadd.f32 0.0, %v118
  %v120 = vpop.f32.mrb[0].mxu0
  %121 = vdwg.mxu0
  %122 = vmatprep.subr.mxu0 0.0
  %v123 = vand.u32 %v39, 4294901760
  %v124 = vsub.f32 %v39, %v123
  %v125 = vand.u32 %v124, 4294901760
  %v126 = vsub.f32 %v124, %v125
  %v127 = vand.u32 %v126, 4294901760
  %128 = vmatpush1.msra.mxu0 %v127
  %129 = vmatprep.subr.mxu0 0.0
  %v130 = vand.u32 %v40, 4294901760
  %v131 = vsub.f32 %v40, %v130
  %v132 = vand.u32 %v131, 4294901760
  %v133 = vsub.f32 %v131, %v132
  %v134 = vand.u32 %v133, 4294901760
  %135 = vmatpush1.msra.mxu0 %v134
  %136 = vmatprep.subr.mxu0 0.0
  %137 = vmatpush1.msra.mxu0 0.0
  %138 = vmatprep.subr.mxu0 0.0
  %139 = vmatpush1.msra.mxu0 0.0
  %140 = vmatprep.subr.mxu0 0.0
  %141 = vmatpush1.msra.mxu0 0.0
  %142 = vmatprep.subr.mxu0 0.0
  %143 = vmatpush1.msra.mxu0 0.0
  %144 = vmatprep.subr.mxu0 0.0
  %145 = vmatpush1.msra.mxu0 0.0
  %146 = vmatprep.subr.mxu0 0.0
  %147 = vmatpush1.msra.mxu0 0.0
  %148 = vmatprep.subr.mxu0 0.0
  %149 = vmatpush1.msra.mxu0 0.0
  %150 = vmatprep.subr.mxu0 0.0
  %151 = vmatpush1.msra.mxu0 0.0
  %152 = vmatprep.subr.mxu0 0.0
  %153 = vmatpush1.msra.mxu0 0.0
  %154 = vmatprep.subr.mxu0 0.0
  %155 = vmatpush1.msra.mxu0 0.0
  %156 = vmatprep.subr.mxu0 0.0
  %157 = vmatpush1.msra.mxu0 0.0
  %158 = vmatprep.subr.mxu0 0.0
  %159 = vmatpush1.msra.mxu0 0.0
  %160 = vmatprep.subr.mxu0 0.0
  %161 = vmatpush1.msra.mxu0 0.0
  %162 = vmatprep.subr.mxu0 0.0
  %163 = vmatpush1.msra.mxu0 0.0
  %164 = vmatprep.subr.mxu0 0.0
  %165 = vmatpush1.msra.mxu0 0.0
  %166 = vmatprep.subr.mxu0 0.0
  %167 = vmatpush1.msra.mxu0 0.0
  %168 = vmatprep.subr.mxu0 0.0
  %169 = vmatpush1.msra.mxu0 0.0
  %170 = vmatprep.subr.mxu0 0.0
  %171 = vmatpush1.msra.mxu0 0.0
  %172 = vmatprep.subr.mxu0 0.0
  %173 = vmatpush1.msra.mxu0 0.0
  %174 = vmatprep.subr.mxu0 0.0
  %175 = vmatpush1.msra.mxu0 0.0
  %176 = vmatprep.subr.mxu0 0.0
  %177 = vmatpush1.msra.mxu0 0.0
  %178 = vmatprep.subr.mxu0 0.0
  %179 = vmatpush1.msra.mxu0 0.0
  %180 = vmatprep.subr.mxu0 0.0
  %181 = vmatpush1.msra.mxu0 0.0
  %182 = vmatprep.subr.mxu0 0.0
  %183 = vmatpush1.msra.mxu0 0.0
  %184 = vmatprep.subr.mxu0 0.0
  %185 = vmatpush1.msra.mxu0 0.0
  %186 = vmatprep.subr.mxu0 0.0
  %187 = vmatpush1.msra.mxu0 0.0
  %188 = vmatprep.subr.mxu0 0.0
  %189 = vmatpush1.msra.mxu0 0.0
  %190 = vmatprep.subr.mxu0 0.0
  %191 = vmatpush1.msra.mxu0 0.0
  %192 = vmatprep.subr.mxu0 0.0
  %193 = vmatpush1.msra.mxu0 0.0
  %194 = vmatprep.subr.mxu0 0.0
  %195 = vmatpush1.msra.mxu0 0.0
  %196 = vmatprep.mubr.f32.mxu0 0.0
  %v197 = vand.u32 %v43, 4294901760
  %198 = vmatmul.mubr.f32.gmra.mrb[0].mxu0 %v197
  %v199 = vpop.f32.mrb[0].mxu0
  %v200 = vadd.f32 %v119, %v199
  %v201 = vpop.f32.mrb[0].mxu0
  %202 = vdwg.mxu0
  %203 = vmatprep.subr.mxu0 0.0
  %v204 = vand.u32 %v39, 4294901760
  %v205 = vsub.f32 %v39, %v204
  %206 = vmatpush1.msra.mxu0 %v205
  %207 = vmatprep.subr.mxu0 0.0
  %v208 = vand.u32 %v40, 4294901760
  %v209 = vsub.f32 %v40, %v208
  %210 = vmatpush1.msra.mxu0 %v209
  %211 = vmatprep.subr.mxu0 0.0
  %212 = vmatpush1.msra.mxu0 0.0
  %213 = vmatprep.subr.mxu0 0.0
  %214 = vmatpush1.msra.mxu0 0.0
  %215 = vmatprep.subr.mxu0 0.0
  %216 = vmatpush1.msra.mxu0 0.0
  %217 = vmatprep.subr.mxu0 0.0
  %218 = vmatpush1.msra.mxu0 0.0
  %219 = vmatprep.subr.mxu0 0.0
  %220 = vmatpush1.msra.mxu0 0.0
  %221 = vmatprep.subr.mxu0 0.0
  %222 = vmatpush1.msra.mxu0 0.0
  %223 = vmatprep.subr.mxu0 0.0
  %224 = vmatpush1.msra.mxu0 0.0
  %225 = vmatprep.subr.mxu0 0.0
  %226 = vmatpush1.msra.mxu0 0.0
  %227 = vmatprep.subr.mxu0 0.0
  %228 = vmatpush1.msra.mxu0 0.0
  %229 = vmatprep.subr.mxu0 0.0
  %230 = vmatpush1.msra.mxu0 0.0
  %231 = vmatprep.subr.mxu0 0.0
  %232 = vmatpush1.msra.mxu0 0.0
  %233 = vmatprep.subr.mxu0 0.0
  %234 = vmatpush1.msra.mxu0 0.0
  %235 = vmatprep.subr.mxu0 0.0
  %236 = vmatpush1.msra.mxu0 0.0
  %237 = vmatprep.subr.mxu0 0.0
  %238 = vmatpush1.msra.mxu0 0.0
  %239 = vmatprep.subr.mxu0 0.0
  %240 = vmatpush1.msra.mxu0 0.0
  %241 = vmatprep.subr.mxu0 0.0
  %242 = vmatpush1.msra.mxu0 0.0
  %243 = vmatprep.subr.mxu0 0.0
  %244 = vmatpush1.msra.mxu0 0.0
  %245 = vmatprep.subr.mxu0 0.0
  %246 = vmatpush1.msra.mxu0 0.0
  %247 = vmatprep.subr.mxu0 0.0
  %248 = vmatpush1.msra.mxu0 0.0
  %249 = vmatprep.subr.mxu0 0.0
  %250 = vmatpush1.msra.mxu0 0.0
  %251 = vmatprep.subr.mxu0 0.0
  %252 = vmatpush1.msra.mxu0 0.0
  %253 = vmatprep.subr.mxu0 0.0
  %254 = vmatpush1.msra.mxu0 0.0
  %255 = vmatprep.subr.mxu0 0.0
  %256 = vmatpush1.msra.mxu0 0.0
  %257 = vmatprep.subr.mxu0 0.0
  %258 = vmatpush1.msra.mxu0 0.0
  %259 = vmatprep.subr.mxu0 0.0
  %260 = vmatpush1.msra.mxu0 0.0
  %261 = vmatprep.subr.mxu0 0.0
  %262 = vmatpush1.msra.mxu0 0.0
  %263 = vmatprep.subr.mxu0 0.0
  %264 = vmatpush1.msra.mxu0 0.0
  %265 = vmatprep.subr.mxu0 0.0
  %266 = vmatpush1.msra.mxu0 0.0
  %267 = vmatprep.subr.mxu0 0.0
  %268 = vmatpush1.msra.mxu0 0.0
  %269 = vmatprep.subr.mxu0 0.0
  %270 = vmatpush1.msra.mxu0 0.0
  %271 = vmatprep.mubr.f32.mxu0 0.0
  %v272 = vand.u32 %v43, 4294901760
  %v273 = vsub.f32 %v43, %v272
  %274 = vmatmul.mubr.f32.gmra.mrb[0].mxu0 %v273
  %v275 = vpop.f32.mrb[0].mxu0
  %v276 = vadd.f32 %v200, %v275
  %v277 = vpop.f32.mrb[0].mxu0
  %278 = vdwg.mxu0
  %279 = vmatprep.subr.mxu0 0.0
  %v280 = vand.u32 %v39, 4294901760
  %281 = vmatpush1.msra.mxu0 %v280
  %282 = vmatprep.subr.mxu0 0.0
  %v283 = vand.u32 %v40, 4294901760
  %284 = vmatpush1.msra.mxu0 %v283
  %285 = vmatprep.subr.mxu0 0.0
  %286 = vmatpush1.msra.mxu0 0.0
  %287 = vmatprep.subr.mxu0 0.0
  %288 = vmatpush1.msra.mxu0 0.0
  %289 = vmatprep.subr.mxu0 0.0
  %290 = vmatpush1.msra.mxu0 0.0
  %291 = vmatprep.subr.mxu0 0.0
  %292 = vmatpush1.msra.mxu0 0.0
  %293 = vmatprep.subr.mxu0 0.0
  %294 = vmatpush1.msra.mxu0 0.0
  %295 = vmatprep.subr.mxu0 0.0
  %296 = vmatpush1.msra.mxu0 0.0
  %297 = vmatprep.subr.mxu0 0.0
  %298 = vmatpush1.msra.mxu0 0.0
  %299 = vmatprep.subr.mxu0 0.0
  %300 = vmatpush1.msra.mxu0 0.0
  %301 = vmatprep.subr.mxu0 0.0
  %302 = vmatpush1.msra.mxu0 0.0
  %303 = vmatprep.subr.mxu0 0.0
  %304 = vmatpush1.msra.mxu0 0.0
  %305 = vmatprep.subr.mxu0 0.0
  %306 = vmatpush1.msra.mxu0 0.0
  %307 = vmatprep.subr.mxu0 0.0
  %308 = vmatpush1.msra.mxu0 0.0
  %309 = vmatprep.subr.mxu0 0.0
  %310 = vmatpush1.msra.mxu0 0.0
  %311 = vmatprep.subr.mxu0 0.0
  %312 = vmatpush1.msra.mxu0 0.0
  %313 = vmatprep.subr.mxu0 0.0
  %314 = vmatpush1.msra.mxu0 0.0
  %315 = vmatprep.subr.mxu0 0.0
  %316 = vmatpush1.msra.mxu0 0.0
  %317 = vmatprep.subr.mxu0 0.0
  %318 = vmatpush1.msra.mxu0 0.0
  %319 = vmatprep.subr.mxu0 0.0
  %320 = vmatpush1.msra.mxu0 0.0
  %321 = vmatprep.subr.mxu0 0.0
  %322 = vmatpush1.msra.mxu0 0.0
  %323 = vmatprep.subr.mxu0 0.0
  %324 = vmatpush1.msra.mxu0 0.0
  %325 = vmatprep.subr.mxu0 0.0
  %326 = vmatpush1.msra.mxu0 0.0
  %327 = vmatprep.subr.mxu0 0.0
  %328 = vmatpush1.msra.mxu0 0.0
  %329 = vmatprep.subr.mxu0 0.0
  %330 = vmatpush1.msra.mxu0 0.0
  %331 = vmatprep.subr.mxu0 0.0
  %332 = vmatpush1.msra.mxu0 0.0
  %333 = vmatprep.subr.mxu0 0.0
  %334 = vmatpush1.msra.mxu0 0.0
  %335 = vmatprep.subr.mxu0 0.0
  %336 = vmatpush1.msra.mxu0 0.0
  %337 = vmatprep.subr.mxu0 0.0
  %338 = vmatpush1.msra.mxu0 0.0
  %339 = vmatprep.subr.mxu0 0.0
  %340 = vmatpush1.msra.mxu0 0.0
  %341 = vmatprep.subr.mxu0 0.0
  %342 = vmatpush1.msra.mxu0 0.0
  %343 = vmatprep.subr.mxu0 0.0
  %344 = vmatpush1.msra.mxu0 0.0
  %345 = vmatprep.mubr.f32.mxu0 0.0
  %v346 = vand.u32 %v43, 4294901760
  %v347 = vsub.f32 %v43, %v346
  %v348 = vand.u32 %v347, 4294901760
  %349 = vmatmul.mubr.f32.gmra.mrb[0].mxu0 %v348
  %v350 = vpop.f32.mrb[0].mxu0
  %v351 = vadd.f32 %v276, %v350
  %v352 = vpop.f32.mrb[0].mxu0
  %353 = vdwg.mxu0
  %354 = vmatprep.subr.mxu0 0.0
  %v355 = vand.u32 %v39, 4294901760
  %v356 = vsub.f32 %v39, %v355
  %v357 = vand.u32 %v356, 4294901760
  %358 = vmatpush1.msra.mxu0 %v357
  %359 = vmatprep.subr.mxu0 0.0
  %v360 = vand.u32 %v40, 4294901760
  %v361 = vsub.f32 %v40, %v360
  %v362 = vand.u32 %v361, 4294901760
  %363 = vmatpush1.msra.mxu0 %v362
  %364 = vmatprep.subr.mxu0 0.0
  %365 = vmatpush1.msra.mxu0 0.0
  %366 = vmatprep.subr.mxu0 0.0
  %367 = vmatpush1.msra.mxu0 0.0
  %368 = vmatprep.subr.mxu0 0.0
  %369 = vmatpush1.msra.mxu0 0.0
  %370 = vmatprep.subr.mxu0 0.0
  %371 = vmatpush1.msra.mxu0 0.0
  %372 = vmatprep.subr.mxu0 0.0
  %373 = vmatpush1.msra.mxu0 0.0
  %374 = vmatprep.subr.mxu0 0.0
  %375 = vmatpush1.msra.mxu0 0.0
  %376 = vmatprep.subr.mxu0 0.0
  %377 = vmatpush1.msra.mxu0 0.0
  %378 = vmatprep.subr.mxu0 0.0
  %379 = vmatpush1.msra.mxu0 0.0
  %380 = vmatprep.subr.mxu0 0.0
  %381 = vmatpush1.msra.mxu0 0.0
  %382 = vmatprep.subr.mxu0 0.0
  %383 = vmatpush1.msra.mxu0 0.0
  %384 = vmatprep.subr.mxu0 0.0
  %385 = vmatpush1.msra.mxu0 0.0
  %386 = vmatprep.subr.mxu0 0.0
  %387 = vmatpush1.msra.mxu0 0.0
  %388 = vmatprep.subr.mxu0 0.0
  %389 = vmatpush1.msra.mxu0 0.0
  %390 = vmatprep.subr.mxu0 0.0
  %391 = vmatpush1.msra.mxu0 0.0
  %392 = vmatprep.subr.mxu0 0.0
  %393 = vmatpush1.msra.mxu0 0.0
  %394 = vmatprep.subr.mxu0 0.0
  %395 = vmatpush1.msra.mxu0 0.0
  %396 = vmatprep.subr.mxu0 0.0
  %397 = vmatpush1.msra.mxu0 0.0
  %398 = vmatprep.subr.mxu0 0.0
  %399 = vmatpush1.msra.mxu0 0.0
  %400 = vmatprep.subr.mxu0 0.0
  %401 = vmatpush1.msra.mxu0 0.0
  %402 = vmatprep.subr.mxu0 0.0
  %403 = vmatpush1.msra.mxu0 0.0
  %404 = vmatprep.subr.mxu0 0.0
  %405 = vmatpush1.msra.mxu0 0.0
  %406 = vmatprep.subr.mxu0 0.0
  %407 = vmatpush1.msra.mxu0 0.0
  %408 = vmatprep.subr.mxu0 0.0
  %409 = vmatpush1.msra.mxu0 0.0
  %410 = vmatprep.subr.mxu0 0.0
  %411 = vmatpush1.msra.mxu0 0.0
  %412 = vmatprep.subr.mxu0 0.0
  %413 = vmatpush1.msra.mxu0 0.0
  %414 = vmatprep.subr.mxu0 0.0
  %415 = vmatpush1.msra.mxu0 0.0
  %416 = vmatprep.subr.mxu0 0.0
  %417 = vmatpush1.msra.mxu0 0.0
  %418 = vmatprep.subr.mxu0 0.0
  %419 = vmatpush1.msra.mxu0 0.0
  %420 = vmatprep.subr.mxu0 0.0
  %421 = vmatpush1.msra.mxu0 0.0
  %422 = vmatprep.subr.mxu0 0.0
  %423 = vmatpush1.msra.mxu0 0.0
  %424 = vmatprep.mubr.f32.mxu0 0.0
  %v425 = vand.u32 %v43, 4294901760
  %426 = vmatmul.mubr.f32.gmra.mrb[0].mxu0 %v425
  %v427 = vpop.f32.mrb[0].mxu0
  %v428 = vadd.f32 %v351, %v427
  %v429 = vpop.f32.mrb[0].mxu0
  %430 = vdwg.mxu0
  %431 = vmatprep.subr.mxu0 0.0
  %v432 = vand.u32 %v39, 4294901760
  %433 = vmatpush1.msra.mxu0 %v432
  %434 = vmatprep.subr.mxu0 0.0
  %v435 = vand.u32 %v40, 4294901760
  %436 = vmatpush1.msra.mxu0 %v435
  %437 = vmatprep.subr.mxu0 0.0
  %438 = vmatpush1.msra.mxu0 0.0
  %439 = vmatprep.subr.mxu0 0.0
  %440 = vmatpush1.msra.mxu0 0.0
  %441 = vmatprep.subr.mxu0 0.0
  %442 = vmatpush1.msra.mxu0 0.0
  %443 = vmatprep.subr.mxu0 0.0
  %444 = vmatpush1.msra.mxu0 0.0
  %445 = vmatprep.subr.mxu0 0.0
  %446 = vmatpush1.msra.mxu0 0.0
  %447 = vmatprep.subr.mxu0 0.0
  %448 = vmatpush1.msra.mxu0 0.0
  %449 = vmatprep.subr.mxu0 0.0
  %450 = vmatpush1.msra.mxu0 0.0
  %451 = vmatprep.subr.mxu0 0.0
  %452 = vmatpush1.msra.mxu0 0.0
  %453 = vmatprep.subr.mxu0 0.0
  %454 = vmatpush1.msra.mxu0 0.0
  %455 = vmatprep.subr.mxu0 0.0
  %456 = vmatpush1.msra.mxu0 0.0
  %457 = vmatprep.subr.mxu0 0.0
  %458 = vmatpush1.msra.mxu0 0.0
  %459 = vmatprep.subr.mxu0 0.0
  %460 = vmatpush1.msra.mxu0 0.0
  %461 = vmatprep.subr.mxu0 0.0
  %462 = vmatpush1.msra.mxu0 0.0
  %463 = vmatprep.subr.mxu0 0.0
  %464 = vmatpush1.msra.mxu0 0.0
  %465 = vmatprep.subr.mxu0 0.0
  %466 = vmatpush1.msra.mxu0 0.0
  %467 = vmatprep.subr.mxu0 0.0
  %468 = vmatpush1.msra.mxu0 0.0
  %469 = vmatprep.subr.mxu0 0.0
  %470 = vmatpush1.msra.mxu0 0.0
  %471 = vmatprep.subr.mxu0 0.0
  %472 = vmatpush1.msra.mxu0 0.0
  %473 = vmatprep.subr.mxu0 0.0
  %474 = vmatpush1.msra.mxu0 0.0
  %475 = vmatprep.subr.mxu0 0.0
  %476 = vmatpush1.msra.mxu0 0.0
  %477 = vmatprep.subr.mxu0 0.0
  %478 = vmatpush1.msra.mxu0 0.0
  %479 = vmatprep.subr.mxu0 0.0
  %480 = vmatpush1.msra.mxu0 0.0
  %481 = vmatprep.subr.mxu0 0.0
  %482 = vmatpush1.msra.mxu0 0.0
  %483 = vmatprep.subr.mxu0 0.0
  %484 = vmatpush1.msra.mxu0 0.0
  %485 = vmatprep.subr.mxu0 0.0
  %486 = vmatpush1.msra.mxu0 0.0
  %487 = vmatprep.subr.mxu0 0.0
  %488 = vmatpush1.msra.mxu0 0.0
  %489 = vmatprep.subr.mxu0 0.0
  %490 = vmatpush1.msra.mxu0 0.0
  %491 = vmatprep.subr.mxu0 0.0
  %492 = vmatpush1.msra.mxu0 0.0
  %493 = vmatprep.subr.mxu0 0.0
  %494 = vmatpush1.msra.mxu0 0.0
  %495 = vmatprep.subr.mxu0 0.0
  %496 = vmatpush1.msra.mxu0 0.0
  %497 = vmatprep.mubr.f32.mxu0 0.0
  %v498 = vand.u32 %v43, 4294901760
  %499 = vmatmul.mubr.f32.gmra.mrb[0].mxu0 %v498
  %v500 = vpop.f32.mrb[0].mxu0
  %v501 = vadd.f32 %v428, %v500
  %v502 = vpop.f32.mrb[0].mxu0
  %503 = vdwg.mxu0
  %v504 = vld [vmem:[%s4] sm:$0xff]
  %v505 = vld [vmem:[%s4 + $0x8] sm:$0xff]
  %506 = vmatprep.subr.mxu0 0.0
  %v507 = vand.u32 %v504, 4294901760
  %508 = vmatpush1.msra.mxu0 %v507
  %509 = vmatprep.subr.mxu0 0.0
  %v510 = vand.u32 %v505, 4294901760
  %511 = vmatpush1.msra.mxu0 %v510
  %512 = vmatprep.subr.mxu0 0.0
  %513 = vmatpush1.msra.mxu0 0.0
  %514 = vmatprep.subr.mxu0 0.0
  %515 = vmatpush1.msra.mxu0 0.0
  %516 = vmatprep.subr.mxu0 0.0
  %517 = vmatpush1.msra.mxu0 0.0
  %518 = vmatprep.subr.mxu0 0.0
  %519 = vmatpush1.msra.mxu0 0.0
  %520 = vmatprep.subr.mxu0 0.0
  %521 = vmatpush1.msra.mxu0 0.0
  %522 = vmatprep.subr.mxu0 0.0
  %523 = vmatpush1.msra.mxu0 0.0
  %524 = vmatprep.subr.mxu0 0.0
  %525 = vmatpush1.msra.mxu0 0.0
  %526 = vmatprep.subr.mxu0 0.0
  %527 = vmatpush1.msra.mxu0 0.0
  %528 = vmatprep.subr.mxu0 0.0
  %529 = vmatpush1.msra.mxu0 0.0
  %530 = vmatprep.subr.mxu0 0.0
  %531 = vmatpush1.msra.mxu0 0.0
  %532 = vmatprep.subr.mxu0 0.0
  %533 = vmatpush1.msra.mxu0 0.0
  %534 = vmatprep.subr.mxu0 0.0
  %535 = vmatpush1.msra.mxu0 0.0
  %536 = vmatprep.subr.mxu0 0.0
  %537 = vmatpush1.msra.mxu0 0.0
  %538 = vmatprep.subr.mxu0 0.0
  %539 = vmatpush1.msra.mxu0 0.0
  %540 = vmatprep.subr.mxu0 0.0
  %541 = vmatpush1.msra.mxu0 0.0
  %542 = vmatprep.subr.mxu0 0.0
  %543 = vmatpush1.msra.mxu0 0.0
  %544 = vmatprep.subr.mxu0 0.0
  %545 = vmatpush1.msra.mxu0 0.0
  %546 = vmatprep.subr.mxu0 0.0
  %547 = vmatpush1.msra.mxu0 0.0
  %548 = vmatprep.subr.mxu0 0.0
  %549 = vmatpush1.msra.mxu0 0.0
  %550 = vmatprep.subr.mxu0 0.0
  %551 = vmatpush1.msra.mxu0 0.0
  %552 = vmatprep.subr.mxu0 0.0
  %553 = vmatpush1.msra.mxu0 0.0
  %554 = vmatprep.subr.mxu0 0.0
  %555 = vmatpush1.msra.mxu0 0.0
  %556 = vmatprep.subr.mxu0 0.0
  %557 = vmatpush1.msra.mxu0 0.0
  %558 = vmatprep.subr.mxu0 0.0
  %559 = vmatpush1.msra.mxu0 0.0
  %560 = vmatprep.subr.mxu0 0.0
  %561 = vmatpush1.msra.mxu0 0.0
  %562 = vmatprep.subr.mxu0 0.0
  %563 = vmatpush1.msra.mxu0 0.0
  %564 = vmatprep.subr.mxu0 0.0
  %565 = vmatpush1.msra.mxu0 0.0
  %566 = vmatprep.subr.mxu0 0.0
  %567 = vmatpush1.msra.mxu0 0.0
  %568 = vmatprep.subr.mxu0 0.0
  %569 = vmatpush1.msra.mxu0 0.0
  %570 = vmatprep.subr.mxu0 0.0
  %571 = vmatpush1.msra.mxu0 0.0
  %572 = vmatprep.mubr.f32.mxu0 0.0
  %v573 = vand.u32 %v43, 4294901760
  %v574 = vsub.f32 %v43, %v573
  %v575 = vand.u32 %v574, 4294901760
  %v576 = vsub.f32 %v574, %v575
  %v577 = vand.u32 %v576, 4294901760
  %578 = vmatmul.mubr.f32.gmra.mrb[0].mxu0 %v577
  %v579 = vpop.f32.mrb[0].mxu0
  %v580 = vadd.f32 0.0, %v579
  %v581 = vpop.f32.mrb[0].mxu0
  %582 = vdwg.mxu0
  %583 = vmatprep.subr.mxu0 0.0
  %v584 = vand.u32 %v504, 4294901760
  %v585 = vsub.f32 %v504, %v584
  %v586 = vand.u32 %v585, 4294901760
  %v587 = vsub.f32 %v585, %v586
  %v588 = vand.u32 %v587, 4294901760
  %589 = vmatpush1.msra.mxu0 %v588
  %590 = vmatprep.subr.mxu0 0.0
  %v591 = vand.u32 %v505, 4294901760
  %v592 = vsub.f32 %v505, %v591
  %v593 = vand.u32 %v592, 4294901760
  %v594 = vsub.f32 %v592, %v593
  %v595 = vand.u32 %v594, 4294901760
  %596 = vmatpush1.msra.mxu0 %v595
  %597 = vmatprep.subr.mxu0 0.0
  %598 = vmatpush1.msra.mxu0 0.0
  %599 = vmatprep.subr.mxu0 0.0
  %600 = vmatpush1.msra.mxu0 0.0
  %601 = vmatprep.subr.mxu0 0.0
  %602 = vmatpush1.msra.mxu0 0.0
  %603 = vmatprep.subr.mxu0 0.0
  %604 = vmatpush1.msra.mxu0 0.0
  %605 = vmatprep.subr.mxu0 0.0
  %606 = vmatpush1.msra.mxu0 0.0
  %607 = vmatprep.subr.mxu0 0.0
  %608 = vmatpush1.msra.mxu0 0.0
  %609 = vmatprep.subr.mxu0 0.0
  %610 = vmatpush1.msra.mxu0 0.0
  %611 = vmatprep.subr.mxu0 0.0
  %612 = vmatpush1.msra.mxu0 0.0
  %613 = vmatprep.subr.mxu0 0.0
  %614 = vmatpush1.msra.mxu0 0.0
  %615 = vmatprep.subr.mxu0 0.0
  %616 = vmatpush1.msra.mxu0 0.0
  %617 = vmatprep.subr.mxu0 0.0
  %618 = vmatpush1.msra.mxu0 0.0
  %619 = vmatprep.subr.mxu0 0.0
  %620 = vmatpush1.msra.mxu0 0.0
  %621 = vmatprep.subr.mxu0 0.0
  %622 = vmatpush1.msra.mxu0 0.0
  %623 = vmatprep.subr.mxu0 0.0
  %624 = vmatpush1.msra.mxu0 0.0
  %625 = vmatprep.subr.mxu0 0.0
  %626 = vmatpush1.msra.mxu0 0.0
  %627 = vmatprep.subr.mxu0 0.0
  %628 = vmatpush1.msra.mxu0 0.0
  %629 = vmatprep.subr.mxu0 0.0
  %630 = vmatpush1.msra.mxu0 0.0
  %631 = vmatprep.subr.mxu0 0.0
  %632 = vmatpush1.msra.mxu0 0.0
  %633 = vmatprep.subr.mxu0 0.0
  %634 = vmatpush1.msra.mxu0 0.0
  %635 = vmatprep.subr.mxu0 0.0
  %636 = vmatpush1.msra.mxu0 0.0
  %637 = vmatprep.subr.mxu0 0.0
  %638 = vmatpush1.msra.mxu0 0.0
  %639 = vmatprep.subr.mxu0 0.0
  %640 = vmatpush1.msra.mxu0 0.0
  %641 = vmatprep.subr.mxu0 0.0
  %642 = vmatpush1.msra.mxu0 0.0
  %643 = vmatprep.subr.mxu0 0.0
  %644 = vmatpush1.msra.mxu0 0.0
  %645 = vmatprep.subr.mxu0 0.0
  %646 = vmatpush1.msra.mxu0 0.0
  %647 = vmatprep.subr.mxu0 0.0
  %648 = vmatpush1.msra.mxu0 0.0
  %649 = vmatprep.subr.mxu0 0.0
  %650 = vmatpush1.msra.mxu0 0.0
  %651 = vmatprep.subr.mxu0 0.0
  %652 = vmatpush1.msra.mxu0 0.0
  %653 = vmatprep.subr.mxu0 0.0
  %654 = vmatpush1.msra.mxu0 0.0
  %655 = vmatprep.subr.mxu0 0.0
  %656 = vmatpush1.msra.mxu0 0.0
  %657 = vmatprep.mubr.f32.mxu0 0.0
  %v658 = vand.u32 %v43, 4294901760
  %659 = vmatmul.mubr.f32.gmra.mrb[0].mxu0 %v658
  %v660 = vpop.f32.mrb[0].mxu0
  %v661 = vadd.f32 %v580, %v660
  %v662 = vpop.f32.mrb[0].mxu0
  %663 = vdwg.mxu0
  %664 = vmatprep.subr.mxu0 0.0
  %v665 = vand.u32 %v504, 4294901760
  %v666 = vsub.f32 %v504, %v665
  %667 = vmatpush1.msra.mxu0 %v666
  %668 = vmatprep.subr.mxu0 0.0
  %v669 = vand.u32 %v505, 4294901760
  %v670 = vsub.f32 %v505, %v669
  %671 = vmatpush1.msra.mxu0 %v670
  %672 = vmatprep.subr.mxu0 0.0
  %673 = vmatpush1.msra.mxu0 0.0
  %674 = vmatprep.subr.mxu0 0.0
  %675 = vmatpush1.msra.mxu0 0.0
  %676 = vmatprep.subr.mxu0 0.0
  %677 = vmatpush1.msra.mxu0 0.0
  %678 = vmatprep.subr.mxu0 0.0
  %679 = vmatpush1.msra.mxu0 0.0
  %680 = vmatprep.subr.mxu0 0.0
  %681 = vmatpush1.msra.mxu0 0.0
  %682 = vmatprep.subr.mxu0 0.0
  %683 = vmatpush1.msra.mxu0 0.0
  %684 = vmatprep.subr.mxu0 0.0
  %685 = vmatpush1.msra.mxu0 0.0
  %686 = vmatprep.subr.mxu0 0.0
  %687 = vmatpush1.msra.mxu0 0.0
  %688 = vmatprep.subr.mxu0 0.0
  %689 = vmatpush1.msra.mxu0 0.0
  %690 = vmatprep.subr.mxu0 0.0
  %691 = vmatpush1.msra.mxu0 0.0
  %692 = vmatprep.subr.mxu0 0.0
  %693 = vmatpush1.msra.mxu0 0.0
  %694 = vmatprep.subr.mxu0 0.0
  %695 = vmatpush1.msra.mxu0 0.0
  %696 = vmatprep.subr.mxu0 0.0
  %697 = vmatpush1.msra.mxu0 0.0
  %698 = vmatprep.subr.mxu0 0.0
  %699 = vmatpush1.msra.mxu0 0.0
  %700 = vmatprep.subr.mxu0 0.0
  %701 = vmatpush1.msra.mxu0 0.0
  %702 = vmatprep.subr.mxu0 0.0
  %703 = vmatpush1.msra.mxu0 0.0
  %704 = vmatprep.subr.mxu0 0.0
  %705 = vmatpush1.msra.mxu0 0.0
  %706 = vmatprep.subr.mxu0 0.0
  %707 = vmatpush1.msra.mxu0 0.0
  %708 = vmatprep.subr.mxu0 0.0
  %709 = vmatpush1.msra.mxu0 0.0
  %710 = vmatprep.subr.mxu0 0.0
  %711 = vmatpush1.msra.mxu0 0.0
  %712 = vmatprep.subr.mxu0 0.0
  %713 = vmatpush1.msra.mxu0 0.0
  %714 = vmatprep.subr.mxu0 0.0
  %715 = vmatpush1.msra.mxu0 0.0
  %716 = vmatprep.subr.mxu0 0.0
  %717 = vmatpush1.msra.mxu0 0.0
  %718 = vmatprep.subr.mxu0 0.0
  %719 = vmatpush1.msra.mxu0 0.0
  %720 = vmatprep.subr.mxu0 0.0
  %721 = vmatpush1.msra.mxu0 0.0
  %722 = vmatprep.subr.mxu0 0.0
  %723 = vmatpush1.msra.mxu0 0.0
  %724 = vmatprep.subr.mxu0 0.0
  %725 = vmatpush1.msra.mxu0 0.0
  %726 = vmatprep.subr.mxu0 0.0
  %727 = vmatpush1.msra.mxu0 0.0
  %728 = vmatprep.subr.mxu0 0.0
  %729 = vmatpush1.msra.mxu0 0.0
  %730 = vmatprep.subr.mxu0 0.0
  %731 = vmatpush1.msra.mxu0 0.0
  %732 = vmatprep.mubr.f32.mxu0 0.0
  %v733 = vand.u32 %v43, 4294901760
  %v734 = vsub.f32 %v43, %v733
  %735 = vmatmul.mubr.f32.gmra.mrb[0].mxu0 %v734
  %v736 = vpop.f32.mrb[0].mxu0
  %v737 = vadd.f32 %v661, %v736
  %v738 = vpop.f32.mrb[0].mxu0
  %739 = vdwg.mxu0
  %740 = vmatprep.subr.mxu0 0.0
  %v741 = vand.u32 %v504, 4294901760
  %742 = vmatpush1.msra.mxu0 %v741
  %743 = vmatprep.subr.mxu0 0.0
  %v744 = vand.u32 %v505, 4294901760
  %745 = vmatpush1.msra.mxu0 %v744
  %746 = vmatprep.subr.mxu0 0.0
  %747 = vmatpush1.msra.mxu0 0.0
  %748 = vmatprep.subr.mxu0 0.0
  %749 = vmatpush1.msra.mxu0 0.0
  %750 = vmatprep.subr.mxu0 0.0
  %751 = vmatpush1.msra.mxu0 0.0
  %752 = vmatprep.subr.mxu0 0.0
  %753 = vmatpush1.msra.mxu0 0.0
  %754 = vmatprep.subr.mxu0 0.0
  %755 = vmatpush1.msra.mxu0 0.0
  %756 = vmatprep.subr.mxu0 0.0
  %757 = vmatpush1.msra.mxu0 0.0
  %758 = vmatprep.subr.mxu0 0.0
  %759 = vmatpush1.msra.mxu0 0.0
  %760 = vmatprep.subr.mxu0 0.0
  %761 = vmatpush1.msra.mxu0 0.0
  %762 = vmatprep.subr.mxu0 0.0
  %763 = vmatpush1.msra.mxu0 0.0
  %764 = vmatprep.subr.mxu0 0.0
  %765 = vmatpush1.msra.mxu0 0.0
  %766 = vmatprep.subr.mxu0 0.0
  %767 = vmatpush1.msra.mxu0 0.0
  %768 = vmatprep.subr.mxu0 0.0
  %769 = vmatpush1.msra.mxu0 0.0
  %770 = vmatprep.subr.mxu0 0.0
  %771 = vmatpush1.msra.mxu0 0.0
  %772 = vmatprep.subr.mxu0 0.0
  %773 = vmatpush1.msra.mxu0 0.0
  %774 = vmatprep.subr.mxu0 0.0
  %775 = vmatpush1.msra.mxu0 0.0
  %776 = vmatprep.subr.mxu0 0.0
  %777 = vmatpush1.msra.mxu0 0.0
  %778 = vmatprep.subr.mxu0 0.0
  %779 = vmatpush1.msra.mxu0 0.0
  %780 = vmatprep.subr.mxu0 0.0
  %781 = vmatpush1.msra.mxu0 0.0
  %782 = vmatprep.subr.mxu0 0.0
  %783 = vmatpush1.msra.mxu0 0.0
  %784 = vmatprep.subr.mxu0 0.0
  %785 = vmatpush1.msra.mxu0 0.0
  %786 = vmatprep.subr.mxu0 0.0
  %787 = vmatpush1.msra.mxu0 0.0
  %788 = vmatprep.subr.mxu0 0.0
  %789 = vmatpush1.msra.mxu0 0.0
  %790 = vmatprep.subr.mxu0 0.0
  %791 = vmatpush1.msra.mxu0 0.0
  %792 = vmatprep.subr.mxu0 0.0
  %793 = vmatpush1.msra.mxu0 0.0
  %794 = vmatprep.subr.mxu0 0.0
  %795 = vmatpush1.msra.mxu0 0.0
  %796 = vmatprep.subr.mxu0 0.0
  %797 = vmatpush1.msra.mxu0 0.0
  %798 = vmatprep.subr.mxu0 0.0
  %799 = vmatpush1.msra.mxu0 0.0
  %800 = vmatprep.subr.mxu0 0.0
  %801 = vmatpush1.msra.mxu0 0.0
  %802 = vmatprep.subr.mxu0 0.0
  %803 = vmatpush1.msra.mxu0 0.0
  %804 = vmatprep.subr.mxu0 0.0
  %805 = vmatpush1.msra.mxu0 0.0
  %806 = vmatprep.mubr.f32.mxu0 0.0
  %v807 = vand.u32 %v43, 4294901760
  %v808 = vsub.f32 %v43, %v807
  %v809 = vand.u32 %v808, 4294901760
  %810 = vmatmul.mubr.f32.gmra.mrb[0].mxu0 %v809
  %v811 = vpop.f32.mrb[0].mxu0
  %v812 = vadd.f32 %v737, %v811
  %v813 = vpop.f32.mrb[0].mxu0
  %814 = vdwg.mxu0
  %815 = vmatprep.subr.mxu0 0.0
  %v816 = vand.u32 %v504, 4294901760
  %v817 = vsub.f32 %v504, %v816
  %v818 = vand.u32 %v817, 4294901760
  %819 = vmatpush1.msra.mxu0 %v818
  %820 = vmatprep.subr.mxu0 0.0
  %v821 = vand.u32 %v505, 4294901760
  %v822 = vsub.f32 %v505, %v821
  %v823 = vand.u32 %v822, 4294901760
  %824 = vmatpush1.msra.mxu0 %v823
  %825 = vmatprep.subr.mxu0 0.0
  %826 = vmatpush1.msra.mxu0 0.0
  %827 = vmatprep.subr.mxu0 0.0
  %828 = vmatpush1.msra.mxu0 0.0
  %829 = vmatprep.subr.mxu0 0.0
  %830 = vmatpush1.msra.mxu0 0.0
  %831 = vmatprep.subr.mxu0 0.0
  %832 = vmatpush1.msra.mxu0 0.0
  %833 = vmatprep.subr.mxu0 0.0
  %834 = vmatpush1.msra.mxu0 0.0
  %835 = vmatprep.subr.mxu0 0.0
  %836 = vmatpush1.msra.mxu0 0.0
  %837 = vmatprep.subr.mxu0 0.0
  %838 = vmatpush1.msra.mxu0 0.0
  %839 = vmatprep.subr.mxu0 0.0
  %840 = vmatpush1.msra.mxu0 0.0
  %841 = vmatprep.subr.mxu0 0.0
  %842 = vmatpush1.msra.mxu0 0.0
  %843 = vmatprep.subr.mxu0 0.0
  %844 = vmatpush1.msra.mxu0 0.0
  %845 = vmatprep.subr.mxu0 0.0
  %846 = vmatpush1.msra.mxu0 0.0
  %847 = vmatprep.subr.mxu0 0.0
  %848 = vmatpush1.msra.mxu0 0.0
  %849 = vmatprep.subr.mxu0 0.0
  %850 = vmatpush1.msra.mxu0 0.0
  %851 = vmatprep.subr.mxu0 0.0
  %852 = vmatpush1.msra.mxu0 0.0
  %853 = vmatprep.subr.mxu0 0.0
  %854 = vmatpush1.msra.mxu0 0.0
  %855 = vmatprep.subr.mxu0 0.0
  %856 = vmatpush1.msra.mxu0 0.0
  %857 = vmatprep.subr.mxu0 0.0
  %858 = vmatpush1.msra.mxu0 0.0
  %859 = vmatprep.subr.mxu0 0.0
  %860 = vmatpush1.msra.mxu0 0.0
  %861 = vmatprep.subr.mxu0 0.0
  %862 = vmatpush1.msra.mxu0 0.0
  %863 = vmatprep.subr.mxu0 0.0
  %864 = vmatpush1.msra.mxu0 0.0
  %865 = vmatprep.subr.mxu0 0.0
  %866 = vmatpush1.msra.mxu0 0.0
  %867 = vmatprep.subr.mxu0 0.0
  %868 = vmatpush1.msra.mxu0 0.0
  %869 = vmatprep.subr.mxu0 0.0
  %870 = vmatpush1.msra.mxu0 0.0
  %871 = vmatprep.subr.mxu0 0.0
  %872 = vmatpush1.msra.mxu0 0.0
  %873 = vmatprep.subr.mxu0 0.0
  %874 = vmatpush1.msra.mxu0 0.0
  %875 = vmatprep.subr.mxu0 0.0
  %876 = vmatpush1.msra.mxu0 0.0
  %877 = vmatprep.subr.mxu0 0.0
  %878 = vmatpush1.msra.mxu0 0.0
  %879 = vmatprep.subr.mxu0 0.0
  %880 = vmatpush1.msra.mxu0 0.0
  %881 = vmatprep.subr.mxu0 0.0
  %882 = vmatpush1.msra.mxu0 0.0
  %883 = vmatprep.subr.mxu0 0.0
  %884 = vmatpush1.msra.mxu0 0.0
  %885 = vmatprep.mubr.f32.mxu0 0.0
  %v886 = vand.u32 %v43, 4294901760
  %887 = vmatmul.mubr.f32.gmra.mrb[0].mxu0 %v886
  %v888 = vpop.f32.mrb[0].mxu0
  %v889 = vadd.f32 %v812, %v888
  %v890 = vpop.f32.mrb[0].mxu0
  %891 = vdwg.mxu0
  %892 = vmatprep.subr.mxu0 0.0
  %v893 = vand.u32 %v504, 4294901760
  %894 = vmatpush1.msra.mxu0 %v893
  %895 = vmatprep.subr.mxu0 0.0
  %v896 = vand.u32 %v505, 4294901760
  %897 = vmatpush1.msra.mxu0 %v896
  %898 = vmatprep.subr.mxu0 0.0
  %899 = vmatpush1.msra.mxu0 0.0
  %900 = vmatprep.subr.mxu0 0.0
  %901 = vmatpush1.msra.mxu0 0.0
  %902 = vmatprep.subr.mxu0 0.0
  %903 = vmatpush1.msra.mxu0 0.0
  %904 = vmatprep.subr.mxu0 0.0
  %905 = vmatpush1.msra.mxu0 0.0
  %906 = vmatprep.subr.mxu0 0.0
  %907 = vmatpush1.msra.mxu0 0.0
  %908 = vmatprep.subr.mxu0 0.0
  %909 = vmatpush1.msra.mxu0 0.0
  %910 = vmatprep.subr.mxu0 0.0
  %911 = vmatpush1.msra.mxu0 0.0
  %912 = vmatprep.subr.mxu0 0.0
  %913 = vmatpush1.msra.mxu0 0.0
  %914 = vmatprep.subr.mxu0 0.0
  %915 = vmatpush1.msra.mxu0 0.0
  %916 = vmatprep.subr.mxu0 0.0
  %917 = vmatpush1.msra.mxu0 0.0
  %918 = vmatprep.subr.mxu0 0.0
  %919 = vmatpush1.msra.mxu0 0.0
  %920 = vmatprep.subr.mxu0 0.0
  %921 = vmatpush1.msra.mxu0 0.0
  %922 = vmatprep.subr.mxu0 0.0
  %923 = vmatpush1.msra.mxu0 0.0
  %924 = vmatprep.subr.mxu0 0.0
  %925 = vmatpush1.msra.mxu0 0.0
  %926 = vmatprep.subr.mxu0 0.0
  %927 = vmatpush1.msra.mxu0 0.0
  %928 = vmatprep.subr.mxu0 0.0
  %929 = vmatpush1.msra.mxu0 0.0
  %930 = vmatprep.subr.mxu0 0.0
  %931 = vmatpush1.msra.mxu0 0.0
  %932 = vmatprep.subr.mxu0 0.0
  %933 = vmatpush1.msra.mxu0 0.0
  %934 = vmatprep.subr.mxu0 0.0
  %935 = vmatpush1.msra.mxu0 0.0
  %936 = vmatprep.subr.mxu0 0.0
  %937 = vmatpush1.msra.mxu0 0.0
  %938 = vmatprep.subr.mxu0 0.0
  %939 = vmatpush1.msra.mxu0 0.0
  %940 = vmatprep.subr.mxu0 0.0
  %941 = vmatpush1.msra.mxu0 0.0
  %942 = vmatprep.subr.mxu0 0.0
  %943 = vmatpush1.msra.mxu0 0.0
  %944 = vmatprep.subr.mxu0 0.0
  %945 = vmatpush1.msra.mxu0 0.0
  %946 = vmatprep.subr.mxu0 0.0
  %947 = vmatpush1.msra.mxu0 0.0
  %948 = vmatprep.subr.mxu0 0.0
  %949 = vmatpush1.msra.mxu0 0.0
  %950 = vmatprep.subr.mxu0 0.0
  %951 = vmatpush1.msra.mxu0 0.0
  %952 = vmatprep.subr.mxu0 0.0
  %953 = vmatpush1.msra.mxu0 0.0
  %954 = vmatprep.subr.mxu0 0.0
  %955 = vmatpush1.msra.mxu0 0.0
  %956 = vmatprep.subr.mxu0 0.0
  %957 = vmatpush1.msra.mxu0 0.0
  %958 = vmatprep.mubr.f32.mxu0 0.0
  %v959 = vand.u32 %v43, 4294901760
  %960 = vmatmul.mubr.f32.gmra.mrb[0].mxu0 %v959
  %v961 = vpop.f32.mrb[0].mxu0
  %v962 = vadd.f32 %v889, %v961
  %v963 = vpop.f32.mrb[0].mxu0
  %964 = vdwg.mxu0
  %v965 = vld [vmem:[%s1] sm:$0xf]
  %v966 = vld [vmem:[%s2] sm:$0xf]
  %968 = vset.pattern.permute.xlu0 0
  %969 = vperm.xlu0 %968, %v965
  %v970 = vpop.permute.xlu0 %969
  %v972 = vmul.f32 %v970, %v501
  %974 = vset.pattern.permute.xlu0 0
  %975 = vperm.xlu0 %974, %v966
  %v976 = vpop.permute.xlu0 %975
  %v978 = vmul.f32 %v976, %v501
  %979 = vset.pattern.permute.xlu0 1
  %980 = vperm.xlu0 %979, %v965
  %v981 = vpop.permute.xlu0 %980
  %v983 = vmul.f32 %v981, %v962
  %984 = vset.pattern.permute.xlu0 1
  %985 = vperm.xlu0 %984, %v966
  %v986 = vpop.permute.xlu0 %985
  %v988 = vmul.f32 %v986, %v962
  %v989 = vadd.f32 %v972, %v983
  %v990 = vadd.f32 %v978, %v988
  %991 = vset.pattern.permute.xlu0 2
  %992 = vperm.xlu0 %991, %v965
  %v993 = vpop.permute.xlu0 %992
  %v995 = vmul.f32 %v993, %v501
  %996 = vset.pattern.permute.xlu0 2
  %997 = vperm.xlu0 %996, %v966
  %v998 = vpop.permute.xlu0 %997
  %v1000 = vmul.f32 %v998, %v501
  %1002 = vrot.lane.b32.xlu0 %v995, 127
  %v1003 = vpop.permute.xlu0 %1002
  %v1005 = vadd.f32 %v989, %v1003
  %1007 = vrot.lane.b32.xlu0 %v1000, 127
  %v1008 = vpop.permute.xlu0 %1007
  %v1010 = vadd.f32 %v990, %v1008
  %1011 = vset.pattern.permute.xlu0 3
  %1012 = vperm.xlu0 %1011, %v965
  %v1013 = vpop.permute.xlu0 %1012
  %v1015 = vmul.f32 %v1013, %v962
  %1016 = vset.pattern.permute.xlu0 3
  %1017 = vperm.xlu0 %1016, %v966
  %v1018 = vpop.permute.xlu0 %1017
  %v1020 = vmul.f32 %v1018, %v962
  %1022 = vrot.lane.b32.xlu0 %v1015, 127
  %v1023 = vpop.permute.xlu0 %1022
  %v1025 = vadd.f32 %v1005, %v1023
  %1027 = vrot.lane.b32.xlu0 %v1020, 127
  %v1028 = vpop.permute.xlu0 %1027
  %v1030 = vadd.f32 %v1010, %v1028
  %1031 = vset.pattern.permute.xlu0 4
  %1032 = vperm.xlu0 %1031, %v965
  %v1033 = vpop.permute.xlu0 %1032
  %v1035 = vmul.f32 %v1033, %v501
  %1036 = vset.pattern.permute.xlu0 4
  %1037 = vperm.xlu0 %1036, %v966
  %v1038 = vpop.permute.xlu0 %1037
  %v1040 = vmul.f32 %v1038, %v501
  %1042 = vrot.lane.b32.xlu0 %v1035, 126
  %v1043 = vpop.permute.xlu0 %1042
  %v1045 = vadd.f32 %v1025, %v1043
  %1047 = vrot.lane.b32.xlu0 %v1040, 126
  %v1048 = vpop.permute.xlu0 %1047
  %v1050 = vadd.f32 %v1030, %v1048
  %vm1051 = vcmask 60416
  %1052 = vst.msk [vmem:[%s9] sm:$0xf] %vm1051, %v1045
  %1053 = vst.msk [vmem:[%s10] sm:$0xf] %vm1051, %v1050
  %v1054 = vld [vmem:[%s5] sm:$0xff]
  %vm1055 = vcmask 64512
  %v1057 = vsel %vm1055, %v1045, 0
  %1059 = vmatprep.subr.mxu0 0.0
  %v1060 = vand.u32 %v1054, 4294901760
  %1061 = vmatpush1.msra.mxu0 %v1060
  %1062 = vmatprep.subr.mxu0 0.0
  %1063 = vmatpush1.msra.mxu0 0.0
  %1064 = vmatprep.subr.mxu0 0.0
  %1065 = vmatpush1.msra.mxu0 0.0
  %1066 = vmatprep.subr.mxu0 0.0
  %1067 = vmatpush1.msra.mxu0 0.0
  %1068 = vmatprep.subr.mxu0 0.0
  %1069 = vmatpush1.msra.mxu0 0.0
  %1070 = vmatprep.subr.mxu0 0.0
  %1071 = vmatpush1.msra.mxu0 0.0
  %1072 = vmatprep.subr.mxu0 0.0
  %1073 = vmatpush1.msra.mxu0 0.0
  %1074 = vmatprep.subr.mxu0 0.0
  %1075 = vmatpush1.msra.mxu0 0.0
  %1076 = vmatprep.subr.mxu0 0.0
  %1077 = vmatpush1.msra.mxu0 0.0
  %1078 = vmatprep.subr.mxu0 0.0
  %1079 = vmatpush1.msra.mxu0 0.0
  %1080 = vmatprep.subr.mxu0 0.0
  %1081 = vmatpush1.msra.mxu0 0.0
  %1082 = vmatprep.subr.mxu0 0.0
  %1083 = vmatpush1.msra.mxu0 0.0
  %1084 = vmatprep.subr.mxu0 0.0
  %1085 = vmatpush1.msra.mxu0 0.0
  %1086 = vmatprep.subr.mxu0 0.0
  %1087 = vmatpush1.msra.mxu0 0.0
  %1088 = vmatprep.subr.mxu0 0.0
  %1089 = vmatpush1.msra.mxu0 0.0
  %1090 = vmatprep.subr.mxu0 0.0
  %1091 = vmatpush1.msra.mxu0 0.0
  %1092 = vmatprep.subr.mxu0 0.0
  %1093 = vmatpush1.msra.mxu0 0.0
  %1094 = vmatprep.subr.mxu0 0.0
  %1095 = vmatpush1.msra.mxu0 0.0
  %1096 = vmatprep.subr.mxu0 0.0
  %1097 = vmatpush1.msra.mxu0 0.0
  %1098 = vmatprep.subr.mxu0 0.0
  %1099 = vmatpush1.msra.mxu0 0.0
  %1100 = vmatprep.subr.mxu0 0.0
  %1101 = vmatpush1.msra.mxu0 0.0
  %1102 = vmatprep.subr.mxu0 0.0
  %1103 = vmatpush1.msra.mxu0 0.0
  %1104 = vmatprep.subr.mxu0 0.0
  %1105 = vmatpush1.msra.mxu0 0.0
  %1106 = vmatprep.subr.mxu0 0.0
  %1107 = vmatpush1.msra.mxu0 0.0
  %1108 = vmatprep.subr.mxu0 0.0
  %1109 = vmatpush1.msra.mxu0 0.0
  %1110 = vmatprep.subr.mxu0 0.0
  %1111 = vmatpush1.msra.mxu0 0.0
  %1112 = vmatprep.subr.mxu0 0.0
  %1113 = vmatpush1.msra.mxu0 0.0
  %1114 = vmatprep.subr.mxu0 0.0
  %1115 = vmatpush1.msra.mxu0 0.0
  %1116 = vmatprep.subr.mxu0 0.0
  %1117 = vmatpush1.msra.mxu0 0.0
  %1118 = vmatprep.subr.mxu0 0.0
  %1119 = vmatpush1.msra.mxu0 0.0
  %1120 = vmatprep.subr.mxu0 0.0
  %1121 = vmatpush1.msra.mxu0 0.0
  %1122 = vmatprep.subr.mxu0 0.0
  %1123 = vmatpush1.msra.mxu0 0.0
  %1124 = vmatprep.mubr.f32.mxu0 0.0
  %v1125 = vand.u32 %v1057, 4294901760
  %v1126 = vsub.f32 %v1057, %v1125
  %v1127 = vand.u32 %v1126, 4294901760
  %v1128 = vsub.f32 %v1126, %v1127
  %v1129 = vand.u32 %v1128, 4294901760
  %1130 = vmatmul.mubr.f32.gmra.mrb[0].mxu0 %v1129
  %v1131 = vpop.f32.mrb[0].mxu0
  %v1132 = vadd.f32 0.0, %v1131
  %v1133 = vpop.f32.mrb[0].mxu0
  %1134 = vdwg.mxu0
  %1135 = vmatprep.subr.mxu0 0.0
  %v1136 = vand.u32 %v1054, 4294901760
  %v1137 = vsub.f32 %v1054, %v1136
  %v1138 = vand.u32 %v1137, 4294901760
  %v1139 = vsub.f32 %v1137, %v1138
  %v1140 = vand.u32 %v1139, 4294901760
  %1141 = vmatpush1.msra.mxu0 %v1140
  %1142 = vmatprep.subr.mxu0 0.0
  %1143 = vmatpush1.msra.mxu0 0.0
  %1144 = vmatprep.subr.mxu0 0.0
  %1145 = vmatpush1.msra.mxu0 0.0
  %1146 = vmatprep.subr.mxu0 0.0
  %1147 = vmatpush1.msra.mxu0 0.0
  %1148 = vmatprep.subr.mxu0 0.0
  %1149 = vmatpush1.msra.mxu0 0.0
  %1150 = vmatprep.subr.mxu0 0.0
  %1151 = vmatpush1.msra.mxu0 0.0
  %1152 = vmatprep.subr.mxu0 0.0
  %1153 = vmatpush1.msra.mxu0 0.0
  %1154 = vmatprep.subr.mxu0 0.0
  %1155 = vmatpush1.msra.mxu0 0.0
  %1156 = vmatprep.subr.mxu0 0.0
  %1157 = vmatpush1.msra.mxu0 0.0
  %1158 = vmatprep.subr.mxu0 0.0
  %1159 = vmatpush1.msra.mxu0 0.0
  %1160 = vmatprep.subr.mxu0 0.0
  %1161 = vmatpush1.msra.mxu0 0.0
  %1162 = vmatprep.subr.mxu0 0.0
  %1163 = vmatpush1.msra.mxu0 0.0
  %1164 = vmatprep.subr.mxu0 0.0
  %1165 = vmatpush1.msra.mxu0 0.0
  %1166 = vmatprep.subr.mxu0 0.0
  %1167 = vmatpush1.msra.mxu0 0.0
  %1168 = vmatprep.subr.mxu0 0.0
  %1169 = vmatpush1.msra.mxu0 0.0
  %1170 = vmatprep.subr.mxu0 0.0
  %1171 = vmatpush1.msra.mxu0 0.0
  %1172 = vmatprep.subr.mxu0 0.0
  %1173 = vmatpush1.msra.mxu0 0.0
  %1174 = vmatprep.subr.mxu0 0.0
  %1175 = vmatpush1.msra.mxu0 0.0
  %1176 = vmatprep.subr.mxu0 0.0
  %1177 = vmatpush1.msra.mxu0 0.0
  %1178 = vmatprep.subr.mxu0 0.0
  %1179 = vmatpush1.msra.mxu0 0.0
  %1180 = vmatprep.subr.mxu0 0.0
  %1181 = vmatpush1.msra.mxu0 0.0
  %1182 = vmatprep.subr.mxu0 0.0
  %1183 = vmatpush1.msra.mxu0 0.0
  %1184 = vmatprep.subr.mxu0 0.0
  %1185 = vmatpush1.msra.mxu0 0.0
  %1186 = vmatprep.subr.mxu0 0.0
  %1187 = vmatpush1.msra.mxu0 0.0
  %1188 = vmatprep.subr.mxu0 0.0
  %1189 = vmatpush1.msra.mxu0 0.0
  %1190 = vmatprep.subr.mxu0 0.0
  %1191 = vmatpush1.msra.mxu0 0.0
  %1192 = vmatprep.subr.mxu0 0.0
  %1193 = vmatpush1.msra.mxu0 0.0
  %1194 = vmatprep.subr.mxu0 0.0
  %1195 = vmatpush1.msra.mxu0 0.0
  %1196 = vmatprep.subr.mxu0 0.0
  %1197 = vmatpush1.msra.mxu0 0.0
  %1198 = vmatprep.subr.mxu0 0.0
  %1199 = vmatpush1.msra.mxu0 0.0
  %1200 = vmatprep.subr.mxu0 0.0
  %1201 = vmatpush1.msra.mxu0 0.0
  %1202 = vmatprep.subr.mxu0 0.0
  %1203 = vmatpush1.msra.mxu0 0.0
  %1204 = vmatprep.mubr.f32.mxu0 0.0
  %v1205 = vand.u32 %v1057, 4294901760
  %1206 = vmatmul.mubr.f32.gmra.mrb[0].mxu0 %v1205
  %v1207 = vpop.f32.mrb[0].mxu0
  %v1208 = vadd.f32 %v1132, %v1207
  %v1209 = vpop.f32.mrb[0].mxu0
  %1210 = vdwg.mxu0
  %1211 = vmatprep.subr.mxu0 0.0
  %v1212 = vand.u32 %v1054, 4294901760
  %v1213 = vsub.f32 %v1054, %v1212
  %1214 = vmatpush1.msra.mxu0 %v1213
  %1215 = vmatprep.subr.mxu0 0.0
  %1216 = vmatpush1.msra.mxu0 0.0
  %1217 = vmatprep.subr.mxu0 0.0
  %1218 = vmatpush1.msra.mxu0 0.0
  %1219 = vmatprep.subr.mxu0 0.0
  %1220 = vmatpush1.msra.mxu0 0.0
  %1221 = vmatprep.subr.mxu0 0.0
  %1222 = vmatpush1.msra.mxu0 0.0
  %1223 = vmatprep.subr.mxu0 0.0
  %1224 = vmatpush1.msra.mxu0 0.0
  %1225 = vmatprep.subr.mxu0 0.0
  %1226 = vmatpush1.msra.mxu0 0.0
  %1227 = vmatprep.subr.mxu0 0.0
  %1228 = vmatpush1.msra.mxu0 0.0
  %1229 = vmatprep.subr.mxu0 0.0
  %1230 = vmatpush1.msra.mxu0 0.0
  %1231 = vmatprep.subr.mxu0 0.0
  %1232 = vmatpush1.msra.mxu0 0.0
  %1233 = vmatprep.subr.mxu0 0.0
  %1234 = vmatpush1.msra.mxu0 0.0
  %1235 = vmatprep.subr.mxu0 0.0
  %1236 = vmatpush1.msra.mxu0 0.0
  %1237 = vmatprep.subr.mxu0 0.0
  %1238 = vmatpush1.msra.mxu0 0.0
  %1239 = vmatprep.subr.mxu0 0.0
  %1240 = vmatpush1.msra.mxu0 0.0
  %1241 = vmatprep.subr.mxu0 0.0
  %1242 = vmatpush1.msra.mxu0 0.0
  %1243 = vmatprep.subr.mxu0 0.0
  %1244 = vmatpush1.msra.mxu0 0.0
  %1245 = vmatprep.subr.mxu0 0.0
  %1246 = vmatpush1.msra.mxu0 0.0
  %1247 = vmatprep.subr.mxu0 0.0
  %1248 = vmatpush1.msra.mxu0 0.0
  %1249 = vmatprep.subr.mxu0 0.0
  %1250 = vmatpush1.msra.mxu0 0.0
  %1251 = vmatprep.subr.mxu0 0.0
  %1252 = vmatpush1.msra.mxu0 0.0
  %1253 = vmatprep.subr.mxu0 0.0
  %1254 = vmatpush1.msra.mxu0 0.0
  %1255 = vmatprep.subr.mxu0 0.0
  %1256 = vmatpush1.msra.mxu0 0.0
  %1257 = vmatprep.subr.mxu0 0.0
  %1258 = vmatpush1.msra.mxu0 0.0
  %1259 = vmatprep.subr.mxu0 0.0
  %1260 = vmatpush1.msra.mxu0 0.0
  %1261 = vmatprep.subr.mxu0 0.0
  %1262 = vmatpush1.msra.mxu0 0.0
  %1263 = vmatprep.subr.mxu0 0.0
  %1264 = vmatpush1.msra.mxu0 0.0
  %1265 = vmatprep.subr.mxu0 0.0
  %1266 = vmatpush1.msra.mxu0 0.0
  %1267 = vmatprep.subr.mxu0 0.0
  %1268 = vmatpush1.msra.mxu0 0.0
  %1269 = vmatprep.subr.mxu0 0.0
  %1270 = vmatpush1.msra.mxu0 0.0
  %1271 = vmatprep.subr.mxu0 0.0
  %1272 = vmatpush1.msra.mxu0 0.0
  %1273 = vmatprep.subr.mxu0 0.0
  %1274 = vmatpush1.msra.mxu0 0.0
  %1275 = vmatprep.subr.mxu0 0.0
  %1276 = vmatpush1.msra.mxu0 0.0
  %1277 = vmatprep.mubr.f32.mxu0 0.0
  %v1278 = vand.u32 %v1057, 4294901760
  %v1279 = vsub.f32 %v1057, %v1278
  %1280 = vmatmul.mubr.f32.gmra.mrb[0].mxu0 %v1279
  %v1281 = vpop.f32.mrb[0].mxu0
  %v1282 = vadd.f32 %v1208, %v1281
  %v1283 = vpop.f32.mrb[0].mxu0
  %1284 = vdwg.mxu0
  %1285 = vmatprep.subr.mxu0 0.0
  %v1286 = vand.u32 %v1054, 4294901760
  %1287 = vmatpush1.msra.mxu0 %v1286
  %1288 = vmatprep.subr.mxu0 0.0
  %1289 = vmatpush1.msra.mxu0 0.0
  %1290 = vmatprep.subr.mxu0 0.0
  %1291 = vmatpush1.msra.mxu0 0.0
  %1292 = vmatprep.subr.mxu0 0.0
  %1293 = vmatpush1.msra.mxu0 0.0
  %1294 = vmatprep.subr.mxu0 0.0
  %1295 = vmatpush1.msra.mxu0 0.0
  %1296 = vmatprep.subr.mxu0 0.0
  %1297 = vmatpush1.msra.mxu0 0.0
  %1298 = vmatprep.subr.mxu0 0.0
  %1299 = vmatpush1.msra.mxu0 0.0
  %1300 = vmatprep.subr.mxu0 0.0
  %1301 = vmatpush1.msra.mxu0 0.0
  %1302 = vmatprep.subr.mxu0 0.0
  %1303 = vmatpush1.msra.mxu0 0.0
  %1304 = vmatprep.subr.mxu0 0.0
  %1305 = vmatpush1.msra.mxu0 0.0
  %1306 = vmatprep.subr.mxu0 0.0
  %1307 = vmatpush1.msra.mxu0 0.0
  %1308 = vmatprep.subr.mxu0 0.0
  %1309 = vmatpush1.msra.mxu0 0.0
  %1310 = vmatprep.subr.mxu0 0.0
  %1311 = vmatpush1.msra.mxu0 0.0
  %1312 = vmatprep.subr.mxu0 0.0
  %1313 = vmatpush1.msra.mxu0 0.0
  %1314 = vmatprep.subr.mxu0 0.0
  %1315 = vmatpush1.msra.mxu0 0.0
  %1316 = vmatprep.subr.mxu0 0.0
  %1317 = vmatpush1.msra.mxu0 0.0
  %1318 = vmatprep.subr.mxu0 0.0
  %1319 = vmatpush1.msra.mxu0 0.0
  %1320 = vmatprep.subr.mxu0 0.0
  %1321 = vmatpush1.msra.mxu0 0.0
  %1322 = vmatprep.subr.mxu0 0.0
  %1323 = vmatpush1.msra.mxu0 0.0
  %1324 = vmatprep.subr.mxu0 0.0
  %1325 = vmatpush1.msra.mxu0 0.0
  %1326 = vmatprep.subr.mxu0 0.0
  %1327 = vmatpush1.msra.mxu0 0.0
  %1328 = vmatprep.subr.mxu0 0.0
  %1329 = vmatpush1.msra.mxu0 0.0
  %1330 = vmatprep.subr.mxu0 0.0
  %1331 = vmatpush1.msra.mxu0 0.0
  %1332 = vmatprep.subr.mxu0 0.0
  %1333 = vmatpush1.msra.mxu0 0.0
  %1334 = vmatprep.subr.mxu0 0.0
  %1335 = vmatpush1.msra.mxu0 0.0
  %1336 = vmatprep.subr.mxu0 0.0
  %1337 = vmatpush1.msra.mxu0 0.0
  %1338 = vmatprep.subr.mxu0 0.0
  %1339 = vmatpush1.msra.mxu0 0.0
  %1340 = vmatprep.subr.mxu0 0.0
  %1341 = vmatpush1.msra.mxu0 0.0
  %1342 = vmatprep.subr.mxu0 0.0
  %1343 = vmatpush1.msra.mxu0 0.0
  %1344 = vmatprep.subr.mxu0 0.0
  %1345 = vmatpush1.msra.mxu0 0.0
  %1346 = vmatprep.subr.mxu0 0.0
  %1347 = vmatpush1.msra.mxu0 0.0
  %1348 = vmatprep.subr.mxu0 0.0
  %1349 = vmatpush1.msra.mxu0 0.0
  %1350 = vmatprep.mubr.f32.mxu0 0.0
  %v1351 = vand.u32 %v1057, 4294901760
  %v1352 = vsub.f32 %v1057, %v1351
  %v1353 = vand.u32 %v1352, 4294901760
  %1354 = vmatmul.mubr.f32.gmra.mrb[0].mxu0 %v1353
  %v1355 = vpop.f32.mrb[0].mxu0
  %v1356 = vadd.f32 %v1282, %v1355
  %v1357 = vpop.f32.mrb[0].mxu0
  %1358 = vdwg.mxu0
  %1359 = vmatprep.subr.mxu0 0.0
  %v1360 = vand.u32 %v1054, 4294901760
  %v1361 = vsub.f32 %v1054, %v1360
  %v1362 = vand.u32 %v1361, 4294901760
  %1363 = vmatpush1.msra.mxu0 %v1362
  %1364 = vmatprep.subr.mxu0 0.0
  %1365 = vmatpush1.msra.mxu0 0.0
  %1366 = vmatprep.subr.mxu0 0.0
  %1367 = vmatpush1.msra.mxu0 0.0
  %1368 = vmatprep.subr.mxu0 0.0
  %1369 = vmatpush1.msra.mxu0 0.0
  %1370 = vmatprep.subr.mxu0 0.0
  %1371 = vmatpush1.msra.mxu0 0.0
  %1372 = vmatprep.subr.mxu0 0.0
  %1373 = vmatpush1.msra.mxu0 0.0
  %1374 = vmatprep.subr.mxu0 0.0
  %1375 = vmatpush1.msra.mxu0 0.0
  %1376 = vmatprep.subr.mxu0 0.0
  %1377 = vmatpush1.msra.mxu0 0.0
  %1378 = vmatprep.subr.mxu0 0.0
  %1379 = vmatpush1.msra.mxu0 0.0
  %1380 = vmatprep.subr.mxu0 0.0
  %1381 = vmatpush1.msra.mxu0 0.0
  %1382 = vmatprep.subr.mxu0 0.0
  %1383 = vmatpush1.msra.mxu0 0.0
  %1384 = vmatprep.subr.mxu0 0.0
  %1385 = vmatpush1.msra.mxu0 0.0
  %1386 = vmatprep.subr.mxu0 0.0
  %1387 = vmatpush1.msra.mxu0 0.0
  %1388 = vmatprep.subr.mxu0 0.0
  %1389 = vmatpush1.msra.mxu0 0.0
  %1390 = vmatprep.subr.mxu0 0.0
  %1391 = vmatpush1.msra.mxu0 0.0
  %1392 = vmatprep.subr.mxu0 0.0
  %1393 = vmatpush1.msra.mxu0 0.0
  %1394 = vmatprep.subr.mxu0 0.0
  %1395 = vmatpush1.msra.mxu0 0.0
  %1396 = vmatprep.subr.mxu0 0.0
  %1397 = vmatpush1.msra.mxu0 0.0
  %1398 = vmatprep.subr.mxu0 0.0
  %1399 = vmatpush1.msra.mxu0 0.0
  %1400 = vmatprep.subr.mxu0 0.0
  %1401 = vmatpush1.msra.mxu0 0.0
  %1402 = vmatprep.subr.mxu0 0.0
  %1403 = vmatpush1.msra.mxu0 0.0
  %1404 = vmatprep.subr.mxu0 0.0
  %1405 = vmatpush1.msra.mxu0 0.0
  %1406 = vmatprep.subr.mxu0 0.0
  %1407 = vmatpush1.msra.mxu0 0.0
  %1408 = vmatprep.subr.mxu0 0.0
  %1409 = vmatpush1.msra.mxu0 0.0
  %1410 = vmatprep.subr.mxu0 0.0
  %1411 = vmatpush1.msra.mxu0 0.0
  %1412 = vmatprep.subr.mxu0 0.0
  %1413 = vmatpush1.msra.mxu0 0.0
  %1414 = vmatprep.subr.mxu0 0.0
  %1415 = vmatpush1.msra.mxu0 0.0
  %1416 = vmatprep.subr.mxu0 0.0
  %1417 = vmatpush1.msra.mxu0 0.0
  %1418 = vmatprep.subr.mxu0 0.0
  %1419 = vmatpush1.msra.mxu0 0.0
  %1420 = vmatprep.subr.mxu0 0.0
  %1421 = vmatpush1.msra.mxu0 0.0
  %1422 = vmatprep.subr.mxu0 0.0
  %1423 = vmatpush1.msra.mxu0 0.0
  %1424 = vmatprep.subr.mxu0 0.0
  %1425 = vmatpush1.msra.mxu0 0.0
  %1426 = vmatprep.mubr.f32.mxu0 0.0
  %v1427 = vand.u32 %v1057, 4294901760
  %1428 = vmatmul.mubr.f32.gmra.mrb[0].mxu0 %v1427
  %v1429 = vpop.f32.mrb[0].mxu0
  %v1430 = vadd.f32 %v1356, %v1429
  %v1431 = vpop.f32.mrb[0].mxu0
  %1432 = vdwg.mxu0
  %1433 = vmatprep.subr.mxu0 0.0
  %v1434 = vand.u32 %v1054, 4294901760
  %1435 = vmatpush1.msra.mxu0 %v1434
  %1436 = vmatprep.subr.mxu0 0.0
  %1437 = vmatpush1.msra.mxu0 0.0
  %1438 = vmatprep.subr.mxu0 0.0
  %1439 = vmatpush1.msra.mxu0 0.0
  %1440 = vmatprep.subr.mxu0 0.0
  %1441 = vmatpush1.msra.mxu0 0.0
  %1442 = vmatprep.subr.mxu0 0.0
  %1443 = vmatpush1.msra.mxu0 0.0
  %1444 = vmatprep.subr.mxu0 0.0
  %1445 = vmatpush1.msra.mxu0 0.0
  %1446 = vmatprep.subr.mxu0 0.0
  %1447 = vmatpush1.msra.mxu0 0.0
  %1448 = vmatprep.subr.mxu0 0.0
  %1449 = vmatpush1.msra.mxu0 0.0
  %1450 = vmatprep.subr.mxu0 0.0
  %1451 = vmatpush1.msra.mxu0 0.0
  %1452 = vmatprep.subr.mxu0 0.0
  %1453 = vmatpush1.msra.mxu0 0.0
  %1454 = vmatprep.subr.mxu0 0.0
  %1455 = vmatpush1.msra.mxu0 0.0
  %1456 = vmatprep.subr.mxu0 0.0
  %1457 = vmatpush1.msra.mxu0 0.0
  %1458 = vmatprep.subr.mxu0 0.0
  %1459 = vmatpush1.msra.mxu0 0.0
  %1460 = vmatprep.subr.mxu0 0.0
  %1461 = vmatpush1.msra.mxu0 0.0
  %1462 = vmatprep.subr.mxu0 0.0
  %1463 = vmatpush1.msra.mxu0 0.0
  %1464 = vmatprep.subr.mxu0 0.0
  %1465 = vmatpush1.msra.mxu0 0.0
  %1466 = vmatprep.subr.mxu0 0.0
  %1467 = vmatpush1.msra.mxu0 0.0
  %1468 = vmatprep.subr.mxu0 0.0
  %1469 = vmatpush1.msra.mxu0 0.0
  %1470 = vmatprep.subr.mxu0 0.0
  %1471 = vmatpush1.msra.mxu0 0.0
  %1472 = vmatprep.subr.mxu0 0.0
  %1473 = vmatpush1.msra.mxu0 0.0
  %1474 = vmatprep.subr.mxu0 0.0
  %1475 = vmatpush1.msra.mxu0 0.0
  %1476 = vmatprep.subr.mxu0 0.0
  %1477 = vmatpush1.msra.mxu0 0.0
  %1478 = vmatprep.subr.mxu0 0.0
  %1479 = vmatpush1.msra.mxu0 0.0
  %1480 = vmatprep.subr.mxu0 0.0
  %1481 = vmatpush1.msra.mxu0 0.0
  %1482 = vmatprep.subr.mxu0 0.0
  %1483 = vmatpush1.msra.mxu0 0.0
  %1484 = vmatprep.subr.mxu0 0.0
  %1485 = vmatpush1.msra.mxu0 0.0
  %1486 = vmatprep.subr.mxu0 0.0
  %1487 = vmatpush1.msra.mxu0 0.0
  %1488 = vmatprep.subr.mxu0 0.0
  %1489 = vmatpush1.msra.mxu0 0.0
  %1490 = vmatprep.subr.mxu0 0.0
  %1491 = vmatpush1.msra.mxu0 0.0
  %1492 = vmatprep.subr.mxu0 0.0
  %1493 = vmatpush1.msra.mxu0 0.0
  %1494 = vmatprep.subr.mxu0 0.0
  %1495 = vmatpush1.msra.mxu0 0.0
  %1496 = vmatprep.subr.mxu0 0.0
  %1497 = vmatpush1.msra.mxu0 0.0
  %1498 = vmatprep.mubr.f32.mxu0 0.0
  %v1499 = vand.u32 %v1057, 4294901760
  %1500 = vmatmul.mubr.f32.gmra.mrb[0].mxu0 %v1499
  %v1501 = vpop.f32.mrb[0].mxu0
  %v1502 = vadd.f32 %v1430, %v1501
  %v1503 = vpop.f32.mrb[0].mxu0
  %1504 = vdwg.mxu0
  %v1505 = vld [vmem:[%s6] sm:$0xff]
  %1506 = vmatprep.subr.mxu0 0.0
  %v1507 = vand.u32 %v1505, 4294901760
  %1508 = vmatpush1.msra.mxu0 %v1507
  %1509 = vmatprep.subr.mxu0 0.0
  %1510 = vmatpush1.msra.mxu0 0.0
  %1511 = vmatprep.subr.mxu0 0.0
  %1512 = vmatpush1.msra.mxu0 0.0
  %1513 = vmatprep.subr.mxu0 0.0
  %1514 = vmatpush1.msra.mxu0 0.0
  %1515 = vmatprep.subr.mxu0 0.0
  %1516 = vmatpush1.msra.mxu0 0.0
  %1517 = vmatprep.subr.mxu0 0.0
  %1518 = vmatpush1.msra.mxu0 0.0
  %1519 = vmatprep.subr.mxu0 0.0
  %1520 = vmatpush1.msra.mxu0 0.0
  %1521 = vmatprep.subr.mxu0 0.0
  %1522 = vmatpush1.msra.mxu0 0.0
  %1523 = vmatprep.subr.mxu0 0.0
  %1524 = vmatpush1.msra.mxu0 0.0
  %1525 = vmatprep.subr.mxu0 0.0
  %1526 = vmatpush1.msra.mxu0 0.0
  %1527 = vmatprep.subr.mxu0 0.0
  %1528 = vmatpush1.msra.mxu0 0.0
  %1529 = vmatprep.subr.mxu0 0.0
  %1530 = vmatpush1.msra.mxu0 0.0
  %1531 = vmatprep.subr.mxu0 0.0
  %1532 = vmatpush1.msra.mxu0 0.0
  %1533 = vmatprep.subr.mxu0 0.0
  %1534 = vmatpush1.msra.mxu0 0.0
  %1535 = vmatprep.subr.mxu0 0.0
  %1536 = vmatpush1.msra.mxu0 0.0
  %1537 = vmatprep.subr.mxu0 0.0
  %1538 = vmatpush1.msra.mxu0 0.0
  %1539 = vmatprep.subr.mxu0 0.0
  %1540 = vmatpush1.msra.mxu0 0.0
  %1541 = vmatprep.subr.mxu0 0.0
  %1542 = vmatpush1.msra.mxu0 0.0
  %1543 = vmatprep.subr.mxu0 0.0
  %1544 = vmatpush1.msra.mxu0 0.0
  %1545 = vmatprep.subr.mxu0 0.0
  %1546 = vmatpush1.msra.mxu0 0.0
  %1547 = vmatprep.subr.mxu0 0.0
  %1548 = vmatpush1.msra.mxu0 0.0
  %1549 = vmatprep.subr.mxu0 0.0
  %1550 = vmatpush1.msra.mxu0 0.0
  %1551 = vmatprep.subr.mxu0 0.0
  %1552 = vmatpush1.msra.mxu0 0.0
  %1553 = vmatprep.subr.mxu0 0.0
  %1554 = vmatpush1.msra.mxu0 0.0
  %1555 = vmatprep.subr.mxu0 0.0
  %1556 = vmatpush1.msra.mxu0 0.0
  %1557 = vmatprep.subr.mxu0 0.0
  %1558 = vmatpush1.msra.mxu0 0.0
  %1559 = vmatprep.subr.mxu0 0.0
  %1560 = vmatpush1.msra.mxu0 0.0
  %1561 = vmatprep.subr.mxu0 0.0
  %1562 = vmatpush1.msra.mxu0 0.0
  %1563 = vmatprep.subr.mxu0 0.0
  %1564 = vmatpush1.msra.mxu0 0.0
  %1565 = vmatprep.subr.mxu0 0.0
  %1566 = vmatpush1.msra.mxu0 0.0
  %1567 = vmatprep.subr.mxu0 0.0
  %1568 = vmatpush1.msra.mxu0 0.0
  %1569 = vmatprep.subr.mxu0 0.0
  %1570 = vmatpush1.msra.mxu0 0.0
  %1571 = vmatprep.mubr.f32.mxu0 0.0
  %v1572 = vand.u32 %v1057, 4294901760
  %v1573 = vsub.f32 %v1057, %v1572
  %v1574 = vand.u32 %v1573, 4294901760
  %v1575 = vsub.f32 %v1573, %v1574
  %v1576 = vand.u32 %v1575, 4294901760
  %1577 = vmatmul.mubr.f32.gmra.mrb[0].mxu0 %v1576
  %v1578 = vpop.f32.mrb[0].mxu0
  %v1579 = vadd.f32 0.0, %v1578
  %v1580 = vpop.f32.mrb[0].mxu0
  %1581 = vdwg.mxu0
  %1582 = vmatprep.subr.mxu0 0.0
  %v1583 = vand.u32 %v1505, 4294901760
  %v1584 = vsub.f32 %v1505, %v1583
  %v1585 = vand.u32 %v1584, 4294901760
  %v1586 = vsub.f32 %v1584, %v1585
  %v1587 = vand.u32 %v1586, 4294901760
  %1588 = vmatpush1.msra.mxu0 %v1587
  %1589 = vmatprep.subr.mxu0 0.0
  %1590 = vmatpush1.msra.mxu0 0.0
  %1591 = vmatprep.subr.mxu0 0.0
  %1592 = vmatpush1.msra.mxu0 0.0
  %1593 = vmatprep.subr.mxu0 0.0
  %1594 = vmatpush1.msra.mxu0 0.0
  %1595 = vmatprep.subr.mxu0 0.0
  %1596 = vmatpush1.msra.mxu0 0.0
  %1597 = vmatprep.subr.mxu0 0.0
  %1598 = vmatpush1.msra.mxu0 0.0
  %1599 = vmatprep.subr.mxu0 0.0
  %1600 = vmatpush1.msra.mxu0 0.0
  %1601 = vmatprep.subr.mxu0 0.0
  %1602 = vmatpush1.msra.mxu0 0.0
  %1603 = vmatprep.subr.mxu0 0.0
  %1604 = vmatpush1.msra.mxu0 0.0
  %1605 = vmatprep.subr.mxu0 0.0
  %1606 = vmatpush1.msra.mxu0 0.0
  %1607 = vmatprep.subr.mxu0 0.0
  %1608 = vmatpush1.msra.mxu0 0.0
  %1609 = vmatprep.subr.mxu0 0.0
  %1610 = vmatpush1.msra.mxu0 0.0
  %1611 = vmatprep.subr.mxu0 0.0
  %1612 = vmatpush1.msra.mxu0 0.0
  %1613 = vmatprep.subr.mxu0 0.0
  %1614 = vmatpush1.msra.mxu0 0.0
  %1615 = vmatprep.subr.mxu0 0.0
  %1616 = vmatpush1.msra.mxu0 0.0
  %1617 = vmatprep.subr.mxu0 0.0
  %1618 = vmatpush1.msra.mxu0 0.0
  %1619 = vmatprep.subr.mxu0 0.0
  %1620 = vmatpush1.msra.mxu0 0.0
  %1621 = vmatprep.subr.mxu0 0.0
  %1622 = vmatpush1.msra.mxu0 0.0
  %1623 = vmatprep.subr.mxu0 0.0
  %1624 = vmatpush1.msra.mxu0 0.0
  %1625 = vmatprep.subr.mxu0 0.0
  %1626 = vmatpush1.msra.mxu0 0.0
  %1627 = vmatprep.subr.mxu0 0.0
  %1628 = vmatpush1.msra.mxu0 0.0
  %1629 = vmatprep.subr.mxu0 0.0
  %1630 = vmatpush1.msra.mxu0 0.0
  %1631 = vmatprep.subr.mxu0 0.0
  %1632 = vmatpush1.msra.mxu0 0.0
  %1633 = vmatprep.subr.mxu0 0.0
  %1634 = vmatpush1.msra.mxu0 0.0
  %1635 = vmatprep.subr.mxu0 0.0
  %1636 = vmatpush1.msra.mxu0 0.0
  %1637 = vmatprep.subr.mxu0 0.0
  %1638 = vmatpush1.msra.mxu0 0.0
  %1639 = vmatprep.subr.mxu0 0.0
  %1640 = vmatpush1.msra.mxu0 0.0
  %1641 = vmatprep.subr.mxu0 0.0
  %1642 = vmatpush1.msra.mxu0 0.0
  %1643 = vmatprep.subr.mxu0 0.0
  %1644 = vmatpush1.msra.mxu0 0.0
  %1645 = vmatprep.subr.mxu0 0.0
  %1646 = vmatpush1.msra.mxu0 0.0
  %1647 = vmatprep.subr.mxu0 0.0
  %1648 = vmatpush1.msra.mxu0 0.0
  %1649 = vmatprep.subr.mxu0 0.0
  %1650 = vmatpush1.msra.mxu0 0.0
  %1651 = vmatprep.mubr.f32.mxu0 0.0
  %v1652 = vand.u32 %v1057, 4294901760
  %1653 = vmatmul.mubr.f32.gmra.mrb[0].mxu0 %v1652
  %v1654 = vpop.f32.mrb[0].mxu0
  %v1655 = vadd.f32 %v1579, %v1654
  %v1656 = vpop.f32.mrb[0].mxu0
  %1657 = vdwg.mxu0
  %1658 = vmatprep.subr.mxu0 0.0
  %v1659 = vand.u32 %v1505, 4294901760
  %v1660 = vsub.f32 %v1505, %v1659
  %1661 = vmatpush1.msra.mxu0 %v1660
  %1662 = vmatprep.subr.mxu0 0.0
  %1663 = vmatpush1.msra.mxu0 0.0
  %1664 = vmatprep.subr.mxu0 0.0
  %1665 = vmatpush1.msra.mxu0 0.0
  %1666 = vmatprep.subr.mxu0 0.0
  %1667 = vmatpush1.msra.mxu0 0.0
  %1668 = vmatprep.subr.mxu0 0.0
  %1669 = vmatpush1.msra.mxu0 0.0
  %1670 = vmatprep.subr.mxu0 0.0
  %1671 = vmatpush1.msra.mxu0 0.0
  %1672 = vmatprep.subr.mxu0 0.0
  %1673 = vmatpush1.msra.mxu0 0.0
  %1674 = vmatprep.subr.mxu0 0.0
  %1675 = vmatpush1.msra.mxu0 0.0
  %1676 = vmatprep.subr.mxu0 0.0
  %1677 = vmatpush1.msra.mxu0 0.0
  %1678 = vmatprep.subr.mxu0 0.0
  %1679 = vmatpush1.msra.mxu0 0.0
  %1680 = vmatprep.subr.mxu0 0.0
  %1681 = vmatpush1.msra.mxu0 0.0
  %1682 = vmatprep.subr.mxu0 0.0
  %1683 = vmatpush1.msra.mxu0 0.0
  %1684 = vmatprep.subr.mxu0 0.0
  %1685 = vmatpush1.msra.mxu0 0.0
  %1686 = vmatprep.subr.mxu0 0.0
  %1687 = vmatpush1.msra.mxu0 0.0
  %1688 = vmatprep.subr.mxu0 0.0
  %1689 = vmatpush1.msra.mxu0 0.0
  %1690 = vmatprep.subr.mxu0 0.0
  %1691 = vmatpush1.msra.mxu0 0.0
  %1692 = vmatprep.subr.mxu0 0.0
  %1693 = vmatpush1.msra.mxu0 0.0
  %1694 = vmatprep.subr.mxu0 0.0
  %1695 = vmatpush1.msra.mxu0 0.0
  %1696 = vmatprep.subr.mxu0 0.0
  %1697 = vmatpush1.msra.mxu0 0.0
  %1698 = vmatprep.subr.mxu0 0.0
  %1699 = vmatpush1.msra.mxu0 0.0
  %1700 = vmatprep.subr.mxu0 0.0
  %1701 = vmatpush1.msra.mxu0 0.0
  %1702 = vmatprep.subr.mxu0 0.0
  %1703 = vmatpush1.msra.mxu0 0.0
  %1704 = vmatprep.subr.mxu0 0.0
  %1705 = vmatpush1.msra.mxu0 0.0
  %1706 = vmatprep.subr.mxu0 0.0
  %1707 = vmatpush1.msra.mxu0 0.0
  %1708 = vmatprep.subr.mxu0 0.0
  %1709 = vmatpush1.msra.mxu0 0.0
  %1710 = vmatprep.subr.mxu0 0.0
  %1711 = vmatpush1.msra.mxu0 0.0
  %1712 = vmatprep.subr.mxu0 0.0
  %1713 = vmatpush1.msra.mxu0 0.0
  %1714 = vmatprep.subr.mxu0 0.0
  %1715 = vmatpush1.msra.mxu0 0.0
  %1716 = vmatprep.subr.mxu0 0.0
  %1717 = vmatpush1.msra.mxu0 0.0
  %1718 = vmatprep.subr.mxu0 0.0
  %1719 = vmatpush1.msra.mxu0 0.0
  %1720 = vmatprep.subr.mxu0 0.0
  %1721 = vmatpush1.msra.mxu0 0.0
  %1722 = vmatprep.subr.mxu0 0.0
  %1723 = vmatpush1.msra.mxu0 0.0
  %1724 = vmatprep.mubr.f32.mxu0 0.0
  %v1725 = vand.u32 %v1057, 4294901760
  %v1726 = vsub.f32 %v1057, %v1725
  %1727 = vmatmul.mubr.f32.gmra.mrb[0].mxu0 %v1726
  %v1728 = vpop.f32.mrb[0].mxu0
  %v1729 = vadd.f32 %v1655, %v1728
  %v1730 = vpop.f32.mrb[0].mxu0
  %1731 = vdwg.mxu0
  %1732 = vmatprep.subr.mxu0 0.0
  %v1733 = vand.u32 %v1505, 4294901760
  %1734 = vmatpush1.msra.mxu0 %v1733
  %1735 = vmatprep.subr.mxu0 0.0
  %1736 = vmatpush1.msra.mxu0 0.0
  %1737 = vmatprep.subr.mxu0 0.0
  %1738 = vmatpush1.msra.mxu0 0.0
  %1739 = vmatprep.subr.mxu0 0.0
  %1740 = vmatpush1.msra.mxu0 0.0
  %1741 = vmatprep.subr.mxu0 0.0
  %1742 = vmatpush1.msra.mxu0 0.0
  %1743 = vmatprep.subr.mxu0 0.0
  %1744 = vmatpush1.msra.mxu0 0.0
  %1745 = vmatprep.subr.mxu0 0.0
  %1746 = vmatpush1.msra.mxu0 0.0
  %1747 = vmatprep.subr.mxu0 0.0
  %1748 = vmatpush1.msra.mxu0 0.0
  %1749 = vmatprep.subr.mxu0 0.0
  %1750 = vmatpush1.msra.mxu0 0.0
  %1751 = vmatprep.subr.mxu0 0.0
  %1752 = vmatpush1.msra.mxu0 0.0
  %1753 = vmatprep.subr.mxu0 0.0
  %1754 = vmatpush1.msra.mxu0 0.0
  %1755 = vmatprep.subr.mxu0 0.0
  %1756 = vmatpush1.msra.mxu0 0.0
  %1757 = vmatprep.subr.mxu0 0.0
  %1758 = vmatpush1.msra.mxu0 0.0
  %1759 = vmatprep.subr.mxu0 0.0
  %1760 = vmatpush1.msra.mxu0 0.0
  %1761 = vmatprep.subr.mxu0 0.0
  %1762 = vmatpush1.msra.mxu0 0.0
  %1763 = vmatprep.subr.mxu0 0.0
  %1764 = vmatpush1.msra.mxu0 0.0
  %1765 = vmatprep.subr.mxu0 0.0
  %1766 = vmatpush1.msra.mxu0 0.0
  %1767 = vmatprep.subr.mxu0 0.0
  %1768 = vmatpush1.msra.mxu0 0.0
  %1769 = vmatprep.subr.mxu0 0.0
  %1770 = vmatpush1.msra.mxu0 0.0
  %1771 = vmatprep.subr.mxu0 0.0
  %1772 = vmatpush1.msra.mxu0 0.0
  %1773 = vmatprep.subr.mxu0 0.0
  %1774 = vmatpush1.msra.mxu0 0.0
  %1775 = vmatprep.subr.mxu0 0.0
  %1776 = vmatpush1.msra.mxu0 0.0
  %1777 = vmatprep.subr.mxu0 0.0
  %1778 = vmatpush1.msra.mxu0 0.0
  %1779 = vmatprep.subr.mxu0 0.0
  %1780 = vmatpush1.msra.mxu0 0.0
  %1781 = vmatprep.subr.mxu0 0.0
  %1782 = vmatpush1.msra.mxu0 0.0
  %1783 = vmatprep.subr.mxu0 0.0
  %1784 = vmatpush1.msra.mxu0 0.0
  %1785 = vmatprep.subr.mxu0 0.0
  %1786 = vmatpush1.msra.mxu0 0.0
  %1787 = vmatprep.subr.mxu0 0.0
  %1788 = vmatpush1.msra.mxu0 0.0
  %1789 = vmatprep.subr.mxu0 0.0
  %1790 = vmatpush1.msra.mxu0 0.0
  %1791 = vmatprep.subr.mxu0 0.0
  %1792 = vmatpush1.msra.mxu0 0.0
  %1793 = vmatprep.subr.mxu0 0.0
  %1794 = vmatpush1.msra.mxu0 0.0
  %1795 = vmatprep.subr.mxu0 0.0
  %1796 = vmatpush1.msra.mxu0 0.0
  %1797 = vmatprep.mubr.f32.mxu0 0.0
  %v1798 = vand.u32 %v1057, 4294901760
  %v1799 = vsub.f32 %v1057, %v1798
  %v1800 = vand.u32 %v1799, 4294901760
  %1801 = vmatmul.mubr.f32.gmra.mrb[0].mxu0 %v1800
  %v1802 = vpop.f32.mrb[0].mxu0
  %v1803 = vadd.f32 %v1729, %v1802
  %v1804 = vpop.f32.mrb[0].mxu0
  %1805 = vdwg.mxu0
  %1806 = vmatprep.subr.mxu0 0.0
  %v1807 = vand.u32 %v1505, 4294901760
  %v1808 = vsub.f32 %v1505, %v1807
  %v1809 = vand.u32 %v1808, 4294901760
  %1810 = vmatpush1.msra.mxu0 %v1809
  %1811 = vmatprep.subr.mxu0 0.0
  %1812 = vmatpush1.msra.mxu0 0.0
  %1813 = vmatprep.subr.mxu0 0.0
  %1814 = vmatpush1.msra.mxu0 0.0
  %1815 = vmatprep.subr.mxu0 0.0
  %1816 = vmatpush1.msra.mxu0 0.0
  %1817 = vmatprep.subr.mxu0 0.0
  %1818 = vmatpush1.msra.mxu0 0.0
  %1819 = vmatprep.subr.mxu0 0.0
  %1820 = vmatpush1.msra.mxu0 0.0
  %1821 = vmatprep.subr.mxu0 0.0
  %1822 = vmatpush1.msra.mxu0 0.0
  %1823 = vmatprep.subr.mxu0 0.0
  %1824 = vmatpush1.msra.mxu0 0.0
  %1825 = vmatprep.subr.mxu0 0.0
  %1826 = vmatpush1.msra.mxu0 0.0
  %1827 = vmatprep.subr.mxu0 0.0
  %1828 = vmatpush1.msra.mxu0 0.0
  %1829 = vmatprep.subr.mxu0 0.0
  %1830 = vmatpush1.msra.mxu0 0.0
  %1831 = vmatprep.subr.mxu0 0.0
  %1832 = vmatpush1.msra.mxu0 0.0
  %1833 = vmatprep.subr.mxu0 0.0
  %1834 = vmatpush1.msra.mxu0 0.0
  %1835 = vmatprep.subr.mxu0 0.0
  %1836 = vmatpush1.msra.mxu0 0.0
  %1837 = vmatprep.subr.mxu0 0.0
  %1838 = vmatpush1.msra.mxu0 0.0
  %1839 = vmatprep.subr.mxu0 0.0
  %1840 = vmatpush1.msra.mxu0 0.0
  %1841 = vmatprep.subr.mxu0 0.0
  %1842 = vmatpush1.msra.mxu0 0.0
  %1843 = vmatprep.subr.mxu0 0.0
  %1844 = vmatpush1.msra.mxu0 0.0
  %1845 = vmatprep.subr.mxu0 0.0
  %1846 = vmatpush1.msra.mxu0 0.0
  %1847 = vmatprep.subr.mxu0 0.0
  %1848 = vmatpush1.msra.mxu0 0.0
  %1849 = vmatprep.subr.mxu0 0.0
  %1850 = vmatpush1.msra.mxu0 0.0
  %1851 = vmatprep.subr.mxu0 0.0
  %1852 = vmatpush1.msra.mxu0 0.0
  %1853 = vmatprep.subr.mxu0 0.0
  %1854 = vmatpush1.msra.mxu0 0.0
  %1855 = vmatprep.subr.mxu0 0.0
  %1856 = vmatpush1.msra.mxu0 0.0
  %1857 = vmatprep.subr.mxu0 0.0
  %1858 = vmatpush1.msra.mxu0 0.0
  %1859 = vmatprep.subr.mxu0 0.0
  %1860 = vmatpush1.msra.mxu0 0.0
  %1861 = vmatprep.subr.mxu0 0.0
  %1862 = vmatpush1.msra.mxu0 0.0
  %1863 = vmatprep.subr.mxu0 0.0
  %1864 = vmatpush1.msra.mxu0 0.0
  %1865 = vmatprep.subr.mxu0 0.0
  %1866 = vmatpush1.msra.mxu0 0.0
  %1867 = vmatprep.subr.mxu0 0.0
  %1868 = vmatpush1.msra.mxu0 0.0
  %1869 = vmatprep.subr.mxu0 0.0
  %1870 = vmatpush1.msra.mxu0 0.0
  %1871 = vmatprep.subr.mxu0 0.0
  %1872 = vmatpush1.msra.mxu0 0.0
  %1873 = vmatprep.mubr.f32.mxu0 0.0
  %v1874 = vand.u32 %v1057, 4294901760
  %1875 = vmatmul.mubr.f32.gmra.mrb[0].mxu0 %v1874
  %v1876 = vpop.f32.mrb[0].mxu0
  %v1877 = vadd.f32 %v1803, %v1876
  %v1878 = vpop.f32.mrb[0].mxu0
  %1879 = vdwg.mxu0
  %1880 = vmatprep.subr.mxu0 0.0
  %v1881 = vand.u32 %v1505, 4294901760
  %1882 = vmatpush1.msra.mxu0 %v1881
  %1883 = vmatprep.subr.mxu0 0.0
  %1884 = vmatpush1.msra.mxu0 0.0
  %1885 = vmatprep.subr.mxu0 0.0
  %1886 = vmatpush1.msra.mxu0 0.0
  %1887 = vmatprep.subr.mxu0 0.0
  %1888 = vmatpush1.msra.mxu0 0.0
  %1889 = vmatprep.subr.mxu0 0.0
  %1890 = vmatpush1.msra.mxu0 0.0
  %1891 = vmatprep.subr.mxu0 0.0
  %1892 = vmatpush1.msra.mxu0 0.0
  %1893 = vmatprep.subr.mxu0 0.0
  %1894 = vmatpush1.msra.mxu0 0.0
  %1895 = vmatprep.subr.mxu0 0.0
  %1896 = vmatpush1.msra.mxu0 0.0
  %1897 = vmatprep.subr.mxu0 0.0
  %1898 = vmatpush1.msra.mxu0 0.0
  %1899 = vmatprep.subr.mxu0 0.0
  %1900 = vmatpush1.msra.mxu0 0.0
  %1901 = vmatprep.subr.mxu0 0.0
  %1902 = vmatpush1.msra.mxu0 0.0
  %1903 = vmatprep.subr.mxu0 0.0
  %1904 = vmatpush1.msra.mxu0 0.0
  %1905 = vmatprep.subr.mxu0 0.0
  %1906 = vmatpush1.msra.mxu0 0.0
  %1907 = vmatprep.subr.mxu0 0.0
  %1908 = vmatpush1.msra.mxu0 0.0
  %1909 = vmatprep.subr.mxu0 0.0
  %1910 = vmatpush1.msra.mxu0 0.0
  %1911 = vmatprep.subr.mxu0 0.0
  %1912 = vmatpush1.msra.mxu0 0.0
  %1913 = vmatprep.subr.mxu0 0.0
  %1914 = vmatpush1.msra.mxu0 0.0
  %1915 = vmatprep.subr.mxu0 0.0
  %1916 = vmatpush1.msra.mxu0 0.0
  %1917 = vmatprep.subr.mxu0 0.0
  %1918 = vmatpush1.msra.mxu0 0.0
  %1919 = vmatprep.subr.mxu0 0.0
  %1920 = vmatpush1.msra.mxu0 0.0
  %1921 = vmatprep.subr.mxu0 0.0
  %1922 = vmatpush1.msra.mxu0 0.0
  %1923 = vmatprep.subr.mxu0 0.0
  %1924 = vmatpush1.msra.mxu0 0.0
  %1925 = vmatprep.subr.mxu0 0.0
  %1926 = vmatpush1.msra.mxu0 0.0
  %1927 = vmatprep.subr.mxu0 0.0
  %1928 = vmatpush1.msra.mxu0 0.0
  %1929 = vmatprep.subr.mxu0 0.0
  %1930 = vmatpush1.msra.mxu0 0.0
  %1931 = vmatprep.subr.mxu0 0.0
  %1932 = vmatpush1.msra.mxu0 0.0
  %1933 = vmatprep.subr.mxu0 0.0
  %1934 = vmatpush1.msra.mxu0 0.0
  %1935 = vmatprep.subr.mxu0 0.0
  %1936 = vmatpush1.msra.mxu0 0.0
  %1937 = vmatprep.subr.mxu0 0.0
  %1938 = vmatpush1.msra.mxu0 0.0
  %1939 = vmatprep.subr.mxu0 0.0
  %1940 = vmatpush1.msra.mxu0 0.0
  %1941 = vmatprep.subr.mxu0 0.0
  %1942 = vmatpush1.msra.mxu0 0.0
  %1943 = vmatprep.subr.mxu0 0.0
  %1944 = vmatpush1.msra.mxu0 0.0
  %1945 = vmatprep.mubr.f32.mxu0 0.0
  %v1946 = vand.u32 %v1057, 4294901760
  %1947 = vmatmul.mubr.f32.gmra.mrb[0].mxu0 %v1946
  %v1948 = vpop.f32.mrb[0].mxu0
  %v1949 = vadd.f32 %v1877, %v1948
  %v1950 = vpop.f32.mrb[0].mxu0
  %1951 = vdwg.mxu0
  %v1952 = vld [vmem:[%s1] sm:$0xf]
  %v1953 = vld [vmem:[%s2] sm:$0xf]
  %1955 = vset.pattern.permute.xlu0 0
  %1956 = vperm.xlu0 %1955, %v1952
  %v1957 = vpop.permute.xlu0 %1956
  %v1959 = vmul.f32 %v1957, %v1502
  %1961 = vset.pattern.permute.xlu0 0
  %1962 = vperm.xlu0 %1961, %v1953
  %v1963 = vpop.permute.xlu0 %1962
  %v1965 = vmul.f32 %v1963, %v1502
  %1966 = vset.pattern.permute.xlu0 1
  %1967 = vperm.xlu0 %1966, %v1952
  %v1968 = vpop.permute.xlu0 %1967
  %v1970 = vmul.f32 %v1968, %v1949
  %1971 = vset.pattern.permute.xlu0 1
  %1972 = vperm.xlu0 %1971, %v1953
  %v1973 = vpop.permute.xlu0 %1972
  %v1975 = vmul.f32 %v1973, %v1949
  %v1976 = vadd.f32 %v1959, %v1970
  %v1977 = vadd.f32 %v1965, %v1975
  %1978 = vset.pattern.permute.xlu0 2
  %1979 = vperm.xlu0 %1978, %v1952
  %v1980 = vpop.permute.xlu0 %1979
  %v1982 = vmul.f32 %v1980, %v1502
  %1983 = vset.pattern.permute.xlu0 2
  %1984 = vperm.xlu0 %1983, %v1953
  %v1985 = vpop.permute.xlu0 %1984
  %v1987 = vmul.f32 %v1985, %v1502
  %1989 = vrot.lane.b32.xlu0 %v1982, 127
  %v1990 = vpop.permute.xlu0 %1989
  %v1992 = vadd.f32 %v1976, %v1990
  %1994 = vrot.lane.b32.xlu0 %v1987, 127
  %v1995 = vpop.permute.xlu0 %1994
  %v1997 = vadd.f32 %v1977, %v1995
  %1998 = vset.pattern.permute.xlu0 3
  %1999 = vperm.xlu0 %1998, %v1952
  %v2000 = vpop.permute.xlu0 %1999
  %v2002 = vmul.f32 %v2000, %v1949
  %2003 = vset.pattern.permute.xlu0 3
  %2004 = vperm.xlu0 %2003, %v1953
  %v2005 = vpop.permute.xlu0 %2004
  %v2007 = vmul.f32 %v2005, %v1949
  %2009 = vrot.lane.b32.xlu0 %v2002, 127
  %v2010 = vpop.permute.xlu0 %2009
  %v2012 = vadd.f32 %v1992, %v2010
  %2014 = vrot.lane.b32.xlu0 %v2007, 127
  %v2015 = vpop.permute.xlu0 %2014
  %v2017 = vadd.f32 %v1997, %v2015
  %2018 = vset.pattern.permute.xlu0 4
  %2019 = vperm.xlu0 %2018, %v1952
  %v2020 = vpop.permute.xlu0 %2019
  %v2022 = vmul.f32 %v2020, %v1502
  %2023 = vset.pattern.permute.xlu0 4
  %2024 = vperm.xlu0 %2023, %v1953
  %v2025 = vpop.permute.xlu0 %2024
  %v2027 = vmul.f32 %v2025, %v1502
  %2029 = vrot.lane.b32.xlu0 %v2022, 126
  %v2030 = vpop.permute.xlu0 %2029
  %v2032 = vadd.f32 %v2012, %v2030
  %2034 = vrot.lane.b32.xlu0 %v2027, 126
  %v2035 = vpop.permute.xlu0 %2034
  %v2037 = vadd.f32 %v2017, %v2035
  %vm2038 = vcmask 27648
  %2039 = vst.msk [vmem:[%s11] sm:$0xf] %vm2038, %v2032
  %2040 = vst.msk [vmem:[%s12] sm:$0xf] %vm2038, %v2037
  %v2041 = vld [vmem:[%s7] sm:$0xf]
  %vm2042 = vcmask 31744
  %v2044 = vsel %vm2042, %v2032, 0
  %vm2046 = vcmask 1043456
  %v2048 = vsel %vm2046, %v2041, 0
  %2050 = vmatprep.subr.mxu0 0.0
  %v2051 = vand.u32 %v2048, 4294901760
  %2052 = vmatpush1.msra.mxu0 %v2051
  %2053 = vmatprep.subr.mxu0 0.0
  %2054 = vmatpush1.msra.mxu0 0.0
  %2055 = vmatprep.subr.mxu0 0.0
  %2056 = vmatpush1.msra.mxu0 0.0
  %2057 = vmatprep.subr.mxu0 0.0
  %2058 = vmatpush1.msra.mxu0 0.0
  %2059 = vmatprep.subr.mxu0 0.0
  %2060 = vmatpush1.msra.mxu0 0.0
  %2061 = vmatprep.subr.mxu0 0.0
  %2062 = vmatpush1.msra.mxu0 0.0
  %2063 = vmatprep.subr.mxu0 0.0
  %2064 = vmatpush1.msra.mxu0 0.0
  %2065 = vmatprep.subr.mxu0 0.0
  %2066 = vmatpush1.msra.mxu0 0.0
  %2067 = vmatprep.subr.mxu0 0.0
  %2068 = vmatpush1.msra.mxu0 0.0
  %2069 = vmatprep.subr.mxu0 0.0
  %2070 = vmatpush1.msra.mxu0 0.0
  %2071 = vmatprep.subr.mxu0 0.0
  %2072 = vmatpush1.msra.mxu0 0.0
  %2073 = vmatprep.subr.mxu0 0.0
  %2074 = vmatpush1.msra.mxu0 0.0
  %2075 = vmatprep.subr.mxu0 0.0
  %2076 = vmatpush1.msra.mxu0 0.0
  %2077 = vmatprep.subr.mxu0 0.0
  %2078 = vmatpush1.msra.mxu0 0.0
  %2079 = vmatprep.subr.mxu0 0.0
  %2080 = vmatpush1.msra.mxu0 0.0
  %2081 = vmatprep.subr.mxu0 0.0
  %2082 = vmatpush1.msra.mxu0 0.0
  %2083 = vmatprep.subr.mxu0 0.0
  %2084 = vmatpush1.msra.mxu0 0.0
  %2085 = vmatprep.subr.mxu0 0.0
  %2086 = vmatpush1.msra.mxu0 0.0
  %2087 = vmatprep.subr.mxu0 0.0
  %2088 = vmatpush1.msra.mxu0 0.0
  %2089 = vmatprep.subr.mxu0 0.0
  %2090 = vmatpush1.msra.mxu0 0.0
  %2091 = vmatprep.subr.mxu0 0.0
  %2092 = vmatpush1.msra.mxu0 0.0
  %2093 = vmatprep.subr.mxu0 0.0
  %2094 = vmatpush1.msra.mxu0 0.0
  %2095 = vmatprep.subr.mxu0 0.0
  %2096 = vmatpush1.msra.mxu0 0.0
  %2097 = vmatprep.subr.mxu0 0.0
  %2098 = vmatpush1.msra.mxu0 0.0
  %2099 = vmatprep.subr.mxu0 0.0
  %2100 = vmatpush1.msra.mxu0 0.0
  %2101 = vmatprep.subr.mxu0 0.0
  %2102 = vmatpush1.msra.mxu0 0.0
  %2103 = vmatprep.subr.mxu0 0.0
  %2104 = vmatpush1.msra.mxu0 0.0
  %2105 = vmatprep.subr.mxu0 0.0
  %2106 = vmatpush1.msra.mxu0 0.0
  %2107 = vmatprep.subr.mxu0 0.0
  %2108 = vmatpush1.msra.mxu0 0.0
  %2109 = vmatprep.subr.mxu0 0.0
  %2110 = vmatpush1.msra.mxu0 0.0
  %2111 = vmatprep.subr.mxu0 0.0
  %2112 = vmatpush1.msra.mxu0 0.0
  %2113 = vmatprep.subr.mxu0 0.0
  %2114 = vmatpush1.msra.mxu0 0.0
  %2115 = vmatprep.mubr.f32.mxu0 0.0
  %v2116 = vand.u32 %v2044, 4294901760
  %v2117 = vsub.f32 %v2044, %v2116
  %v2118 = vand.u32 %v2117, 4294901760
  %v2119 = vsub.f32 %v2117, %v2118
  %v2120 = vand.u32 %v2119, 4294901760
  %2121 = vmatmul.mubr.f32.gmra.mrb[0].mxu0 %v2120
  %v2122 = vpop.f32.mrb[0].mxu0
  %v2123 = vadd.f32 0.0, %v2122
  %v2124 = vpop.f32.mrb[0].mxu0
  %2125 = vdwg.mxu0
  %2126 = vmatprep.subr.mxu0 0.0
  %v2127 = vand.u32 %v2048, 4294901760
  %v2128 = vsub.f32 %v2048, %v2127
  %v2129 = vand.u32 %v2128, 4294901760
  %v2130 = vsub.f32 %v2128, %v2129
  %v2131 = vand.u32 %v2130, 4294901760
  %2132 = vmatpush1.msra.mxu0 %v2131
  %2133 = vmatprep.subr.mxu0 0.0
  %2134 = vmatpush1.msra.mxu0 0.0
  %2135 = vmatprep.subr.mxu0 0.0
  %2136 = vmatpush1.msra.mxu0 0.0
  %2137 = vmatprep.subr.mxu0 0.0
  %2138 = vmatpush1.msra.mxu0 0.0
  %2139 = vmatprep.subr.mxu0 0.0
  %2140 = vmatpush1.msra.mxu0 0.0
  %2141 = vmatprep.subr.mxu0 0.0
  %2142 = vmatpush1.msra.mxu0 0.0
  %2143 = vmatprep.subr.mxu0 0.0
  %2144 = vmatpush1.msra.mxu0 0.0
  %2145 = vmatprep.subr.mxu0 0.0
  %2146 = vmatpush1.msra.mxu0 0.0
  %2147 = vmatprep.subr.mxu0 0.0
  %2148 = vmatpush1.msra.mxu0 0.0
  %2149 = vmatprep.subr.mxu0 0.0
  %2150 = vmatpush1.msra.mxu0 0.0
  %2151 = vmatprep.subr.mxu0 0.0
  %2152 = vmatpush1.msra.mxu0 0.0
  %2153 = vmatprep.subr.mxu0 0.0
  %2154 = vmatpush1.msra.mxu0 0.0
  %2155 = vmatprep.subr.mxu0 0.0
  %2156 = vmatpush1.msra.mxu0 0.0
  %2157 = vmatprep.subr.mxu0 0.0
  %2158 = vmatpush1.msra.mxu0 0.0
  %2159 = vmatprep.subr.mxu0 0.0
  %2160 = vmatpush1.msra.mxu0 0.0
  %2161 = vmatprep.subr.mxu0 0.0
  %2162 = vmatpush1.msra.mxu0 0.0
  %2163 = vmatprep.subr.mxu0 0.0
  %2164 = vmatpush1.msra.mxu0 0.0
  %2165 = vmatprep.subr.mxu0 0.0
  %2166 = vmatpush1.msra.mxu0 0.0
  %2167 = vmatprep.subr.mxu0 0.0
  %2168 = vmatpush1.msra.mxu0 0.0
  %2169 = vmatprep.subr.mxu0 0.0
  %2170 = vmatpush1.msra.mxu0 0.0
  %2171 = vmatprep.subr.mxu0 0.0
  %2172 = vmatpush1.msra.mxu0 0.0
  %2173 = vmatprep.subr.mxu0 0.0
  %2174 = vmatpush1.msra.mxu0 0.0
  %2175 = vmatprep.subr.mxu0 0.0
  %2176 = vmatpush1.msra.mxu0 0.0
  %2177 = vmatprep.subr.mxu0 0.0
  %2178 = vmatpush1.msra.mxu0 0.0
  %2179 = vmatprep.subr.mxu0 0.0
  %2180 = vmatpush1.msra.mxu0 0.0
  %2181 = vmatprep.subr.mxu0 0.0
  %2182 = vmatpush1.msra.mxu0 0.0
  %2183 = vmatprep.subr.mxu0 0.0
  %2184 = vmatpush1.msra.mxu0 0.0
  %2185 = vmatprep.subr.mxu0 0.0
  %2186 = vmatpush1.msra.mxu0 0.0
  %2187 = vmatprep.subr.mxu0 0.0
  %2188 = vmatpush1.msra.mxu0 0.0
  %2189 = vmatprep.subr.mxu0 0.0
  %2190 = vmatpush1.msra.mxu0 0.0
  %2191 = vmatprep.subr.mxu0 0.0
  %2192 = vmatpush1.msra.mxu0 0.0
  %2193 = vmatprep.subr.mxu0 0.0
  %2194 = vmatpush1.msra.mxu0 0.0
  %2195 = vmatprep.mubr.f32.mxu0 0.0
  %v2196 = vand.u32 %v2044, 4294901760
  %2197 = vmatmul.mubr.f32.gmra.mrb[0].mxu0 %v2196
  %v2198 = vpop.f32.mrb[0].mxu0
  %v2199 = vadd.f32 %v2123, %v2198
  %v2200 = vpop.f32.mrb[0].mxu0
  %2201 = vdwg.mxu0
  %2202 = vmatprep.subr.mxu0 0.0
  %v2203 = vand.u32 %v2048, 4294901760
  %v2204 = vsub.f32 %v2048, %v2203
  %2205 = vmatpush1.msra.mxu0 %v2204
  %2206 = vmatprep.subr.mxu0 0.0
  %2207 = vmatpush1.msra.mxu0 0.0
  %2208 = vmatprep.subr.mxu0 0.0
  %2209 = vmatpush1.msra.mxu0 0.0
  %2210 = vmatprep.subr.mxu0 0.0
  %2211 = vmatpush1.msra.mxu0 0.0
  %2212 = vmatprep.subr.mxu0 0.0
  %2213 = vmatpush1.msra.mxu0 0.0
  %2214 = vmatprep.subr.mxu0 0.0
  %2215 = vmatpush1.msra.mxu0 0.0
  %2216 = vmatprep.subr.mxu0 0.0
  %2217 = vmatpush1.msra.mxu0 0.0
  %2218 = vmatprep.subr.mxu0 0.0
  %2219 = vmatpush1.msra.mxu0 0.0
  %2220 = vmatprep.subr.mxu0 0.0
  %2221 = vmatpush1.msra.mxu0 0.0
  %2222 = vmatprep.subr.mxu0 0.0
  %2223 = vmatpush1.msra.mxu0 0.0
  %2224 = vmatprep.subr.mxu0 0.0
  %2225 = vmatpush1.msra.mxu0 0.0
  %2226 = vmatprep.subr.mxu0 0.0
  %2227 = vmatpush1.msra.mxu0 0.0
  %2228 = vmatprep.subr.mxu0 0.0
  %2229 = vmatpush1.msra.mxu0 0.0
  %2230 = vmatprep.subr.mxu0 0.0
  %2231 = vmatpush1.msra.mxu0 0.0
  %2232 = vmatprep.subr.mxu0 0.0
  %2233 = vmatpush1.msra.mxu0 0.0
  %2234 = vmatprep.subr.mxu0 0.0
  %2235 = vmatpush1.msra.mxu0 0.0
  %2236 = vmatprep.subr.mxu0 0.0
  %2237 = vmatpush1.msra.mxu0 0.0
  %2238 = vmatprep.subr.mxu0 0.0
  %2239 = vmatpush1.msra.mxu0 0.0
  %2240 = vmatprep.subr.mxu0 0.0
  %2241 = vmatpush1.msra.mxu0 0.0
  %2242 = vmatprep.subr.mxu0 0.0
  %2243 = vmatpush1.msra.mxu0 0.0
  %2244 = vmatprep.subr.mxu0 0.0
  %2245 = vmatpush1.msra.mxu0 0.0
  %2246 = vmatprep.subr.mxu0 0.0
  %2247 = vmatpush1.msra.mxu0 0.0
  %2248 = vmatprep.subr.mxu0 0.0
  %2249 = vmatpush1.msra.mxu0 0.0
  %2250 = vmatprep.subr.mxu0 0.0
  %2251 = vmatpush1.msra.mxu0 0.0
  %2252 = vmatprep.subr.mxu0 0.0
  %2253 = vmatpush1.msra.mxu0 0.0
  %2254 = vmatprep.subr.mxu0 0.0
  %2255 = vmatpush1.msra.mxu0 0.0
  %2256 = vmatprep.subr.mxu0 0.0
  %2257 = vmatpush1.msra.mxu0 0.0
  %2258 = vmatprep.subr.mxu0 0.0
  %2259 = vmatpush1.msra.mxu0 0.0
  %2260 = vmatprep.subr.mxu0 0.0
  %2261 = vmatpush1.msra.mxu0 0.0
  %2262 = vmatprep.subr.mxu0 0.0
  %2263 = vmatpush1.msra.mxu0 0.0
  %2264 = vmatprep.subr.mxu0 0.0
  %2265 = vmatpush1.msra.mxu0 0.0
  %2266 = vmatprep.subr.mxu0 0.0
  %2267 = vmatpush1.msra.mxu0 0.0
  %2268 = vmatprep.mubr.f32.mxu0 0.0
  %v2269 = vand.u32 %v2044, 4294901760
  %v2270 = vsub.f32 %v2044, %v2269
  %2271 = vmatmul.mubr.f32.gmra.mrb[0].mxu0 %v2270
  %v2272 = vpop.f32.mrb[0].mxu0
  %v2273 = vadd.f32 %v2199, %v2272
  %v2274 = vpop.f32.mrb[0].mxu0
  %2275 = vdwg.mxu0
  %2276 = vmatprep.subr.mxu0 0.0
  %v2277 = vand.u32 %v2048, 4294901760
  %2278 = vmatpush1.msra.mxu0 %v2277
  %2279 = vmatprep.subr.mxu0 0.0
  %2280 = vmatpush1.msra.mxu0 0.0
  %2281 = vmatprep.subr.mxu0 0.0
  %2282 = vmatpush1.msra.mxu0 0.0
  %2283 = vmatprep.subr.mxu0 0.0
  %2284 = vmatpush1.msra.mxu0 0.0
  %2285 = vmatprep.subr.mxu0 0.0
  %2286 = vmatpush1.msra.mxu0 0.0
  %2287 = vmatprep.subr.mxu0 0.0
  %2288 = vmatpush1.msra.mxu0 0.0
  %2289 = vmatprep.subr.mxu0 0.0
  %2290 = vmatpush1.msra.mxu0 0.0
  %2291 = vmatprep.subr.mxu0 0.0
  %2292 = vmatpush1.msra.mxu0 0.0
  %2293 = vmatprep.subr.mxu0 0.0
  %2294 = vmatpush1.msra.mxu0 0.0
  %2295 = vmatprep.subr.mxu0 0.0
  %2296 = vmatpush1.msra.mxu0 0.0
  %2297 = vmatprep.subr.mxu0 0.0
  %2298 = vmatpush1.msra.mxu0 0.0
  %2299 = vmatprep.subr.mxu0 0.0
  %2300 = vmatpush1.msra.mxu0 0.0
  %2301 = vmatprep.subr.mxu0 0.0
  %2302 = vmatpush1.msra.mxu0 0.0
  %2303 = vmatprep.subr.mxu0 0.0
  %2304 = vmatpush1.msra.mxu0 0.0
  %2305 = vmatprep.subr.mxu0 0.0
  %2306 = vmatpush1.msra.mxu0 0.0
  %2307 = vmatprep.subr.mxu0 0.0
  %2308 = vmatpush1.msra.mxu0 0.0
  %2309 = vmatprep.subr.mxu0 0.0
  %2310 = vmatpush1.msra.mxu0 0.0
  %2311 = vmatprep.subr.mxu0 0.0
  %2312 = vmatpush1.msra.mxu0 0.0
  %2313 = vmatprep.subr.mxu0 0.0
  %2314 = vmatpush1.msra.mxu0 0.0
  %2315 = vmatprep.subr.mxu0 0.0
  %2316 = vmatpush1.msra.mxu0 0.0
  %2317 = vmatprep.subr.mxu0 0.0
  %2318 = vmatpush1.msra.mxu0 0.0
  %2319 = vmatprep.subr.mxu0 0.0
  %2320 = vmatpush1.msra.mxu0 0.0
  %2321 = vmatprep.subr.mxu0 0.0
  %2322 = vmatpush1.msra.mxu0 0.0
  %2323 = vmatprep.subr.mxu0 0.0
  %2324 = vmatpush1.msra.mxu0 0.0
  %2325 = vmatprep.subr.mxu0 0.0
  %2326 = vmatpush1.msra.mxu0 0.0
  %2327 = vmatprep.subr.mxu0 0.0
  %2328 = vmatpush1.msra.mxu0 0.0
  %2329 = vmatprep.subr.mxu0 0.0
  %2330 = vmatpush1.msra.mxu0 0.0
  %2331 = vmatprep.subr.mxu0 0.0
  %2332 = vmatpush1.msra.mxu0 0.0
  %2333 = vmatprep.subr.mxu0 0.0
  %2334 = vmatpush1.msra.mxu0 0.0
  %2335 = vmatprep.subr.mxu0 0.0
  %2336 = vmatpush1.msra.mxu0 0.0
  %2337 = vmatprep.subr.mxu0 0.0
  %2338 = vmatpush1.msra.mxu0 0.0
  %2339 = vmatprep.subr.mxu0 0.0
  %2340 = vmatpush1.msra.mxu0 0.0
  %2341 = vmatprep.mubr.f32.mxu0 0.0
  %v2342 = vand.u32 %v2044, 4294901760
  %v2343 = vsub.f32 %v2044, %v2342
  %v2344 = vand.u32 %v2343, 4294901760
  %2345 = vmatmul.mubr.f32.gmra.mrb[0].mxu0 %v2344
  %v2346 = vpop.f32.mrb[0].mxu0
  %v2347 = vadd.f32 %v2273, %v2346
  %v2348 = vpop.f32.mrb[0].mxu0
  %2349 = vdwg.mxu0
  %2350 = vmatprep.subr.mxu0 0.0
  %v2351 = vand.u32 %v2048, 4294901760
  %v2352 = vsub.f32 %v2048, %v2351
  %v2353 = vand.u32 %v2352, 4294901760
  %2354 = vmatpush1.msra.mxu0 %v2353
  %2355 = vmatprep.subr.mxu0 0.0
  %2356 = vmatpush1.msra.mxu0 0.0
  %2357 = vmatprep.subr.mxu0 0.0
  %2358 = vmatpush1.msra.mxu0 0.0
  %2359 = vmatprep.subr.mxu0 0.0
  %2360 = vmatpush1.msra.mxu0 0.0
  %2361 = vmatprep.subr.mxu0 0.0
  %2362 = vmatpush1.msra.mxu0 0.0
  %2363 = vmatprep.subr.mxu0 0.0
  %2364 = vmatpush1.msra.mxu0 0.0
  %2365 = vmatprep.subr.mxu0 0.0
  %2366 = vmatpush1.msra.mxu0 0.0
  %2367 = vmatprep.subr.mxu0 0.0
  %2368 = vmatpush1.msra.mxu0 0.0
  %2369 = vmatprep.subr.mxu0 0.0
  %2370 = vmatpush1.msra.mxu0 0.0
  %2371 = vmatprep.subr.mxu0 0.0
  %2372 = vmatpush1.msra.mxu0 0.0
  %2373 = vmatprep.subr.mxu0 0.0
  %2374 = vmatpush1.msra.mxu0 0.0
  %2375 = vmatprep.subr.mxu0 0.0
  %2376 = vmatpush1.msra.mxu0 0.0
  %2377 = vmatprep.subr.mxu0 0.0
  %2378 = vmatpush1.msra.mxu0 0.0
  %2379 = vmatprep.subr.mxu0 0.0
  %2380 = vmatpush1.msra.mxu0 0.0
  %2381 = vmatprep.subr.mxu0 0.0
  %2382 = vmatpush1.msra.mxu0 0.0
  %2383 = vmatprep.subr.mxu0 0.0
  %2384 = vmatpush1.msra.mxu0 0.0
  %2385 = vmatprep.subr.mxu0 0.0
  %2386 = vmatpush1.msra.mxu0 0.0
  %2387 = vmatprep.subr.mxu0 0.0
  %2388 = vmatpush1.msra.mxu0 0.0
  %2389 = vmatprep.subr.mxu0 0.0
  %2390 = vmatpush1.msra.mxu0 0.0
  %2391 = vmatprep.subr.mxu0 0.0
  %2392 = vmatpush1.msra.mxu0 0.0
  %2393 = vmatprep.subr.mxu0 0.0
  %2394 = vmatpush1.msra.mxu0 0.0
  %2395 = vmatprep.subr.mxu0 0.0
  %2396 = vmatpush1.msra.mxu0 0.0
  %2397 = vmatprep.subr.mxu0 0.0
  %2398 = vmatpush1.msra.mxu0 0.0
  %2399 = vmatprep.subr.mxu0 0.0
  %2400 = vmatpush1.msra.mxu0 0.0
  %2401 = vmatprep.subr.mxu0 0.0
  %2402 = vmatpush1.msra.mxu0 0.0
  %2403 = vmatprep.subr.mxu0 0.0
  %2404 = vmatpush1.msra.mxu0 0.0
  %2405 = vmatprep.subr.mxu0 0.0
  %2406 = vmatpush1.msra.mxu0 0.0
  %2407 = vmatprep.subr.mxu0 0.0
  %2408 = vmatpush1.msra.mxu0 0.0
  %2409 = vmatprep.subr.mxu0 0.0
  %2410 = vmatpush1.msra.mxu0 0.0
  %2411 = vmatprep.subr.mxu0 0.0
  %2412 = vmatpush1.msra.mxu0 0.0
  %2413 = vmatprep.subr.mxu0 0.0
  %2414 = vmatpush1.msra.mxu0 0.0
  %2415 = vmatprep.subr.mxu0 0.0
  %2416 = vmatpush1.msra.mxu0 0.0
  %2417 = vmatprep.mubr.f32.mxu0 0.0
  %v2418 = vand.u32 %v2044, 4294901760
  %2419 = vmatmul.mubr.f32.gmra.mrb[0].mxu0 %v2418
  %v2420 = vpop.f32.mrb[0].mxu0
  %v2421 = vadd.f32 %v2347, %v2420
  %v2422 = vpop.f32.mrb[0].mxu0
  %2423 = vdwg.mxu0
  %2424 = vmatprep.subr.mxu0 0.0
  %v2425 = vand.u32 %v2048, 4294901760
  %2426 = vmatpush1.msra.mxu0 %v2425
  %2427 = vmatprep.subr.mxu0 0.0
  %2428 = vmatpush1.msra.mxu0 0.0
  %2429 = vmatprep.subr.mxu0 0.0
  %2430 = vmatpush1.msra.mxu0 0.0
  %2431 = vmatprep.subr.mxu0 0.0
  %2432 = vmatpush1.msra.mxu0 0.0
  %2433 = vmatprep.subr.mxu0 0.0
  %2434 = vmatpush1.msra.mxu0 0.0
  %2435 = vmatprep.subr.mxu0 0.0
  %2436 = vmatpush1.msra.mxu0 0.0
  %2437 = vmatprep.subr.mxu0 0.0
  %2438 = vmatpush1.msra.mxu0 0.0
  %2439 = vmatprep.subr.mxu0 0.0
  %2440 = vmatpush1.msra.mxu0 0.0
  %2441 = vmatprep.subr.mxu0 0.0
  %2442 = vmatpush1.msra.mxu0 0.0
  %2443 = vmatprep.subr.mxu0 0.0
  %2444 = vmatpush1.msra.mxu0 0.0
  %2445 = vmatprep.subr.mxu0 0.0
  %2446 = vmatpush1.msra.mxu0 0.0
  %2447 = vmatprep.subr.mxu0 0.0
  %2448 = vmatpush1.msra.mxu0 0.0
  %2449 = vmatprep.subr.mxu0 0.0
  %2450 = vmatpush1.msra.mxu0 0.0
  %2451 = vmatprep.subr.mxu0 0.0
  %2452 = vmatpush1.msra.mxu0 0.0
  %2453 = vmatprep.subr.mxu0 0.0
  %2454 = vmatpush1.msra.mxu0 0.0
  %2455 = vmatprep.subr.mxu0 0.0
  %2456 = vmatpush1.msra.mxu0 0.0
  %2457 = vmatprep.subr.mxu0 0.0
  %2458 = vmatpush1.msra.mxu0 0.0
  %2459 = vmatprep.subr.mxu0 0.0
  %2460 = vmatpush1.msra.mxu0 0.0
  %2461 = vmatprep.subr.mxu0 0.0
  %2462 = vmatpush1.msra.mxu0 0.0
  %2463 = vmatprep.subr.mxu0 0.0
  %2464 = vmatpush1.msra.mxu0 0.0
  %2465 = vmatprep.subr.mxu0 0.0
  %2466 = vmatpush1.msra.mxu0 0.0
  %2467 = vmatprep.subr.mxu0 0.0
  %2468 = vmatpush1.msra.mxu0 0.0
  %2469 = vmatprep.subr.mxu0 0.0
  %2470 = vmatpush1.msra.mxu0 0.0
  %2471 = vmatprep.subr.mxu0 0.0
  %2472 = vmatpush1.msra.mxu0 0.0
  %2473 = vmatprep.subr.mxu0 0.0
  %2474 = vmatpush1.msra.mxu0 0.0
  %2475 = vmatprep.subr.mxu0 0.0
  %2476 = vmatpush1.msra.mxu0 0.0
  %2477 = vmatprep.subr.mxu0 0.0
  %2478 = vmatpush1.msra.mxu0 0.0
  %2479 = vmatprep.subr.mxu0 0.0
  %2480 = vmatpush1.msra.mxu0 0.0
  %2481 = vmatprep.subr.mxu0 0.0
  %2482 = vmatpush1.msra.mxu0 0.0
  %2483 = vmatprep.subr.mxu0 0.0
  %2484 = vmatpush1.msra.mxu0 0.0
  %2485 = vmatprep.subr.mxu0 0.0
  %2486 = vmatpush1.msra.mxu0 0.0
  %2487 = vmatprep.subr.mxu0 0.0
  %2488 = vmatpush1.msra.mxu0 0.0
  %2489 = vmatprep.mubr.f32.mxu0 0.0
  %v2490 = vand.u32 %v2044, 4294901760
  %2491 = vmatmul.mubr.f32.gmra.mrb[0].mxu0 %v2490
  %v2492 = vpop.f32.mrb[0].mxu0
  %v2493 = vadd.f32 %v2421, %v2492
  %v2494 = vpop.f32.mrb[0].mxu0
  %2495 = vdwg.mxu0
  %v2496 = vld [vmem:[%s8] sm:$0xf]
  %v2498 = vsel %vm2046, %v2496, 0
  %2500 = vmatprep.subr.mxu0 0.0
  %v2501 = vand.u32 %v2498, 4294901760
  %2502 = vmatpush1.msra.mxu0 %v2501
  %2503 = vmatprep.subr.mxu0 0.0
  %2504 = vmatpush1.msra.mxu0 0.0
  %2505 = vmatprep.subr.mxu0 0.0
  %2506 = vmatpush1.msra.mxu0 0.0
  %2507 = vmatprep.subr.mxu0 0.0
  %2508 = vmatpush1.msra.mxu0 0.0
  %2509 = vmatprep.subr.mxu0 0.0
  %2510 = vmatpush1.msra.mxu0 0.0
  %2511 = vmatprep.subr.mxu0 0.0
  %2512 = vmatpush1.msra.mxu0 0.0
  %2513 = vmatprep.subr.mxu0 0.0
  %2514 = vmatpush1.msra.mxu0 0.0
  %2515 = vmatprep.subr.mxu0 0.0
  %2516 = vmatpush1.msra.mxu0 0.0
  %2517 = vmatprep.subr.mxu0 0.0
  %2518 = vmatpush1.msra.mxu0 0.0
  %2519 = vmatprep.subr.mxu0 0.0
  %2520 = vmatpush1.msra.mxu0 0.0
  %2521 = vmatprep.subr.mxu0 0.0
  %2522 = vmatpush1.msra.mxu0 0.0
  %2523 = vmatprep.subr.mxu0 0.0
  %2524 = vmatpush1.msra.mxu0 0.0
  %2525 = vmatprep.subr.mxu0 0.0
  %2526 = vmatpush1.msra.mxu0 0.0
  %2527 = vmatprep.subr.mxu0 0.0
  %2528 = vmatpush1.msra.mxu0 0.0
  %2529 = vmatprep.subr.mxu0 0.0
  %2530 = vmatpush1.msra.mxu0 0.0
  %2531 = vmatprep.subr.mxu0 0.0
  %2532 = vmatpush1.msra.mxu0 0.0
  %2533 = vmatprep.subr.mxu0 0.0
  %2534 = vmatpush1.msra.mxu0 0.0
  %2535 = vmatprep.subr.mxu0 0.0
  %2536 = vmatpush1.msra.mxu0 0.0
  %2537 = vmatprep.subr.mxu0 0.0
  %2538 = vmatpush1.msra.mxu0 0.0
  %2539 = vmatprep.subr.mxu0 0.0
  %2540 = vmatpush1.msra.mxu0 0.0
  %2541 = vmatprep.subr.mxu0 0.0
  %2542 = vmatpush1.msra.mxu0 0.0
  %2543 = vmatprep.subr.mxu0 0.0
  %2544 = vmatpush1.msra.mxu0 0.0
  %2545 = vmatprep.subr.mxu0 0.0
  %2546 = vmatpush1.msra.mxu0 0.0
  %2547 = vmatprep.subr.mxu0 0.0
  %2548 = vmatpush1.msra.mxu0 0.0
  %2549 = vmatprep.subr.mxu0 0.0
  %2550 = vmatpush1.msra.mxu0 0.0
  %2551 = vmatprep.subr.mxu0 0.0
  %2552 = vmatpush1.msra.mxu0 0.0
  %2553 = vmatprep.subr.mxu0 0.0
  %2554 = vmatpush1.msra.mxu0 0.0
  %2555 = vmatprep.subr.mxu0 0.0
  %2556 = vmatpush1.msra.mxu0 0.0
  %2557 = vmatprep.subr.mxu0 0.0
  %2558 = vmatpush1.msra.mxu0 0.0
  %2559 = vmatprep.subr.mxu0 0.0
  %2560 = vmatpush1.msra.mxu0 0.0
  %2561 = vmatprep.subr.mxu0 0.0
  %2562 = vmatpush1.msra.mxu0 0.0
  %2563 = vmatprep.subr.mxu0 0.0
  %2564 = vmatpush1.msra.mxu0 0.0
  %2565 = vmatprep.mubr.f32.mxu0 0.0
  %v2566 = vand.u32 %v2044, 4294901760
  %v2567 = vsub.f32 %v2044, %v2566
  %v2568 = vand.u32 %v2567, 4294901760
  %v2569 = vsub.f32 %v2567, %v2568
  %v2570 = vand.u32 %v2569, 4294901760
  %2571 = vmatmul.mubr.f32.gmra.mrb[0].mxu0 %v2570
  %v2572 = vpop.f32.mrb[0].mxu0
  %v2573 = vadd.f32 0.0, %v2572
  %v2574 = vpop.f32.mrb[0].mxu0
  %2575 = vdwg.mxu0
  %2576 = vmatprep.subr.mxu0 0.0
  %v2577 = vand.u32 %v2498, 4294901760
  %v2578 = vsub.f32 %v2498, %v2577
  %v2579 = vand.u32 %v2578, 4294901760
  %v2580 = vsub.f32 %v2578, %v2579
  %v2581 = vand.u32 %v2580, 4294901760
  %2582 = vmatpush1.msra.mxu0 %v2581
  %2583 = vmatprep.subr.mxu0 0.0
  %2584 = vmatpush1.msra.mxu0 0.0
  %2585 = vmatprep.subr.mxu0 0.0
  %2586 = vmatpush1.msra.mxu0 0.0
  %2587 = vmatprep.subr.mxu0 0.0
  %2588 = vmatpush1.msra.mxu0 0.0
  %2589 = vmatprep.subr.mxu0 0.0
  %2590 = vmatpush1.msra.mxu0 0.0
  %2591 = vmatprep.subr.mxu0 0.0
  %2592 = vmatpush1.msra.mxu0 0.0
  %2593 = vmatprep.subr.mxu0 0.0
  %2594 = vmatpush1.msra.mxu0 0.0
  %2595 = vmatprep.subr.mxu0 0.0
  %2596 = vmatpush1.msra.mxu0 0.0
  %2597 = vmatprep.subr.mxu0 0.0
  %2598 = vmatpush1.msra.mxu0 0.0
  %2599 = vmatprep.subr.mxu0 0.0
  %2600 = vmatpush1.msra.mxu0 0.0
  %2601 = vmatprep.subr.mxu0 0.0
  %2602 = vmatpush1.msra.mxu0 0.0
  %2603 = vmatprep.subr.mxu0 0.0
  %2604 = vmatpush1.msra.mxu0 0.0
  %2605 = vmatprep.subr.mxu0 0.0
  %2606 = vmatpush1.msra.mxu0 0.0
  %2607 = vmatprep.subr.mxu0 0.0
  %2608 = vmatpush1.msra.mxu0 0.0
  %2609 = vmatprep.subr.mxu0 0.0
  %2610 = vmatpush1.msra.mxu0 0.0
  %2611 = vmatprep.subr.mxu0 0.0
  %2612 = vmatpush1.msra.mxu0 0.0
  %2613 = vmatprep.subr.mxu0 0.0
  %2614 = vmatpush1.msra.mxu0 0.0
  %2615 = vmatprep.subr.mxu0 0.0
  %2616 = vmatpush1.msra.mxu0 0.0
  %2617 = vmatprep.subr.mxu0 0.0
  %2618 = vmatpush1.msra.mxu0 0.0
  %2619 = vmatprep.subr.mxu0 0.0
  %2620 = vmatpush1.msra.mxu0 0.0
  %2621 = vmatprep.subr.mxu0 0.0
  %2622 = vmatpush1.msra.mxu0 0.0
  %2623 = vmatprep.subr.mxu0 0.0
  %2624 = vmatpush1.msra.mxu0 0.0
  %2625 = vmatprep.subr.mxu0 0.0
  %2626 = vmatpush1.msra.mxu0 0.0
  %2627 = vmatprep.subr.mxu0 0.0
  %2628 = vmatpush1.msra.mxu0 0.0
  %2629 = vmatprep.subr.mxu0 0.0
  %2630 = vmatpush1.msra.mxu0 0.0
  %2631 = vmatprep.subr.mxu0 0.0
  %2632 = vmatpush1.msra.mxu0 0.0
  %2633 = vmatprep.subr.mxu0 0.0
  %2634 = vmatpush1.msra.mxu0 0.0
  %2635 = vmatprep.subr.mxu0 0.0
  %2636 = vmatpush1.msra.mxu0 0.0
  %2637 = vmatprep.subr.mxu0 0.0
  %2638 = vmatpush1.msra.mxu0 0.0
  %2639 = vmatprep.subr.mxu0 0.0
  %2640 = vmatpush1.msra.mxu0 0.0
  %2641 = vmatprep.subr.mxu0 0.0
  %2642 = vmatpush1.msra.mxu0 0.0
  %2643 = vmatprep.subr.mxu0 0.0
  %2644 = vmatpush1.msra.mxu0 0.0
  %2645 = vmatprep.mubr.f32.mxu0 0.0
  %v2646 = vand.u32 %v2044, 4294901760
  %2647 = vmatmul.mubr.f32.gmra.mrb[0].mxu0 %v2646
  %v2648 = vpop.f32.mrb[0].mxu0
  %v2649 = vadd.f32 %v2573, %v2648
  %v2650 = vpop.f32.mrb[0].mxu0
  %2651 = vdwg.mxu0
  %2652 = vmatprep.subr.mxu0 0.0
  %v2653 = vand.u32 %v2498, 4294901760
  %v2654 = vsub.f32 %v2498, %v2653
  %2655 = vmatpush1.msra.mxu0 %v2654
  %2656 = vmatprep.subr.mxu0 0.0
  %2657 = vmatpush1.msra.mxu0 0.0
  %2658 = vmatprep.subr.mxu0 0.0
  %2659 = vmatpush1.msra.mxu0 0.0
  %2660 = vmatprep.subr.mxu0 0.0
  %2661 = vmatpush1.msra.mxu0 0.0
  %2662 = vmatprep.subr.mxu0 0.0
  %2663 = vmatpush1.msra.mxu0 0.0
  %2664 = vmatprep.subr.mxu0 0.0
  %2665 = vmatpush1.msra.mxu0 0.0
  %2666 = vmatprep.subr.mxu0 0.0
  %2667 = vmatpush1.msra.mxu0 0.0
  %2668 = vmatprep.subr.mxu0 0.0
  %2669 = vmatpush1.msra.mxu0 0.0
  %2670 = vmatprep.subr.mxu0 0.0
  %2671 = vmatpush1.msra.mxu0 0.0
  %2672 = vmatprep.subr.mxu0 0.0
  %2673 = vmatpush1.msra.mxu0 0.0
  %2674 = vmatprep.subr.mxu0 0.0
  %2675 = vmatpush1.msra.mxu0 0.0
  %2676 = vmatprep.subr.mxu0 0.0
  %2677 = vmatpush1.msra.mxu0 0.0
  %2678 = vmatprep.subr.mxu0 0.0
  %2679 = vmatpush1.msra.mxu0 0.0
  %2680 = vmatprep.subr.mxu0 0.0
  %2681 = vmatpush1.msra.mxu0 0.0
  %2682 = vmatprep.subr.mxu0 0.0
  %2683 = vmatpush1.msra.mxu0 0.0
  %2684 = vmatprep.subr.mxu0 0.0
  %2685 = vmatpush1.msra.mxu0 0.0
  %2686 = vmatprep.subr.mxu0 0.0
  %2687 = vmatpush1.msra.mxu0 0.0
  %2688 = vmatprep.subr.mxu0 0.0
  %2689 = vmatpush1.msra.mxu0 0.0
  %2690 = vmatprep.subr.mxu0 0.0
  %2691 = vmatpush1.msra.mxu0 0.0
  %2692 = vmatprep.subr.mxu0 0.0
  %2693 = vmatpush1.msra.mxu0 0.0
  %2694 = vmatprep.subr.mxu0 0.0
  %2695 = vmatpush1.msra.mxu0 0.0
  %2696 = vmatprep.subr.mxu0 0.0
  %2697 = vmatpush1.msra.mxu0 0.0
  %2698 = vmatprep.subr.mxu0 0.0
  %2699 = vmatpush1.msra.mxu0 0.0
  %2700 = vmatprep.subr.mxu0 0.0
  %2701 = vmatpush1.msra.mxu0 0.0
  %2702 = vmatprep.subr.mxu0 0.0
  %2703 = vmatpush1.msra.mxu0 0.0
  %2704 = vmatprep.subr.mxu0 0.0
  %2705 = vmatpush1.msra.mxu0 0.0
  %2706 = vmatprep.subr.mxu0 0.0
  %2707 = vmatpush1.msra.mxu0 0.0
  %2708 = vmatprep.subr.mxu0 0.0
  %2709 = vmatpush1.msra.mxu0 0.0
  %2710 = vmatprep.subr.mxu0 0.0
  %2711 = vmatpush1.msra.mxu0 0.0
  %2712 = vmatprep.subr.mxu0 0.0
  %2713 = vmatpush1.msra.mxu0 0.0
  %2714 = vmatprep.subr.mxu0 0.0
  %2715 = vmatpush1.msra.mxu0 0.0
  %2716 = vmatprep.subr.mxu0 0.0
  %2717 = vmatpush1.msra.mxu0 0.0
  %2718 = vmatprep.mubr.f32.mxu0 0.0
  %v2719 = vand.u32 %v2044, 4294901760
  %v2720 = vsub.f32 %v2044, %v2719
  %2721 = vmatmul.mubr.f32.gmra.mrb[0].mxu0 %v2720
  %v2722 = vpop.f32.mrb[0].mxu0
  %v2723 = vadd.f32 %v2649, %v2722
  %v2724 = vpop.f32.mrb[0].mxu0
  %2725 = vdwg.mxu0
  %2726 = vmatprep.subr.mxu0 0.0
  %v2727 = vand.u32 %v2498, 4294901760
  %2728 = vmatpush1.msra.mxu0 %v2727
  %2729 = vmatprep.subr.mxu0 0.0
  %2730 = vmatpush1.msra.mxu0 0.0
  %2731 = vmatprep.subr.mxu0 0.0
  %2732 = vmatpush1.msra.mxu0 0.0
  %2733 = vmatprep.subr.mxu0 0.0
  %2734 = vmatpush1.msra.mxu0 0.0
  %2735 = vmatprep.subr.mxu0 0.0
  %2736 = vmatpush1.msra.mxu0 0.0
  %2737 = vmatprep.subr.mxu0 0.0
  %2738 = vmatpush1.msra.mxu0 0.0
  %2739 = vmatprep.subr.mxu0 0.0
  %2740 = vmatpush1.msra.mxu0 0.0
  %2741 = vmatprep.subr.mxu0 0.0
  %2742 = vmatpush1.msra.mxu0 0.0
  %2743 = vmatprep.subr.mxu0 0.0
  %2744 = vmatpush1.msra.mxu0 0.0
  %2745 = vmatprep.subr.mxu0 0.0
  %2746 = vmatpush1.msra.mxu0 0.0
  %2747 = vmatprep.subr.mxu0 0.0
  %2748 = vmatpush1.msra.mxu0 0.0
  %2749 = vmatprep.subr.mxu0 0.0
  %2750 = vmatpush1.msra.mxu0 0.0
  %2751 = vmatprep.subr.mxu0 0.0
  %2752 = vmatpush1.msra.mxu0 0.0
  %2753 = vmatprep.subr.mxu0 0.0
  %2754 = vmatpush1.msra.mxu0 0.0
  %2755 = vmatprep.subr.mxu0 0.0
  %2756 = vmatpush1.msra.mxu0 0.0
  %2757 = vmatprep.subr.mxu0 0.0
  %2758 = vmatpush1.msra.mxu0 0.0
  %2759 = vmatprep.subr.mxu0 0.0
  %2760 = vmatpush1.msra.mxu0 0.0
  %2761 = vmatprep.subr.mxu0 0.0
  %2762 = vmatpush1.msra.mxu0 0.0
  %2763 = vmatprep.subr.mxu0 0.0
  %2764 = vmatpush1.msra.mxu0 0.0
  %2765 = vmatprep.subr.mxu0 0.0
  %2766 = vmatpush1.msra.mxu0 0.0
  %2767 = vmatprep.subr.mxu0 0.0
  %2768 = vmatpush1.msra.mxu0 0.0
  %2769 = vmatprep.subr.mxu0 0.0
  %2770 = vmatpush1.msra.mxu0 0.0
  %2771 = vmatprep.subr.mxu0 0.0
  %2772 = vmatpush1.msra.mxu0 0.0
  %2773 = vmatprep.subr.mxu0 0.0
  %2774 = vmatpush1.msra.mxu0 0.0
  %2775 = vmatprep.subr.mxu0 0.0
  %2776 = vmatpush1.msra.mxu0 0.0
  %2777 = vmatprep.subr.mxu0 0.0
  %2778 = vmatpush1.msra.mxu0 0.0
  %2779 = vmatprep.subr.mxu0 0.0
  %2780 = vmatpush1.msra.mxu0 0.0
  %2781 = vmatprep.subr.mxu0 0.0
  %2782 = vmatpush1.msra.mxu0 0.0
  %2783 = vmatprep.subr.mxu0 0.0
  %2784 = vmatpush1.msra.mxu0 0.0
  %2785 = vmatprep.subr.mxu0 0.0
  %2786 = vmatpush1.msra.mxu0 0.0
  %2787 = vmatprep.subr.mxu0 0.0
  %2788 = vmatpush1.msra.mxu0 0.0
  %2789 = vmatprep.subr.mxu0 0.0
  %2790 = vmatpush1.msra.mxu0 0.0
  %2791 = vmatprep.mubr.f32.mxu0 0.0
  %v2792 = vand.u32 %v2044, 4294901760
  %v2793 = vsub.f32 %v2044, %v2792
  %v2794 = vand.u32 %v2793, 4294901760
  %2795 = vmatmul.mubr.f32.gmra.mrb[0].mxu0 %v2794
  %v2796 = vpop.f32.mrb[0].mxu0
  %v2797 = vadd.f32 %v2723, %v2796
  %v2798 = vpop.f32.mrb[0].mxu0
  %2799 = vdwg.mxu0
  %2800 = vmatprep.subr.mxu0 0.0
  %v2801 = vand.u32 %v2498, 4294901760
  %v2802 = vsub.f32 %v2498, %v2801
  %v2803 = vand.u32 %v2802, 4294901760
  %2804 = vmatpush1.msra.mxu0 %v2803
  %2805 = vmatprep.subr.mxu0 0.0
  %2806 = vmatpush1.msra.mxu0 0.0
  %2807 = vmatprep.subr.mxu0 0.0
  %2808 = vmatpush1.msra.mxu0 0.0
  %2809 = vmatprep.subr.mxu0 0.0
  %2810 = vmatpush1.msra.mxu0 0.0
  %2811 = vmatprep.subr.mxu0 0.0
  %2812 = vmatpush1.msra.mxu0 0.0
  %2813 = vmatprep.subr.mxu0 0.0
  %2814 = vmatpush1.msra.mxu0 0.0
  %2815 = vmatprep.subr.mxu0 0.0
  %2816 = vmatpush1.msra.mxu0 0.0
  %2817 = vmatprep.subr.mxu0 0.0
  %2818 = vmatpush1.msra.mxu0 0.0
  %2819 = vmatprep.subr.mxu0 0.0
  %2820 = vmatpush1.msra.mxu0 0.0
  %2821 = vmatprep.subr.mxu0 0.0
  %2822 = vmatpush1.msra.mxu0 0.0
  %2823 = vmatprep.subr.mxu0 0.0
  %2824 = vmatpush1.msra.mxu0 0.0
  %2825 = vmatprep.subr.mxu0 0.0
  %2826 = vmatpush1.msra.mxu0 0.0
  %2827 = vmatprep.subr.mxu0 0.0
  %2828 = vmatpush1.msra.mxu0 0.0
  %2829 = vmatprep.subr.mxu0 0.0
  %2830 = vmatpush1.msra.mxu0 0.0
  %2831 = vmatprep.subr.mxu0 0.0
  %2832 = vmatpush1.msra.mxu0 0.0
  %2833 = vmatprep.subr.mxu0 0.0
  %2834 = vmatpush1.msra.mxu0 0.0
  %2835 = vmatprep.subr.mxu0 0.0
  %2836 = vmatpush1.msra.mxu0 0.0
  %2837 = vmatprep.subr.mxu0 0.0
  %2838 = vmatpush1.msra.mxu0 0.0
  %2839 = vmatprep.subr.mxu0 0.0
  %2840 = vmatpush1.msra.mxu0 0.0
  %2841 = vmatprep.subr.mxu0 0.0
  %2842 = vmatpush1.msra.mxu0 0.0
  %2843 = vmatprep.subr.mxu0 0.0
  %2844 = vmatpush1.msra.mxu0 0.0
  %2845 = vmatprep.subr.mxu0 0.0
  %2846 = vmatpush1.msra.mxu0 0.0
  %2847 = vmatprep.subr.mxu0 0.0
  %2848 = vmatpush1.msra.mxu0 0.0
  %2849 = vmatprep.subr.mxu0 0.0
  %2850 = vmatpush1.msra.mxu0 0.0
  %2851 = vmatprep.subr.mxu0 0.0
  %2852 = vmatpush1.msra.mxu0 0.0
  %2853 = vmatprep.subr.mxu0 0.0
  %2854 = vmatpush1.msra.mxu0 0.0
  %2855 = vmatprep.subr.mxu0 0.0
  %2856 = vmatpush1.msra.mxu0 0.0
  %2857 = vmatprep.subr.mxu0 0.0
  %2858 = vmatpush1.msra.mxu0 0.0
  %2859 = vmatprep.subr.mxu0 0.0
  %2860 = vmatpush1.msra.mxu0 0.0
  %2861 = vmatprep.subr.mxu0 0.0
  %2862 = vmatpush1.msra.mxu0 0.0
  %2863 = vmatprep.subr.mxu0 0.0
  %2864 = vmatpush1.msra.mxu0 0.0
  %2865 = vmatprep.subr.mxu0 0.0
  %2866 = vmatpush1.msra.mxu0 0.0
  %2867 = vmatprep.mubr.f32.mxu0 0.0
  %v2868 = vand.u32 %v2044, 4294901760
  %2869 = vmatmul.mubr.f32.gmra.mrb[0].mxu0 %v2868
  %v2870 = vpop.f32.mrb[0].mxu0
  %v2871 = vadd.f32 %v2797, %v2870
  %v2872 = vpop.f32.mrb[0].mxu0
  %2873 = vdwg.mxu0
  %2874 = vmatprep.subr.mxu0 0.0
  %v2875 = vand.u32 %v2498, 4294901760
  %2876 = vmatpush1.msra.mxu0 %v2875
  %2877 = vmatprep.subr.mxu0 0.0
  %2878 = vmatpush1.msra.mxu0 0.0
  %2879 = vmatprep.subr.mxu0 0.0
  %2880 = vmatpush1.msra.mxu0 0.0
  %2881 = vmatprep.subr.mxu0 0.0
  %2882 = vmatpush1.msra.mxu0 0.0
  %2883 = vmatprep.subr.mxu0 0.0
  %2884 = vmatpush1.msra.mxu0 0.0
  %2885 = vmatprep.subr.mxu0 0.0
  %2886 = vmatpush1.msra.mxu0 0.0
  %2887 = vmatprep.subr.mxu0 0.0
  %2888 = vmatpush1.msra.mxu0 0.0
  %2889 = vmatprep.subr.mxu0 0.0
  %2890 = vmatpush1.msra.mxu0 0.0
  %2891 = vmatprep.subr.mxu0 0.0
  %2892 = vmatpush1.msra.mxu0 0.0
  %2893 = vmatprep.subr.mxu0 0.0
  %2894 = vmatpush1.msra.mxu0 0.0
  %2895 = vmatprep.subr.mxu0 0.0
  %2896 = vmatpush1.msra.mxu0 0.0
  %2897 = vmatprep.subr.mxu0 0.0
  %2898 = vmatpush1.msra.mxu0 0.0
  %2899 = vmatprep.subr.mxu0 0.0
  %2900 = vmatpush1.msra.mxu0 0.0
  %2901 = vmatprep.subr.mxu0 0.0
  %2902 = vmatpush1.msra.mxu0 0.0
  %2903 = vmatprep.subr.mxu0 0.0
  %2904 = vmatpush1.msra.mxu0 0.0
  %2905 = vmatprep.subr.mxu0 0.0
  %2906 = vmatpush1.msra.mxu0 0.0
  %2907 = vmatprep.subr.mxu0 0.0
  %2908 = vmatpush1.msra.mxu0 0.0
  %2909 = vmatprep.subr.mxu0 0.0
  %2910 = vmatpush1.msra.mxu0 0.0
  %2911 = vmatprep.subr.mxu0 0.0
  %2912 = vmatpush1.msra.mxu0 0.0
  %2913 = vmatprep.subr.mxu0 0.0
  %2914 = vmatpush1.msra.mxu0 0.0
  %2915 = vmatprep.subr.mxu0 0.0
  %2916 = vmatpush1.msra.mxu0 0.0
  %2917 = vmatprep.subr.mxu0 0.0
  %2918 = vmatpush1.msra.mxu0 0.0
  %2919 = vmatprep.subr.mxu0 0.0
  %2920 = vmatpush1.msra.mxu0 0.0
  %2921 = vmatprep.subr.mxu0 0.0
  %2922 = vmatpush1.msra.mxu0 0.0
  %2923 = vmatprep.subr.mxu0 0.0
  %2924 = vmatpush1.msra.mxu0 0.0
  %2925 = vmatprep.subr.mxu0 0.0
  %2926 = vmatpush1.msra.mxu0 0.0
  %2927 = vmatprep.subr.mxu0 0.0
  %2928 = vmatpush1.msra.mxu0 0.0
  %2929 = vmatprep.subr.mxu0 0.0
  %2930 = vmatpush1.msra.mxu0 0.0
  %2931 = vmatprep.subr.mxu0 0.0
  %2932 = vmatpush1.msra.mxu0 0.0
  %2933 = vmatprep.subr.mxu0 0.0
  %2934 = vmatpush1.msra.mxu0 0.0
  %2935 = vmatprep.subr.mxu0 0.0
  %2936 = vmatpush1.msra.mxu0 0.0
  %2937 = vmatprep.subr.mxu0 0.0
  %2938 = vmatpush1.msra.mxu0 0.0
  %2939 = vmatprep.mubr.f32.mxu0 0.0
  %v2940 = vand.u32 %v2044, 4294901760
  %2941 = vmatmul.mubr.f32.gmra.mrb[0].mxu0 %v2940
  %v2942 = vpop.f32.mrb[0].mxu0
  %v2943 = vadd.f32 %v2871, %v2942
  %v2944 = vpop.f32.mrb[0].mxu0
  %2945 = vdwg.mxu0
  %v2946 = vld [vmem:[%s1] sm:$0xf]
  %v2947 = vld [vmem:[%s2] sm:$0xf]
  %2949 = vset.pattern.permute.xlu0 0
  %2950 = vperm.xlu0 %2949, %v2946
  %v2951 = vpop.permute.xlu0 %2950
  %v2953 = vmul.f32 %v2951, %v2493
  %2955 = vset.pattern.permute.xlu0 0
  %2956 = vperm.xlu0 %2955, %v2947
  %v2957 = vpop.permute.xlu0 %2956
  %v2959 = vmul.f32 %v2957, %v2493
  %2960 = vset.pattern.permute.xlu0 1
  %2961 = vperm.xlu0 %2960, %v2946
  %v2962 = vpop.permute.xlu0 %2961
  %v2964 = vmul.f32 %v2962, %v2943
  %2965 = vset.pattern.permute.xlu0 1
  %2966 = vperm.xlu0 %2965, %v2947
  %v2967 = vpop.permute.xlu0 %2966
  %v2969 = vmul.f32 %v2967, %v2943
  %v2970 = vadd.f32 %v2953, %v2964
  %v2971 = vadd.f32 %v2959, %v2969
  %2972 = vset.pattern.permute.xlu0 2
  %2973 = vperm.xlu0 %2972, %v2946
  %v2974 = vpop.permute.xlu0 %2973
  %v2976 = vmul.f32 %v2974, %v2493
  %2977 = vset.pattern.permute.xlu0 2
  %2978 = vperm.xlu0 %2977, %v2947
  %v2979 = vpop.permute.xlu0 %2978
  %v2981 = vmul.f32 %v2979, %v2493
  %2983 = vrot.lane.b32.xlu0 %v2976, 127
  %v2984 = vpop.permute.xlu0 %2983
  %v2986 = vadd.f32 %v2970, %v2984
  %2988 = vrot.lane.b32.xlu0 %v2981, 127
  %v2989 = vpop.permute.xlu0 %2988
  %v2991 = vadd.f32 %v2971, %v2989
  %2992 = vset.pattern.permute.xlu0 3
  %2993 = vperm.xlu0 %2992, %v2946
  %v2994 = vpop.permute.xlu0 %2993
  %v2996 = vmul.f32 %v2994, %v2943
  %2997 = vset.pattern.permute.xlu0 3
  %2998 = vperm.xlu0 %2997, %v2947
  %v2999 = vpop.permute.xlu0 %2998
  %v3001 = vmul.f32 %v2999, %v2943
  %3003 = vrot.lane.b32.xlu0 %v2996, 127
  %v3004 = vpop.permute.xlu0 %3003
  %v3006 = vadd.f32 %v2986, %v3004
  %3008 = vrot.lane.b32.xlu0 %v3001, 127
  %v3009 = vpop.permute.xlu0 %3008
  %v3011 = vadd.f32 %v2991, %v3009
  %3012 = vset.pattern.permute.xlu0 4
  %3013 = vperm.xlu0 %3012, %v2946
  %v3014 = vpop.permute.xlu0 %3013
  %v3016 = vmul.f32 %v3014, %v2493
  %3017 = vset.pattern.permute.xlu0 4
  %3018 = vperm.xlu0 %3017, %v2947
  %v3019 = vpop.permute.xlu0 %3018
  %v3021 = vmul.f32 %v3019, %v2493
  %3023 = vrot.lane.b32.xlu0 %v3016, 126
  %v3024 = vpop.permute.xlu0 %3023
  %v3026 = vadd.f32 %v3006, %v3024
  %3028 = vrot.lane.b32.xlu0 %v3021, 126
  %v3029 = vpop.permute.xlu0 %3028
  %v3031 = vadd.f32 %v3011, %v3029
  %vm3032 = vcmask 11264
  %3033 = vst.msk [vmem:[%s13] sm:$0xf] %vm3032, %v3026
  %3034 = vst.msk [vmem:[%s14] sm:$0xf] %vm3032, %v3031
  %v3035 = vld [vmem:[%s1] sm:$0xf]
  %v3036 = vld [vmem:[%s2] sm:$0xf]
  %3038 = vset.pattern.permute.xlu0 5
  %3039 = vperm.xlu0 %3038, %v3035
  %v3040 = vpop.permute.xlu0 %3039
  %v3042 = vmul.f32 %v3040, %v501
  %3044 = vset.pattern.permute.xlu0 5
  %3045 = vperm.xlu0 %3044, %v3036
  %v3046 = vpop.permute.xlu0 %3045
  %v3048 = vmul.f32 %v3046, %v501
  %3049 = vset.pattern.permute.xlu0 6
  %3050 = vperm.xlu0 %3049, %v3035
  %v3051 = vpop.permute.xlu0 %3050
  %v3053 = vmul.f32 %v3051, %v962
  %3054 = vset.pattern.permute.xlu0 6
  %3055 = vperm.xlu0 %3054, %v3036
  %v3056 = vpop.permute.xlu0 %3055
  %v3058 = vmul.f32 %v3056, %v962
  %v3059 = vadd.f32 %v3042, %v3053
  %v3060 = vadd.f32 %v3048, %v3058
  %3061 = vset.pattern.permute.xlu0 7
  %3062 = vperm.xlu0 %3061, %v3035
  %v3063 = vpop.permute.xlu0 %3062
  %v3065 = vmul.f32 %v3063, %v501
  %3066 = vset.pattern.permute.xlu0 7
  %3067 = vperm.xlu0 %3066, %v3036
  %v3068 = vpop.permute.xlu0 %3067
  %v3070 = vmul.f32 %v3068, %v501
  %3072 = vrot.lane.b32.xlu0 %v3065, 127
  %v3073 = vpop.permute.xlu0 %3072
  %v3075 = vadd.f32 %v3059, %v3073
  %3077 = vrot.lane.b32.xlu0 %v3070, 127
  %v3078 = vpop.permute.xlu0 %3077
  %v3080 = vadd.f32 %v3060, %v3078
  %3081 = vset.pattern.permute.xlu0 8
  %3082 = vperm.xlu0 %3081, %v3035
  %v3083 = vpop.permute.xlu0 %3082
  %v3085 = vmul.f32 %v3083, %v962
  %3086 = vset.pattern.permute.xlu0 8
  %3087 = vperm.xlu0 %3086, %v3036
  %v3088 = vpop.permute.xlu0 %3087
  %v3090 = vmul.f32 %v3088, %v962
  %3092 = vrot.lane.b32.xlu0 %v3085, 127
  %v3093 = vpop.permute.xlu0 %3092
  %v3095 = vadd.f32 %v3075, %v3093
  %3097 = vrot.lane.b32.xlu0 %v3090, 127
  %v3098 = vpop.permute.xlu0 %3097
  %v3100 = vadd.f32 %v3080, %v3098
  %3101 = vset.pattern.permute.xlu0 9
  %3102 = vperm.xlu0 %3101, %v3035
  %v3103 = vpop.permute.xlu0 %3102
  %v3105 = vmul.f32 %v3103, %v501
  %3106 = vset.pattern.permute.xlu0 9
  %3107 = vperm.xlu0 %3106, %v3036
  %v3108 = vpop.permute.xlu0 %3107
  %v3110 = vmul.f32 %v3108, %v501
  %3112 = vrot.lane.b32.xlu0 %v3105, 126
  %v3113 = vpop.permute.xlu0 %3112
  %v3115 = vadd.f32 %v3095, %v3113
  %3117 = vrot.lane.b32.xlu0 %v3110, 126
  %v3118 = vpop.permute.xlu0 %3117
  %v3120 = vadd.f32 %v3100, %v3118
  %3122 = vrot.lane.b32.xlu0 %v3115, 8
  %v3123 = vpop.permute.xlu0 %3122
  %vm3125 = vcmask 126016
  %3126 = vst.msk [vmem:[%s9] sm:$0xf] %vm3125, %v3123
  %3128 = vrot.lane.b32.xlu0 %v3120, 8
  %v3129 = vpop.permute.xlu0 %3128
  %3131 = vst.msk [vmem:[%s10] sm:$0xf] %vm3125, %v3129
  %v3132 = vld [vmem:[%s5] sm:$0xff]
  %v3133 = vsel %vm1055, %v3115, 0
  %3135 = vmatprep.subr.mxu0 0.0
  %v3136 = vand.u32 %v3132, 4294901760
  %3137 = vmatpush1.msra.mxu0 %v3136
  %3138 = vmatprep.subr.mxu0 0.0
  %3139 = vmatpush1.msra.mxu0 0.0
  %3140 = vmatprep.subr.mxu0 0.0
  %3141 = vmatpush1.msra.mxu0 0.0
  %3142 = vmatprep.subr.mxu0 0.0
  %3143 = vmatpush1.msra.mxu0 0.0
  %3144 = vmatprep.subr.mxu0 0.0
  %3145 = vmatpush1.msra.mxu0 0.0
  %3146 = vmatprep.subr.mxu0 0.0
  %3147 = vmatpush1.msra.mxu0 0.0
  %3148 = vmatprep.subr.mxu0 0.0
  %3149 = vmatpush1.msra.mxu0 0.0
  %3150 = vmatprep.subr.mxu0 0.0
  %3151 = vmatpush1.msra.mxu0 0.0
  %3152 = vmatprep.subr.mxu0 0.0
  %3153 = vmatpush1.msra.mxu0 0.0
  %3154 = vmatprep.subr.mxu0 0.0
  %3155 = vmatpush1.msra.mxu0 0.0
  %3156 = vmatprep.subr.mxu0 0.0
  %3157 = vmatpush1.msra.mxu0 0.0
  %3158 = vmatprep.subr.mxu0 0.0
  %3159 = vmatpush1.msra.mxu0 0.0
  %3160 = vmatprep.subr.mxu0 0.0
  %3161 = vmatpush1.msra.mxu0 0.0
  %3162 = vmatprep.subr.mxu0 0.0
  %3163 = vmatpush1.msra.mxu0 0.0
  %3164 = vmatprep.subr.mxu0 0.0
  %3165 = vmatpush1.msra.mxu0 0.0
  %3166 = vmatprep.subr.mxu0 0.0
  %3167 = vmatpush1.msra.mxu0 0.0
  %3168 = vmatprep.subr.mxu0 0.0
  %3169 = vmatpush1.msra.mxu0 0.0
  %3170 = vmatprep.subr.mxu0 0.0
  %3171 = vmatpush1.msra.mxu0 0.0
  %3172 = vmatprep.subr.mxu0 0.0
  %3173 = vmatpush1.msra.mxu0 0.0
  %3174 = vmatprep.subr.mxu0 0.0
  %3175 = vmatpush1.msra.mxu0 0.0
  %3176 = vmatprep.subr.mxu0 0.0
  %3177 = vmatpush1.msra.mxu0 0.0
  %3178 = vmatprep.subr.mxu0 0.0
  %3179 = vmatpush1.msra.mxu0 0.0
  %3180 = vmatprep.subr.mxu0 0.0
  %3181 = vmatpush1.msra.mxu0 0.0
  %3182 = vmatprep.subr.mxu0 0.0
  %3183 = vmatpush1.msra.mxu0 0.0
  %3184 = vmatprep.subr.mxu0 0.0
  %3185 = vmatpush1.msra.mxu0 0.0
  %3186 = vmatprep.subr.mxu0 0.0
  %3187 = vmatpush1.msra.mxu0 0.0
  %3188 = vmatprep.subr.mxu0 0.0
  %3189 = vmatpush1.msra.mxu0 0.0
  %3190 = vmatprep.subr.mxu0 0.0
  %3191 = vmatpush1.msra.mxu0 0.0
  %3192 = vmatprep.subr.mxu0 0.0
  %3193 = vmatpush1.msra.mxu0 0.0
  %3194 = vmatprep.subr.mxu0 0.0
  %3195 = vmatpush1.msra.mxu0 0.0
  %3196 = vmatprep.subr.mxu0 0.0
  %3197 = vmatpush1.msra.mxu0 0.0
  %3198 = vmatprep.subr.mxu0 0.0
  %3199 = vmatpush1.msra.mxu0 0.0
  %3200 = vmatprep.mubr.f32.mxu0 0.0
  %v3201 = vand.u32 %v3133, 4294901760
  %v3202 = vsub.f32 %v3133, %v3201
  %v3203 = vand.u32 %v3202, 4294901760
  %v3204 = vsub.f32 %v3202, %v3203
  %v3205 = vand.u32 %v3204, 4294901760
  %3206 = vmatmul.mubr.f32.gmra.mrb[0].mxu0 %v3205
  %v3207 = vpop.f32.mrb[0].mxu0
  %v3208 = vadd.f32 0.0, %v3207
  %v3209 = vpop.f32.mrb[0].mxu0
  %3210 = vdwg.mxu0
  %3211 = vmatprep.subr.mxu0 0.0
  %v3212 = vand.u32 %v3132, 4294901760
  %v3213 = vsub.f32 %v3132, %v3212
  %v3214 = vand.u32 %v3213, 4294901760
  %v3215 = vsub.f32 %v3213, %v3214
  %v3216 = vand.u32 %v3215, 4294901760
  %3217 = vmatpush1.msra.mxu0 %v3216
  %3218 = vmatprep.subr.mxu0 0.0
  %3219 = vmatpush1.msra.mxu0 0.0
  %3220 = vmatprep.subr.mxu0 0.0
  %3221 = vmatpush1.msra.mxu0 0.0
  %3222 = vmatprep.subr.mxu0 0.0
  %3223 = vmatpush1.msra.mxu0 0.0
  %3224 = vmatprep.subr.mxu0 0.0
  %3225 = vmatpush1.msra.mxu0 0.0
  %3226 = vmatprep.subr.mxu0 0.0
  %3227 = vmatpush1.msra.mxu0 0.0
  %3228 = vmatprep.subr.mxu0 0.0
  %3229 = vmatpush1.msra.mxu0 0.0
  %3230 = vmatprep.subr.mxu0 0.0
  %3231 = vmatpush1.msra.mxu0 0.0
  %3232 = vmatprep.subr.mxu0 0.0
  %3233 = vmatpush1.msra.mxu0 0.0
  %3234 = vmatprep.subr.mxu0 0.0
  %3235 = vmatpush1.msra.mxu0 0.0
  %3236 = vmatprep.subr.mxu0 0.0
  %3237 = vmatpush1.msra.mxu0 0.0
  %3238 = vmatprep.subr.mxu0 0.0
  %3239 = vmatpush1.msra.mxu0 0.0
  %3240 = vmatprep.subr.mxu0 0.0
  %3241 = vmatpush1.msra.mxu0 0.0
  %3242 = vmatprep.subr.mxu0 0.0
  %3243 = vmatpush1.msra.mxu0 0.0
  %3244 = vmatprep.subr.mxu0 0.0
  %3245 = vmatpush1.msra.mxu0 0.0
  %3246 = vmatprep.subr.mxu0 0.0
  %3247 = vmatpush1.msra.mxu0 0.0
  %3248 = vmatprep.subr.mxu0 0.0
  %3249 = vmatpush1.msra.mxu0 0.0
  %3250 = vmatprep.subr.mxu0 0.0
  %3251 = vmatpush1.msra.mxu0 0.0
  %3252 = vmatprep.subr.mxu0 0.0
  %3253 = vmatpush1.msra.mxu0 0.0
  %3254 = vmatprep.subr.mxu0 0.0
  %3255 = vmatpush1.msra.mxu0 0.0
  %3256 = vmatprep.subr.mxu0 0.0
  %3257 = vmatpush1.msra.mxu0 0.0
  %3258 = vmatprep.subr.mxu0 0.0
  %3259 = vmatpush1.msra.mxu0 0.0
  %3260 = vmatprep.subr.mxu0 0.0
  %3261 = vmatpush1.msra.mxu0 0.0
  %3262 = vmatprep.subr.mxu0 0.0
  %3263 = vmatpush1.msra.mxu0 0.0
  %3264 = vmatprep.subr.mxu0 0.0
  %3265 = vmatpush1.msra.mxu0 0.0
  %3266 = vmatprep.subr.mxu0 0.0
  %3267 = vmatpush1.msra.mxu0 0.0
  %3268 = vmatprep.subr.mxu0 0.0
  %3269 = vmatpush1.msra.mxu0 0.0
  %3270 = vmatprep.subr.mxu0 0.0
  %3271 = vmatpush1.msra.mxu0 0.0
  %3272 = vmatprep.subr.mxu0 0.0
  %3273 = vmatpush1.msra.mxu0 0.0
  %3274 = vmatprep.subr.mxu0 0.0
  %3275 = vmatpush1.msra.mxu0 0.0
  %3276 = vmatprep.subr.mxu0 0.0
  %3277 = vmatpush1.msra.mxu0 0.0
  %3278 = vmatprep.subr.mxu0 0.0
  %3279 = vmatpush1.msra.mxu0 0.0
  %3280 = vmatprep.mubr.f32.mxu0 0.0
  %v3281 = vand.u32 %v3133, 4294901760
  %3282 = vmatmul.mubr.f32.gmra.mrb[0].mxu0 %v3281
  %v3283 = vpop.f32.mrb[0].mxu0
  %v3284 = vadd.f32 %v3208, %v3283
  %v3285 = vpop.f32.mrb[0].mxu0
  %3286 = vdwg.mxu0
  %3287 = vmatprep.subr.mxu0 0.0
  %v3288 = vand.u32 %v3132, 4294901760
  %v3289 = vsub.f32 %v3132, %v3288
  %3290 = vmatpush1.msra.mxu0 %v3289
  %3291 = vmatprep.subr.mxu0 0.0
  %3292 = vmatpush1.msra.mxu0 0.0
  %3293 = vmatprep.subr.mxu0 0.0
  %3294 = vmatpush1.msra.mxu0 0.0
  %3295 = vmatprep.subr.mxu0 0.0
  %3296 = vmatpush1.msra.mxu0 0.0
  %3297 = vmatprep.subr.mxu0 0.0
  %3298 = vmatpush1.msra.mxu0 0.0
  %3299 = vmatprep.subr.mxu0 0.0
  %3300 = vmatpush1.msra.mxu0 0.0
  %3301 = vmatprep.subr.mxu0 0.0
  %3302 = vmatpush1.msra.mxu0 0.0
  %3303 = vmatprep.subr.mxu0 0.0
  %3304 = vmatpush1.msra.mxu0 0.0
  %3305 = vmatprep.subr.mxu0 0.0
  %3306 = vmatpush1.msra.mxu0 0.0
  %3307 = vmatprep.subr.mxu0 0.0
  %3308 = vmatpush1.msra.mxu0 0.0
  %3309 = vmatprep.subr.mxu0 0.0
  %3310 = vmatpush1.msra.mxu0 0.0
  %3311 = vmatprep.subr.mxu0 0.0
  %3312 = vmatpush1.msra.mxu0 0.0
  %3313 = vmatprep.subr.mxu0 0.0
  %3314 = vmatpush1.msra.mxu0 0.0
  %3315 = vmatprep.subr.mxu0 0.0
  %3316 = vmatpush1.msra.mxu0 0.0
  %3317 = vmatprep.subr.mxu0 0.0
  %3318 = vmatpush1.msra.mxu0 0.0
  %3319 = vmatprep.subr.mxu0 0.0
  %3320 = vmatpush1.msra.mxu0 0.0
  %3321 = vmatprep.subr.mxu0 0.0
  %3322 = vmatpush1.msra.mxu0 0.0
  %3323 = vmatprep.subr.mxu0 0.0
  %3324 = vmatpush1.msra.mxu0 0.0
  %3325 = vmatprep.subr.mxu0 0.0
  %3326 = vmatpush1.msra.mxu0 0.0
  %3327 = vmatprep.subr.mxu0 0.0
  %3328 = vmatpush1.msra.mxu0 0.0
  %3329 = vmatprep.subr.mxu0 0.0
  %3330 = vmatpush1.msra.mxu0 0.0
  %3331 = vmatprep.subr.mxu0 0.0
  %3332 = vmatpush1.msra.mxu0 0.0
  %3333 = vmatprep.subr.mxu0 0.0
  %3334 = vmatpush1.msra.mxu0 0.0
  %3335 = vmatprep.subr.mxu0 0.0
  %3336 = vmatpush1.msra.mxu0 0.0
  %3337 = vmatprep.subr.mxu0 0.0
  %3338 = vmatpush1.msra.mxu0 0.0
  %3339 = vmatprep.subr.mxu0 0.0
  %3340 = vmatpush1.msra.mxu0 0.0
  %3341 = vmatprep.subr.mxu0 0.0
  %3342 = vmatpush1.msra.mxu0 0.0
  %3343 = vmatprep.subr.mxu0 0.0
  %3344 = vmatpush1.msra.mxu0 0.0
  %3345 = vmatprep.subr.mxu0 0.0
  %3346 = vmatpush1.msra.mxu0 0.0
  %3347 = vmatprep.subr.mxu0 0.0
  %3348 = vmatpush1.msra.mxu0 0.0
  %3349 = vmatprep.subr.mxu0 0.0
  %3350 = vmatpush1.msra.mxu0 0.0
  %3351 = vmatprep.subr.mxu0 0.0
  %3352 = vmatpush1.msra.mxu0 0.0
  %3353 = vmatprep.mubr.f32.mxu0 0.0
  %v3354 = vand.u32 %v3133, 4294901760
  %v3355 = vsub.f32 %v3133, %v3354
  %3356 = vmatmul.mubr.f32.gmra.mrb[0].mxu0 %v3355
  %v3357 = vpop.f32.mrb[0].mxu0
  %v3358 = vadd.f32 %v3284, %v3357
  %v3359 = vpop.f32.mrb[0].mxu0
  %3360 = vdwg.mxu0
  %3361 = vmatprep.subr.mxu0 0.0
  %v3362 = vand.u32 %v3132, 4294901760
  %3363 = vmatpush1.msra.mxu0 %v3362
  %3364 = vmatprep.subr.mxu0 0.0
  %3365 = vmatpush1.msra.mxu0 0.0
  %3366 = vmatprep.subr.mxu0 0.0
  %3367 = vmatpush1.msra.mxu0 0.0
  %3368 = vmatprep.subr.mxu0 0.0
  %3369 = vmatpush1.msra.mxu0 0.0
  %3370 = vmatprep.subr.mxu0 0.0
  %3371 = vmatpush1.msra.mxu0 0.0
  %3372 = vmatprep.subr.mxu0 0.0
  %3373 = vmatpush1.msra.mxu0 0.0
  %3374 = vmatprep.subr.mxu0 0.0
  %3375 = vmatpush1.msra.mxu0 0.0
  %3376 = vmatprep.subr.mxu0 0.0
  %3377 = vmatpush1.msra.mxu0 0.0
  %3378 = vmatprep.subr.mxu0 0.0
  %3379 = vmatpush1.msra.mxu0 0.0
  %3380 = vmatprep.subr.mxu0 0.0
  %3381 = vmatpush1.msra.mxu0 0.0
  %3382 = vmatprep.subr.mxu0 0.0
  %3383 = vmatpush1.msra.mxu0 0.0
  %3384 = vmatprep.subr.mxu0 0.0
  %3385 = vmatpush1.msra.mxu0 0.0
  %3386 = vmatprep.subr.mxu0 0.0
  %3387 = vmatpush1.msra.mxu0 0.0
  %3388 = vmatprep.subr.mxu0 0.0
  %3389 = vmatpush1.msra.mxu0 0.0
  %3390 = vmatprep.subr.mxu0 0.0
  %3391 = vmatpush1.msra.mxu0 0.0
  %3392 = vmatprep.subr.mxu0 0.0
  %3393 = vmatpush1.msra.mxu0 0.0
  %3394 = vmatprep.subr.mxu0 0.0
  %3395 = vmatpush1.msra.mxu0 0.0
  %3396 = vmatprep.subr.mxu0 0.0
  %3397 = vmatpush1.msra.mxu0 0.0
  %3398 = vmatprep.subr.mxu0 0.0
  %3399 = vmatpush1.msra.mxu0 0.0
  %3400 = vmatprep.subr.mxu0 0.0
  %3401 = vmatpush1.msra.mxu0 0.0
  %3402 = vmatprep.subr.mxu0 0.0
  %3403 = vmatpush1.msra.mxu0 0.0
  %3404 = vmatprep.subr.mxu0 0.0
  %3405 = vmatpush1.msra.mxu0 0.0
  %3406 = vmatprep.subr.mxu0 0.0
  %3407 = vmatpush1.msra.mxu0 0.0
  %3408 = vmatprep.subr.mxu0 0.0
  %3409 = vmatpush1.msra.mxu0 0.0
  %3410 = vmatprep.subr.mxu0 0.0
  %3411 = vmatpush1.msra.mxu0 0.0
  %3412 = vmatprep.subr.mxu0 0.0
  %3413 = vmatpush1.msra.mxu0 0.0
  %3414 = vmatprep.subr.mxu0 0.0
  %3415 = vmatpush1.msra.mxu0 0.0
  %3416 = vmatprep.subr.mxu0 0.0
  %3417 = vmatpush1.msra.mxu0 0.0
  %3418 = vmatprep.subr.mxu0 0.0
  %3419 = vmatpush1.msra.mxu0 0.0
  %3420 = vmatprep.subr.mxu0 0.0
  %3421 = vmatpush1.msra.mxu0 0.0
  %3422 = vmatprep.subr.mxu0 0.0
  %3423 = vmatpush1.msra.mxu0 0.0
  %3424 = vmatprep.subr.mxu0 0.0
  %3425 = vmatpush1.msra.mxu0 0.0
  %3426 = vmatprep.mubr.f32.mxu0 0.0
  %v3427 = vand.u32 %v3133, 4294901760
  %v3428 = vsub.f32 %v3133, %v3427
  %v3429 = vand.u32 %v3428, 4294901760
  %3430 = vmatmul.mubr.f32.gmra.mrb[0].mxu0 %v3429
  %v3431 = vpop.f32.mrb[0].mxu0
  %v3432 = vadd.f32 %v3358, %v3431
  %v3433 = vpop.f32.mrb[0].mxu0
  %3434 = vdwg.mxu0
  %3435 = vmatprep.subr.mxu0 0.0
  %v3436 = vand.u32 %v3132, 4294901760
  %v3437 = vsub.f32 %v3132, %v3436
  %v3438 = vand.u32 %v3437, 4294901760
  %3439 = vmatpush1.msra.mxu0 %v3438
  %3440 = vmatprep.subr.mxu0 0.0
  %3441 = vmatpush1.msra.mxu0 0.0
  %3442 = vmatprep.subr.mxu0 0.0
  %3443 = vmatpush1.msra.mxu0 0.0
  %3444 = vmatprep.subr.mxu0 0.0
  %3445 = vmatpush1.msra.mxu0 0.0
  %3446 = vmatprep.subr.mxu0 0.0
  %3447 = vmatpush1.msra.mxu0 0.0
  %3448 = vmatprep.subr.mxu0 0.0
  %3449 = vmatpush1.msra.mxu0 0.0
  %3450 = vmatprep.subr.mxu0 0.0
  %3451 = vmatpush1.msra.mxu0 0.0
  %3452 = vmatprep.subr.mxu0 0.0
  %3453 = vmatpush1.msra.mxu0 0.0
  %3454 = vmatprep.subr.mxu0 0.0
  %3455 = vmatpush1.msra.mxu0 0.0
  %3456 = vmatprep.subr.mxu0 0.0
  %3457 = vmatpush1.msra.mxu0 0.0
  %3458 = vmatprep.subr.mxu0 0.0
  %3459 = vmatpush1.msra.mxu0 0.0
  %3460 = vmatprep.subr.mxu0 0.0
  %3461 = vmatpush1.msra.mxu0 0.0
  %3462 = vmatprep.subr.mxu0 0.0
  %3463 = vmatpush1.msra.mxu0 0.0
  %3464 = vmatprep.subr.mxu0 0.0
  %3465 = vmatpush1.msra.mxu0 0.0
  %3466 = vmatprep.subr.mxu0 0.0
  %3467 = vmatpush1.msra.mxu0 0.0
  %3468 = vmatprep.subr.mxu0 0.0
  %3469 = vmatpush1.msra.mxu0 0.0
  %3470 = vmatprep.subr.mxu0 0.0
  %3471 = vmatpush1.msra.mxu0 0.0
  %3472 = vmatprep.subr.mxu0 0.0
  %3473 = vmatpush1.msra.mxu0 0.0
  %3474 = vmatprep.subr.mxu0 0.0
  %3475 = vmatpush1.msra.mxu0 0.0
  %3476 = vmatprep.subr.mxu0 0.0
  %3477 = vmatpush1.msra.mxu0 0.0
  %3478 = vmatprep.subr.mxu0 0.0
  %3479 = vmatpush1.msra.mxu0 0.0
  %3480 = vmatprep.subr.mxu0 0.0
  %3481 = vmatpush1.msra.mxu0 0.0
  %3482 = vmatprep.subr.mxu0 0.0
  %3483 = vmatpush1.msra.mxu0 0.0
  %3484 = vmatprep.subr.mxu0 0.0
  %3485 = vmatpush1.msra.mxu0 0.0
  %3486 = vmatprep.subr.mxu0 0.0
  %3487 = vmatpush1.msra.mxu0 0.0
  %3488 = vmatprep.subr.mxu0 0.0
  %3489 = vmatpush1.msra.mxu0 0.0
  %3490 = vmatprep.subr.mxu0 0.0
  %3491 = vmatpush1.msra.mxu0 0.0
  %3492 = vmatprep.subr.mxu0 0.0
  %3493 = vmatpush1.msra.mxu0 0.0
  %3494 = vmatprep.subr.mxu0 0.0
  %3495 = vmatpush1.msra.mxu0 0.0
  %3496 = vmatprep.subr.mxu0 0.0
  %3497 = vmatpush1.msra.mxu0 0.0
  %3498 = vmatprep.subr.mxu0 0.0
  %3499 = vmatpush1.msra.mxu0 0.0
  %3500 = vmatprep.subr.mxu0 0.0
  %3501 = vmatpush1.msra.mxu0 0.0
  %3502 = vmatprep.mubr.f32.mxu0 0.0
  %v3503 = vand.u32 %v3133, 4294901760
  %3504 = vmatmul.mubr.f32.gmra.mrb[0].mxu0 %v3503
  %v3505 = vpop.f32.mrb[0].mxu0
  %v3506 = vadd.f32 %v3432, %v3505
  %v3507 = vpop.f32.mrb[0].mxu0
  %3508 = vdwg.mxu0
  %3509 = vmatprep.subr.mxu0 0.0
  %v3510 = vand.u32 %v3132, 4294901760
  %3511 = vmatpush1.msra.mxu0 %v3510
  %3512 = vmatprep.subr.mxu0 0.0
  %3513 = vmatpush1.msra.mxu0 0.0
  %3514 = vmatprep.subr.mxu0 0.0
  %3515 = vmatpush1.msra.mxu0 0.0
  %3516 = vmatprep.subr.mxu0 0.0
  %3517 = vmatpush1.msra.mxu0 0.0
  %3518 = vmatprep.subr.mxu0 0.0
  %3519 = vmatpush1.msra.mxu0 0.0
  %3520 = vmatprep.subr.mxu0 0.0
  %3521 = vmatpush1.msra.mxu0 0.0
  %3522 = vmatprep.subr.mxu0 0.0
  %3523 = vmatpush1.msra.mxu0 0.0
  %3524 = vmatprep.subr.mxu0 0.0
  %3525 = vmatpush1.msra.mxu0 0.0
  %3526 = vmatprep.subr.mxu0 0.0
  %3527 = vmatpush1.msra.mxu0 0.0
  %3528 = vmatprep.subr.mxu0 0.0
  %3529 = vmatpush1.msra.mxu0 0.0
  %3530 = vmatprep.subr.mxu0 0.0
  %3531 = vmatpush1.msra.mxu0 0.0
  %3532 = vmatprep.subr.mxu0 0.0
  %3533 = vmatpush1.msra.mxu0 0.0
  %3534 = vmatprep.subr.mxu0 0.0
  %3535 = vmatpush1.msra.mxu0 0.0
  %3536 = vmatprep.subr.mxu0 0.0
  %3537 = vmatpush1.msra.mxu0 0.0
  %3538 = vmatprep.subr.mxu0 0.0
  %3539 = vmatpush1.msra.mxu0 0.0
  %3540 = vmatprep.subr.mxu0 0.0
  %3541 = vmatpush1.msra.mxu0 0.0
  %3542 = vmatprep.subr.mxu0 0.0
  %3543 = vmatpush1.msra.mxu0 0.0
  %3544 = vmatprep.subr.mxu0 0.0
  %3545 = vmatpush1.msra.mxu0 0.0
  %3546 = vmatprep.subr.mxu0 0.0
  %3547 = vmatpush1.msra.mxu0 0.0
  %3548 = vmatprep.subr.mxu0 0.0
  %3549 = vmatpush1.msra.mxu0 0.0
  %3550 = vmatprep.subr.mxu0 0.0
  %3551 = vmatpush1.msra.mxu0 0.0
  %3552 = vmatprep.subr.mxu0 0.0
  %3553 = vmatpush1.msra.mxu0 0.0
  %3554 = vmatprep.subr.mxu0 0.0
  %3555 = vmatpush1.msra.mxu0 0.0
  %3556 = vmatprep.subr.mxu0 0.0
  %3557 = vmatpush1.msra.mxu0 0.0
  %3558 = vmatprep.subr.mxu0 0.0
  %3559 = vmatpush1.msra.mxu0 0.0
  %3560 = vmatprep.subr.mxu0 0.0
  %3561 = vmatpush1.msra.mxu0 0.0
  %3562 = vmatprep.subr.mxu0 0.0
  %3563 = vmatpush1.msra.mxu0 0.0
  %3564 = vmatprep.subr.mxu0 0.0
  %3565 = vmatpush1.msra.mxu0 0.0
  %3566 = vmatprep.subr.mxu0 0.0
  %3567 = vmatpush1.msra.mxu0 0.0
  %3568 = vmatprep.subr.mxu0 0.0
  %3569 = vmatpush1.msra.mxu0 0.0
  %3570 = vmatprep.subr.mxu0 0.0
  %3571 = vmatpush1.msra.mxu0 0.0
  %3572 = vmatprep.subr.mxu0 0.0
  %3573 = vmatpush1.msra.mxu0 0.0
  %3574 = vmatprep.mubr.f32.mxu0 0.0
  %v3575 = vand.u32 %v3133, 4294901760
  %3576 = vmatmul.mubr.f32.gmra.mrb[0].mxu0 %v3575
  %v3577 = vpop.f32.mrb[0].mxu0
  %v3578 = vadd.f32 %v3506, %v3577
  %v3579 = vpop.f32.mrb[0].mxu0
  %3580 = vdwg.mxu0
  %v3581 = vld [vmem:[%s6] sm:$0xff]
  %3582 = vmatprep.subr.mxu0 0.0
  %v3583 = vand.u32 %v3581, 4294901760
  %3584 = vmatpush1.msra.mxu0 %v3583
  %3585 = vmatprep.subr.mxu0 0.0
  %3586 = vmatpush1.msra.mxu0 0.0
  %3587 = vmatprep.subr.mxu0 0.0
  %3588 = vmatpush1.msra.mxu0 0.0
  %3589 = vmatprep.subr.mxu0 0.0
  %3590 = vmatpush1.msra.mxu0 0.0
  %3591 = vmatprep.subr.mxu0 0.0
  %3592 = vmatpush1.msra.mxu0 0.0
  %3593 = vmatprep.subr.mxu0 0.0
  %3594 = vmatpush1.msra.mxu0 0.0
  %3595 = vmatprep.subr.mxu0 0.0
  %3596 = vmatpush1.msra.mxu0 0.0
  %3597 = vmatprep.subr.mxu0 0.0
  %3598 = vmatpush1.msra.mxu0 0.0
  %3599 = vmatprep.subr.mxu0 0.0
  %3600 = vmatpush1.msra.mxu0 0.0
  %3601 = vmatprep.subr.mxu0 0.0
  %3602 = vmatpush1.msra.mxu0 0.0
  %3603 = vmatprep.subr.mxu0 0.0
  %3604 = vmatpush1.msra.mxu0 0.0
  %3605 = vmatprep.subr.mxu0 0.0
  %3606 = vmatpush1.msra.mxu0 0.0
  %3607 = vmatprep.subr.mxu0 0.0
  %3608 = vmatpush1.msra.mxu0 0.0
  %3609 = vmatprep.subr.mxu0 0.0
  %3610 = vmatpush1.msra.mxu0 0.0
  %3611 = vmatprep.subr.mxu0 0.0
  %3612 = vmatpush1.msra.mxu0 0.0
  %3613 = vmatprep.subr.mxu0 0.0
  %3614 = vmatpush1.msra.mxu0 0.0
  %3615 = vmatprep.subr.mxu0 0.0
  %3616 = vmatpush1.msra.mxu0 0.0
  %3617 = vmatprep.subr.mxu0 0.0
  %3618 = vmatpush1.msra.mxu0 0.0
  %3619 = vmatprep.subr.mxu0 0.0
  %3620 = vmatpush1.msra.mxu0 0.0
  %3621 = vmatprep.subr.mxu0 0.0
  %3622 = vmatpush1.msra.mxu0 0.0
  %3623 = vmatprep.subr.mxu0 0.0
  %3624 = vmatpush1.msra.mxu0 0.0
  %3625 = vmatprep.subr.mxu0 0.0
  %3626 = vmatpush1.msra.mxu0 0.0
  %3627 = vmatprep.subr.mxu0 0.0
  %3628 = vmatpush1.msra.mxu0 0.0
  %3629 = vmatprep.subr.mxu0 0.0
  %3630 = vmatpush1.msra.mxu0 0.0
  %3631 = vmatprep.subr.mxu0 0.0
  %3632 = vmatpush1.msra.mxu0 0.0
  %3633 = vmatprep.subr.mxu0 0.0
  %3634 = vmatpush1.msra.mxu0 0.0
  %3635 = vmatprep.subr.mxu0 0.0
  %3636 = vmatpush1.msra.mxu0 0.0
  %3637 = vmatprep.subr.mxu0 0.0
  %3638 = vmatpush1.msra.mxu0 0.0
  %3639 = vmatprep.subr.mxu0 0.0
  %3640 = vmatpush1.msra.mxu0 0.0
  %3641 = vmatprep.subr.mxu0 0.0
  %3642 = vmatpush1.msra.mxu0 0.0
  %3643 = vmatprep.subr.mxu0 0.0
  %3644 = vmatpush1.msra.mxu0 0.0
  %3645 = vmatprep.subr.mxu0 0.0
  %3646 = vmatpush1.msra.mxu0 0.0
  %3647 = vmatprep.mubr.f32.mxu0 0.0
  %v3648 = vand.u32 %v3133, 4294901760
  %v3649 = vsub.f32 %v3133, %v3648
  %v3650 = vand.u32 %v3649, 4294901760
  %v3651 = vsub.f32 %v3649, %v3650
  %v3652 = vand.u32 %v3651, 4294901760
  %3653 = vmatmul.mubr.f32.gmra.mrb[0].mxu0 %v3652
  %v3654 = vpop.f32.mrb[0].mxu0
  %v3655 = vadd.f32 0.0, %v3654
  %v3656 = vpop.f32.mrb[0].mxu0
  %3657 = vdwg.mxu0
  %3658 = vmatprep.subr.mxu0 0.0
  %v3659 = vand.u32 %v3581, 4294901760
  %v3660 = vsub.f32 %v3581, %v3659
  %v3661 = vand.u32 %v3660, 4294901760
  %v3662 = vsub.f32 %v3660, %v3661
  %v3663 = vand.u32 %v3662, 4294901760
  %3664 = vmatpush1.msra.mxu0 %v3663
  %3665 = vmatprep.subr.mxu0 0.0
  %3666 = vmatpush1.msra.mxu0 0.0
  %3667 = vmatprep.subr.mxu0 0.0
  %3668 = vmatpush1.msra.mxu0 0.0
  %3669 = vmatprep.subr.mxu0 0.0
  %3670 = vmatpush1.msra.mxu0 0.0
  %3671 = vmatprep.subr.mxu0 0.0
  %3672 = vmatpush1.msra.mxu0 0.0
  %3673 = vmatprep.subr.mxu0 0.0
  %3674 = vmatpush1.msra.mxu0 0.0
  %3675 = vmatprep.subr.mxu0 0.0
  %3676 = vmatpush1.msra.mxu0 0.0
  %3677 = vmatprep.subr.mxu0 0.0
  %3678 = vmatpush1.msra.mxu0 0.0
  %3679 = vmatprep.subr.mxu0 0.0
  %3680 = vmatpush1.msra.mxu0 0.0
  %3681 = vmatprep.subr.mxu0 0.0
  %3682 = vmatpush1.msra.mxu0 0.0
  %3683 = vmatprep.subr.mxu0 0.0
  %3684 = vmatpush1.msra.mxu0 0.0
  %3685 = vmatprep.subr.mxu0 0.0
  %3686 = vmatpush1.msra.mxu0 0.0
  %3687 = vmatprep.subr.mxu0 0.0
  %3688 = vmatpush1.msra.mxu0 0.0
  %3689 = vmatprep.subr.mxu0 0.0
  %3690 = vmatpush1.msra.mxu0 0.0
  %3691 = vmatprep.subr.mxu0 0.0
  %3692 = vmatpush1.msra.mxu0 0.0
  %3693 = vmatprep.subr.mxu0 0.0
  %3694 = vmatpush1.msra.mxu0 0.0
  %3695 = vmatprep.subr.mxu0 0.0
  %3696 = vmatpush1.msra.mxu0 0.0
  %3697 = vmatprep.subr.mxu0 0.0
  %3698 = vmatpush1.msra.mxu0 0.0
  %3699 = vmatprep.subr.mxu0 0.0
  %3700 = vmatpush1.msra.mxu0 0.0
  %3701 = vmatprep.subr.mxu0 0.0
  %3702 = vmatpush1.msra.mxu0 0.0
  %3703 = vmatprep.subr.mxu0 0.0
  %3704 = vmatpush1.msra.mxu0 0.0
  %3705 = vmatprep.subr.mxu0 0.0
  %3706 = vmatpush1.msra.mxu0 0.0
  %3707 = vmatprep.subr.mxu0 0.0
  %3708 = vmatpush1.msra.mxu0 0.0
  %3709 = vmatprep.subr.mxu0 0.0
  %3710 = vmatpush1.msra.mxu0 0.0
  %3711 = vmatprep.subr.mxu0 0.0
  %3712 = vmatpush1.msra.mxu0 0.0
  %3713 = vmatprep.subr.mxu0 0.0
  %3714 = vmatpush1.msra.mxu0 0.0
  %3715 = vmatprep.subr.mxu0 0.0
  %3716 = vmatpush1.msra.mxu0 0.0
  %3717 = vmatprep.subr.mxu0 0.0
  %3718 = vmatpush1.msra.mxu0 0.0
  %3719 = vmatprep.subr.mxu0 0.0
  %3720 = vmatpush1.msra.mxu0 0.0
  %3721 = vmatprep.subr.mxu0 0.0
  %3722 = vmatpush1.msra.mxu0 0.0
  %3723 = vmatprep.subr.mxu0 0.0
  %3724 = vmatpush1.msra.mxu0 0.0
  %3725 = vmatprep.subr.mxu0 0.0
  %3726 = vmatpush1.msra.mxu0 0.0
  %3727 = vmatprep.mubr.f32.mxu0 0.0
  %v3728 = vand.u32 %v3133, 4294901760
  %3729 = vmatmul.mubr.f32.gmra.mrb[0].mxu0 %v3728
  %v3730 = vpop.f32.mrb[0].mxu0
  %v3731 = vadd.f32 %v3655, %v3730
  %v3732 = vpop.f32.mrb[0].mxu0
  %3733 = vdwg.mxu0
  %3734 = vmatprep.subr.mxu0 0.0
  %v3735 = vand.u32 %v3581, 4294901760
  %v3736 = vsub.f32 %v3581, %v3735
  %3737 = vmatpush1.msra.mxu0 %v3736
  %3738 = vmatprep.subr.mxu0 0.0
  %3739 = vmatpush1.msra.mxu0 0.0
  %3740 = vmatprep.subr.mxu0 0.0
  %3741 = vmatpush1.msra.mxu0 0.0
  %3742 = vmatprep.subr.mxu0 0.0
  %3743 = vmatpush1.msra.mxu0 0.0
  %3744 = vmatprep.subr.mxu0 0.0
  %3745 = vmatpush1.msra.mxu0 0.0
  %3746 = vmatprep.subr.mxu0 0.0
  %3747 = vmatpush1.msra.mxu0 0.0
  %3748 = vmatprep.subr.mxu0 0.0
  %3749 = vmatpush1.msra.mxu0 0.0
  %3750 = vmatprep.subr.mxu0 0.0
  %3751 = vmatpush1.msra.mxu0 0.0
  %3752 = vmatprep.subr.mxu0 0.0
  %3753 = vmatpush1.msra.mxu0 0.0
  %3754 = vmatprep.subr.mxu0 0.0
  %3755 = vmatpush1.msra.mxu0 0.0
  %3756 = vmatprep.subr.mxu0 0.0
  %3757 = vmatpush1.msra.mxu0 0.0
  %3758 = vmatprep.subr.mxu0 0.0
  %3759 = vmatpush1.msra.mxu0 0.0
  %3760 = vmatprep.subr.mxu0 0.0
  %3761 = vmatpush1.msra.mxu0 0.0
  %3762 = vmatprep.subr.mxu0 0.0
  %3763 = vmatpush1.msra.mxu0 0.0
  %3764 = vmatprep.subr.mxu0 0.0
  %3765 = vmatpush1.msra.mxu0 0.0
  %3766 = vmatprep.subr.mxu0 0.0
  %3767 = vmatpush1.msra.mxu0 0.0
  %3768 = vmatprep.subr.mxu0 0.0
  %3769 = vmatpush1.msra.mxu0 0.0
  %3770 = vmatprep.subr.mxu0 0.0
  %3771 = vmatpush1.msra.mxu0 0.0
  %3772 = vmatprep.subr.mxu0 0.0
  %3773 = vmatpush1.msra.mxu0 0.0
  %3774 = vmatprep.subr.mxu0 0.0
  %3775 = vmatpush1.msra.mxu0 0.0
  %3776 = vmatprep.subr.mxu0 0.0
  %3777 = vmatpush1.msra.mxu0 0.0
  %3778 = vmatprep.subr.mxu0 0.0
  %3779 = vmatpush1.msra.mxu0 0.0
  %3780 = vmatprep.subr.mxu0 0.0
  %3781 = vmatpush1.msra.mxu0 0.0
  %3782 = vmatprep.subr.mxu0 0.0
  %3783 = vmatpush1.msra.mxu0 0.0
  %3784 = vmatprep.subr.mxu0 0.0
  %3785 = vmatpush1.msra.mxu0 0.0
  %3786 = vmatprep.subr.mxu0 0.0
  %3787 = vmatpush1.msra.mxu0 0.0
  %3788 = vmatprep.subr.mxu0 0.0
  %3789 = vmatpush1.msra.mxu0 0.0
  %3790 = vmatprep.subr.mxu0 0.0
  %3791 = vmatpush1.msra.mxu0 0.0
  %3792 = vmatprep.subr.mxu0 0.0
  %3793 = vmatpush1.msra.mxu0 0.0
  %3794 = vmatprep.subr.mxu0 0.0
  %3795 = vmatpush1.msra.mxu0 0.0
  %3796 = vmatprep.subr.mxu0 0.0
  %3797 = vmatpush1.msra.mxu0 0.0
  %3798 = vmatprep.subr.mxu0 0.0
  %3799 = vmatpush1.msra.mxu0 0.0
  %3800 = vmatprep.mubr.f32.mxu0 0.0
  %v3801 = vand.u32 %v3133, 4294901760
  %v3802 = vsub.f32 %v3133, %v3801
  %3803 = vmatmul.mubr.f32.gmra.mrb[0].mxu0 %v3802
  %v3804 = vpop.f32.mrb[0].mxu0
  %v3805 = vadd.f32 %v3731, %v3804
  %v3806 = vpop.f32.mrb[0].mxu0
  %3807 = vdwg.mxu0
  %3808 = vmatprep.subr.mxu0 0.0
  %v3809 = vand.u32 %v3581, 4294901760
  %3810 = vmatpush1.msra.mxu0 %v3809
  %3811 = vmatprep.subr.mxu0 0.0
  %3812 = vmatpush1.msra.mxu0 0.0
  %3813 = vmatprep.subr.mxu0 0.0
  %3814 = vmatpush1.msra.mxu0 0.0
  %3815 = vmatprep.subr.mxu0 0.0
  %3816 = vmatpush1.msra.mxu0 0.0
  %3817 = vmatprep.subr.mxu0 0.0
  %3818 = vmatpush1.msra.mxu0 0.0
  %3819 = vmatprep.subr.mxu0 0.0
  %3820 = vmatpush1.msra.mxu0 0.0
  %3821 = vmatprep.subr.mxu0 0.0
  %3822 = vmatpush1.msra.mxu0 0.0
  %3823 = vmatprep.subr.mxu0 0.0
  %3824 = vmatpush1.msra.mxu0 0.0
  %3825 = vmatprep.subr.mxu0 0.0
  %3826 = vmatpush1.msra.mxu0 0.0
  %3827 = vmatprep.subr.mxu0 0.0
  %3828 = vmatpush1.msra.mxu0 0.0
  %3829 = vmatprep.subr.mxu0 0.0
  %3830 = vmatpush1.msra.mxu0 0.0
  %3831 = vmatprep.subr.mxu0 0.0
  %3832 = vmatpush1.msra.mxu0 0.0
  %3833 = vmatprep.subr.mxu0 0.0
  %3834 = vmatpush1.msra.mxu0 0.0
  %3835 = vmatprep.subr.mxu0 0.0
  %3836 = vmatpush1.msra.mxu0 0.0
  %3837 = vmatprep.subr.mxu0 0.0
  %3838 = vmatpush1.msra.mxu0 0.0
  %3839 = vmatprep.subr.mxu0 0.0
  %3840 = vmatpush1.msra.mxu0 0.0
  %3841 = vmatprep.subr.mxu0 0.0
  %3842 = vmatpush1.msra.mxu0 0.0
  %3843 = vmatprep.subr.mxu0 0.0
  %3844 = vmatpush1.msra.mxu0 0.0
  %3845 = vmatprep.subr.mxu0 0.0
  %3846 = vmatpush1.msra.mxu0 0.0
  %3847 = vmatprep.subr.mxu0 0.0
  %3848 = vmatpush1.msra.mxu0 0.0
  %3849 = vmatprep.subr.mxu0 0.0
  %3850 = vmatpush1.msra.mxu0 0.0
  %3851 = vmatprep.subr.mxu0 0.0
  %3852 = vmatpush1.msra.mxu0 0.0
  %3853 = vmatprep.subr.mxu0 0.0
  %3854 = vmatpush1.msra.mxu0 0.0
  %3855 = vmatprep.subr.mxu0 0.0
  %3856 = vmatpush1.msra.mxu0 0.0
  %3857 = vmatprep.subr.mxu0 0.0
  %3858 = vmatpush1.msra.mxu0 0.0
  %3859 = vmatprep.subr.mxu0 0.0
  %3860 = vmatpush1.msra.mxu0 0.0
  %3861 = vmatprep.subr.mxu0 0.0
  %3862 = vmatpush1.msra.mxu0 0.0
  %3863 = vmatprep.subr.mxu0 0.0
  %3864 = vmatpush1.msra.mxu0 0.0
  %3865 = vmatprep.subr.mxu0 0.0
  %3866 = vmatpush1.msra.mxu0 0.0
  %3867 = vmatprep.subr.mxu0 0.0
  %3868 = vmatpush1.msra.mxu0 0.0
  %3869 = vmatprep.subr.mxu0 0.0
  %3870 = vmatpush1.msra.mxu0 0.0
  %3871 = vmatprep.subr.mxu0 0.0
  %3872 = vmatpush1.msra.mxu0 0.0
  %3873 = vmatprep.mubr.f32.mxu0 0.0
  %v3874 = vand.u32 %v3133, 4294901760
  %v3875 = vsub.f32 %v3133, %v3874
  %v3876 = vand.u32 %v3875, 4294901760
  %3877 = vmatmul.mubr.f32.gmra.mrb[0].mxu0 %v3876
  %v3878 = vpop.f32.mrb[0].mxu0
  %v3879 = vadd.f32 %v3805, %v3878
  %v3880 = vpop.f32.mrb[0].mxu0
  %3881 = vdwg.mxu0
  %3882 = vmatprep.subr.mxu0 0.0
  %v3883 = vand.u32 %v3581, 4294901760
  %v3884 = vsub.f32 %v3581, %v3883
  %v3885 = vand.u32 %v3884, 4294901760
  %3886 = vmatpush1.msra.mxu0 %v3885
  %3887 = vmatprep.subr.mxu0 0.0
  %3888 = vmatpush1.msra.mxu0 0.0
  %3889 = vmatprep.subr.mxu0 0.0
  %3890 = vmatpush1.msra.mxu0 0.0
  %3891 = vmatprep.subr.mxu0 0.0
  %3892 = vmatpush1.msra.mxu0 0.0
  %3893 = vmatprep.subr.mxu0 0.0
  %3894 = vmatpush1.msra.mxu0 0.0
  %3895 = vmatprep.subr.mxu0 0.0
  %3896 = vmatpush1.msra.mxu0 0.0
  %3897 = vmatprep.subr.mxu0 0.0
  %3898 = vmatpush1.msra.mxu0 0.0
  %3899 = vmatprep.subr.mxu0 0.0
  %3900 = vmatpush1.msra.mxu0 0.0
  %3901 = vmatprep.subr.mxu0 0.0
  %3902 = vmatpush1.msra.mxu0 0.0
  %3903 = vmatprep.subr.mxu0 0.0
  %3904 = vmatpush1.msra.mxu0 0.0
  %3905 = vmatprep.subr.mxu0 0.0
  %3906 = vmatpush1.msra.mxu0 0.0
  %3907 = vmatprep.subr.mxu0 0.0
  %3908 = vmatpush1.msra.mxu0 0.0
  %3909 = vmatprep.subr.mxu0 0.0
  %3910 = vmatpush1.msra.mxu0 0.0
  %3911 = vmatprep.subr.mxu0 0.0
  %3912 = vmatpush1.msra.mxu0 0.0
  %3913 = vmatprep.subr.mxu0 0.0
  %3914 = vmatpush1.msra.mxu0 0.0
  %3915 = vmatprep.subr.mxu0 0.0
  %3916 = vmatpush1.msra.mxu0 0.0
  %3917 = vmatprep.subr.mxu0 0.0
  %3918 = vmatpush1.msra.mxu0 0.0
  %3919 = vmatprep.subr.mxu0 0.0
  %3920 = vmatpush1.msra.mxu0 0.0
  %3921 = vmatprep.subr.mxu0 0.0
  %3922 = vmatpush1.msra.mxu0 0.0
  %3923 = vmatprep.subr.mxu0 0.0
  %3924 = vmatpush1.msra.mxu0 0.0
  %3925 = vmatprep.subr.mxu0 0.0
  %3926 = vmatpush1.msra.mxu0 0.0
  %3927 = vmatprep.subr.mxu0 0.0
  %3928 = vmatpush1.msra.mxu0 0.0
  %3929 = vmatprep.subr.mxu0 0.0
  %3930 = vmatpush1.msra.mxu0 0.0
  %3931 = vmatprep.subr.mxu0 0.0
  %3932 = vmatpush1.msra.mxu0 0.0
  %3933 = vmatprep.subr.mxu0 0.0
  %3934 = vmatpush1.msra.mxu0 0.0
  %3935 = vmatprep.subr.mxu0 0.0
  %3936 = vmatpush1.msra.mxu0 0.0
  %3937 = vmatprep.subr.mxu0 0.0
  %3938 = vmatpush1.msra.mxu0 0.0
  %3939 = vmatprep.subr.mxu0 0.0
  %3940 = vmatpush1.msra.mxu0 0.0
  %3941 = vmatprep.subr.mxu0 0.0
  %3942 = vmatpush1.msra.mxu0 0.0
  %3943 = vmatprep.subr.mxu0 0.0
  %3944 = vmatpush1.msra.mxu0 0.0
  %3945 = vmatprep.subr.mxu0 0.0
  %3946 = vmatpush1.msra.mxu0 0.0
  %3947 = vmatprep.subr.mxu0 0.0
  %3948 = vmatpush1.msra.mxu0 0.0
  %3949 = vmatprep.mubr.f32.mxu0 0.0
  %v3950 = vand.u32 %v3133, 4294901760
  %3951 = vmatmul.mubr.f32.gmra.mrb[0].mxu0 %v3950
  %v3952 = vpop.f32.mrb[0].mxu0
  %v3953 = vadd.f32 %v3879, %v3952
  %v3954 = vpop.f32.mrb[0].mxu0
  %3955 = vdwg.mxu0
  %3956 = vmatprep.subr.mxu0 0.0
  %v3957 = vand.u32 %v3581, 4294901760
  %3958 = vmatpush1.msra.mxu0 %v3957
  %3959 = vmatprep.subr.mxu0 0.0
  %3960 = vmatpush1.msra.mxu0 0.0
  %3961 = vmatprep.subr.mxu0 0.0
  %3962 = vmatpush1.msra.mxu0 0.0
  %3963 = vmatprep.subr.mxu0 0.0
  %3964 = vmatpush1.msra.mxu0 0.0
  %3965 = vmatprep.subr.mxu0 0.0
  %3966 = vmatpush1.msra.mxu0 0.0
  %3967 = vmatprep.subr.mxu0 0.0
  %3968 = vmatpush1.msra.mxu0 0.0
  %3969 = vmatprep.subr.mxu0 0.0
  %3970 = vmatpush1.msra.mxu0 0.0
  %3971 = vmatprep.subr.mxu0 0.0
  %3972 = vmatpush1.msra.mxu0 0.0
  %3973 = vmatprep.subr.mxu0 0.0
  %3974 = vmatpush1.msra.mxu0 0.0
  %3975 = vmatprep.subr.mxu0 0.0
  %3976 = vmatpush1.msra.mxu0 0.0
  %3977 = vmatprep.subr.mxu0 0.0
  %3978 = vmatpush1.msra.mxu0 0.0
  %3979 = vmatprep.subr.mxu0 0.0
  %3980 = vmatpush1.msra.mxu0 0.0
  %3981 = vmatprep.subr.mxu0 0.0
  %3982 = vmatpush1.msra.mxu0 0.0
  %3983 = vmatprep.subr.mxu0 0.0
  %3984 = vmatpush1.msra.mxu0 0.0
  %3985 = vmatprep.subr.mxu0 0.0
  %3986 = vmatpush1.msra.mxu0 0.0
  %3987 = vmatprep.subr.mxu0 0.0
  %3988 = vmatpush1.msra.mxu0 0.0
  %3989 = vmatprep.subr.mxu0 0.0
  %3990 = vmatpush1.msra.mxu0 0.0
  %3991 = vmatprep.subr.mxu0 0.0
  %3992 = vmatpush1.msra.mxu0 0.0
  %3993 = vmatprep.subr.mxu0 0.0
  %3994 = vmatpush1.msra.mxu0 0.0
  %3995 = vmatprep.subr.mxu0 0.0
  %3996 = vmatpush1.msra.mxu0 0.0
  %3997 = vmatprep.subr.mxu0 0.0
  %3998 = vmatpush1.msra.mxu0 0.0
  %3999 = vmatprep.subr.mxu0 0.0
  %4000 = vmatpush1.msra.mxu0 0.0
  %4001 = vmatprep.subr.mxu0 0.0
  %4002 = vmatpush1.msra.mxu0 0.0
  %4003 = vmatprep.subr.mxu0 0.0
  %4004 = vmatpush1.msra.mxu0 0.0
  %4005 = vmatprep.subr.mxu0 0.0
  %4006 = vmatpush1.msra.mxu0 0.0
  %4007 = vmatprep.subr.mxu0 0.0
  %4008 = vmatpush1.msra.mxu0 0.0
  %4009 = vmatprep.subr.mxu0 0.0
  %4010 = vmatpush1.msra.mxu0 0.0
  %4011 = vmatprep.subr.mxu0 0.0
  %4012 = vmatpush1.msra.mxu0 0.0
  %4013 = vmatprep.subr.mxu0 0.0
  %4014 = vmatpush1.msra.mxu0 0.0
  %4015 = vmatprep.subr.mxu0 0.0
  %4016 = vmatpush1.msra.mxu0 0.0
  %4017 = vmatprep.subr.mxu0 0.0
  %4018 = vmatpush1.msra.mxu0 0.0
  %4019 = vmatprep.subr.mxu0 0.0
  %4020 = vmatpush1.msra.mxu0 0.0
  %4021 = vmatprep.mubr.f32.mxu0 0.0
  %v4022 = vand.u32 %v3133, 4294901760
  %4023 = vmatmul.mubr.f32.gmra.mrb[0].mxu0 %v4022
  %v4024 = vpop.f32.mrb[0].mxu0
  %v4025 = vadd.f32 %v3953, %v4024
  %v4026 = vpop.f32.mrb[0].mxu0
  %4027 = vdwg.mxu0
  %v4028 = vld [vmem:[%s1] sm:$0xf]
  %v4029 = vld [vmem:[%s2] sm:$0xf]
  %4031 = vset.pattern.permute.xlu0 5
  %4032 = vperm.xlu0 %4031, %v4028
  %v4033 = vpop.permute.xlu0 %4032
  %v4035 = vmul.f32 %v4033, %v3578
  %4037 = vset.pattern.permute.xlu0 5
  %4038 = vperm.xlu0 %4037, %v4029
  %v4039 = vpop.permute.xlu0 %4038
  %v4041 = vmul.f32 %v4039, %v3578
  %4042 = vset.pattern.permute.xlu0 6
  %4043 = vperm.xlu0 %4042, %v4028
  %v4044 = vpop.permute.xlu0 %4043
  %v4046 = vmul.f32 %v4044, %v4025
  %4047 = vset.pattern.permute.xlu0 6
  %4048 = vperm.xlu0 %4047, %v4029
  %v4049 = vpop.permute.xlu0 %4048
  %v4051 = vmul.f32 %v4049, %v4025
  %v4052 = vadd.f32 %v4035, %v4046
  %v4053 = vadd.f32 %v4041, %v4051
  %4054 = vset.pattern.permute.xlu0 7
  %4055 = vperm.xlu0 %4054, %v4028
  %v4056 = vpop.permute.xlu0 %4055
  %v4058 = vmul.f32 %v4056, %v3578
  %4059 = vset.pattern.permute.xlu0 7
  %4060 = vperm.xlu0 %4059, %v4029
  %v4061 = vpop.permute.xlu0 %4060
  %v4063 = vmul.f32 %v4061, %v3578
  %4065 = vrot.lane.b32.xlu0 %v4058, 127
  %v4066 = vpop.permute.xlu0 %4065
  %v4068 = vadd.f32 %v4052, %v4066
  %4070 = vrot.lane.b32.xlu0 %v4063, 127
  %v4071 = vpop.permute.xlu0 %4070
  %v4073 = vadd.f32 %v4053, %v4071
  %4074 = vset.pattern.permute.xlu0 8
  %4075 = vperm.xlu0 %4074, %v4028
  %v4076 = vpop.permute.xlu0 %4075
  %v4078 = vmul.f32 %v4076, %v4025
  %4079 = vset.pattern.permute.xlu0 8
  %4080 = vperm.xlu0 %4079, %v4029
  %v4081 = vpop.permute.xlu0 %4080
  %v4083 = vmul.f32 %v4081, %v4025
  %4085 = vrot.lane.b32.xlu0 %v4078, 127
  %v4086 = vpop.permute.xlu0 %4085
  %v4088 = vadd.f32 %v4068, %v4086
  %4090 = vrot.lane.b32.xlu0 %v4083, 127
  %v4091 = vpop.permute.xlu0 %4090
  %v4093 = vadd.f32 %v4073, %v4091
  %4094 = vset.pattern.permute.xlu0 9
  %4095 = vperm.xlu0 %4094, %v4028
  %v4096 = vpop.permute.xlu0 %4095
  %v4098 = vmul.f32 %v4096, %v3578
  %4099 = vset.pattern.permute.xlu0 9
  %4100 = vperm.xlu0 %4099, %v4029
  %v4101 = vpop.permute.xlu0 %4100
  %v4103 = vmul.f32 %v4101, %v3578
  %4105 = vrot.lane.b32.xlu0 %v4098, 126
  %v4106 = vpop.permute.xlu0 %4105
  %v4108 = vadd.f32 %v4088, %v4106
  %4110 = vrot.lane.b32.xlu0 %v4103, 126
  %v4111 = vpop.permute.xlu0 %4110
  %v4113 = vadd.f32 %v4093, %v4111
  %4115 = vrot.lane.b32.xlu0 %v4108, 4
  %v4116 = vpop.permute.xlu0 %4115
  %vm4118 = vcmask 60448
  %4119 = vst.msk [vmem:[%s11] sm:$0xf] %vm4118, %v4116
  %4121 = vrot.lane.b32.xlu0 %v4113, 4
  %v4122 = vpop.permute.xlu0 %4121
  %4124 = vst.msk [vmem:[%s12] sm:$0xf] %vm4118, %v4122
  %v4125 = vld [vmem:[%s7] sm:$0xf]
  %v4126 = vsel %vm2042, %v4108, 0
  %v4129 = vsel %vm2046, %v4125, 0
  %4131 = vmatprep.subr.mxu0 0.0
  %v4132 = vand.u32 %v4129, 4294901760
  %4133 = vmatpush1.msra.mxu0 %v4132
  %4134 = vmatprep.subr.mxu0 0.0
  %4135 = vmatpush1.msra.mxu0 0.0
  %4136 = vmatprep.subr.mxu0 0.0
  %4137 = vmatpush1.msra.mxu0 0.0
  %4138 = vmatprep.subr.mxu0 0.0
  %4139 = vmatpush1.msra.mxu0 0.0
  %4140 = vmatprep.subr.mxu0 0.0
  %4141 = vmatpush1.msra.mxu0 0.0
  %4142 = vmatprep.subr.mxu0 0.0
  %4143 = vmatpush1.msra.mxu0 0.0
  %4144 = vmatprep.subr.mxu0 0.0
  %4145 = vmatpush1.msra.mxu0 0.0
  %4146 = vmatprep.subr.mxu0 0.0
  %4147 = vmatpush1.msra.mxu0 0.0
  %4148 = vmatprep.subr.mxu0 0.0
  %4149 = vmatpush1.msra.mxu0 0.0
  %4150 = vmatprep.subr.mxu0 0.0
  %4151 = vmatpush1.msra.mxu0 0.0
  %4152 = vmatprep.subr.mxu0 0.0
  %4153 = vmatpush1.msra.mxu0 0.0
  %4154 = vmatprep.subr.mxu0 0.0
  %4155 = vmatpush1.msra.mxu0 0.0
  %4156 = vmatprep.subr.mxu0 0.0
  %4157 = vmatpush1.msra.mxu0 0.0
  %4158 = vmatprep.subr.mxu0 0.0
  %4159 = vmatpush1.msra.mxu0 0.0
  %4160 = vmatprep.subr.mxu0 0.0
  %4161 = vmatpush1.msra.mxu0 0.0
  %4162 = vmatprep.subr.mxu0 0.0
  %4163 = vmatpush1.msra.mxu0 0.0
  %4164 = vmatprep.subr.mxu0 0.0
  %4165 = vmatpush1.msra.mxu0 0.0
  %4166 = vmatprep.subr.mxu0 0.0
  %4167 = vmatpush1.msra.mxu0 0.0
  %4168 = vmatprep.subr.mxu0 0.0
  %4169 = vmatpush1.msra.mxu0 0.0
  %4170 = vmatprep.subr.mxu0 0.0
  %4171 = vmatpush1.msra.mxu0 0.0
  %4172 = vmatprep.subr.mxu0 0.0
  %4173 = vmatpush1.msra.mxu0 0.0
  %4174 = vmatprep.subr.mxu0 0.0
  %4175 = vmatpush1.msra.mxu0 0.0
  %4176 = vmatprep.subr.mxu0 0.0
  %4177 = vmatpush1.msra.mxu0 0.0
  %4178 = vmatprep.subr.mxu0 0.0
  %4179 = vmatpush1.msra.mxu0 0.0
  %4180 = vmatprep.subr.mxu0 0.0
  %4181 = vmatpush1.msra.mxu0 0.0
  %4182 = vmatprep.subr.mxu0 0.0
  %4183 = vmatpush1.msra.mxu0 0.0
  %4184 = vmatprep.subr.mxu0 0.0
  %4185 = vmatpush1.msra.mxu0 0.0
  %4186 = vmatprep.subr.mxu0 0.0
  %4187 = vmatpush1.msra.mxu0 0.0
  %4188 = vmatprep.subr.mxu0 0.0
  %4189 = vmatpush1.msra.mxu0 0.0
  %4190 = vmatprep.subr.mxu0 0.0
  %4191 = vmatpush1.msra.mxu0 0.0
  %4192 = vmatprep.subr.mxu0 0.0
  %4193 = vmatpush1.msra.mxu0 0.0
  %4194 = vmatprep.subr.mxu0 0.0
  %4195 = vmatpush1.msra.mxu0 0.0
  %4196 = vmatprep.mubr.f32.mxu0 0.0
  %v4197 = vand.u32 %v4126, 4294901760
  %v4198 = vsub.f32 %v4126, %v4197
  %v4199 = vand.u32 %v4198, 4294901760
  %v4200 = vsub.f32 %v4198, %v4199
  %v4201 = vand.u32 %v4200, 4294901760
  %4202 = vmatmul.mubr.f32.gmra.mrb[0].mxu0 %v4201
  %v4203 = vpop.f32.mrb[0].mxu0
  %v4204 = vadd.f32 0.0, %v4203
  %v4205 = vpop.f32.mrb[0].mxu0
  %4206 = vdwg.mxu0
  %4207 = vmatprep.subr.mxu0 0.0
  %v4208 = vand.u32 %v4129, 4294901760
  %v4209 = vsub.f32 %v4129, %v4208
  %v4210 = vand.u32 %v4209, 4294901760
  %v4211 = vsub.f32 %v4209, %v4210
  %v4212 = vand.u32 %v4211, 4294901760
  %4213 = vmatpush1.msra.mxu0 %v4212
  %4214 = vmatprep.subr.mxu0 0.0
  %4215 = vmatpush1.msra.mxu0 0.0
  %4216 = vmatprep.subr.mxu0 0.0
  %4217 = vmatpush1.msra.mxu0 0.0
  %4218 = vmatprep.subr.mxu0 0.0
  %4219 = vmatpush1.msra.mxu0 0.0
  %4220 = vmatprep.subr.mxu0 0.0
  %4221 = vmatpush1.msra.mxu0 0.0
  %4222 = vmatprep.subr.mxu0 0.0
  %4223 = vmatpush1.msra.mxu0 0.0
  %4224 = vmatprep.subr.mxu0 0.0
  %4225 = vmatpush1.msra.mxu0 0.0
  %4226 = vmatprep.subr.mxu0 0.0
  %4227 = vmatpush1.msra.mxu0 0.0
  %4228 = vmatprep.subr.mxu0 0.0
  %4229 = vmatpush1.msra.mxu0 0.0
  %4230 = vmatprep.subr.mxu0 0.0
  %4231 = vmatpush1.msra.mxu0 0.0
  %4232 = vmatprep.subr.mxu0 0.0
  %4233 = vmatpush1.msra.mxu0 0.0
  %4234 = vmatprep.subr.mxu0 0.0
  %4235 = vmatpush1.msra.mxu0 0.0
  %4236 = vmatprep.subr.mxu0 0.0
  %4237 = vmatpush1.msra.mxu0 0.0
  %4238 = vmatprep.subr.mxu0 0.0
  %4239 = vmatpush1.msra.mxu0 0.0
  %4240 = vmatprep.subr.mxu0 0.0
  %4241 = vmatpush1.msra.mxu0 0.0
  %4242 = vmatprep.subr.mxu0 0.0
  %4243 = vmatpush1.msra.mxu0 0.0
  %4244 = vmatprep.subr.mxu0 0.0
  %4245 = vmatpush1.msra.mxu0 0.0
  %4246 = vmatprep.subr.mxu0 0.0
  %4247 = vmatpush1.msra.mxu0 0.0
  %4248 = vmatprep.subr.mxu0 0.0
  %4249 = vmatpush1.msra.mxu0 0.0
  %4250 = vmatprep.subr.mxu0 0.0
  %4251 = vmatpush1.msra.mxu0 0.0
  %4252 = vmatprep.subr.mxu0 0.0
  %4253 = vmatpush1.msra.mxu0 0.0
  %4254 = vmatprep.subr.mxu0 0.0
  %4255 = vmatpush1.msra.mxu0 0.0
  %4256 = vmatprep.subr.mxu0 0.0
  %4257 = vmatpush1.msra.mxu0 0.0
  %4258 = vmatprep.subr.mxu0 0.0
  %4259 = vmatpush1.msra.mxu0 0.0
  %4260 = vmatprep.subr.mxu0 0.0
  %4261 = vmatpush1.msra.mxu0 0.0
  %4262 = vmatprep.subr.mxu0 0.0
  %4263 = vmatpush1.msra.mxu0 0.0
  %4264 = vmatprep.subr.mxu0 0.0
  %4265 = vmatpush1.msra.mxu0 0.0
  %4266 = vmatprep.subr.mxu0 0.0
  %4267 = vmatpush1.msra.mxu0 0.0
  %4268 = vmatprep.subr.mxu0 0.0
  %4269 = vmatpush1.msra.mxu0 0.0
  %4270 = vmatprep.subr.mxu0 0.0
  %4271 = vmatpush1.msra.mxu0 0.0
  %4272 = vmatprep.subr.mxu0 0.0
  %4273 = vmatpush1.msra.mxu0 0.0
  %4274 = vmatprep.subr.mxu0 0.0
  %4275 = vmatpush1.msra.mxu0 0.0
  %4276 = vmatprep.mubr.f32.mxu0 0.0
  %v4277 = vand.u32 %v4126, 4294901760
  %4278 = vmatmul.mubr.f32.gmra.mrb[0].mxu0 %v4277
  %v4279 = vpop.f32.mrb[0].mxu0
  %v4280 = vadd.f32 %v4204, %v4279
  %v4281 = vpop.f32.mrb[0].mxu0
  %4282 = vdwg.mxu0
  %4283 = vmatprep.subr.mxu0 0.0
  %v4284 = vand.u32 %v4129, 4294901760
  %v4285 = vsub.f32 %v4129, %v4284
  %4286 = vmatpush1.msra.mxu0 %v4285
  %4287 = vmatprep.subr.mxu0 0.0
  %4288 = vmatpush1.msra.mxu0 0.0
  %4289 = vmatprep.subr.mxu0 0.0
  %4290 = vmatpush1.msra.mxu0 0.0
  %4291 = vmatprep.subr.mxu0 0.0
  %4292 = vmatpush1.msra.mxu0 0.0
  %4293 = vmatprep.subr.mxu0 0.0
  %4294 = vmatpush1.msra.mxu0 0.0
  %4295 = vmatprep.subr.mxu0 0.0
  %4296 = vmatpush1.msra.mxu0 0.0
  %4297 = vmatprep.subr.mxu0 0.0
  %4298 = vmatpush1.msra.mxu0 0.0
  %4299 = vmatprep.subr.mxu0 0.0
  %4300 = vmatpush1.msra.mxu0 0.0
  %4301 = vmatprep.subr.mxu0 0.0
  %4302 = vmatpush1.msra.mxu0 0.0
  %4303 = vmatprep.subr.mxu0 0.0
  %4304 = vmatpush1.msra.mxu0 0.0
  %4305 = vmatprep.subr.mxu0 0.0
  %4306 = vmatpush1.msra.mxu0 0.0
  %4307 = vmatprep.subr.mxu0 0.0
  %4308 = vmatpush1.msra.mxu0 0.0
  %4309 = vmatprep.subr.mxu0 0.0
  %4310 = vmatpush1.msra.mxu0 0.0
  %4311 = vmatprep.subr.mxu0 0.0
  %4312 = vmatpush1.msra.mxu0 0.0
  %4313 = vmatprep.subr.mxu0 0.0
  %4314 = vmatpush1.msra.mxu0 0.0
  %4315 = vmatprep.subr.mxu0 0.0
  %4316 = vmatpush1.msra.mxu0 0.0
  %4317 = vmatprep.subr.mxu0 0.0
  %4318 = vmatpush1.msra.mxu0 0.0
  %4319 = vmatprep.subr.mxu0 0.0
  %4320 = vmatpush1.msra.mxu0 0.0
  %4321 = vmatprep.subr.mxu0 0.0
  %4322 = vmatpush1.msra.mxu0 0.0
  %4323 = vmatprep.subr.mxu0 0.0
  %4324 = vmatpush1.msra.mxu0 0.0
  %4325 = vmatprep.subr.mxu0 0.0
  %4326 = vmatpush1.msra.mxu0 0.0
  %4327 = vmatprep.subr.mxu0 0.0
  %4328 = vmatpush1.msra.mxu0 0.0
  %4329 = vmatprep.subr.mxu0 0.0
  %4330 = vmatpush1.msra.mxu0 0.0
  %4331 = vmatprep.subr.mxu0 0.0
  %4332 = vmatpush1.msra.mxu0 0.0
  %4333 = vmatprep.subr.mxu0 0.0
  %4334 = vmatpush1.msra.mxu0 0.0
  %4335 = vmatprep.subr.mxu0 0.0
  %4336 = vmatpush1.msra.mxu0 0.0
  %4337 = vmatprep.subr.mxu0 0.0
  %4338 = vmatpush1.msra.mxu0 0.0
  %4339 = vmatprep.subr.mxu0 0.0
  %4340 = vmatpush1.msra.mxu0 0.0
  %4341 = vmatprep.subr.mxu0 0.0
  %4342 = vmatpush1.msra.mxu0 0.0
  %4343 = vmatprep.subr.mxu0 0.0
  %4344 = vmatpush1.msra.mxu0 0.0
  %4345 = vmatprep.subr.mxu0 0.0
  %4346 = vmatpush1.msra.mxu0 0.0
  %4347 = vmatprep.subr.mxu0 0.0
  %4348 = vmatpush1.msra.mxu0 0.0
  %4349 = vmatprep.mubr.f32.mxu0 0.0
  %v4350 = vand.u32 %v4126, 4294901760
  %v4351 = vsub.f32 %v4126, %v4350
  %4352 = vmatmul.mubr.f32.gmra.mrb[0].mxu0 %v4351
  %v4353 = vpop.f32.mrb[0].mxu0
  %v4354 = vadd.f32 %v4280, %v4353
  %v4355 = vpop.f32.mrb[0].mxu0
  %4356 = vdwg.mxu0
  %4357 = vmatprep.subr.mxu0 0.0
  %v4358 = vand.u32 %v4129, 4294901760
  %4359 = vmatpush1.msra.mxu0 %v4358
  %4360 = vmatprep.subr.mxu0 0.0
  %4361 = vmatpush1.msra.mxu0 0.0
  %4362 = vmatprep.subr.mxu0 0.0
  %4363 = vmatpush1.msra.mxu0 0.0
  %4364 = vmatprep.subr.mxu0 0.0
  %4365 = vmatpush1.msra.mxu0 0.0
  %4366 = vmatprep.subr.mxu0 0.0
  %4367 = vmatpush1.msra.mxu0 0.0
  %4368 = vmatprep.subr.mxu0 0.0
  %4369 = vmatpush1.msra.mxu0 0.0
  %4370 = vmatprep.subr.mxu0 0.0
  %4371 = vmatpush1.msra.mxu0 0.0
  %4372 = vmatprep.subr.mxu0 0.0
  %4373 = vmatpush1.msra.mxu0 0.0
  %4374 = vmatprep.subr.mxu0 0.0
  %4375 = vmatpush1.msra.mxu0 0.0
  %4376 = vmatprep.subr.mxu0 0.0
  %4377 = vmatpush1.msra.mxu0 0.0
  %4378 = vmatprep.subr.mxu0 0.0
  %4379 = vmatpush1.msra.mxu0 0.0
  %4380 = vmatprep.subr.mxu0 0.0
  %4381 = vmatpush1.msra.mxu0 0.0
  %4382 = vmatprep.subr.mxu0 0.0
  %4383 = vmatpush1.msra.mxu0 0.0
  %4384 = vmatprep.subr.mxu0 0.0
  %4385 = vmatpush1.msra.mxu0 0.0
  %4386 = vmatprep.subr.mxu0 0.0
  %4387 = vmatpush1.msra.mxu0 0.0
  %4388 = vmatprep.subr.mxu0 0.0
  %4389 = vmatpush1.msra.mxu0 0.0
  %4390 = vmatprep.subr.mxu0 0.0
  %4391 = vmatpush1.msra.mxu0 0.0
  %4392 = vmatprep.subr.mxu0 0.0
  %4393 = vmatpush1.msra.mxu0 0.0
  %4394 = vmatprep.subr.mxu0 0.0
  %4395 = vmatpush1.msra.mxu0 0.0
  %4396 = vmatprep.subr.mxu0 0.0
  %4397 = vmatpush1.msra.mxu0 0.0
  %4398 = vmatprep.subr.mxu0 0.0
  %4399 = vmatpush1.msra.mxu0 0.0
  %4400 = vmatprep.subr.mxu0 0.0
  %4401 = vmatpush1.msra.mxu0 0.0
  %4402 = vmatprep.subr.mxu0 0.0
  %4403 = vmatpush1.msra.mxu0 0.0
  %4404 = vmatprep.subr.mxu0 0.0
  %4405 = vmatpush1.msra.mxu0 0.0
  %4406 = vmatprep.subr.mxu0 0.0
  %4407 = vmatpush1.msra.mxu0 0.0
  %4408 = vmatprep.subr.mxu0 0.0
  %4409 = vmatpush1.msra.mxu0 0.0
  %4410 = vmatprep.subr.mxu0 0.0
  %4411 = vmatpush1.msra.mxu0 0.0
  %4412 = vmatprep.subr.mxu0 0.0
  %4413 = vmatpush1.msra.mxu0 0.0
  %4414 = vmatprep.subr.mxu0 0.0
  %4415 = vmatpush1.msra.mxu0 0.0
  %4416 = vmatprep.subr.mxu0 0.0
  %4417 = vmatpush1.msra.mxu0 0.0
  %4418 = vmatprep.subr.mxu0 0.0
  %4419 = vmatpush1.msra.mxu0 0.0
  %4420 = vmatprep.subr.mxu0 0.0
  %4421 = vmatpush1.msra.mxu0 0.0
  %4422 = vmatprep.mubr.f32.mxu0 0.0
  %v4423 = vand.u32 %v4126, 4294901760
  %v4424 = vsub.f32 %v4126, %v4423
  %v4425 = vand.u32 %v4424, 4294901760
  %4426 = vmatmul.mubr.f32.gmra.mrb[0].mxu0 %v4425
  %v4427 = vpop.f32.mrb[0].mxu0
  %v4428 = vadd.f32 %v4354, %v4427
  %v4429 = vpop.f32.mrb[0].mxu0
  %4430 = vdwg.mxu0
  %4431 = vmatprep.subr.mxu0 0.0
  %v4432 = vand.u32 %v4129, 4294901760
  %v4433 = vsub.f32 %v4129, %v4432
  %v4434 = vand.u32 %v4433, 4294901760
  %4435 = vmatpush1.msra.mxu0 %v4434
  %4436 = vmatprep.subr.mxu0 0.0
  %4437 = vmatpush1.msra.mxu0 0.0
  %4438 = vmatprep.subr.mxu0 0.0
  %4439 = vmatpush1.msra.mxu0 0.0
  %4440 = vmatprep.subr.mxu0 0.0
  %4441 = vmatpush1.msra.mxu0 0.0
  %4442 = vmatprep.subr.mxu0 0.0
  %4443 = vmatpush1.msra.mxu0 0.0
  %4444 = vmatprep.subr.mxu0 0.0
  %4445 = vmatpush1.msra.mxu0 0.0
  %4446 = vmatprep.subr.mxu0 0.0
  %4447 = vmatpush1.msra.mxu0 0.0
  %4448 = vmatprep.subr.mxu0 0.0
  %4449 = vmatpush1.msra.mxu0 0.0
  %4450 = vmatprep.subr.mxu0 0.0
  %4451 = vmatpush1.msra.mxu0 0.0
  %4452 = vmatprep.subr.mxu0 0.0
  %4453 = vmatpush1.msra.mxu0 0.0
  %4454 = vmatprep.subr.mxu0 0.0
  %4455 = vmatpush1.msra.mxu0 0.0
  %4456 = vmatprep.subr.mxu0 0.0
  %4457 = vmatpush1.msra.mxu0 0.0
  %4458 = vmatprep.subr.mxu0 0.0
  %4459 = vmatpush1.msra.mxu0 0.0
  %4460 = vmatprep.subr.mxu0 0.0
  %4461 = vmatpush1.msra.mxu0 0.0
  %4462 = vmatprep.subr.mxu0 0.0
  %4463 = vmatpush1.msra.mxu0 0.0
  %4464 = vmatprep.subr.mxu0 0.0
  %4465 = vmatpush1.msra.mxu0 0.0
  %4466 = vmatprep.subr.mxu0 0.0
  %4467 = vmatpush1.msra.mxu0 0.0
  %4468 = vmatprep.subr.mxu0 0.0
  %4469 = vmatpush1.msra.mxu0 0.0
  %4470 = vmatprep.subr.mxu0 0.0
  %4471 = vmatpush1.msra.mxu0 0.0
  %4472 = vmatprep.subr.mxu0 0.0
  %4473 = vmatpush1.msra.mxu0 0.0
  %4474 = vmatprep.subr.mxu0 0.0
  %4475 = vmatpush1.msra.mxu0 0.0
  %4476 = vmatprep.subr.mxu0 0.0
  %4477 = vmatpush1.msra.mxu0 0.0
  %4478 = vmatprep.subr.mxu0 0.0
  %4479 = vmatpush1.msra.mxu0 0.0
  %4480 = vmatprep.subr.mxu0 0.0
  %4481 = vmatpush1.msra.mxu0 0.0
  %4482 = vmatprep.subr.mxu0 0.0
  %4483 = vmatpush1.msra.mxu0 0.0
  %4484 = vmatprep.subr.mxu0 0.0
  %4485 = vmatpush1.msra.mxu0 0.0
  %4486 = vmatprep.subr.mxu0 0.0
  %4487 = vmatpush1.msra.mxu0 0.0
  %4488 = vmatprep.subr.mxu0 0.0
  %4489 = vmatpush1.msra.mxu0 0.0
  %4490 = vmatprep.subr.mxu0 0.0
  %4491 = vmatpush1.msra.mxu0 0.0
  %4492 = vmatprep.subr.mxu0 0.0
  %4493 = vmatpush1.msra.mxu0 0.0
  %4494 = vmatprep.subr.mxu0 0.0
  %4495 = vmatpush1.msra.mxu0 0.0
  %4496 = vmatprep.subr.mxu0 0.0
  %4497 = vmatpush1.msra.mxu0 0.0
  %4498 = vmatprep.mubr.f32.mxu0 0.0
  %v4499 = vand.u32 %v4126, 4294901760
  %4500 = vmatmul.mubr.f32.gmra.mrb[0].mxu0 %v4499
  %v4501 = vpop.f32.mrb[0].mxu0
  %v4502 = vadd.f32 %v4428, %v4501
  %v4503 = vpop.f32.mrb[0].mxu0
  %4504 = vdwg.mxu0
  %4505 = vmatprep.subr.mxu0 0.0
  %v4506 = vand.u32 %v4129, 4294901760
  %4507 = vmatpush1.msra.mxu0 %v4506
  %4508 = vmatprep.subr.mxu0 0.0
  %4509 = vmatpush1.msra.mxu0 0.0
  %4510 = vmatprep.subr.mxu0 0.0
  %4511 = vmatpush1.msra.mxu0 0.0
  %4512 = vmatprep.subr.mxu0 0.0
  %4513 = vmatpush1.msra.mxu0 0.0
  %4514 = vmatprep.subr.mxu0 0.0
  %4515 = vmatpush1.msra.mxu0 0.0
  %4516 = vmatprep.subr.mxu0 0.0
  %4517 = vmatpush1.msra.mxu0 0.0
  %4518 = vmatprep.subr.mxu0 0.0
  %4519 = vmatpush1.msra.mxu0 0.0
  %4520 = vmatprep.subr.mxu0 0.0
  %4521 = vmatpush1.msra.mxu0 0.0
  %4522 = vmatprep.subr.mxu0 0.0
  %4523 = vmatpush1.msra.mxu0 0.0
  %4524 = vmatprep.subr.mxu0 0.0
  %4525 = vmatpush1.msra.mxu0 0.0
  %4526 = vmatprep.subr.mxu0 0.0
  %4527 = vmatpush1.msra.mxu0 0.0
  %4528 = vmatprep.subr.mxu0 0.0
  %4529 = vmatpush1.msra.mxu0 0.0
  %4530 = vmatprep.subr.mxu0 0.0
  %4531 = vmatpush1.msra.mxu0 0.0
  %4532 = vmatprep.subr.mxu0 0.0
  %4533 = vmatpush1.msra.mxu0 0.0
  %4534 = vmatprep.subr.mxu0 0.0
  %4535 = vmatpush1.msra.mxu0 0.0
  %4536 = vmatprep.subr.mxu0 0.0
  %4537 = vmatpush1.msra.mxu0 0.0
  %4538 = vmatprep.subr.mxu0 0.0
  %4539 = vmatpush1.msra.mxu0 0.0
  %4540 = vmatprep.subr.mxu0 0.0
  %4541 = vmatpush1.msra.mxu0 0.0
  %4542 = vmatprep.subr.mxu0 0.0
  %4543 = vmatpush1.msra.mxu0 0.0
  %4544 = vmatprep.subr.mxu0 0.0
  %4545 = vmatpush1.msra.mxu0 0.0
  %4546 = vmatprep.subr.mxu0 0.0
  %4547 = vmatpush1.msra.mxu0 0.0
  %4548 = vmatprep.subr.mxu0 0.0
  %4549 = vmatpush1.msra.mxu0 0.0
  %4550 = vmatprep.subr.mxu0 0.0
  %4551 = vmatpush1.msra.mxu0 0.0
  %4552 = vmatprep.subr.mxu0 0.0
  %4553 = vmatpush1.msra.mxu0 0.0
  %4554 = vmatprep.subr.mxu0 0.0
  %4555 = vmatpush1.msra.mxu0 0.0
  %4556 = vmatprep.subr.mxu0 0.0
  %4557 = vmatpush1.msra.mxu0 0.0
  %4558 = vmatprep.subr.mxu0 0.0
  %4559 = vmatpush1.msra.mxu0 0.0
  %4560 = vmatprep.subr.mxu0 0.0
  %4561 = vmatpush1.msra.mxu0 0.0
  %4562 = vmatprep.subr.mxu0 0.0
  %4563 = vmatpush1.msra.mxu0 0.0
  %4564 = vmatprep.subr.mxu0 0.0
  %4565 = vmatpush1.msra.mxu0 0.0
  %4566 = vmatprep.subr.mxu0 0.0
  %4567 = vmatpush1.msra.mxu0 0.0
  %4568 = vmatprep.subr.mxu0 0.0
  %4569 = vmatpush1.msra.mxu0 0.0
  %4570 = vmatprep.mubr.f32.mxu0 0.0
  %v4571 = vand.u32 %v4126, 4294901760
  %4572 = vmatmul.mubr.f32.gmra.mrb[0].mxu0 %v4571
  %v4573 = vpop.f32.mrb[0].mxu0
  %v4574 = vadd.f32 %v4502, %v4573
  %v4575 = vpop.f32.mrb[0].mxu0
  %4576 = vdwg.mxu0
  %v4577 = vld [vmem:[%s8] sm:$0xf]
  %v4579 = vsel %vm2046, %v4577, 0
  %4581 = vmatprep.subr.mxu0 0.0
  %v4582 = vand.u32 %v4579, 4294901760
  %4583 = vmatpush1.msra.mxu0 %v4582
  %4584 = vmatprep.subr.mxu0 0.0
  %4585 = vmatpush1.msra.mxu0 0.0
  %4586 = vmatprep.subr.mxu0 0.0
  %4587 = vmatpush1.msra.mxu0 0.0
  %4588 = vmatprep.subr.mxu0 0.0
  %4589 = vmatpush1.msra.mxu0 0.0
  %4590 = vmatprep.subr.mxu0 0.0
  %4591 = vmatpush1.msra.mxu0 0.0
  %4592 = vmatprep.subr.mxu0 0.0
  %4593 = vmatpush1.msra.mxu0 0.0
  %4594 = vmatprep.subr.mxu0 0.0
  %4595 = vmatpush1.msra.mxu0 0.0
  %4596 = vmatprep.subr.mxu0 0.0
  %4597 = vmatpush1.msra.mxu0 0.0
  %4598 = vmatprep.subr.mxu0 0.0
  %4599 = vmatpush1.msra.mxu0 0.0
  %4600 = vmatprep.subr.mxu0 0.0
  %4601 = vmatpush1.msra.mxu0 0.0
  %4602 = vmatprep.subr.mxu0 0.0
  %4603 = vmatpush1.msra.mxu0 0.0
  %4604 = vmatprep.subr.mxu0 0.0
  %4605 = vmatpush1.msra.mxu0 0.0
  %4606 = vmatprep.subr.mxu0 0.0
  %4607 = vmatpush1.msra.mxu0 0.0
  %4608 = vmatprep.subr.mxu0 0.0
  %4609 = vmatpush1.msra.mxu0 0.0
  %4610 = vmatprep.subr.mxu0 0.0
  %4611 = vmatpush1.msra.mxu0 0.0
  %4612 = vmatprep.subr.mxu0 0.0
  %4613 = vmatpush1.msra.mxu0 0.0
  %4614 = vmatprep.subr.mxu0 0.0
  %4615 = vmatpush1.msra.mxu0 0.0
  %4616 = vmatprep.subr.mxu0 0.0
  %4617 = vmatpush1.msra.mxu0 0.0
  %4618 = vmatprep.subr.mxu0 0.0
  %4619 = vmatpush1.msra.mxu0 0.0
  %4620 = vmatprep.subr.mxu0 0.0
  %4621 = vmatpush1.msra.mxu0 0.0
  %4622 = vmatprep.subr.mxu0 0.0
  %4623 = vmatpush1.msra.mxu0 0.0
  %4624 = vmatprep.subr.mxu0 0.0
  %4625 = vmatpush1.msra.mxu0 0.0
  %4626 = vmatprep.subr.mxu0 0.0
  %4627 = vmatpush1.msra.mxu0 0.0
  %4628 = vmatprep.subr.mxu0 0.0
  %4629 = vmatpush1.msra.mxu0 0.0
  %4630 = vmatprep.subr.mxu0 0.0
  %4631 = vmatpush1.msra.mxu0 0.0
  %4632 = vmatprep.subr.mxu0 0.0
  %4633 = vmatpush1.msra.mxu0 0.0
  %4634 = vmatprep.subr.mxu0 0.0
  %4635 = vmatpush1.msra.mxu0 0.0
  %4636 = vmatprep.subr.mxu0 0.0
  %4637 = vmatpush1.msra.mxu0 0.0
  %4638 = vmatprep.subr.mxu0 0.0
  %4639 = vmatpush1.msra.mxu0 0.0
  %4640 = vmatprep.subr.mxu0 0.0
  %4641 = vmatpush1.msra.mxu0 0.0
  %4642 = vmatprep.subr.mxu0 0.0
  %4643 = vmatpush1.msra.mxu0 0.0
  %4644 = vmatprep.subr.mxu0 0.0
  %4645 = vmatpush1.msra.mxu0 0.0
  %4646 = vmatprep.mubr.f32.mxu0 0.0
  %v4647 = vand.u32 %v4126, 4294901760
  %v4648 = vsub.f32 %v4126, %v4647
  %v4649 = vand.u32 %v4648, 4294901760
  %v4650 = vsub.f32 %v4648, %v4649
  %v4651 = vand.u32 %v4650, 4294901760
  %4652 = vmatmul.mubr.f32.gmra.mrb[0].mxu0 %v4651
  %v4653 = vpop.f32.mrb[0].mxu0
  %v4654 = vadd.f32 0.0, %v4653
  %v4655 = vpop.f32.mrb[0].mxu0
  %4656 = vdwg.mxu0
  %4657 = vmatprep.subr.mxu0 0.0
  %v4658 = vand.u32 %v4579, 4294901760
  %v4659 = vsub.f32 %v4579, %v4658
  %v4660 = vand.u32 %v4659, 4294901760
  %v4661 = vsub.f32 %v4659, %v4660
  %v4662 = vand.u32 %v4661, 4294901760
  %4663 = vmatpush1.msra.mxu0 %v4662
  %4664 = vmatprep.subr.mxu0 0.0
  %4665 = vmatpush1.msra.mxu0 0.0
  %4666 = vmatprep.subr.mxu0 0.0
  %4667 = vmatpush1.msra.mxu0 0.0
  %4668 = vmatprep.subr.mxu0 0.0
  %4669 = vmatpush1.msra.mxu0 0.0
  %4670 = vmatprep.subr.mxu0 0.0
  %4671 = vmatpush1.msra.mxu0 0.0
  %4672 = vmatprep.subr.mxu0 0.0
  %4673 = vmatpush1.msra.mxu0 0.0
  %4674 = vmatprep.subr.mxu0 0.0
  %4675 = vmatpush1.msra.mxu0 0.0
  %4676 = vmatprep.subr.mxu0 0.0
  %4677 = vmatpush1.msra.mxu0 0.0
  %4678 = vmatprep.subr.mxu0 0.0
  %4679 = vmatpush1.msra.mxu0 0.0
  %4680 = vmatprep.subr.mxu0 0.0
  %4681 = vmatpush1.msra.mxu0 0.0
  %4682 = vmatprep.subr.mxu0 0.0
  %4683 = vmatpush1.msra.mxu0 0.0
  %4684 = vmatprep.subr.mxu0 0.0
  %4685 = vmatpush1.msra.mxu0 0.0
  %4686 = vmatprep.subr.mxu0 0.0
  %4687 = vmatpush1.msra.mxu0 0.0
  %4688 = vmatprep.subr.mxu0 0.0
  %4689 = vmatpush1.msra.mxu0 0.0
  %4690 = vmatprep.subr.mxu0 0.0
  %4691 = vmatpush1.msra.mxu0 0.0
  %4692 = vmatprep.subr.mxu0 0.0
  %4693 = vmatpush1.msra.mxu0 0.0
  %4694 = vmatprep.subr.mxu0 0.0
  %4695 = vmatpush1.msra.mxu0 0.0
  %4696 = vmatprep.subr.mxu0 0.0
  %4697 = vmatpush1.msra.mxu0 0.0
  %4698 = vmatprep.subr.mxu0 0.0
  %4699 = vmatpush1.msra.mxu0 0.0
  %4700 = vmatprep.subr.mxu0 0.0
  %4701 = vmatpush1.msra.mxu0 0.0
  %4702 = vmatprep.subr.mxu0 0.0
  %4703 = vmatpush1.msra.mxu0 0.0
  %4704 = vmatprep.subr.mxu0 0.0
  %4705 = vmatpush1.msra.mxu0 0.0
  %4706 = vmatprep.subr.mxu0 0.0
  %4707 = vmatpush1.msra.mxu0 0.0
  %4708 = vmatprep.subr.mxu0 0.0
  %4709 = vmatpush1.msra.mxu0 0.0
  %4710 = vmatprep.subr.mxu0 0.0
  %4711 = vmatpush1.msra.mxu0 0.0
  %4712 = vmatprep.subr.mxu0 0.0
  %4713 = vmatpush1.msra.mxu0 0.0
  %4714 = vmatprep.subr.mxu0 0.0
  %4715 = vmatpush1.msra.mxu0 0.0
  %4716 = vmatprep.subr.mxu0 0.0
  %4717 = vmatpush1.msra.mxu0 0.0
  %4718 = vmatprep.subr.mxu0 0.0
  %4719 = vmatpush1.msra.mxu0 0.0
  %4720 = vmatprep.subr.mxu0 0.0
  %4721 = vmatpush1.msra.mxu0 0.0
  %4722 = vmatprep.subr.mxu0 0.0
  %4723 = vmatpush1.msra.mxu0 0.0
  %4724 = vmatprep.subr.mxu0 0.0
  %4725 = vmatpush1.msra.mxu0 0.0
  %4726 = vmatprep.mubr.f32.mxu0 0.0
  %v4727 = vand.u32 %v4126, 4294901760
  %4728 = vmatmul.mubr.f32.gmra.mrb[0].mxu0 %v4727
  %v4729 = vpop.f32.mrb[0].mxu0
  %v4730 = vadd.f32 %v4654, %v4729
  %v4731 = vpop.f32.mrb[0].mxu0
  %4732 = vdwg.mxu0
  %4733 = vmatprep.subr.mxu0 0.0
  %v4734 = vand.u32 %v4579, 4294901760
  %v4735 = vsub.f32 %v4579, %v4734
  %4736 = vmatpush1.msra.mxu0 %v4735
  %4737 = vmatprep.subr.mxu0 0.0
  %4738 = vmatpush1.msra.mxu0 0.0
  %4739 = vmatprep.subr.mxu0 0.0
  %4740 = vmatpush1.msra.mxu0 0.0
  %4741 = vmatprep.subr.mxu0 0.0
  %4742 = vmatpush1.msra.mxu0 0.0
  %4743 = vmatprep.subr.mxu0 0.0
  %4744 = vmatpush1.msra.mxu0 0.0
  %4745 = vmatprep.subr.mxu0 0.0
  %4746 = vmatpush1.msra.mxu0 0.0
  %4747 = vmatprep.subr.mxu0 0.0
  %4748 = vmatpush1.msra.mxu0 0.0
  %4749 = vmatprep.subr.mxu0 0.0
  %4750 = vmatpush1.msra.mxu0 0.0
  %4751 = vmatprep.subr.mxu0 0.0
  %4752 = vmatpush1.msra.mxu0 0.0
  %4753 = vmatprep.subr.mxu0 0.0
  %4754 = vmatpush1.msra.mxu0 0.0
  %4755 = vmatprep.subr.mxu0 0.0
  %4756 = vmatpush1.msra.mxu0 0.0
  %4757 = vmatprep.subr.mxu0 0.0
  %4758 = vmatpush1.msra.mxu0 0.0
  %4759 = vmatprep.subr.mxu0 0.0
  %4760 = vmatpush1.msra.mxu0 0.0
  %4761 = vmatprep.subr.mxu0 0.0
  %4762 = vmatpush1.msra.mxu0 0.0
  %4763 = vmatprep.subr.mxu0 0.0
  %4764 = vmatpush1.msra.mxu0 0.0
  %4765 = vmatprep.subr.mxu0 0.0
  %4766 = vmatpush1.msra.mxu0 0.0
  %4767 = vmatprep.subr.mxu0 0.0
  %4768 = vmatpush1.msra.mxu0 0.0
  %4769 = vmatprep.subr.mxu0 0.0
  %4770 = vmatpush1.msra.mxu0 0.0
  %4771 = vmatprep.subr.mxu0 0.0
  %4772 = vmatpush1.msra.mxu0 0.0
  %4773 = vmatprep.subr.mxu0 0.0
  %4774 = vmatpush1.msra.mxu0 0.0
  %4775 = vmatprep.subr.mxu0 0.0
  %4776 = vmatpush1.msra.mxu0 0.0
  %4777 = vmatprep.subr.mxu0 0.0
  %4778 = vmatpush1.msra.mxu0 0.0
  %4779 = vmatprep.subr.mxu0 0.0
  %4780 = vmatpush1.msra.mxu0 0.0
  %4781 = vmatprep.subr.mxu0 0.0
  %4782 = vmatpush1.msra.mxu0 0.0
  %4783 = vmatprep.subr.mxu0 0.0
  %4784 = vmatpush1.msra.mxu0 0.0
  %4785 = vmatprep.subr.mxu0 0.0
  %4786 = vmatpush1.msra.mxu0 0.0
  %4787 = vmatprep.subr.mxu0 0.0
  %4788 = vmatpush1.msra.mxu0 0.0
  %4789 = vmatprep.subr.mxu0 0.0
  %4790 = vmatpush1.msra.mxu0 0.0
  %4791 = vmatprep.subr.mxu0 0.0
  %4792 = vmatpush1.msra.mxu0 0.0
  %4793 = vmatprep.subr.mxu0 0.0
  %4794 = vmatpush1.msra.mxu0 0.0
  %4795 = vmatprep.subr.mxu0 0.0
  %4796 = vmatpush1.msra.mxu0 0.0
  %4797 = vmatprep.subr.mxu0 0.0
  %4798 = vmatpush1.msra.mxu0 0.0
  %4799 = vmatprep.mubr.f32.mxu0 0.0
  %v4800 = vand.u32 %v4126, 4294901760
  %v4801 = vsub.f32 %v4126, %v4800
  %4802 = vmatmul.mubr.f32.gmra.mrb[0].mxu0 %v4801
  %v4803 = vpop.f32.mrb[0].mxu0
  %v4804 = vadd.f32 %v4730, %v4803
  %v4805 = vpop.f32.mrb[0].mxu0
  %4806 = vdwg.mxu0
  %4807 = vmatprep.subr.mxu0 0.0
  %v4808 = vand.u32 %v4579, 4294901760
  %4809 = vmatpush1.msra.mxu0 %v4808
  %4810 = vmatprep.subr.mxu0 0.0
  %4811 = vmatpush1.msra.mxu0 0.0
  %4812 = vmatprep.subr.mxu0 0.0
  %4813 = vmatpush1.msra.mxu0 0.0
  %4814 = vmatprep.subr.mxu0 0.0
  %4815 = vmatpush1.msra.mxu0 0.0
  %4816 = vmatprep.subr.mxu0 0.0
  %4817 = vmatpush1.msra.mxu0 0.0
  %4818 = vmatprep.subr.mxu0 0.0
  %4819 = vmatpush1.msra.mxu0 0.0
  %4820 = vmatprep.subr.mxu0 0.0
  %4821 = vmatpush1.msra.mxu0 0.0
  %4822 = vmatprep.subr.mxu0 0.0
  %4823 = vmatpush1.msra.mxu0 0.0
  %4824 = vmatprep.subr.mxu0 0.0
  %4825 = vmatpush1.msra.mxu0 0.0
  %4826 = vmatprep.subr.mxu0 0.0
  %4827 = vmatpush1.msra.mxu0 0.0
  %4828 = vmatprep.subr.mxu0 0.0
  %4829 = vmatpush1.msra.mxu0 0.0
  %4830 = vmatprep.subr.mxu0 0.0
  %4831 = vmatpush1.msra.mxu0 0.0
  %4832 = vmatprep.subr.mxu0 0.0
  %4833 = vmatpush1.msra.mxu0 0.0
  %4834 = vmatprep.subr.mxu0 0.0
  %4835 = vmatpush1.msra.mxu0 0.0
  %4836 = vmatprep.subr.mxu0 0.0
  %4837 = vmatpush1.msra.mxu0 0.0
  %4838 = vmatprep.subr.mxu0 0.0
  %4839 = vmatpush1.msra.mxu0 0.0
  %4840 = vmatprep.subr.mxu0 0.0
  %4841 = vmatpush1.msra.mxu0 0.0
  %4842 = vmatprep.subr.mxu0 0.0
  %4843 = vmatpush1.msra.mxu0 0.0
  %4844 = vmatprep.subr.mxu0 0.0
  %4845 = vmatpush1.msra.mxu0 0.0
  %4846 = vmatprep.subr.mxu0 0.0
  %4847 = vmatpush1.msra.mxu0 0.0
  %4848 = vmatprep.subr.mxu0 0.0
  %4849 = vmatpush1.msra.mxu0 0.0
  %4850 = vmatprep.subr.mxu0 0.0
  %4851 = vmatpush1.msra.mxu0 0.0
  %4852 = vmatprep.subr.mxu0 0.0
  %4853 = vmatpush1.msra.mxu0 0.0
  %4854 = vmatprep.subr.mxu0 0.0
  %4855 = vmatpush1.msra.mxu0 0.0
  %4856 = vmatprep.subr.mxu0 0.0
  %4857 = vmatpush1.msra.mxu0 0.0
  %4858 = vmatprep.subr.mxu0 0.0
  %4859 = vmatpush1.msra.mxu0 0.0
  %4860 = vmatprep.subr.mxu0 0.0
  %4861 = vmatpush1.msra.mxu0 0.0
  %4862 = vmatprep.subr.mxu0 0.0
  %4863 = vmatpush1.msra.mxu0 0.0
  %4864 = vmatprep.subr.mxu0 0.0
  %4865 = vmatpush1.msra.mxu0 0.0
  %4866 = vmatprep.subr.mxu0 0.0
  %4867 = vmatpush1.msra.mxu0 0.0
  %4868 = vmatprep.subr.mxu0 0.0
  %4869 = vmatpush1.msra.mxu0 0.0
  %4870 = vmatprep.subr.mxu0 0.0
  %4871 = vmatpush1.msra.mxu0 0.0
  %4872 = vmatprep.mubr.f32.mxu0 0.0
  %v4873 = vand.u32 %v4126, 4294901760
  %v4874 = vsub.f32 %v4126, %v4873
  %v4875 = vand.u32 %v4874, 4294901760
  %4876 = vmatmul.mubr.f32.gmra.mrb[0].mxu0 %v4875
  %v4877 = vpop.f32.mrb[0].mxu0
  %v4878 = vadd.f32 %v4804, %v4877
  %v4879 = vpop.f32.mrb[0].mxu0
  %4880 = vdwg.mxu0
  %4881 = vmatprep.subr.mxu0 0.0
  %v4882 = vand.u32 %v4579, 4294901760
  %v4883 = vsub.f32 %v4579, %v4882
  %v4884 = vand.u32 %v4883, 4294901760
  %4885 = vmatpush1.msra.mxu0 %v4884
  %4886 = vmatprep.subr.mxu0 0.0
  %4887 = vmatpush1.msra.mxu0 0.0
  %4888 = vmatprep.subr.mxu0 0.0
  %4889 = vmatpush1.msra.mxu0 0.0
  %4890 = vmatprep.subr.mxu0 0.0
  %4891 = vmatpush1.msra.mxu0 0.0
  %4892 = vmatprep.subr.mxu0 0.0
  %4893 = vmatpush1.msra.mxu0 0.0
  %4894 = vmatprep.subr.mxu0 0.0
  %4895 = vmatpush1.msra.mxu0 0.0
  %4896 = vmatprep.subr.mxu0 0.0
  %4897 = vmatpush1.msra.mxu0 0.0
  %4898 = vmatprep.subr.mxu0 0.0
  %4899 = vmatpush1.msra.mxu0 0.0
  %4900 = vmatprep.subr.mxu0 0.0
  %4901 = vmatpush1.msra.mxu0 0.0
  %4902 = vmatprep.subr.mxu0 0.0
  %4903 = vmatpush1.msra.mxu0 0.0
  %4904 = vmatprep.subr.mxu0 0.0
  %4905 = vmatpush1.msra.mxu0 0.0
  %4906 = vmatprep.subr.mxu0 0.0
  %4907 = vmatpush1.msra.mxu0 0.0
  %4908 = vmatprep.subr.mxu0 0.0
  %4909 = vmatpush1.msra.mxu0 0.0
  %4910 = vmatprep.subr.mxu0 0.0
  %4911 = vmatpush1.msra.mxu0 0.0
  %4912 = vmatprep.subr.mxu0 0.0
  %4913 = vmatpush1.msra.mxu0 0.0
  %4914 = vmatprep.subr.mxu0 0.0
  %4915 = vmatpush1.msra.mxu0 0.0
  %4916 = vmatprep.subr.mxu0 0.0
  %4917 = vmatpush1.msra.mxu0 0.0
  %4918 = vmatprep.subr.mxu0 0.0
  %4919 = vmatpush1.msra.mxu0 0.0
  %4920 = vmatprep.subr.mxu0 0.0
  %4921 = vmatpush1.msra.mxu0 0.0
  %4922 = vmatprep.subr.mxu0 0.0
  %4923 = vmatpush1.msra.mxu0 0.0
  %4924 = vmatprep.subr.mxu0 0.0
  %4925 = vmatpush1.msra.mxu0 0.0
  %4926 = vmatprep.subr.mxu0 0.0
  %4927 = vmatpush1.msra.mxu0 0.0
  %4928 = vmatprep.subr.mxu0 0.0
  %4929 = vmatpush1.msra.mxu0 0.0
  %4930 = vmatprep.subr.mxu0 0.0
  %4931 = vmatpush1.msra.mxu0 0.0
  %4932 = vmatprep.subr.mxu0 0.0
  %4933 = vmatpush1.msra.mxu0 0.0
  %4934 = vmatprep.subr.mxu0 0.0
  %4935 = vmatpush1.msra.mxu0 0.0
  %4936 = vmatprep.subr.mxu0 0.0
  %4937 = vmatpush1.msra.mxu0 0.0
  %4938 = vmatprep.subr.mxu0 0.0
  %4939 = vmatpush1.msra.mxu0 0.0
  %4940 = vmatprep.subr.mxu0 0.0
  %4941 = vmatpush1.msra.mxu0 0.0
  %4942 = vmatprep.subr.mxu0 0.0
  %4943 = vmatpush1.msra.mxu0 0.0
  %4944 = vmatprep.subr.mxu0 0.0
  %4945 = vmatpush1.msra.mxu0 0.0
  %4946 = vmatprep.subr.mxu0 0.0
  %4947 = vmatpush1.msra.mxu0 0.0
  %4948 = vmatprep.mubr.f32.mxu0 0.0
  %v4949 = vand.u32 %v4126, 4294901760
  %4950 = vmatmul.mubr.f32.gmra.mrb[0].mxu0 %v4949
  %v4951 = vpop.f32.mrb[0].mxu0
  %v4952 = vadd.f32 %v4878, %v4951
  %v4953 = vpop.f32.mrb[0].mxu0
  %4954 = vdwg.mxu0
  %4955 = vmatprep.subr.mxu0 0.0
  %v4956 = vand.u32 %v4579, 4294901760
  %4957 = vmatpush1.msra.mxu0 %v4956
  %4958 = vmatprep.subr.mxu0 0.0
  %4959 = vmatpush1.msra.mxu0 0.0
  %4960 = vmatprep.subr.mxu0 0.0
  %4961 = vmatpush1.msra.mxu0 0.0
  %4962 = vmatprep.subr.mxu0 0.0
  %4963 = vmatpush1.msra.mxu0 0.0
  %4964 = vmatprep.subr.mxu0 0.0
  %4965 = vmatpush1.msra.mxu0 0.0
  %4966 = vmatprep.subr.mxu0 0.0
  %4967 = vmatpush1.msra.mxu0 0.0
  %4968 = vmatprep.subr.mxu0 0.0
  %4969 = vmatpush1.msra.mxu0 0.0
  %4970 = vmatprep.subr.mxu0 0.0
  %4971 = vmatpush1.msra.mxu0 0.0
  %4972 = vmatprep.subr.mxu0 0.0
  %4973 = vmatpush1.msra.mxu0 0.0
  %4974 = vmatprep.subr.mxu0 0.0
  %4975 = vmatpush1.msra.mxu0 0.0
  %4976 = vmatprep.subr.mxu0 0.0
  %4977 = vmatpush1.msra.mxu0 0.0
  %4978 = vmatprep.subr.mxu0 0.0
  %4979 = vmatpush1.msra.mxu0 0.0
  %4980 = vmatprep.subr.mxu0 0.0
  %4981 = vmatpush1.msra.mxu0 0.0
  %4982 = vmatprep.subr.mxu0 0.0
  %4983 = vmatpush1.msra.mxu0 0.0
  %4984 = vmatprep.subr.mxu0 0.0
  %4985 = vmatpush1.msra.mxu0 0.0
  %4986 = vmatprep.subr.mxu0 0.0
  %4987 = vmatpush1.msra.mxu0 0.0
  %4988 = vmatprep.subr.mxu0 0.0
  %4989 = vmatpush1.msra.mxu0 0.0
  %4990 = vmatprep.subr.mxu0 0.0
  %4991 = vmatpush1.msra.mxu0 0.0
  %4992 = vmatprep.subr.mxu0 0.0
  %4993 = vmatpush1.msra.mxu0 0.0
  %4994 = vmatprep.subr.mxu0 0.0
  %4995 = vmatpush1.msra.mxu0 0.0
  %4996 = vmatprep.subr.mxu0 0.0
  %4997 = vmatpush1.msra.mxu0 0.0
  %4998 = vmatprep.subr.mxu0 0.0
  %4999 = vmatpush1.msra.mxu0 0.0
  %5000 = vmatprep.subr.mxu0 0.0
  %5001 = vmatpush1.msra.mxu0 0.0
  %5002 = vmatprep.subr.mxu0 0.0
  %5003 = vmatpush1.msra.mxu0 0.0
  %5004 = vmatprep.subr.mxu0 0.0
  %5005 = vmatpush1.msra.mxu0 0.0
  %5006 = vmatprep.subr.mxu0 0.0
  %5007 = vmatpush1.msra.mxu0 0.0
  %5008 = vmatprep.subr.mxu0 0.0
  %5009 = vmatpush1.msra.mxu0 0.0
  %5010 = vmatprep.subr.mxu0 0.0
  %5011 = vmatpush1.msra.mxu0 0.0
  %5012 = vmatprep.subr.mxu0 0.0
  %5013 = vmatpush1.msra.mxu0 0.0
  %5014 = vmatprep.subr.mxu0 0.0
  %5015 = vmatpush1.msra.mxu0 0.0
  %5016 = vmatprep.subr.mxu0 0.0
  %5017 = vmatpush1.msra.mxu0 0.0
  %5018 = vmatprep.subr.mxu0 0.0
  %5019 = vmatpush1.msra.mxu0 0.0
  %5020 = vmatprep.mubr.f32.mxu0 0.0
  %v5021 = vand.u32 %v4126, 4294901760
  %5022 = vmatmul.mubr.f32.gmra.mrb[0].mxu0 %v5021
  %v5023 = vpop.f32.mrb[0].mxu0
  %v5024 = vadd.f32 %v4952, %v5023
  %v5025 = vpop.f32.mrb[0].mxu0
  %5026 = vdwg.mxu0
  %v5027 = vld [vmem:[%s1] sm:$0xf]
  %v5028 = vld [vmem:[%s2] sm:$0xf]
  %5030 = vset.pattern.permute.xlu0 5
  %5031 = vperm.xlu0 %5030, %v5027
  %v5032 = vpop.permute.xlu0 %5031
  %v5034 = vmul.f32 %v5032, %v4574
  %5036 = vset.pattern.permute.xlu0 5
  %5037 = vperm.xlu0 %5036, %v5028
  %v5038 = vpop.permute.xlu0 %5037
  %v5040 = vmul.f32 %v5038, %v4574
  %5041 = vset.pattern.permute.xlu0 6
  %5042 = vperm.xlu0 %5041, %v5027
  %v5043 = vpop.permute.xlu0 %5042
  %v5045 = vmul.f32 %v5043, %v5024
  %5046 = vset.pattern.permute.xlu0 6
  %5047 = vperm.xlu0 %5046, %v5028
  %v5048 = vpop.permute.xlu0 %5047
  %v5050 = vmul.f32 %v5048, %v5024
  %v5051 = vadd.f32 %v5034, %v5045
  %v5052 = vadd.f32 %v5040, %v5050
  %5053 = vset.pattern.permute.xlu0 7
  %5054 = vperm.xlu0 %5053, %v5027
  %v5055 = vpop.permute.xlu0 %5054
  %v5057 = vmul.f32 %v5055, %v4574
  %5058 = vset.pattern.permute.xlu0 7
  %5059 = vperm.xlu0 %5058, %v5028
  %v5060 = vpop.permute.xlu0 %5059
  %v5062 = vmul.f32 %v5060, %v4574
  %5064 = vrot.lane.b32.xlu0 %v5057, 127
  %v5065 = vpop.permute.xlu0 %5064
  %v5067 = vadd.f32 %v5051, %v5065
  %5069 = vrot.lane.b32.xlu0 %v5062, 127
  %v5070 = vpop.permute.xlu0 %5069
  %v5072 = vadd.f32 %v5052, %v5070
  %5073 = vset.pattern.permute.xlu0 8
  %5074 = vperm.xlu0 %5073, %v5027
  %v5075 = vpop.permute.xlu0 %5074
  %v5077 = vmul.f32 %v5075, %v5024
  %5078 = vset.pattern.permute.xlu0 8
  %5079 = vperm.xlu0 %5078, %v5028
  %v5080 = vpop.permute.xlu0 %5079
  %v5082 = vmul.f32 %v5080, %v5024
  %5084 = vrot.lane.b32.xlu0 %v5077, 127
  %v5085 = vpop.permute.xlu0 %5084
  %v5087 = vadd.f32 %v5067, %v5085
  %5089 = vrot.lane.b32.xlu0 %v5082, 127
  %v5090 = vpop.permute.xlu0 %5089
  %v5092 = vadd.f32 %v5072, %v5090
  %5093 = vset.pattern.permute.xlu0 9
  %5094 = vperm.xlu0 %5093, %v5027
  %v5095 = vpop.permute.xlu0 %5094
  %v5097 = vmul.f32 %v5095, %v4574
  %5098 = vset.pattern.permute.xlu0 9
  %5099 = vperm.xlu0 %5098, %v5028
  %v5100 = vpop.permute.xlu0 %5099
  %v5102 = vmul.f32 %v5100, %v4574
  %5104 = vrot.lane.b32.xlu0 %v5097, 126
  %v5105 = vpop.permute.xlu0 %5104
  %v5107 = vadd.f32 %v5087, %v5105
  %5109 = vrot.lane.b32.xlu0 %v5102, 126
  %v5110 = vpop.permute.xlu0 %5109
  %v5112 = vadd.f32 %v5092, %v5110
  %5114 = vrot.lane.b32.xlu0 %v5107, 2
  %v5115 = vpop.permute.xlu0 %5114
  %vm5117 = vcmask 27664
  %5118 = vst.msk [vmem:[%s13] sm:$0xf] %vm5117, %v5115
  %5120 = vrot.lane.b32.xlu0 %v5112, 2
  %v5121 = vpop.permute.xlu0 %5120
  %5123 = vst.msk [vmem:[%s14] sm:$0xf] %vm5117, %v5121
  %v5124 = vld [vmem:[%s1] sm:$0xf]
  %v5125 = vld [vmem:[%s2] sm:$0xf]
  %5127 = vset.pattern.permute.xlu0 10
  %5128 = vperm.xlu0 %5127, %v5124
  %v5129 = vpop.permute.xlu0 %5128
  %v5131 = vmul.f32 %v5129, %v501
  %5133 = vset.pattern.permute.xlu0 10
  %5134 = vperm.xlu0 %5133, %v5125
  %v5135 = vpop.permute.xlu0 %5134
  %v5137 = vmul.f32 %v5135, %v501
  %5138 = vset.pattern.permute.xlu0 11
  %5139 = vperm.xlu0 %5138, %v5124
  %v5140 = vpop.permute.xlu0 %5139
  %v5142 = vmul.f32 %v5140, %v962
  %5143 = vset.pattern.permute.xlu0 11
  %5144 = vperm.xlu0 %5143, %v5125
  %v5145 = vpop.permute.xlu0 %5144
  %v5147 = vmul.f32 %v5145, %v962
  %v5148 = vadd.f32 %v5131, %v5142
  %v5149 = vadd.f32 %v5137, %v5147
  %5150 = vset.pattern.permute.xlu0 12
  %5151 = vperm.xlu0 %5150, %v5124
  %v5152 = vpop.permute.xlu0 %5151
  %v5154 = vmul.f32 %v5152, %v501
  %5155 = vset.pattern.permute.xlu0 12
  %5156 = vperm.xlu0 %5155, %v5125
  %v5157 = vpop.permute.xlu0 %5156
  %v5159 = vmul.f32 %v5157, %v501
  %5161 = vrot.lane.b32.xlu0 %v5154, 127
  %v5162 = vpop.permute.xlu0 %5161
  %v5164 = vadd.f32 %v5148, %v5162
  %5166 = vrot.lane.b32.xlu0 %v5159, 127
  %v5167 = vpop.permute.xlu0 %5166
  %v5169 = vadd.f32 %v5149, %v5167
  %5170 = vset.pattern.permute.xlu0 13
  %5171 = vperm.xlu0 %5170, %v5124
  %v5172 = vpop.permute.xlu0 %5171
  %v5174 = vmul.f32 %v5172, %v962
  %5175 = vset.pattern.permute.xlu0 13
  %5176 = vperm.xlu0 %5175, %v5125
  %v5177 = vpop.permute.xlu0 %5176
  %v5179 = vmul.f32 %v5177, %v962
  %5181 = vrot.lane.b32.xlu0 %v5174, 127
  %v5182 = vpop.permute.xlu0 %5181
  %v5184 = vadd.f32 %v5164, %v5182
  %5186 = vrot.lane.b32.xlu0 %v5179, 127
  %v5187 = vpop.permute.xlu0 %5186
  %v5189 = vadd.f32 %v5169, %v5187
  %5190 = vset.pattern.permute.xlu0 14
  %5191 = vperm.xlu0 %5190, %v5124
  %v5192 = vpop.permute.xlu0 %5191
  %v5194 = vmul.f32 %v5192, %v501
  %5195 = vset.pattern.permute.xlu0 14
  %5196 = vperm.xlu0 %5195, %v5125
  %v5197 = vpop.permute.xlu0 %5196
  %v5199 = vmul.f32 %v5197, %v501
  %5201 = vrot.lane.b32.xlu0 %v5194, 126
  %v5202 = vpop.permute.xlu0 %5201
  %v5204 = vadd.f32 %v5184, %v5202
  %5206 = vrot.lane.b32.xlu0 %v5199, 126
  %v5207 = vpop.permute.xlu0 %5206
  %v5209 = vadd.f32 %v5189, %v5207
  %5211 = vrot.lane.b32.xlu0 %v5204, 16
  %v5212 = vpop.permute.xlu0 %5211
  %vm5214 = vcmask 191616
  %5215 = vst.msk [vmem:[%s9] sm:$0xf] %vm5214, %v5212
  %5217 = vrot.lane.b32.xlu0 %v5209, 16
  %v5218 = vpop.permute.xlu0 %5217
  %5220 = vst.msk [vmem:[%s10] sm:$0xf] %vm5214, %v5218
  %v5221 = vld [vmem:[%s5] sm:$0xff]
  %v5222 = vsel %vm1055, %v5204, 0
  %5224 = vmatprep.subr.mxu0 0.0
  %v5225 = vand.u32 %v5221, 4294901760
  %5226 = vmatpush1.msra.mxu0 %v5225
  %5227 = vmatprep.subr.mxu0 0.0
  %5228 = vmatpush1.msra.mxu0 0.0
  %5229 = vmatprep.subr.mxu0 0.0
  %5230 = vmatpush1.msra.mxu0 0.0
  %5231 = vmatprep.subr.mxu0 0.0
  %5232 = vmatpush1.msra.mxu0 0.0
  %5233 = vmatprep.subr.mxu0 0.0
  %5234 = vmatpush1.msra.mxu0 0.0
  %5235 = vmatprep.subr.mxu0 0.0
  %5236 = vmatpush1.msra.mxu0 0.0
  %5237 = vmatprep.subr.mxu0 0.0
  %5238 = vmatpush1.msra.mxu0 0.0
  %5239 = vmatprep.subr.mxu0 0.0
  %5240 = vmatpush1.msra.mxu0 0.0
  %5241 = vmatprep.subr.mxu0 0.0
  %5242 = vmatpush1.msra.mxu0 0.0
  %5243 = vmatprep.subr.mxu0 0.0
  %5244 = vmatpush1.msra.mxu0 0.0
  %5245 = vmatprep.subr.mxu0 0.0
  %5246 = vmatpush1.msra.mxu0 0.0
  %5247 = vmatprep.subr.mxu0 0.0
  %5248 = vmatpush1.msra.mxu0 0.0
  %5249 = vmatprep.subr.mxu0 0.0
  %5250 = vmatpush1.msra.mxu0 0.0
  %5251 = vmatprep.subr.mxu0 0.0
  %5252 = vmatpush1.msra.mxu0 0.0
  %5253 = vmatprep.subr.mxu0 0.0
  %5254 = vmatpush1.msra.mxu0 0.0
  %5255 = vmatprep.subr.mxu0 0.0
  %5256 = vmatpush1.msra.mxu0 0.0
  %5257 = vmatprep.subr.mxu0 0.0
  %5258 = vmatpush1.msra.mxu0 0.0
  %5259 = vmatprep.subr.mxu0 0.0
  %5260 = vmatpush1.msra.mxu0 0.0
  %5261 = vmatprep.subr.mxu0 0.0
  %5262 = vmatpush1.msra.mxu0 0.0
  %5263 = vmatprep.subr.mxu0 0.0
  %5264 = vmatpush1.msra.mxu0 0.0
  %5265 = vmatprep.subr.mxu0 0.0
  %5266 = vmatpush1.msra.mxu0 0.0
  %5267 = vmatprep.subr.mxu0 0.0
  %5268 = vmatpush1.msra.mxu0 0.0
  %5269 = vmatprep.subr.mxu0 0.0
  %5270 = vmatpush1.msra.mxu0 0.0
  %5271 = vmatprep.subr.mxu0 0.0
  %5272 = vmatpush1.msra.mxu0 0.0
  %5273 = vmatprep.subr.mxu0 0.0
  %5274 = vmatpush1.msra.mxu0 0.0
  %5275 = vmatprep.subr.mxu0 0.0
  %5276 = vmatpush1.msra.mxu0 0.0
  %5277 = vmatprep.subr.mxu0 0.0
  %5278 = vmatpush1.msra.mxu0 0.0
  %5279 = vmatprep.subr.mxu0 0.0
  %5280 = vmatpush1.msra.mxu0 0.0
  %5281 = vmatprep.subr.mxu0 0.0
  %5282 = vmatpush1.msra.mxu0 0.0
  %5283 = vmatprep.subr.mxu0 0.0
  %5284 = vmatpush1.msra.mxu0 0.0
  %5285 = vmatprep.subr.mxu0 0.0
  %5286 = vmatpush1.msra.mxu0 0.0
  %5287 = vmatprep.subr.mxu0 0.0
  %5288 = vmatpush1.msra.mxu0 0.0
  %5289 = vmatprep.mubr.f32.mxu0 0.0
  %v5290 = vand.u32 %v5222, 4294901760
  %v5291 = vsub.f32 %v5222, %v5290
  %v5292 = vand.u32 %v5291, 4294901760
  %v5293 = vsub.f32 %v5291, %v5292
  %v5294 = vand.u32 %v5293, 4294901760
  %5295 = vmatmul.mubr.f32.gmra.mrb[0].mxu0 %v5294
  %v5296 = vpop.f32.mrb[0].mxu0
  %v5297 = vadd.f32 0.0, %v5296
  %v5298 = vpop.f32.mrb[0].mxu0
  %5299 = vdwg.mxu0
  %5300 = vmatprep.subr.mxu0 0.0
  %v5301 = vand.u32 %v5221, 4294901760
  %v5302 = vsub.f32 %v5221, %v5301
  %v5303 = vand.u32 %v5302, 4294901760
  %v5304 = vsub.f32 %v5302, %v5303
  %v5305 = vand.u32 %v5304, 4294901760
  %5306 = vmatpush1.msra.mxu0 %v5305
  %5307 = vmatprep.subr.mxu0 0.0
  %5308 = vmatpush1.msra.mxu0 0.0
  %5309 = vmatprep.subr.mxu0 0.0
  %5310 = vmatpush1.msra.mxu0 0.0
  %5311 = vmatprep.subr.mxu0 0.0
  %5312 = vmatpush1.msra.mxu0 0.0
  %5313 = vmatprep.subr.mxu0 0.0
  %5314 = vmatpush1.msra.mxu0 0.0
  %5315 = vmatprep.subr.mxu0 0.0
  %5316 = vmatpush1.msra.mxu0 0.0
  %5317 = vmatprep.subr.mxu0 0.0
  %5318 = vmatpush1.msra.mxu0 0.0
  %5319 = vmatprep.subr.mxu0 0.0
  %5320 = vmatpush1.msra.mxu0 0.0
  %5321 = vmatprep.subr.mxu0 0.0
  %5322 = vmatpush1.msra.mxu0 0.0
  %5323 = vmatprep.subr.mxu0 0.0
  %5324 = vmatpush1.msra.mxu0 0.0
  %5325 = vmatprep.subr.mxu0 0.0
  %5326 = vmatpush1.msra.mxu0 0.0
  %5327 = vmatprep.subr.mxu0 0.0
  %5328 = vmatpush1.msra.mxu0 0.0
  %5329 = vmatprep.subr.mxu0 0.0
  %5330 = vmatpush1.msra.mxu0 0.0
  %5331 = vmatprep.subr.mxu0 0.0
  %5332 = vmatpush1.msra.mxu0 0.0
  %5333 = vmatprep.subr.mxu0 0.0
  %5334 = vmatpush1.msra.mxu0 0.0
  %5335 = vmatprep.subr.mxu0 0.0
  %5336 = vmatpush1.msra.mxu0 0.0
  %5337 = vmatprep.subr.mxu0 0.0
  %5338 = vmatpush1.msra.mxu0 0.0
  %5339 = vmatprep.subr.mxu0 0.0
  %5340 = vmatpush1.msra.mxu0 0.0
  %5341 = vmatprep.subr.mxu0 0.0
  %5342 = vmatpush1.msra.mxu0 0.0
  %5343 = vmatprep.subr.mxu0 0.0
  %5344 = vmatpush1.msra.mxu0 0.0
  %5345 = vmatprep.subr.mxu0 0.0
  %5346 = vmatpush1.msra.mxu0 0.0
  %5347 = vmatprep.subr.mxu0 0.0
  %5348 = vmatpush1.msra.mxu0 0.0
  %5349 = vmatprep.subr.mxu0 0.0
  %5350 = vmatpush1.msra.mxu0 0.0
  %5351 = vmatprep.subr.mxu0 0.0
  %5352 = vmatpush1.msra.mxu0 0.0
  %5353 = vmatprep.subr.mxu0 0.0
  %5354 = vmatpush1.msra.mxu0 0.0
  %5355 = vmatprep.subr.mxu0 0.0
  %5356 = vmatpush1.msra.mxu0 0.0
  %5357 = vmatprep.subr.mxu0 0.0
  %5358 = vmatpush1.msra.mxu0 0.0
  %5359 = vmatprep.subr.mxu0 0.0
  %5360 = vmatpush1.msra.mxu0 0.0
  %5361 = vmatprep.subr.mxu0 0.0
  %5362 = vmatpush1.msra.mxu0 0.0
  %5363 = vmatprep.subr.mxu0 0.0
  %5364 = vmatpush1.msra.mxu0 0.0
  %5365 = vmatprep.subr.mxu0 0.0
  %5366 = vmatpush1.msra.mxu0 0.0
  %5367 = vmatprep.subr.mxu0 0.0
  %5368 = vmatpush1.msra.mxu0 0.0
  %5369 = vmatprep.mubr.f32.mxu0 0.0
  %v5370 = vand.u32 %v5222, 4294901760
  %5371 = vmatmul.mubr.f32.gmra.mrb[0].mxu0 %v5370
  %v5372 = vpop.f32.mrb[0].mxu0
  %v5373 = vadd.f32 %v5297, %v5372
  %v5374 = vpop.f32.mrb[0].mxu0
  %5375 = vdwg.mxu0
  %5376 = vmatprep.subr.mxu0 0.0
  %v5377 = vand.u32 %v5221, 4294901760
  %v5378 = vsub.f32 %v5221, %v5377
  %5379 = vmatpush1.msra.mxu0 %v5378
  %5380 = vmatprep.subr.mxu0 0.0
  %5381 = vmatpush1.msra.mxu0 0.0
  %5382 = vmatprep.subr.mxu0 0.0
  %5383 = vmatpush1.msra.mxu0 0.0
  %5384 = vmatprep.subr.mxu0 0.0
  %5385 = vmatpush1.msra.mxu0 0.0
  %5386 = vmatprep.subr.mxu0 0.0
  %5387 = vmatpush1.msra.mxu0 0.0
  %5388 = vmatprep.subr.mxu0 0.0
  %5389 = vmatpush1.msra.mxu0 0.0
  %5390 = vmatprep.subr.mxu0 0.0
  %5391 = vmatpush1.msra.mxu0 0.0
  %5392 = vmatprep.subr.mxu0 0.0
  %5393 = vmatpush1.msra.mxu0 0.0
  %5394 = vmatprep.subr.mxu0 0.0
  %5395 = vmatpush1.msra.mxu0 0.0
  %5396 = vmatprep.subr.mxu0 0.0
  %5397 = vmatpush1.msra.mxu0 0.0
  %5398 = vmatprep.subr.mxu0 0.0
  %5399 = vmatpush1.msra.mxu0 0.0
  %5400 = vmatprep.subr.mxu0 0.0
  %5401 = vmatpush1.msra.mxu0 0.0
  %5402 = vmatprep.subr.mxu0 0.0
  %5403 = vmatpush1.msra.mxu0 0.0
  %5404 = vmatprep.subr.mxu0 0.0
  %5405 = vmatpush1.msra.mxu0 0.0
  %5406 = vmatprep.subr.mxu0 0.0
  %5407 = vmatpush1.msra.mxu0 0.0
  %5408 = vmatprep.subr.mxu0 0.0
  %5409 = vmatpush1.msra.mxu0 0.0
  %5410 = vmatprep.subr.mxu0 0.0
  %5411 = vmatpush1.msra.mxu0 0.0
  %5412 = vmatprep.subr.mxu0 0.0
  %5413 = vmatpush1.msra.mxu0 0.0
  %5414 = vmatprep.subr.mxu0 0.0
  %5415 = vmatpush1.msra.mxu0 0.0
  %5416 = vmatprep.subr.mxu0 0.0
  %5417 = vmatpush1.msra.mxu0 0.0
  %5418 = vmatprep.subr.mxu0 0.0
  %5419 = vmatpush1.msra.mxu0 0.0
  %5420 = vmatprep.subr.mxu0 0.0
  %5421 = vmatpush1.msra.mxu0 0.0
  %5422 = vmatprep.subr.mxu0 0.0
  %5423 = vmatpush1.msra.mxu0 0.0
  %5424 = vmatprep.subr.mxu0 0.0
  %5425 = vmatpush1.msra.mxu0 0.0
  %5426 = vmatprep.subr.mxu0 0.0
  %5427 = vmatpush1.msra.mxu0 0.0
  %5428 = vmatprep.subr.mxu0 0.0
  %5429 = vmatpush1.msra.mxu0 0.0
  %5430 = vmatprep.subr.mxu0 0.0
  %5431 = vmatpush1.msra.mxu0 0.0
  %5432 = vmatprep.subr.mxu0 0.0
  %5433 = vmatpush1.msra.mxu0 0.0
  %5434 = vmatprep.subr.mxu0 0.0
  %5435 = vmatpush1.msra.mxu0 0.0
  %5436 = vmatprep.subr.mxu0 0.0
  %5437 = vmatpush1.msra.mxu0 0.0
  %5438 = vmatprep.subr.mxu0 0.0
  %5439 = vmatpush1.msra.mxu0 0.0
  %5440 = vmatprep.subr.mxu0 0.0
  %5441 = vmatpush1.msra.mxu0 0.0
  %5442 = vmatprep.mubr.f32.mxu0 0.0
  %v5443 = vand.u32 %v5222, 4294901760
  %v5444 = vsub.f32 %v5222, %v5443
  %5445 = vmatmul.mubr.f32.gmra.mrb[0].mxu0 %v5444
  %v5446 = vpop.f32.mrb[0].mxu0
  %v5447 = vadd.f32 %v5373, %v5446
  %v5448 = vpop.f32.mrb[0].mxu0
  %5449 = vdwg.mxu0
  %5450 = vmatprep.subr.mxu0 0.0
  %v5451 = vand.u32 %v5221, 4294901760
  %5452 = vmatpush1.msra.mxu0 %v5451
  %5453 = vmatprep.subr.mxu0 0.0
  %5454 = vmatpush1.msra.mxu0 0.0
  %5455 = vmatprep.subr.mxu0 0.0
  %5456 = vmatpush1.msra.mxu0 0.0
  %5457 = vmatprep.subr.mxu0 0.0
  %5458 = vmatpush1.msra.mxu0 0.0
  %5459 = vmatprep.subr.mxu0 0.0
  %5460 = vmatpush1.msra.mxu0 0.0
  %5461 = vmatprep.subr.mxu0 0.0
  %5462 = vmatpush1.msra.mxu0 0.0
  %5463 = vmatprep.subr.mxu0 0.0
  %5464 = vmatpush1.msra.mxu0 0.0
  %5465 = vmatprep.subr.mxu0 0.0
  %5466 = vmatpush1.msra.mxu0 0.0
  %5467 = vmatprep.subr.mxu0 0.0
  %5468 = vmatpush1.msra.mxu0 0.0
  %5469 = vmatprep.subr.mxu0 0.0
  %5470 = vmatpush1.msra.mxu0 0.0
  %5471 = vmatprep.subr.mxu0 0.0
  %5472 = vmatpush1.msra.mxu0 0.0
  %5473 = vmatprep.subr.mxu0 0.0
  %5474 = vmatpush1.msra.mxu0 0.0
  %5475 = vmatprep.subr.mxu0 0.0
  %5476 = vmatpush1.msra.mxu0 0.0
  %5477 = vmatprep.subr.mxu0 0.0
  %5478 = vmatpush1.msra.mxu0 0.0
  %5479 = vmatprep.subr.mxu0 0.0
  %5480 = vmatpush1.msra.mxu0 0.0
  %5481 = vmatprep.subr.mxu0 0.0
  %5482 = vmatpush1.msra.mxu0 0.0
  %5483 = vmatprep.subr.mxu0 0.0
  %5484 = vmatpush1.msra.mxu0 0.0
  %5485 = vmatprep.subr.mxu0 0.0
  %5486 = vmatpush1.msra.mxu0 0.0
  %5487 = vmatprep.subr.mxu0 0.0
  %5488 = vmatpush1.msra.mxu0 0.0
  %5489 = vmatprep.subr.mxu0 0.0
  %5490 = vmatpush1.msra.mxu0 0.0
  %5491 = vmatprep.subr.mxu0 0.0
  %5492 = vmatpush1.msra.mxu0 0.0
  %5493 = vmatprep.subr.mxu0 0.0
  %5494 = vmatpush1.msra.mxu0 0.0
  %5495 = vmatprep.subr.mxu0 0.0
  %5496 = vmatpush1.msra.mxu0 0.0
  %5497 = vmatprep.subr.mxu0 0.0
  %5498 = vmatpush1.msra.mxu0 0.0
  %5499 = vmatprep.subr.mxu0 0.0
  %5500 = vmatpush1.msra.mxu0 0.0
  %5501 = vmatprep.subr.mxu0 0.0
  %5502 = vmatpush1.msra.mxu0 0.0
  %5503 = vmatprep.subr.mxu0 0.0
  %5504 = vmatpush1.msra.mxu0 0.0
  %5505 = vmatprep.subr.mxu0 0.0
  %5506 = vmatpush1.msra.mxu0 0.0
  %5507 = vmatprep.subr.mxu0 0.0
  %5508 = vmatpush1.msra.mxu0 0.0
  %5509 = vmatprep.subr.mxu0 0.0
  %5510 = vmatpush1.msra.mxu0 0.0
  %5511 = vmatprep.subr.mxu0 0.0
  %5512 = vmatpush1.msra.mxu0 0.0
  %5513 = vmatprep.subr.mxu0 0.0
  %5514 = vmatpush1.msra.mxu0 0.0
  %5515 = vmatprep.mubr.f32.mxu0 0.0
  %v5516 = vand.u32 %v5222, 4294901760
  %v5517 = vsub.f32 %v5222, %v5516
  %v5518 = vand.u32 %v5517, 4294901760
  %5519 = vmatmul.mubr.f32.gmra.mrb[0].mxu0 %v5518
  %v5520 = vpop.f32.mrb[0].mxu0
  %v5521 = vadd.f32 %v5447, %v5520
  %v5522 = vpop.f32.mrb[0].mxu0
  %5523 = vdwg.mxu0
  %5524 = vmatprep.subr.mxu0 0.0
  %v5525 = vand.u32 %v5221, 4294901760
  %v5526 = vsub.f32 %v5221, %v5525
  %v5527 = vand.u32 %v5526, 4294901760
  %5528 = vmatpush1.msra.mxu0 %v5527
  %5529 = vmatprep.subr.mxu0 0.0
  %5530 = vmatpush1.msra.mxu0 0.0
  %5531 = vmatprep.subr.mxu0 0.0
  %5532 = vmatpush1.msra.mxu0 0.0
  %5533 = vmatprep.subr.mxu0 0.0
  %5534 = vmatpush1.msra.mxu0 0.0
  %5535 = vmatprep.subr.mxu0 0.0
  %5536 = vmatpush1.msra.mxu0 0.0
  %5537 = vmatprep.subr.mxu0 0.0
  %5538 = vmatpush1.msra.mxu0 0.0
  %5539 = vmatprep.subr.mxu0 0.0
  %5540 = vmatpush1.msra.mxu0 0.0
  %5541 = vmatprep.subr.mxu0 0.0
  %5542 = vmatpush1.msra.mxu0 0.0
  %5543 = vmatprep.subr.mxu0 0.0
  %5544 = vmatpush1.msra.mxu0 0.0
  %5545 = vmatprep.subr.mxu0 0.0
  %5546 = vmatpush1.msra.mxu0 0.0
  %5547 = vmatprep.subr.mxu0 0.0
  %5548 = vmatpush1.msra.mxu0 0.0
  %5549 = vmatprep.subr.mxu0 0.0
  %5550 = vmatpush1.msra.mxu0 0.0
  %5551 = vmatprep.subr.mxu0 0.0
  %5552 = vmatpush1.msra.mxu0 0.0
  %5553 = vmatprep.subr.mxu0 0.0
  %5554 = vmatpush1.msra.mxu0 0.0
  %5555 = vmatprep.subr.mxu0 0.0
  %5556 = vmatpush1.msra.mxu0 0.0
  %5557 = vmatprep.subr.mxu0 0.0
  %5558 = vmatpush1.msra.mxu0 0.0
  %5559 = vmatprep.subr.mxu0 0.0
  %5560 = vmatpush1.msra.mxu0 0.0
  %5561 = vmatprep.subr.mxu0 0.0
  %5562 = vmatpush1.msra.mxu0 0.0
  %5563 = vmatprep.subr.mxu0 0.0
  %5564 = vmatpush1.msra.mxu0 0.0
  %5565 = vmatprep.subr.mxu0 0.0
  %5566 = vmatpush1.msra.mxu0 0.0
  %5567 = vmatprep.subr.mxu0 0.0
  %5568 = vmatpush1.msra.mxu0 0.0
  %5569 = vmatprep.subr.mxu0 0.0
  %5570 = vmatpush1.msra.mxu0 0.0
  %5571 = vmatprep.subr.mxu0 0.0
  %5572 = vmatpush1.msra.mxu0 0.0
  %5573 = vmatprep.subr.mxu0 0.0
  %5574 = vmatpush1.msra.mxu0 0.0
  %5575 = vmatprep.subr.mxu0 0.0
  %5576 = vmatpush1.msra.mxu0 0.0
  %5577 = vmatprep.subr.mxu0 0.0
  %5578 = vmatpush1.msra.mxu0 0.0
  %5579 = vmatprep.subr.mxu0 0.0
  %5580 = vmatpush1.msra.mxu0 0.0
  %5581 = vmatprep.subr.mxu0 0.0
  %5582 = vmatpush1.msra.mxu0 0.0
  %5583 = vmatprep.subr.mxu0 0.0
  %5584 = vmatpush1.msra.mxu0 0.0
  %5585 = vmatprep.subr.mxu0 0.0
  %5586 = vmatpush1.msra.mxu0 0.0
  %5587 = vmatprep.subr.mxu0 0.0
  %5588 = vmatpush1.msra.mxu0 0.0
  %5589 = vmatprep.subr.mxu0 0.0
  %5590 = vmatpush1.msra.mxu0 0.0
  %5591 = vmatprep.mubr.f32.mxu0 0.0
  %v5592 = vand.u32 %v5222, 4294901760
  %5593 = vmatmul.mubr.f32.gmra.mrb[0].mxu0 %v5592
  %v5594 = vpop.f32.mrb[0].mxu0
  %v5595 = vadd.f32 %v5521, %v5594
  %v5596 = vpop.f32.mrb[0].mxu0
  %5597 = vdwg.mxu0
  %5598 = vmatprep.subr.mxu0 0.0
  %v5599 = vand.u32 %v5221, 4294901760
  %5600 = vmatpush1.msra.mxu0 %v5599
  %5601 = vmatprep.subr.mxu0 0.0
  %5602 = vmatpush1.msra.mxu0 0.0
  %5603 = vmatprep.subr.mxu0 0.0
  %5604 = vmatpush1.msra.mxu0 0.0
  %5605 = vmatprep.subr.mxu0 0.0
  %5606 = vmatpush1.msra.mxu0 0.0
  %5607 = vmatprep.subr.mxu0 0.0
  %5608 = vmatpush1.msra.mxu0 0.0
  %5609 = vmatprep.subr.mxu0 0.0
  %5610 = vmatpush1.msra.mxu0 0.0
  %5611 = vmatprep.subr.mxu0 0.0
  %5612 = vmatpush1.msra.mxu0 0.0
  %5613 = vmatprep.subr.mxu0 0.0
  %5614 = vmatpush1.msra.mxu0 0.0
  %5615 = vmatprep.subr.mxu0 0.0
  %5616 = vmatpush1.msra.mxu0 0.0
  %5617 = vmatprep.subr.mxu0 0.0
  %5618 = vmatpush1.msra.mxu0 0.0
  %5619 = vmatprep.subr.mxu0 0.0
  %5620 = vmatpush1.msra.mxu0 0.0
  %5621 = vmatprep.subr.mxu0 0.0
  %5622 = vmatpush1.msra.mxu0 0.0
  %5623 = vmatprep.subr.mxu0 0.0
  %5624 = vmatpush1.msra.mxu0 0.0
  %5625 = vmatprep.subr.mxu0 0.0
  %5626 = vmatpush1.msra.mxu0 0.0
  %5627 = vmatprep.subr.mxu0 0.0
  %5628 = vmatpush1.msra.mxu0 0.0
  %5629 = vmatprep.subr.mxu0 0.0
  %5630 = vmatpush1.msra.mxu0 0.0
  %5631 = vmatprep.subr.mxu0 0.0
  %5632 = vmatpush1.msra.mxu0 0.0
  %5633 = vmatprep.subr.mxu0 0.0
  %5634 = vmatpush1.msra.mxu0 0.0
  %5635 = vmatprep.subr.mxu0 0.0
  %5636 = vmatpush1.msra.mxu0 0.0
  %5637 = vmatprep.subr.mxu0 0.0
  %5638 = vmatpush1.msra.mxu0 0.0
  %5639 = vmatprep.subr.mxu0 0.0
  %5640 = vmatpush1.msra.mxu0 0.0
  %5641 = vmatprep.subr.mxu0 0.0
  %5642 = vmatpush1.msra.mxu0 0.0
  %5643 = vmatprep.subr.mxu0 0.0
  %5644 = vmatpush1.msra.mxu0 0.0
  %5645 = vmatprep.subr.mxu0 0.0
  %5646 = vmatpush1.msra.mxu0 0.0
  %5647 = vmatprep.subr.mxu0 0.0
  %5648 = vmatpush1.msra.mxu0 0.0
  %5649 = vmatprep.subr.mxu0 0.0
  %5650 = vmatpush1.msra.mxu0 0.0
  %5651 = vmatprep.subr.mxu0 0.0
  %5652 = vmatpush1.msra.mxu0 0.0
  %5653 = vmatprep.subr.mxu0 0.0
  %5654 = vmatpush1.msra.mxu0 0.0
  %5655 = vmatprep.subr.mxu0 0.0
  %5656 = vmatpush1.msra.mxu0 0.0
  %5657 = vmatprep.subr.mxu0 0.0
  %5658 = vmatpush1.msra.mxu0 0.0
  %5659 = vmatprep.subr.mxu0 0.0
  %5660 = vmatpush1.msra.mxu0 0.0
  %5661 = vmatprep.subr.mxu0 0.0
  %5662 = vmatpush1.msra.mxu0 0.0
  %5663 = vmatprep.mubr.f32.mxu0 0.0
  %v5664 = vand.u32 %v5222, 4294901760
  %5665 = vmatmul.mubr.f32.gmra.mrb[0].mxu0 %v5664
  %v5666 = vpop.f32.mrb[0].mxu0
  %v5667 = vadd.f32 %v5595, %v5666
  %v5668 = vpop.f32.mrb[0].mxu0
  %5669 = vdwg.mxu0
  %v5670 = vld [vmem:[%s6] sm:$0xff]
  %5671 = vmatprep.subr.mxu0 0.0
  %v5672 = vand.u32 %v5670, 4294901760
  %5673 = vmatpush1.msra.mxu0 %v5672
  %5674 = vmatprep.subr.mxu0 0.0
  %5675 = vmatpush1.msra.mxu0 0.0
  %5676 = vmatprep.subr.mxu0 0.0
  %5677 = vmatpush1.msra.mxu0 0.0
  %5678 = vmatprep.subr.mxu0 0.0
  %5679 = vmatpush1.msra.mxu0 0.0
  %5680 = vmatprep.subr.mxu0 0.0
  %5681 = vmatpush1.msra.mxu0 0.0
  %5682 = vmatprep.subr.mxu0 0.0
  %5683 = vmatpush1.msra.mxu0 0.0
  %5684 = vmatprep.subr.mxu0 0.0
  %5685 = vmatpush1.msra.mxu0 0.0
  %5686 = vmatprep.subr.mxu0 0.0
  %5687 = vmatpush1.msra.mxu0 0.0
  %5688 = vmatprep.subr.mxu0 0.0
  %5689 = vmatpush1.msra.mxu0 0.0
  %5690 = vmatprep.subr.mxu0 0.0
  %5691 = vmatpush1.msra.mxu0 0.0
  %5692 = vmatprep.subr.mxu0 0.0
  %5693 = vmatpush1.msra.mxu0 0.0
  %5694 = vmatprep.subr.mxu0 0.0
  %5695 = vmatpush1.msra.mxu0 0.0
  %5696 = vmatprep.subr.mxu0 0.0
  %5697 = vmatpush1.msra.mxu0 0.0
  %5698 = vmatprep.subr.mxu0 0.0
  %5699 = vmatpush1.msra.mxu0 0.0
  %5700 = vmatprep.subr.mxu0 0.0
  %5701 = vmatpush1.msra.mxu0 0.0
  %5702 = vmatprep.subr.mxu0 0.0
  %5703 = vmatpush1.msra.mxu0 0.0
  %5704 = vmatprep.subr.mxu0 0.0
  %5705 = vmatpush1.msra.mxu0 0.0
  %5706 = vmatprep.subr.mxu0 0.0
  %5707 = vmatpush1.msra.mxu0 0.0
  %5708 = vmatprep.subr.mxu0 0.0
  %5709 = vmatpush1.msra.mxu0 0.0
  %5710 = vmatprep.subr.mxu0 0.0
  %5711 = vmatpush1.msra.mxu0 0.0
  %5712 = vmatprep.subr.mxu0 0.0
  %5713 = vmatpush1.msra.mxu0 0.0
  %5714 = vmatprep.subr.mxu0 0.0
  %5715 = vmatpush1.msra.mxu0 0.0
  %5716 = vmatprep.subr.mxu0 0.0
  %5717 = vmatpush1.msra.mxu0 0.0
  %5718 = vmatprep.subr.mxu0 0.0
  %5719 = vmatpush1.msra.mxu0 0.0
  %5720 = vmatprep.subr.mxu0 0.0
  %5721 = vmatpush1.msra.mxu0 0.0
  %5722 = vmatprep.subr.mxu0 0.0
  %5723 = vmatpush1.msra.mxu0 0.0
  %5724 = vmatprep.subr.mxu0 0.0
  %5725 = vmatpush1.msra.mxu0 0.0
  %5726 = vmatprep.subr.mxu0 0.0
  %5727 = vmatpush1.msra.mxu0 0.0
  %5728 = vmatprep.subr.mxu0 0.0
  %5729 = vmatpush1.msra.mxu0 0.0
  %5730 = vmatprep.subr.mxu0 0.0
  %5731 = vmatpush1.msra.mxu0 0.0
  %5732 = vmatprep.subr.mxu0 0.0
  %5733 = vmatpush1.msra.mxu0 0.0
  %5734 = vmatprep.subr.mxu0 0.0
  %5735 = vmatpush1.msra.mxu0 0.0
  %5736 = vmatprep.mubr.f32.mxu0 0.0
  %v5737 = vand.u32 %v5222, 4294901760
  %v5738 = vsub.f32 %v5222, %v5737
  %v5739 = vand.u32 %v5738, 4294901760
  %v5740 = vsub.f32 %v5738, %v5739
  %v5741 = vand.u32 %v5740, 4294901760
  %5742 = vmatmul.mubr.f32.gmra.mrb[0].mxu0 %v5741
  %v5743 = vpop.f32.mrb[0].mxu0
  %v5744 = vadd.f32 0.0, %v5743
  %v5745 = vpop.f32.mrb[0].mxu0
  %5746 = vdwg.mxu0
  %5747 = vmatprep.subr.mxu0 0.0
  %v5748 = vand.u32 %v5670, 4294901760
  %v5749 = vsub.f32 %v5670, %v5748
  %v5750 = vand.u32 %v5749, 4294901760
  %v5751 = vsub.f32 %v5749, %v5750
  %v5752 = vand.u32 %v5751, 4294901760
  %5753 = vmatpush1.msra.mxu0 %v5752
  %5754 = vmatprep.subr.mxu0 0.0
  %5755 = vmatpush1.msra.mxu0 0.0
  %5756 = vmatprep.subr.mxu0 0.0
  %5757 = vmatpush1.msra.mxu0 0.0
  %5758 = vmatprep.subr.mxu0 0.0
  %5759 = vmatpush1.msra.mxu0 0.0
  %5760 = vmatprep.subr.mxu0 0.0
  %5761 = vmatpush1.msra.mxu0 0.0
  %5762 = vmatprep.subr.mxu0 0.0
  %5763 = vmatpush1.msra.mxu0 0.0
  %5764 = vmatprep.subr.mxu0 0.0
  %5765 = vmatpush1.msra.mxu0 0.0
  %5766 = vmatprep.subr.mxu0 0.0
  %5767 = vmatpush1.msra.mxu0 0.0
  %5768 = vmatprep.subr.mxu0 0.0
  %5769 = vmatpush1.msra.mxu0 0.0
  %5770 = vmatprep.subr.mxu0 0.0
  %5771 = vmatpush1.msra.mxu0 0.0
  %5772 = vmatprep.subr.mxu0 0.0
  %5773 = vmatpush1.msra.mxu0 0.0
  %5774 = vmatprep.subr.mxu0 0.0
  %5775 = vmatpush1.msra.mxu0 0.0
  %5776 = vmatprep.subr.mxu0 0.0
  %5777 = vmatpush1.msra.mxu0 0.0
  %5778 = vmatprep.subr.mxu0 0.0
  %5779 = vmatpush1.msra.mxu0 0.0
  %5780 = vmatprep.subr.mxu0 0.0
  %5781 = vmatpush1.msra.mxu0 0.0
  %5782 = vmatprep.subr.mxu0 0.0
  %5783 = vmatpush1.msra.mxu0 0.0
  %5784 = vmatprep.subr.mxu0 0.0
  %5785 = vmatpush1.msra.mxu0 0.0
  %5786 = vmatprep.subr.mxu0 0.0
  %5787 = vmatpush1.msra.mxu0 0.0
  %5788 = vmatprep.subr.mxu0 0.0
  %5789 = vmatpush1.msra.mxu0 0.0
  %5790 = vmatprep.subr.mxu0 0.0
  %5791 = vmatpush1.msra.mxu0 0.0
  %5792 = vmatprep.subr.mxu0 0.0
  %5793 = vmatpush1.msra.mxu0 0.0
  %5794 = vmatprep.subr.mxu0 0.0
  %5795 = vmatpush1.msra.mxu0 0.0
  %5796 = vmatprep.subr.mxu0 0.0
  %5797 = vmatpush1.msra.mxu0 0.0
  %5798 = vmatprep.subr.mxu0 0.0
  %5799 = vmatpush1.msra.mxu0 0.0
  %5800 = vmatprep.subr.mxu0 0.0
  %5801 = vmatpush1.msra.mxu0 0.0
  %5802 = vmatprep.subr.mxu0 0.0
  %5803 = vmatpush1.msra.mxu0 0.0
  %5804 = vmatprep.subr.mxu0 0.0
  %5805 = vmatpush1.msra.mxu0 0.0
  %5806 = vmatprep.subr.mxu0 0.0
  %5807 = vmatpush1.msra.mxu0 0.0
  %5808 = vmatprep.subr.mxu0 0.0
  %5809 = vmatpush1.msra.mxu0 0.0
  %5810 = vmatprep.subr.mxu0 0.0
  %5811 = vmatpush1.msra.mxu0 0.0
  %5812 = vmatprep.subr.mxu0 0.0
  %5813 = vmatpush1.msra.mxu0 0.0
  %5814 = vmatprep.subr.mxu0 0.0
  %5815 = vmatpush1.msra.mxu0 0.0
  %5816 = vmatprep.mubr.f32.mxu0 0.0
  %v5817 = vand.u32 %v5222, 4294901760
  %5818 = vmatmul.mubr.f32.gmra.mrb[0].mxu0 %v5817
  %v5819 = vpop.f32.mrb[0].mxu0
  %v5820 = vadd.f32 %v5744, %v5819
  %v5821 = vpop.f32.mrb[0].mxu0
  %5822 = vdwg.mxu0
  %5823 = vmatprep.subr.mxu0 0.0
  %v5824 = vand.u32 %v5670, 4294901760
  %v5825 = vsub.f32 %v5670, %v5824
  %5826 = vmatpush1.msra.mxu0 %v5825
  %5827 = vmatprep.subr.mxu0 0.0
  %5828 = vmatpush1.msra.mxu0 0.0
  %5829 = vmatprep.subr.mxu0 0.0
  %5830 = vmatpush1.msra.mxu0 0.0
  %5831 = vmatprep.subr.mxu0 0.0
  %5832 = vmatpush1.msra.mxu0 0.0
  %5833 = vmatprep.subr.mxu0 0.0
  %5834 = vmatpush1.msra.mxu0 0.0
  %5835 = vmatprep.subr.mxu0 0.0
  %5836 = vmatpush1.msra.mxu0 0.0
  %5837 = vmatprep.subr.mxu0 0.0
  %5838 = vmatpush1.msra.mxu0 0.0
  %5839 = vmatprep.subr.mxu0 0.0
  %5840 = vmatpush1.msra.mxu0 0.0
  %5841 = vmatprep.subr.mxu0 0.0
  %5842 = vmatpush1.msra.mxu0 0.0
  %5843 = vmatprep.subr.mxu0 0.0
  %5844 = vmatpush1.msra.mxu0 0.0
  %5845 = vmatprep.subr.mxu0 0.0
  %5846 = vmatpush1.msra.mxu0 0.0
  %5847 = vmatprep.subr.mxu0 0.0
  %5848 = vmatpush1.msra.mxu0 0.0
  %5849 = vmatprep.subr.mxu0 0.0
  %5850 = vmatpush1.msra.mxu0 0.0
  %5851 = vmatprep.subr.mxu0 0.0
  %5852 = vmatpush1.msra.mxu0 0.0
  %5853 = vmatprep.subr.mxu0 0.0
  %5854 = vmatpush1.msra.mxu0 0.0
  %5855 = vmatprep.subr.mxu0 0.0
  %5856 = vmatpush1.msra.mxu0 0.0
  %5857 = vmatprep.subr.mxu0 0.0
  %5858 = vmatpush1.msra.mxu0 0.0
  %5859 = vmatprep.subr.mxu0 0.0
  %5860 = vmatpush1.msra.mxu0 0.0
  %5861 = vmatprep.subr.mxu0 0.0
  %5862 = vmatpush1.msra.mxu0 0.0
  %5863 = vmatprep.subr.mxu0 0.0
  %5864 = vmatpush1.msra.mxu0 0.0
  %5865 = vmatprep.subr.mxu0 0.0
  %5866 = vmatpush1.msra.mxu0 0.0
  %5867 = vmatprep.subr.mxu0 0.0
  %5868 = vmatpush1.msra.mxu0 0.0
  %5869 = vmatprep.subr.mxu0 0.0
  %5870 = vmatpush1.msra.mxu0 0.0
  %5871 = vmatprep.subr.mxu0 0.0
  %5872 = vmatpush1.msra.mxu0 0.0
  %5873 = vmatprep.subr.mxu0 0.0
  %5874 = vmatpush1.msra.mxu0 0.0
  %5875 = vmatprep.subr.mxu0 0.0
  %5876 = vmatpush1.msra.mxu0 0.0
  %5877 = vmatprep.subr.mxu0 0.0
  %5878 = vmatpush1.msra.mxu0 0.0
  %5879 = vmatprep.subr.mxu0 0.0
  %5880 = vmatpush1.msra.mxu0 0.0
  %5881 = vmatprep.subr.mxu0 0.0
  %5882 = vmatpush1.msra.mxu0 0.0
  %5883 = vmatprep.subr.mxu0 0.0
  %5884 = vmatpush1.msra.mxu0 0.0
  %5885 = vmatprep.subr.mxu0 0.0
  %5886 = vmatpush1.msra.mxu0 0.0
  %5887 = vmatprep.subr.mxu0 0.0
  %5888 = vmatpush1.msra.mxu0 0.0
  %5889 = vmatprep.mubr.f32.mxu0 0.0
  %v5890 = vand.u32 %v5222, 4294901760
  %v5891 = vsub.f32 %v5222, %v5890
  %5892 = vmatmul.mubr.f32.gmra.mrb[0].mxu0 %v5891
  %v5893 = vpop.f32.mrb[0].mxu0
  %v5894 = vadd.f32 %v5820, %v5893
  %v5895 = vpop.f32.mrb[0].mxu0
  %5896 = vdwg.mxu0
  %5897 = vmatprep.subr.mxu0 0.0
  %v5898 = vand.u32 %v5670, 4294901760
  %5899 = vmatpush1.msra.mxu0 %v5898
  %5900 = vmatprep.subr.mxu0 0.0
  %5901 = vmatpush1.msra.mxu0 0.0
  %5902 = vmatprep.subr.mxu0 0.0
  %5903 = vmatpush1.msra.mxu0 0.0
  %5904 = vmatprep.subr.mxu0 0.0
  %5905 = vmatpush1.msra.mxu0 0.0
  %5906 = vmatprep.subr.mxu0 0.0
  %5907 = vmatpush1.msra.mxu0 0.0
  %5908 = vmatprep.subr.mxu0 0.0
  %5909 = vmatpush1.msra.mxu0 0.0
  %5910 = vmatprep.subr.mxu0 0.0
  %5911 = vmatpush1.msra.mxu0 0.0
  %5912 = vmatprep.subr.mxu0 0.0
  %5913 = vmatpush1.msra.mxu0 0.0
  %5914 = vmatprep.subr.mxu0 0.0
  %5915 = vmatpush1.msra.mxu0 0.0
  %5916 = vmatprep.subr.mxu0 0.0
  %5917 = vmatpush1.msra.mxu0 0.0
  %5918 = vmatprep.subr.mxu0 0.0
  %5919 = vmatpush1.msra.mxu0 0.0
  %5920 = vmatprep.subr.mxu0 0.0
  %5921 = vmatpush1.msra.mxu0 0.0
  %5922 = vmatprep.subr.mxu0 0.0
  %5923 = vmatpush1.msra.mxu0 0.0
  %5924 = vmatprep.subr.mxu0 0.0
  %5925 = vmatpush1.msra.mxu0 0.0
  %5926 = vmatprep.subr.mxu0 0.0
  %5927 = vmatpush1.msra.mxu0 0.0
  %5928 = vmatprep.subr.mxu0 0.0
  %5929 = vmatpush1.msra.mxu0 0.0
  %5930 = vmatprep.subr.mxu0 0.0
  %5931 = vmatpush1.msra.mxu0 0.0
  %5932 = vmatprep.subr.mxu0 0.0
  %5933 = vmatpush1.msra.mxu0 0.0
  %5934 = vmatprep.subr.mxu0 0.0
  %5935 = vmatpush1.msra.mxu0 0.0
  %5936 = vmatprep.subr.mxu0 0.0
  %5937 = vmatpush1.msra.mxu0 0.0
  %5938 = vmatprep.subr.mxu0 0.0
  %5939 = vmatpush1.msra.mxu0 0.0
  %5940 = vmatprep.subr.mxu0 0.0
  %5941 = vmatpush1.msra.mxu0 0.0
  %5942 = vmatprep.subr.mxu0 0.0
  %5943 = vmatpush1.msra.mxu0 0.0
  %5944 = vmatprep.subr.mxu0 0.0
  %5945 = vmatpush1.msra.mxu0 0.0
  %5946 = vmatprep.subr.mxu0 0.0
  %5947 = vmatpush1.msra.mxu0 0.0
  %5948 = vmatprep.subr.mxu0 0.0
  %5949 = vmatpush1.msra.mxu0 0.0
  %5950 = vmatprep.subr.mxu0 0.0
  %5951 = vmatpush1.msra.mxu0 0.0
  %5952 = vmatprep.subr.mxu0 0.0
  %5953 = vmatpush1.msra.mxu0 0.0
  %5954 = vmatprep.subr.mxu0 0.0
  %5955 = vmatpush1.msra.mxu0 0.0
  %5956 = vmatprep.subr.mxu0 0.0
  %5957 = vmatpush1.msra.mxu0 0.0
  %5958 = vmatprep.subr.mxu0 0.0
  %5959 = vmatpush1.msra.mxu0 0.0
  %5960 = vmatprep.subr.mxu0 0.0
  %5961 = vmatpush1.msra.mxu0 0.0
  %5962 = vmatprep.mubr.f32.mxu0 0.0
  %v5963 = vand.u32 %v5222, 4294901760
  %v5964 = vsub.f32 %v5222, %v5963
  %v5965 = vand.u32 %v5964, 4294901760
  %5966 = vmatmul.mubr.f32.gmra.mrb[0].mxu0 %v5965
  %v5967 = vpop.f32.mrb[0].mxu0
  %v5968 = vadd.f32 %v5894, %v5967
  %v5969 = vpop.f32.mrb[0].mxu0
  %5970 = vdwg.mxu0
  %5971 = vmatprep.subr.mxu0 0.0
  %v5972 = vand.u32 %v5670, 4294901760
  %v5973 = vsub.f32 %v5670, %v5972
  %v5974 = vand.u32 %v5973, 4294901760
  %5975 = vmatpush1.msra.mxu0 %v5974
  %5976 = vmatprep.subr.mxu0 0.0
  %5977 = vmatpush1.msra.mxu0 0.0
  %5978 = vmatprep.subr.mxu0 0.0
  %5979 = vmatpush1.msra.mxu0 0.0
  %5980 = vmatprep.subr.mxu0 0.0
  %5981 = vmatpush1.msra.mxu0 0.0
  %5982 = vmatprep.subr.mxu0 0.0
  %5983 = vmatpush1.msra.mxu0 0.0
  %5984 = vmatprep.subr.mxu0 0.0
  %5985 = vmatpush1.msra.mxu0 0.0
  %5986 = vmatprep.subr.mxu0 0.0
  %5987 = vmatpush1.msra.mxu0 0.0
  %5988 = vmatprep.subr.mxu0 0.0
  %5989 = vmatpush1.msra.mxu0 0.0
  %5990 = vmatprep.subr.mxu0 0.0
  %5991 = vmatpush1.msra.mxu0 0.0
  %5992 = vmatprep.subr.mxu0 0.0
  %5993 = vmatpush1.msra.mxu0 0.0
  %5994 = vmatprep.subr.mxu0 0.0
  %5995 = vmatpush1.msra.mxu0 0.0
  %5996 = vmatprep.subr.mxu0 0.0
  %5997 = vmatpush1.msra.mxu0 0.0
  %5998 = vmatprep.subr.mxu0 0.0
  %5999 = vmatpush1.msra.mxu0 0.0
  %6000 = vmatprep.subr.mxu0 0.0
  %6001 = vmatpush1.msra.mxu0 0.0
  %6002 = vmatprep.subr.mxu0 0.0
  %6003 = vmatpush1.msra.mxu0 0.0
  %6004 = vmatprep.subr.mxu0 0.0
  %6005 = vmatpush1.msra.mxu0 0.0
  %6006 = vmatprep.subr.mxu0 0.0
  %6007 = vmatpush1.msra.mxu0 0.0
  %6008 = vmatprep.subr.mxu0 0.0
  %6009 = vmatpush1.msra.mxu0 0.0
  %6010 = vmatprep.subr.mxu0 0.0
  %6011 = vmatpush1.msra.mxu0 0.0
  %6012 = vmatprep.subr.mxu0 0.0
  %6013 = vmatpush1.msra.mxu0 0.0
  %6014 = vmatprep.subr.mxu0 0.0
  %6015 = vmatpush1.msra.mxu0 0.0
  %6016 = vmatprep.subr.mxu0 0.0
  %6017 = vmatpush1.msra.mxu0 0.0
  %6018 = vmatprep.subr.mxu0 0.0
  %6019 = vmatpush1.msra.mxu0 0.0
  %6020 = vmatprep.subr.mxu0 0.0
  %6021 = vmatpush1.msra.mxu0 0.0
  %6022 = vmatprep.subr.mxu0 0.0
  %6023 = vmatpush1.msra.mxu0 0.0
  %6024 = vmatprep.subr.mxu0 0.0
  %6025 = vmatpush1.msra.mxu0 0.0
  %6026 = vmatprep.subr.mxu0 0.0
  %6027 = vmatpush1.msra.mxu0 0.0
  %6028 = vmatprep.subr.mxu0 0.0
  %6029 = vmatpush1.msra.mxu0 0.0
  %6030 = vmatprep.subr.mxu0 0.0
  %6031 = vmatpush1.msra.mxu0 0.0
  %6032 = vmatprep.subr.mxu0 0.0
  %6033 = vmatpush1.msra.mxu0 0.0
  %6034 = vmatprep.subr.mxu0 0.0
  %6035 = vmatpush1.msra.mxu0 0.0
  %6036 = vmatprep.subr.mxu0 0.0
  %6037 = vmatpush1.msra.mxu0 0.0
  %6038 = vmatprep.mubr.f32.mxu0 0.0
  %v6039 = vand.u32 %v5222, 4294901760
  %6040 = vmatmul.mubr.f32.gmra.mrb[0].mxu0 %v6039
  %v6041 = vpop.f32.mrb[0].mxu0
  %v6042 = vadd.f32 %v5968, %v6041
  %v6043 = vpop.f32.mrb[0].mxu0
  %6044 = vdwg.mxu0
  %6045 = vmatprep.subr.mxu0 0.0
  %v6046 = vand.u32 %v5670, 4294901760
  %6047 = vmatpush1.msra.mxu0 %v6046
  %6048 = vmatprep.subr.mxu0 0.0
  %6049 = vmatpush1.msra.mxu0 0.0
  %6050 = vmatprep.subr.mxu0 0.0
  %6051 = vmatpush1.msra.mxu0 0.0
  %6052 = vmatprep.subr.mxu0 0.0
  %6053 = vmatpush1.msra.mxu0 0.0
  %6054 = vmatprep.subr.mxu0 0.0
  %6055 = vmatpush1.msra.mxu0 0.0
  %6056 = vmatprep.subr.mxu0 0.0
  %6057 = vmatpush1.msra.mxu0 0.0
  %6058 = vmatprep.subr.mxu0 0.0
  %6059 = vmatpush1.msra.mxu0 0.0
  %6060 = vmatprep.subr.mxu0 0.0
  %6061 = vmatpush1.msra.mxu0 0.0
  %6062 = vmatprep.subr.mxu0 0.0
  %6063 = vmatpush1.msra.mxu0 0.0
  %6064 = vmatprep.subr.mxu0 0.0
  %6065 = vmatpush1.msra.mxu0 0.0
  %6066 = vmatprep.subr.mxu0 0.0
  %6067 = vmatpush1.msra.mxu0 0.0
  %6068 = vmatprep.subr.mxu0 0.0
  %6069 = vmatpush1.msra.mxu0 0.0
  %6070 = vmatprep.subr.mxu0 0.0
  %6071 = vmatpush1.msra.mxu0 0.0
  %6072 = vmatprep.subr.mxu0 0.0
  %6073 = vmatpush1.msra.mxu0 0.0
  %6074 = vmatprep.subr.mxu0 0.0
  %6075 = vmatpush1.msra.mxu0 0.0
  %6076 = vmatprep.subr.mxu0 0.0
  %6077 = vmatpush1.msra.mxu0 0.0
  %6078 = vmatprep.subr.mxu0 0.0
  %6079 = vmatpush1.msra.mxu0 0.0
  %6080 = vmatprep.subr.mxu0 0.0
  %6081 = vmatpush1.msra.mxu0 0.0
  %6082 = vmatprep.subr.mxu0 0.0
  %6083 = vmatpush1.msra.mxu0 0.0
  %6084 = vmatprep.subr.mxu0 0.0
  %6085 = vmatpush1.msra.mxu0 0.0
  %6086 = vmatprep.subr.mxu0 0.0
  %6087 = vmatpush1.msra.mxu0 0.0
  %6088 = vmatprep.subr.mxu0 0.0
  %6089 = vmatpush1.msra.mxu0 0.0
  %6090 = vmatprep.subr.mxu0 0.0
  %6091 = vmatpush1.msra.mxu0 0.0
  %6092 = vmatprep.subr.mxu0 0.0
  %6093 = vmatpush1.msra.mxu0 0.0
  %6094 = vmatprep.subr.mxu0 0.0
  %6095 = vmatpush1.msra.mxu0 0.0
  %6096 = vmatprep.subr.mxu0 0.0
  %6097 = vmatpush1.msra.mxu0 0.0
  %6098 = vmatprep.subr.mxu0 0.0
  %6099 = vmatpush1.msra.mxu0 0.0
  %6100 = vmatprep.subr.mxu0 0.0
  %6101 = vmatpush1.msra.mxu0 0.0
  %6102 = vmatprep.subr.mxu0 0.0
  %6103 = vmatpush1.msra.mxu0 0.0
  %6104 = vmatprep.subr.mxu0 0.0
  %6105 = vmatpush1.msra.mxu0 0.0
  %6106 = vmatprep.subr.mxu0 0.0
  %6107 = vmatpush1.msra.mxu0 0.0
  %6108 = vmatprep.subr.mxu0 0.0
  %6109 = vmatpush1.msra.mxu0 0.0
  %6110 = vmatprep.mubr.f32.mxu0 0.0
  %v6111 = vand.u32 %v5222, 4294901760
  %6112 = vmatmul.mubr.f32.gmra.mrb[0].mxu0 %v6111
  %v6113 = vpop.f32.mrb[0].mxu0
  %v6114 = vadd.f32 %v6042, %v6113
  %v6115 = vpop.f32.mrb[0].mxu0
  %6116 = vdwg.mxu0
  %v6117 = vld [vmem:[%s1] sm:$0xf]
  %v6118 = vld [vmem:[%s2] sm:$0xf]
  %6120 = vset.pattern.permute.xlu0 10
  %6121 = vperm.xlu0 %6120, %v6117
  %v6122 = vpop.permute.xlu0 %6121
  %v6124 = vmul.f32 %v6122, %v5667
  %6126 = vset.pattern.permute.xlu0 10
  %6127 = vperm.xlu0 %6126, %v6118
  %v6128 = vpop.permute.xlu0 %6127
  %v6130 = vmul.f32 %v6128, %v5667
  %6131 = vset.pattern.permute.xlu0 11
  %6132 = vperm.xlu0 %6131, %v6117
  %v6133 = vpop.permute.xlu0 %6132
  %v6135 = vmul.f32 %v6133, %v6114
  %6136 = vset.pattern.permute.xlu0 11
  %6137 = vperm.xlu0 %6136, %v6118
  %v6138 = vpop.permute.xlu0 %6137
  %v6140 = vmul.f32 %v6138, %v6114
  %v6141 = vadd.f32 %v6124, %v6135
  %v6142 = vadd.f32 %v6130, %v6140
  %6143 = vset.pattern.permute.xlu0 12
  %6144 = vperm.xlu0 %6143, %v6117
  %v6145 = vpop.permute.xlu0 %6144
  %v6147 = vmul.f32 %v6145, %v5667
  %6148 = vset.pattern.permute.xlu0 12
  %6149 = vperm.xlu0 %6148, %v6118
  %v6150 = vpop.permute.xlu0 %6149
  %v6152 = vmul.f32 %v6150, %v5667
  %6154 = vrot.lane.b32.xlu0 %v6147, 127
  %v6155 = vpop.permute.xlu0 %6154
  %v6157 = vadd.f32 %v6141, %v6155
  %6159 = vrot.lane.b32.xlu0 %v6152, 127
  %v6160 = vpop.permute.xlu0 %6159
  %v6162 = vadd.f32 %v6142, %v6160
  %6163 = vset.pattern.permute.xlu0 13
  %6164 = vperm.xlu0 %6163, %v6117
  %v6165 = vpop.permute.xlu0 %6164
  %v6167 = vmul.f32 %v6165, %v6114
  %6168 = vset.pattern.permute.xlu0 13
  %6169 = vperm.xlu0 %6168, %v6118
  %v6170 = vpop.permute.xlu0 %6169
  %v6172 = vmul.f32 %v6170, %v6114
  %6174 = vrot.lane.b32.xlu0 %v6167, 127
  %v6175 = vpop.permute.xlu0 %6174
  %v6177 = vadd.f32 %v6157, %v6175
  %6179 = vrot.lane.b32.xlu0 %v6172, 127
  %v6180 = vpop.permute.xlu0 %6179
  %v6182 = vadd.f32 %v6162, %v6180
  %6183 = vset.pattern.permute.xlu0 14
  %6184 = vperm.xlu0 %6183, %v6117
  %v6185 = vpop.permute.xlu0 %6184
  %v6187 = vmul.f32 %v6185, %v5667
  %6188 = vset.pattern.permute.xlu0 14
  %6189 = vperm.xlu0 %6188, %v6118
  %v6190 = vpop.permute.xlu0 %6189
  %v6192 = vmul.f32 %v6190, %v5667
  %6194 = vrot.lane.b32.xlu0 %v6187, 126
  %v6195 = vpop.permute.xlu0 %6194
  %v6197 = vadd.f32 %v6177, %v6195
  %6199 = vrot.lane.b32.xlu0 %v6192, 126
  %v6200 = vpop.permute.xlu0 %6199
  %v6202 = vadd.f32 %v6182, %v6200
  %6204 = vrot.lane.b32.xlu0 %v6197, 8
  %v6205 = vpop.permute.xlu0 %6204
  %vm6207 = vcmask 93248
  %6208 = vst.msk [vmem:[%s11] sm:$0xf] %vm6207, %v6205
  %6210 = vrot.lane.b32.xlu0 %v6202, 8
  %v6211 = vpop.permute.xlu0 %6210
  %6213 = vst.msk [vmem:[%s12] sm:$0xf] %vm6207, %v6211
  %v6214 = vld [vmem:[%s7] sm:$0xf]
  %v6215 = vsel %vm2042, %v6197, 0
  %v6218 = vsel %vm2046, %v6214, 0
  %6220 = vmatprep.subr.mxu0 0.0
  %v6221 = vand.u32 %v6218, 4294901760
  %6222 = vmatpush1.msra.mxu0 %v6221
  %6223 = vmatprep.subr.mxu0 0.0
  %6224 = vmatpush1.msra.mxu0 0.0
  %6225 = vmatprep.subr.mxu0 0.0
  %6226 = vmatpush1.msra.mxu0 0.0
  %6227 = vmatprep.subr.mxu0 0.0
  %6228 = vmatpush1.msra.mxu0 0.0
  %6229 = vmatprep.subr.mxu0 0.0
  %6230 = vmatpush1.msra.mxu0 0.0
  %6231 = vmatprep.subr.mxu0 0.0
  %6232 = vmatpush1.msra.mxu0 0.0
  %6233 = vmatprep.subr.mxu0 0.0
  %6234 = vmatpush1.msra.mxu0 0.0
  %6235 = vmatprep.subr.mxu0 0.0
  %6236 = vmatpush1.msra.mxu0 0.0
  %6237 = vmatprep.subr.mxu0 0.0
  %6238 = vmatpush1.msra.mxu0 0.0
  %6239 = vmatprep.subr.mxu0 0.0
  %6240 = vmatpush1.msra.mxu0 0.0
  %6241 = vmatprep.subr.mxu0 0.0
  %6242 = vmatpush1.msra.mxu0 0.0
  %6243 = vmatprep.subr.mxu0 0.0
  %6244 = vmatpush1.msra.mxu0 0.0
  %6245 = vmatprep.subr.mxu0 0.0
  %6246 = vmatpush1.msra.mxu0 0.0
  %6247 = vmatprep.subr.mxu0 0.0
  %6248 = vmatpush1.msra.mxu0 0.0
  %6249 = vmatprep.subr.mxu0 0.0
  %6250 = vmatpush1.msra.mxu0 0.0
  %6251 = vmatprep.subr.mxu0 0.0
  %6252 = vmatpush1.msra.mxu0 0.0
  %6253 = vmatprep.subr.mxu0 0.0
  %6254 = vmatpush1.msra.mxu0 0.0
  %6255 = vmatprep.subr.mxu0 0.0
  %6256 = vmatpush1.msra.mxu0 0.0
  %6257 = vmatprep.subr.mxu0 0.0
  %6258 = vmatpush1.msra.mxu0 0.0
  %6259 = vmatprep.subr.mxu0 0.0
  %6260 = vmatpush1.msra.mxu0 0.0
  %6261 = vmatprep.subr.mxu0 0.0
  %6262 = vmatpush1.msra.mxu0 0.0
  %6263 = vmatprep.subr.mxu0 0.0
  %6264 = vmatpush1.msra.mxu0 0.0
  %6265 = vmatprep.subr.mxu0 0.0
  %6266 = vmatpush1.msra.mxu0 0.0
  %6267 = vmatprep.subr.mxu0 0.0
  %6268 = vmatpush1.msra.mxu0 0.0
  %6269 = vmatprep.subr.mxu0 0.0
  %6270 = vmatpush1.msra.mxu0 0.0
  %6271 = vmatprep.subr.mxu0 0.0
  %6272 = vmatpush1.msra.mxu0 0.0
  %6273 = vmatprep.subr.mxu0 0.0
  %6274 = vmatpush1.msra.mxu0 0.0
  %6275 = vmatprep.subr.mxu0 0.0
  %6276 = vmatpush1.msra.mxu0 0.0
  %6277 = vmatprep.subr.mxu0 0.0
  %6278 = vmatpush1.msra.mxu0 0.0
  %6279 = vmatprep.subr.mxu0 0.0
  %6280 = vmatpush1.msra.mxu0 0.0
  %6281 = vmatprep.subr.mxu0 0.0
  %6282 = vmatpush1.msra.mxu0 0.0
  %6283 = vmatprep.subr.mxu0 0.0
  %6284 = vmatpush1.msra.mxu0 0.0
  %6285 = vmatprep.mubr.f32.mxu0 0.0
  %v6286 = vand.u32 %v6215, 4294901760
  %v6287 = vsub.f32 %v6215, %v6286
  %v6288 = vand.u32 %v6287, 4294901760
  %v6289 = vsub.f32 %v6287, %v6288
  %v6290 = vand.u32 %v6289, 4294901760
  %6291 = vmatmul.mubr.f32.gmra.mrb[0].mxu0 %v6290
  %v6292 = vpop.f32.mrb[0].mxu0
  %v6293 = vadd.f32 0.0, %v6292
  %v6294 = vpop.f32.mrb[0].mxu0
  %6295 = vdwg.mxu0
  %6296 = vmatprep.subr.mxu0 0.0
  %v6297 = vand.u32 %v6218, 4294901760
  %v6298 = vsub.f32 %v6218, %v6297
  %v6299 = vand.u32 %v6298, 4294901760
  %v6300 = vsub.f32 %v6298, %v6299
  %v6301 = vand.u32 %v6300, 4294901760
  %6302 = vmatpush1.msra.mxu0 %v6301
  %6303 = vmatprep.subr.mxu0 0.0
  %6304 = vmatpush1.msra.mxu0 0.0
  %6305 = vmatprep.subr.mxu0 0.0
  %6306 = vmatpush1.msra.mxu0 0.0
  %6307 = vmatprep.subr.mxu0 0.0
  %6308 = vmatpush1.msra.mxu0 0.0
  %6309 = vmatprep.subr.mxu0 0.0
  %6310 = vmatpush1.msra.mxu0 0.0
  %6311 = vmatprep.subr.mxu0 0.0
  %6312 = vmatpush1.msra.mxu0 0.0
  %6313 = vmatprep.subr.mxu0 0.0
  %6314 = vmatpush1.msra.mxu0 0.0
  %6315 = vmatprep.subr.mxu0 0.0
  %6316 = vmatpush1.msra.mxu0 0.0
  %6317 = vmatprep.subr.mxu0 0.0
  %6318 = vmatpush1.msra.mxu0 0.0
  %6319 = vmatprep.subr.mxu0 0.0
  %6320 = vmatpush1.msra.mxu0 0.0
  %6321 = vmatprep.subr.mxu0 0.0
  %6322 = vmatpush1.msra.mxu0 0.0
  %6323 = vmatprep.subr.mxu0 0.0
  %6324 = vmatpush1.msra.mxu0 0.0
  %6325 = vmatprep.subr.mxu0 0.0
  %6326 = vmatpush1.msra.mxu0 0.0
  %6327 = vmatprep.subr.mxu0 0.0
  %6328 = vmatpush1.msra.mxu0 0.0
  %6329 = vmatprep.subr.mxu0 0.0
  %6330 = vmatpush1.msra.mxu0 0.0
  %6331 = vmatprep.subr.mxu0 0.0
  %6332 = vmatpush1.msra.mxu0 0.0
  %6333 = vmatprep.subr.mxu0 0.0
  %6334 = vmatpush1.msra.mxu0 0.0
  %6335 = vmatprep.subr.mxu0 0.0
  %6336 = vmatpush1.msra.mxu0 0.0
  %6337 = vmatprep.subr.mxu0 0.0
  %6338 = vmatpush1.msra.mxu0 0.0
  %6339 = vmatprep.subr.mxu0 0.0
  %6340 = vmatpush1.msra.mxu0 0.0
  %6341 = vmatprep.subr.mxu0 0.0
  %6342 = vmatpush1.msra.mxu0 0.0
  %6343 = vmatprep.subr.mxu0 0.0
  %6344 = vmatpush1.msra.mxu0 0.0
  %6345 = vmatprep.subr.mxu0 0.0
  %6346 = vmatpush1.msra.mxu0 0.0
  %6347 = vmatprep.subr.mxu0 0.0
  %6348 = vmatpush1.msra.mxu0 0.0
  %6349 = vmatprep.subr.mxu0 0.0
  %6350 = vmatpush1.msra.mxu0 0.0
  %6351 = vmatprep.subr.mxu0 0.0
  %6352 = vmatpush1.msra.mxu0 0.0
  %6353 = vmatprep.subr.mxu0 0.0
  %6354 = vmatpush1.msra.mxu0 0.0
  %6355 = vmatprep.subr.mxu0 0.0
  %6356 = vmatpush1.msra.mxu0 0.0
  %6357 = vmatprep.subr.mxu0 0.0
  %6358 = vmatpush1.msra.mxu0 0.0
  %6359 = vmatprep.subr.mxu0 0.0
  %6360 = vmatpush1.msra.mxu0 0.0
  %6361 = vmatprep.subr.mxu0 0.0
  %6362 = vmatpush1.msra.mxu0 0.0
  %6363 = vmatprep.subr.mxu0 0.0
  %6364 = vmatpush1.msra.mxu0 0.0
  %6365 = vmatprep.mubr.f32.mxu0 0.0
  %v6366 = vand.u32 %v6215, 4294901760
  %6367 = vmatmul.mubr.f32.gmra.mrb[0].mxu0 %v6366
  %v6368 = vpop.f32.mrb[0].mxu0
  %v6369 = vadd.f32 %v6293, %v6368
  %v6370 = vpop.f32.mrb[0].mxu0
  %6371 = vdwg.mxu0
  %6372 = vmatprep.subr.mxu0 0.0
  %v6373 = vand.u32 %v6218, 4294901760
  %v6374 = vsub.f32 %v6218, %v6373
  %6375 = vmatpush1.msra.mxu0 %v6374
  %6376 = vmatprep.subr.mxu0 0.0
  %6377 = vmatpush1.msra.mxu0 0.0
  %6378 = vmatprep.subr.mxu0 0.0
  %6379 = vmatpush1.msra.mxu0 0.0
  %6380 = vmatprep.subr.mxu0 0.0
  %6381 = vmatpush1.msra.mxu0 0.0
  %6382 = vmatprep.subr.mxu0 0.0
  %6383 = vmatpush1.msra.mxu0 0.0
  %6384 = vmatprep.subr.mxu0 0.0
  %6385 = vmatpush1.msra.mxu0 0.0
  %6386 = vmatprep.subr.mxu0 0.0
  %6387 = vmatpush1.msra.mxu0 0.0
  %6388 = vmatprep.subr.mxu0 0.0
  %6389 = vmatpush1.msra.mxu0 0.0
  %6390 = vmatprep.subr.mxu0 0.0
  %6391 = vmatpush1.msra.mxu0 0.0
  %6392 = vmatprep.subr.mxu0 0.0
  %6393 = vmatpush1.msra.mxu0 0.0
  %6394 = vmatprep.subr.mxu0 0.0
  %6395 = vmatpush1.msra.mxu0 0.0
  %6396 = vmatprep.subr.mxu0 0.0
  %6397 = vmatpush1.msra.mxu0 0.0
  %6398 = vmatprep.subr.mxu0 0.0
  %6399 = vmatpush1.msra.mxu0 0.0
  %6400 = vmatprep.subr.mxu0 0.0
  %6401 = vmatpush1.msra.mxu0 0.0
  %6402 = vmatprep.subr.mxu0 0.0
  %6403 = vmatpush1.msra.mxu0 0.0
  %6404 = vmatprep.subr.mxu0 0.0
  %6405 = vmatpush1.msra.mxu0 0.0
  %6406 = vmatprep.subr.mxu0 0.0
  %6407 = vmatpush1.msra.mxu0 0.0
  %6408 = vmatprep.subr.mxu0 0.0
  %6409 = vmatpush1.msra.mxu0 0.0
  %6410 = vmatprep.subr.mxu0 0.0
  %6411 = vmatpush1.msra.mxu0 0.0
  %6412 = vmatprep.subr.mxu0 0.0
  %6413 = vmatpush1.msra.mxu0 0.0
  %6414 = vmatprep.subr.mxu0 0.0
  %6415 = vmatpush1.msra.mxu0 0.0
  %6416 = vmatprep.subr.mxu0 0.0
  %6417 = vmatpush1.msra.mxu0 0.0
  %6418 = vmatprep.subr.mxu0 0.0
  %6419 = vmatpush1.msra.mxu0 0.0
  %6420 = vmatprep.subr.mxu0 0.0
  %6421 = vmatpush1.msra.mxu0 0.0
  %6422 = vmatprep.subr.mxu0 0.0
  %6423 = vmatpush1.msra.mxu0 0.0
  %6424 = vmatprep.subr.mxu0 0.0
  %6425 = vmatpush1.msra.mxu0 0.0
  %6426 = vmatprep.subr.mxu0 0.0
  %6427 = vmatpush1.msra.mxu0 0.0
  %6428 = vmatprep.subr.mxu0 0.0
  %6429 = vmatpush1.msra.mxu0 0.0
  %6430 = vmatprep.subr.mxu0 0.0
  %6431 = vmatpush1.msra.mxu0 0.0
  %6432 = vmatprep.subr.mxu0 0.0
  %6433 = vmatpush1.msra.mxu0 0.0
  %6434 = vmatprep.subr.mxu0 0.0
  %6435 = vmatpush1.msra.mxu0 0.0
  %6436 = vmatprep.subr.mxu0 0.0
  %6437 = vmatpush1.msra.mxu0 0.0
  %6438 = vmatprep.mubr.f32.mxu0 0.0
  %v6439 = vand.u32 %v6215, 4294901760
  %v6440 = vsub.f32 %v6215, %v6439
  %6441 = vmatmul.mubr.f32.gmra.mrb[0].mxu0 %v6440
  %v6442 = vpop.f32.mrb[0].mxu0
  %v6443 = vadd.f32 %v6369, %v6442
  %v6444 = vpop.f32.mrb[0].mxu0
  %6445 = vdwg.mxu0
  %6446 = vmatprep.subr.mxu0 0.0
  %v6447 = vand.u32 %v6218, 4294901760
  %6448 = vmatpush1.msra.mxu0 %v6447
  %6449 = vmatprep.subr.mxu0 0.0
  %6450 = vmatpush1.msra.mxu0 0.0
  %6451 = vmatprep.subr.mxu0 0.0
  %6452 = vmatpush1.msra.mxu0 0.0
  %6453 = vmatprep.subr.mxu0 0.0
  %6454 = vmatpush1.msra.mxu0 0.0
  %6455 = vmatprep.subr.mxu0 0.0
  %6456 = vmatpush1.msra.mxu0 0.0
  %6457 = vmatprep.subr.mxu0 0.0
  %6458 = vmatpush1.msra.mxu0 0.0
  %6459 = vmatprep.subr.mxu0 0.0
  %6460 = vmatpush1.msra.mxu0 0.0
  %6461 = vmatprep.subr.mxu0 0.0
  %6462 = vmatpush1.msra.mxu0 0.0
  %6463 = vmatprep.subr.mxu0 0.0
  %6464 = vmatpush1.msra.mxu0 0.0
  %6465 = vmatprep.subr.mxu0 0.0
  %6466 = vmatpush1.msra.mxu0 0.0
  %6467 = vmatprep.subr.mxu0 0.0
  %6468 = vmatpush1.msra.mxu0 0.0
  %6469 = vmatprep.subr.mxu0 0.0
  %6470 = vmatpush1.msra.mxu0 0.0
  %6471 = vmatprep.subr.mxu0 0.0
  %6472 = vmatpush1.msra.mxu0 0.0
  %6473 = vmatprep.subr.mxu0 0.0
  %6474 = vmatpush1.msra.mxu0 0.0
  %6475 = vmatprep.subr.mxu0 0.0
  %6476 = vmatpush1.msra.mxu0 0.0
  %6477 = vmatprep.subr.mxu0 0.0
  %6478 = vmatpush1.msra.mxu0 0.0
  %6479 = vmatprep.subr.mxu0 0.0
  %6480 = vmatpush1.msra.mxu0 0.0
  %6481 = vmatprep.subr.mxu0 0.0
  %6482 = vmatpush1.msra.mxu0 0.0
  %6483 = vmatprep.subr.mxu0 0.0
  %6484 = vmatpush1.msra.mxu0 0.0
  %6485 = vmatprep.subr.mxu0 0.0
  %6486 = vmatpush1.msra.mxu0 0.0
  %6487 = vmatprep.subr.mxu0 0.0
  %6488 = vmatpush1.msra.mxu0 0.0
  %6489 = vmatprep.subr.mxu0 0.0
  %6490 = vmatpush1.msra.mxu0 0.0
  %6491 = vmatprep.subr.mxu0 0.0
  %6492 = vmatpush1.msra.mxu0 0.0
  %6493 = vmatprep.subr.mxu0 0.0
  %6494 = vmatpush1.msra.mxu0 0.0
  %6495 = vmatprep.subr.mxu0 0.0
  %6496 = vmatpush1.msra.mxu0 0.0
  %6497 = vmatprep.subr.mxu0 0.0
  %6498 = vmatpush1.msra.mxu0 0.0
  %6499 = vmatprep.subr.mxu0 0.0
  %6500 = vmatpush1.msra.mxu0 0.0
  %6501 = vmatprep.subr.mxu0 0.0
  %6502 = vmatpush1.msra.mxu0 0.0
  %6503 = vmatprep.subr.mxu0 0.0
  %6504 = vmatpush1.msra.mxu0 0.0
  %6505 = vmatprep.subr.mxu0 0.0
  %6506 = vmatpush1.msra.mxu0 0.0
  %6507 = vmatprep.subr.mxu0 0.0
  %6508 = vmatpush1.msra.mxu0 0.0
  %6509 = vmatprep.subr.mxu0 0.0
  %6510 = vmatpush1.msra.mxu0 0.0
  %6511 = vmatprep.mubr.f32.mxu0 0.0
  %v6512 = vand.u32 %v6215, 4294901760
  %v6513 = vsub.f32 %v6215, %v6512
  %v6514 = vand.u32 %v6513, 4294901760
  %6515 = vmatmul.mubr.f32.gmra.mrb[0].mxu0 %v6514
  %v6516 = vpop.f32.mrb[0].mxu0
  %v6517 = vadd.f32 %v6443, %v6516
  %v6518 = vpop.f32.mrb[0].mxu0
  %6519 = vdwg.mxu0
  %6520 = vmatprep.subr.mxu0 0.0
  %v6521 = vand.u32 %v6218, 4294901760
  %v6522 = vsub.f32 %v6218, %v6521
  %v6523 = vand.u32 %v6522, 4294901760
  %6524 = vmatpush1.msra.mxu0 %v6523
  %6525 = vmatprep.subr.mxu0 0.0
  %6526 = vmatpush1.msra.mxu0 0.0
  %6527 = vmatprep.subr.mxu0 0.0
  %6528 = vmatpush1.msra.mxu0 0.0
  %6529 = vmatprep.subr.mxu0 0.0
  %6530 = vmatpush1.msra.mxu0 0.0
  %6531 = vmatprep.subr.mxu0 0.0
  %6532 = vmatpush1.msra.mxu0 0.0
  %6533 = vmatprep.subr.mxu0 0.0
  %6534 = vmatpush1.msra.mxu0 0.0
  %6535 = vmatprep.subr.mxu0 0.0
  %6536 = vmatpush1.msra.mxu0 0.0
  %6537 = vmatprep.subr.mxu0 0.0
  %6538 = vmatpush1.msra.mxu0 0.0
  %6539 = vmatprep.subr.mxu0 0.0
  %6540 = vmatpush1.msra.mxu0 0.0
  %6541 = vmatprep.subr.mxu0 0.0
  %6542 = vmatpush1.msra.mxu0 0.0
  %6543 = vmatprep.subr.mxu0 0.0
  %6544 = vmatpush1.msra.mxu0 0.0
  %6545 = vmatprep.subr.mxu0 0.0
  %6546 = vmatpush1.msra.mxu0 0.0
  %6547 = vmatprep.subr.mxu0 0.0
  %6548 = vmatpush1.msra.mxu0 0.0
  %6549 = vmatprep.subr.mxu0 0.0
  %6550 = vmatpush1.msra.mxu0 0.0
  %6551 = vmatprep.subr.mxu0 0.0
  %6552 = vmatpush1.msra.mxu0 0.0
  %6553 = vmatprep.subr.mxu0 0.0
  %6554 = vmatpush1.msra.mxu0 0.0
  %6555 = vmatprep.subr.mxu0 0.0
  %6556 = vmatpush1.msra.mxu0 0.0
  %6557 = vmatprep.subr.mxu0 0.0
  %6558 = vmatpush1.msra.mxu0 0.0
  %6559 = vmatprep.subr.mxu0 0.0
  %6560 = vmatpush1.msra.mxu0 0.0
  %6561 = vmatprep.subr.mxu0 0.0
  %6562 = vmatpush1.msra.mxu0 0.0
  %6563 = vmatprep.subr.mxu0 0.0
  %6564 = vmatpush1.msra.mxu0 0.0
  %6565 = vmatprep.subr.mxu0 0.0
  %6566 = vmatpush1.msra.mxu0 0.0
  %6567 = vmatprep.subr.mxu0 0.0
  %6568 = vmatpush1.msra.mxu0 0.0
  %6569 = vmatprep.subr.mxu0 0.0
  %6570 = vmatpush1.msra.mxu0 0.0
  %6571 = vmatprep.subr.mxu0 0.0
  %6572 = vmatpush1.msra.mxu0 0.0
  %6573 = vmatprep.subr.mxu0 0.0
  %6574 = vmatpush1.msra.mxu0 0.0
  %6575 = vmatprep.subr.mxu0 0.0
  %6576 = vmatpush1.msra.mxu0 0.0
  %6577 = vmatprep.subr.mxu0 0.0
  %6578 = vmatpush1.msra.mxu0 0.0
  %6579 = vmatprep.subr.mxu0 0.0
  %6580 = vmatpush1.msra.mxu0 0.0
  %6581 = vmatprep.subr.mxu0 0.0
  %6582 = vmatpush1.msra.mxu0 0.0
  %6583 = vmatprep.subr.mxu0 0.0
  %6584 = vmatpush1.msra.mxu0 0.0
  %6585 = vmatprep.subr.mxu0 0.0
  %6586 = vmatpush1.msra.mxu0 0.0
  %6587 = vmatprep.mubr.f32.mxu0 0.0
  %v6588 = vand.u32 %v6215, 4294901760
  %6589 = vmatmul.mubr.f32.gmra.mrb[0].mxu0 %v6588
  %v6590 = vpop.f32.mrb[0].mxu0
  %v6591 = vadd.f32 %v6517, %v6590
  %v6592 = vpop.f32.mrb[0].mxu0
  %6593 = vdwg.mxu0
  %6594 = vmatprep.subr.mxu0 0.0
  %v6595 = vand.u32 %v6218, 4294901760
  %6596 = vmatpush1.msra.mxu0 %v6595
  %6597 = vmatprep.subr.mxu0 0.0
  %6598 = vmatpush1.msra.mxu0 0.0
  %6599 = vmatprep.subr.mxu0 0.0
  %6600 = vmatpush1.msra.mxu0 0.0
  %6601 = vmatprep.subr.mxu0 0.0
  %6602 = vmatpush1.msra.mxu0 0.0
  %6603 = vmatprep.subr.mxu0 0.0
  %6604 = vmatpush1.msra.mxu0 0.0
  %6605 = vmatprep.subr.mxu0 0.0
  %6606 = vmatpush1.msra.mxu0 0.0
  %6607 = vmatprep.subr.mxu0 0.0
  %6608 = vmatpush1.msra.mxu0 0.0
  %6609 = vmatprep.subr.mxu0 0.0
  %6610 = vmatpush1.msra.mxu0 0.0
  %6611 = vmatprep.subr.mxu0 0.0
  %6612 = vmatpush1.msra.mxu0 0.0
  %6613 = vmatprep.subr.mxu0 0.0
  %6614 = vmatpush1.msra.mxu0 0.0
  %6615 = vmatprep.subr.mxu0 0.0
  %6616 = vmatpush1.msra.mxu0 0.0
  %6617 = vmatprep.subr.mxu0 0.0
  %6618 = vmatpush1.msra.mxu0 0.0
  %6619 = vmatprep.subr.mxu0 0.0
  %6620 = vmatpush1.msra.mxu0 0.0
  %6621 = vmatprep.subr.mxu0 0.0
  %6622 = vmatpush1.msra.mxu0 0.0
  %6623 = vmatprep.subr.mxu0 0.0
  %6624 = vmatpush1.msra.mxu0 0.0
  %6625 = vmatprep.subr.mxu0 0.0
  %6626 = vmatpush1.msra.mxu0 0.0
  %6627 = vmatprep.subr.mxu0 0.0
  %6628 = vmatpush1.msra.mxu0 0.0
  %6629 = vmatprep.subr.mxu0 0.0
  %6630 = vmatpush1.msra.mxu0 0.0
  %6631 = vmatprep.subr.mxu0 0.0
  %6632 = vmatpush1.msra.mxu0 0.0
  %6633 = vmatprep.subr.mxu0 0.0
  %6634 = vmatpush1.msra.mxu0 0.0
  %6635 = vmatprep.subr.mxu0 0.0
  %6636 = vmatpush1.msra.mxu0 0.0
  %6637 = vmatprep.subr.mxu0 0.0
  %6638 = vmatpush1.msra.mxu0 0.0
  %6639 = vmatprep.subr.mxu0 0.0
  %6640 = vmatpush1.msra.mxu0 0.0
  %6641 = vmatprep.subr.mxu0 0.0
  %6642 = vmatpush1.msra.mxu0 0.0
  %6643 = vmatprep.subr.mxu0 0.0
  %6644 = vmatpush1.msra.mxu0 0.0
  %6645 = vmatprep.subr.mxu0 0.0
  %6646 = vmatpush1.msra.mxu0 0.0
  %6647 = vmatprep.subr.mxu0 0.0
  %6648 = vmatpush1.msra.mxu0 0.0
  %6649 = vmatprep.subr.mxu0 0.0
  %6650 = vmatpush1.msra.mxu0 0.0
  %6651 = vmatprep.subr.mxu0 0.0
  %6652 = vmatpush1.msra.mxu0 0.0
  %6653 = vmatprep.subr.mxu0 0.0
  %6654 = vmatpush1.msra.mxu0 0.0
  %6655 = vmatprep.subr.mxu0 0.0
  %6656 = vmatpush1.msra.mxu0 0.0
  %6657 = vmatprep.subr.mxu0 0.0
  %6658 = vmatpush1.msra.mxu0 0.0
  %6659 = vmatprep.mubr.f32.mxu0 0.0
  %v6660 = vand.u32 %v6215, 4294901760
  %6661 = vmatmul.mubr.f32.gmra.mrb[0].mxu0 %v6660
  %v6662 = vpop.f32.mrb[0].mxu0
  %v6663 = vadd.f32 %v6591, %v6662
  %v6664 = vpop.f32.mrb[0].mxu0
  %6665 = vdwg.mxu0
  %v6666 = vld [vmem:[%s8] sm:$0xf]
  %v6668 = vsel %vm2046, %v6666, 0
  %6670 = vmatprep.subr.mxu0 0.0
  %v6671 = vand.u32 %v6668, 4294901760
  %6672 = vmatpush1.msra.mxu0 %v6671
  %6673 = vmatprep.subr.mxu0 0.0
  %6674 = vmatpush1.msra.mxu0 0.0
  %6675 = vmatprep.subr.mxu0 0.0
  %6676 = vmatpush1.msra.mxu0 0.0
  %6677 = vmatprep.subr.mxu0 0.0
  %6678 = vmatpush1.msra.mxu0 0.0
  %6679 = vmatprep.subr.mxu0 0.0
  %6680 = vmatpush1.msra.mxu0 0.0
  %6681 = vmatprep.subr.mxu0 0.0
  %6682 = vmatpush1.msra.mxu0 0.0
  %6683 = vmatprep.subr.mxu0 0.0
  %6684 = vmatpush1.msra.mxu0 0.0
  %6685 = vmatprep.subr.mxu0 0.0
  %6686 = vmatpush1.msra.mxu0 0.0
  %6687 = vmatprep.subr.mxu0 0.0
  %6688 = vmatpush1.msra.mxu0 0.0
  %6689 = vmatprep.subr.mxu0 0.0
  %6690 = vmatpush1.msra.mxu0 0.0
  %6691 = vmatprep.subr.mxu0 0.0
  %6692 = vmatpush1.msra.mxu0 0.0
  %6693 = vmatprep.subr.mxu0 0.0
  %6694 = vmatpush1.msra.mxu0 0.0
  %6695 = vmatprep.subr.mxu0 0.0
  %6696 = vmatpush1.msra.mxu0 0.0
  %6697 = vmatprep.subr.mxu0 0.0
  %6698 = vmatpush1.msra.mxu0 0.0
  %6699 = vmatprep.subr.mxu0 0.0
  %6700 = vmatpush1.msra.mxu0 0.0
  %6701 = vmatprep.subr.mxu0 0.0
  %6702 = vmatpush1.msra.mxu0 0.0
  %6703 = vmatprep.subr.mxu0 0.0
  %6704 = vmatpush1.msra.mxu0 0.0
  %6705 = vmatprep.subr.mxu0 0.0
  %6706 = vmatpush1.msra.mxu0 0.0
  %6707 = vmatprep.subr.mxu0 0.0
  %6708 = vmatpush1.msra.mxu0 0.0
  %6709 = vmatprep.subr.mxu0 0.0
  %6710 = vmatpush1.msra.mxu0 0.0
  %6711 = vmatprep.subr.mxu0 0.0
  %6712 = vmatpush1.msra.mxu0 0.0
  %6713 = vmatprep.subr.mxu0 0.0
  %6714 = vmatpush1.msra.mxu0 0.0
  %6715 = vmatprep.subr.mxu0 0.0
  %6716 = vmatpush1.msra.mxu0 0.0
  %6717 = vmatprep.subr.mxu0 0.0
  %6718 = vmatpush1.msra.mxu0 0.0
  %6719 = vmatprep.subr.mxu0 0.0
  %6720 = vmatpush1.msra.mxu0 0.0
  %6721 = vmatprep.subr.mxu0 0.0
  %6722 = vmatpush1.msra.mxu0 0.0
  %6723 = vmatprep.subr.mxu0 0.0
  %6724 = vmatpush1.msra.mxu0 0.0
  %6725 = vmatprep.subr.mxu0 0.0
  %6726 = vmatpush1.msra.mxu0 0.0
  %6727 = vmatprep.subr.mxu0 0.0
  %6728 = vmatpush1.msra.mxu0 0.0
  %6729 = vmatprep.subr.mxu0 0.0
  %6730 = vmatpush1.msra.mxu0 0.0
  %6731 = vmatprep.subr.mxu0 0.0
  %6732 = vmatpush1.msra.mxu0 0.0
  %6733 = vmatprep.subr.mxu0 0.0
  %6734 = vmatpush1.msra.mxu0 0.0
  %6735 = vmatprep.mubr.f32.mxu0 0.0
  %v6736 = vand.u32 %v6215, 4294901760
  %v6737 = vsub.f32 %v6215, %v6736
  %v6738 = vand.u32 %v6737, 4294901760
  %v6739 = vsub.f32 %v6737, %v6738
  %v6740 = vand.u32 %v6739, 4294901760
  %6741 = vmatmul.mubr.f32.gmra.mrb[0].mxu0 %v6740
  %v6742 = vpop.f32.mrb[0].mxu0
  %v6743 = vadd.f32 0.0, %v6742
  %v6744 = vpop.f32.mrb[0].mxu0
  %6745 = vdwg.mxu0
  %6746 = vmatprep.subr.mxu0 0.0
  %v6747 = vand.u32 %v6668, 4294901760
  %v6748 = vsub.f32 %v6668, %v6747
  %v6749 = vand.u32 %v6748, 4294901760
  %v6750 = vsub.f32 %v6748, %v6749
  %v6751 = vand.u32 %v6750, 4294901760
  %6752 = vmatpush1.msra.mxu0 %v6751
  %6753 = vmatprep.subr.mxu0 0.0
  %6754 = vmatpush1.msra.mxu0 0.0
  %6755 = vmatprep.subr.mxu0 0.0
  %6756 = vmatpush1.msra.mxu0 0.0
  %6757 = vmatprep.subr.mxu0 0.0
  %6758 = vmatpush1.msra.mxu0 0.0
  %6759 = vmatprep.subr.mxu0 0.0
  %6760 = vmatpush1.msra.mxu0 0.0
  %6761 = vmatprep.subr.mxu0 0.0
  %6762 = vmatpush1.msra.mxu0 0.0
  %6763 = vmatprep.subr.mxu0 0.0
  %6764 = vmatpush1.msra.mxu0 0.0
  %6765 = vmatprep.subr.mxu0 0.0
  %6766 = vmatpush1.msra.mxu0 0.0
  %6767 = vmatprep.subr.mxu0 0.0
  %6768 = vmatpush1.msra.mxu0 0.0
  %6769 = vmatprep.subr.mxu0 0.0
  %6770 = vmatpush1.msra.mxu0 0.0
  %6771 = vmatprep.subr.mxu0 0.0
  %6772 = vmatpush1.msra.mxu0 0.0
  %6773 = vmatprep.subr.mxu0 0.0
  %6774 = vmatpush1.msra.mxu0 0.0
  %6775 = vmatprep.subr.mxu0 0.0
  %6776 = vmatpush1.msra.mxu0 0.0
  %6777 = vmatprep.subr.mxu0 0.0
  %6778 = vmatpush1.msra.mxu0 0.0
  %6779 = vmatprep.subr.mxu0 0.0
  %6780 = vmatpush1.msra.mxu0 0.0
  %6781 = vmatprep.subr.mxu0 0.0
  %6782 = vmatpush1.msra.mxu0 0.0
  %6783 = vmatprep.subr.mxu0 0.0
  %6784 = vmatpush1.msra.mxu0 0.0
  %6785 = vmatprep.subr.mxu0 0.0
  %6786 = vmatpush1.msra.mxu0 0.0
  %6787 = vmatprep.subr.mxu0 0.0
  %6788 = vmatpush1.msra.mxu0 0.0
  %6789 = vmatprep.subr.mxu0 0.0
  %6790 = vmatpush1.msra.mxu0 0.0
  %6791 = vmatprep.subr.mxu0 0.0
  %6792 = vmatpush1.msra.mxu0 0.0
  %6793 = vmatprep.subr.mxu0 0.0
  %6794 = vmatpush1.msra.mxu0 0.0
  %6795 = vmatprep.subr.mxu0 0.0
  %6796 = vmatpush1.msra.mxu0 0.0
  %6797 = vmatprep.subr.mxu0 0.0
  %6798 = vmatpush1.msra.mxu0 0.0
  %6799 = vmatprep.subr.mxu0 0.0
  %6800 = vmatpush1.msra.mxu0 0.0
  %6801 = vmatprep.subr.mxu0 0.0
  %6802 = vmatpush1.msra.mxu0 0.0
  %6803 = vmatprep.subr.mxu0 0.0
  %6804 = vmatpush1.msra.mxu0 0.0
  %6805 = vmatprep.subr.mxu0 0.0
  %6806 = vmatpush1.msra.mxu0 0.0
  %6807 = vmatprep.subr.mxu0 0.0
  %6808 = vmatpush1.msra.mxu0 0.0
  %6809 = vmatprep.subr.mxu0 0.0
  %6810 = vmatpush1.msra.mxu0 0.0
  %6811 = vmatprep.subr.mxu0 0.0
  %6812 = vmatpush1.msra.mxu0 0.0
  %6813 = vmatprep.subr.mxu0 0.0
  %6814 = vmatpush1.msra.mxu0 0.0
  %6815 = vmatprep.mubr.f32.mxu0 0.0
  %v6816 = vand.u32 %v6215, 4294901760
  %6817 = vmatmul.mubr.f32.gmra.mrb[0].mxu0 %v6816
  %v6818 = vpop.f32.mrb[0].mxu0
  %v6819 = vadd.f32 %v6743, %v6818
  %v6820 = vpop.f32.mrb[0].mxu0
  %6821 = vdwg.mxu0
  %6822 = vmatprep.subr.mxu0 0.0
  %v6823 = vand.u32 %v6668, 4294901760
  %v6824 = vsub.f32 %v6668, %v6823
  %6825 = vmatpush1.msra.mxu0 %v6824
  %6826 = vmatprep.subr.mxu0 0.0
  %6827 = vmatpush1.msra.mxu0 0.0
  %6828 = vmatprep.subr.mxu0 0.0
  %6829 = vmatpush1.msra.mxu0 0.0
  %6830 = vmatprep.subr.mxu0 0.0
  %6831 = vmatpush1.msra.mxu0 0.0
  %6832 = vmatprep.subr.mxu0 0.0
  %6833 = vmatpush1.msra.mxu0 0.0
  %6834 = vmatprep.subr.mxu0 0.0
  %6835 = vmatpush1.msra.mxu0 0.0
  %6836 = vmatprep.subr.mxu0 0.0
  %6837 = vmatpush1.msra.mxu0 0.0
  %6838 = vmatprep.subr.mxu0 0.0
  %6839 = vmatpush1.msra.mxu0 0.0
  %6840 = vmatprep.subr.mxu0 0.0
  %6841 = vmatpush1.msra.mxu0 0.0
  %6842 = vmatprep.subr.mxu0 0.0
  %6843 = vmatpush1.msra.mxu0 0.0
  %6844 = vmatprep.subr.mxu0 0.0
  %6845 = vmatpush1.msra.mxu0 0.0
  %6846 = vmatprep.subr.mxu0 0.0
  %6847 = vmatpush1.msra.mxu0 0.0
  %6848 = vmatprep.subr.mxu0 0.0
  %6849 = vmatpush1.msra.mxu0 0.0
  %6850 = vmatprep.subr.mxu0 0.0
  %6851 = vmatpush1.msra.mxu0 0.0
  %6852 = vmatprep.subr.mxu0 0.0
  %6853 = vmatpush1.msra.mxu0 0.0
  %6854 = vmatprep.subr.mxu0 0.0
  %6855 = vmatpush1.msra.mxu0 0.0
  %6856 = vmatprep.subr.mxu0 0.0
  %6857 = vmatpush1.msra.mxu0 0.0
  %6858 = vmatprep.subr.mxu0 0.0
  %6859 = vmatpush1.msra.mxu0 0.0
  %6860 = vmatprep.subr.mxu0 0.0
  %6861 = vmatpush1.msra.mxu0 0.0
  %6862 = vmatprep.subr.mxu0 0.0
  %6863 = vmatpush1.msra.mxu0 0.0
  %6864 = vmatprep.subr.mxu0 0.0
  %6865 = vmatpush1.msra.mxu0 0.0
  %6866 = vmatprep.subr.mxu0 0.0
  %6867 = vmatpush1.msra.mxu0 0.0
  %6868 = vmatprep.subr.mxu0 0.0
  %6869 = vmatpush1.msra.mxu0 0.0
  %6870 = vmatprep.subr.mxu0 0.0
  %6871 = vmatpush1.msra.mxu0 0.0
  %6872 = vmatprep.subr.mxu0 0.0
  %6873 = vmatpush1.msra.mxu0 0.0
  %6874 = vmatprep.subr.mxu0 0.0
  %6875 = vmatpush1.msra.mxu0 0.0
  %6876 = vmatprep.subr.mxu0 0.0
  %6877 = vmatpush1.msra.mxu0 0.0
  %6878 = vmatprep.subr.mxu0 0.0
  %6879 = vmatpush1.msra.mxu0 0.0
  %6880 = vmatprep.subr.mxu0 0.0
  %6881 = vmatpush1.msra.mxu0 0.0
  %6882 = vmatprep.subr.mxu0 0.0
  %6883 = vmatpush1.msra.mxu0 0.0
  %6884 = vmatprep.subr.mxu0 0.0
  %6885 = vmatpush1.msra.mxu0 0.0
  %6886 = vmatprep.subr.mxu0 0.0
  %6887 = vmatpush1.msra.mxu0 0.0
  %6888 = vmatprep.mubr.f32.mxu0 0.0
  %v6889 = vand.u32 %v6215, 4294901760
  %v6890 = vsub.f32 %v6215, %v6889
  %6891 = vmatmul.mubr.f32.gmra.mrb[0].mxu0 %v6890
  %v6892 = vpop.f32.mrb[0].mxu0
  %v6893 = vadd.f32 %v6819, %v6892
  %v6894 = vpop.f32.mrb[0].mxu0
  %6895 = vdwg.mxu0
  %6896 = vmatprep.subr.mxu0 0.0
  %v6897 = vand.u32 %v6668, 4294901760
  %6898 = vmatpush1.msra.mxu0 %v6897
  %6899 = vmatprep.subr.mxu0 0.0
  %6900 = vmatpush1.msra.mxu0 0.0
  %6901 = vmatprep.subr.mxu0 0.0
  %6902 = vmatpush1.msra.mxu0 0.0
  %6903 = vmatprep.subr.mxu0 0.0
  %6904 = vmatpush1.msra.mxu0 0.0
  %6905 = vmatprep.subr.mxu0 0.0
  %6906 = vmatpush1.msra.mxu0 0.0
  %6907 = vmatprep.subr.mxu0 0.0
  %6908 = vmatpush1.msra.mxu0 0.0
  %6909 = vmatprep.subr.mxu0 0.0
  %6910 = vmatpush1.msra.mxu0 0.0
  %6911 = vmatprep.subr.mxu0 0.0
  %6912 = vmatpush1.msra.mxu0 0.0
  %6913 = vmatprep.subr.mxu0 0.0
  %6914 = vmatpush1.msra.mxu0 0.0
  %6915 = vmatprep.subr.mxu0 0.0
  %6916 = vmatpush1.msra.mxu0 0.0
  %6917 = vmatprep.subr.mxu0 0.0
  %6918 = vmatpush1.msra.mxu0 0.0
  %6919 = vmatprep.subr.mxu0 0.0
  %6920 = vmatpush1.msra.mxu0 0.0
  %6921 = vmatprep.subr.mxu0 0.0
  %6922 = vmatpush1.msra.mxu0 0.0
  %6923 = vmatprep.subr.mxu0 0.0
  %6924 = vmatpush1.msra.mxu0 0.0
  %6925 = vmatprep.subr.mxu0 0.0
  %6926 = vmatpush1.msra.mxu0 0.0
  %6927 = vmatprep.subr.mxu0 0.0
  %6928 = vmatpush1.msra.mxu0 0.0
  %6929 = vmatprep.subr.mxu0 0.0
  %6930 = vmatpush1.msra.mxu0 0.0
  %6931 = vmatprep.subr.mxu0 0.0
  %6932 = vmatpush1.msra.mxu0 0.0
  %6933 = vmatprep.subr.mxu0 0.0
  %6934 = vmatpush1.msra.mxu0 0.0
  %6935 = vmatprep.subr.mxu0 0.0
  %6936 = vmatpush1.msra.mxu0 0.0
  %6937 = vmatprep.subr.mxu0 0.0
  %6938 = vmatpush1.msra.mxu0 0.0
  %6939 = vmatprep.subr.mxu0 0.0
  %6940 = vmatpush1.msra.mxu0 0.0
  %6941 = vmatprep.subr.mxu0 0.0
  %6942 = vmatpush1.msra.mxu0 0.0
  %6943 = vmatprep.subr.mxu0 0.0
  %6944 = vmatpush1.msra.mxu0 0.0
  %6945 = vmatprep.subr.mxu0 0.0
  %6946 = vmatpush1.msra.mxu0 0.0
  %6947 = vmatprep.subr.mxu0 0.0
  %6948 = vmatpush1.msra.mxu0 0.0
  %6949 = vmatprep.subr.mxu0 0.0
  %6950 = vmatpush1.msra.mxu0 0.0
  %6951 = vmatprep.subr.mxu0 0.0
  %6952 = vmatpush1.msra.mxu0 0.0
  %6953 = vmatprep.subr.mxu0 0.0
  %6954 = vmatpush1.msra.mxu0 0.0
  %6955 = vmatprep.subr.mxu0 0.0
  %6956 = vmatpush1.msra.mxu0 0.0
  %6957 = vmatprep.subr.mxu0 0.0
  %6958 = vmatpush1.msra.mxu0 0.0
  %6959 = vmatprep.subr.mxu0 0.0
  %6960 = vmatpush1.msra.mxu0 0.0
  %6961 = vmatprep.mubr.f32.mxu0 0.0
  %v6962 = vand.u32 %v6215, 4294901760
  %v6963 = vsub.f32 %v6215, %v6962
  %v6964 = vand.u32 %v6963, 4294901760
  %6965 = vmatmul.mubr.f32.gmra.mrb[0].mxu0 %v6964
  %v6966 = vpop.f32.mrb[0].mxu0
  %v6967 = vadd.f32 %v6893, %v6966
  %v6968 = vpop.f32.mrb[0].mxu0
  %6969 = vdwg.mxu0
  %6970 = vmatprep.subr.mxu0 0.0
  %v6971 = vand.u32 %v6668, 4294901760
  %v6972 = vsub.f32 %v6668, %v6971
  %v6973 = vand.u32 %v6972, 4294901760
  %6974 = vmatpush1.msra.mxu0 %v6973
  %6975 = vmatprep.subr.mxu0 0.0
  %6976 = vmatpush1.msra.mxu0 0.0
  %6977 = vmatprep.subr.mxu0 0.0
  %6978 = vmatpush1.msra.mxu0 0.0
  %6979 = vmatprep.subr.mxu0 0.0
  %6980 = vmatpush1.msra.mxu0 0.0
  %6981 = vmatprep.subr.mxu0 0.0
  %6982 = vmatpush1.msra.mxu0 0.0
  %6983 = vmatprep.subr.mxu0 0.0
  %6984 = vmatpush1.msra.mxu0 0.0
  %6985 = vmatprep.subr.mxu0 0.0
  %6986 = vmatpush1.msra.mxu0 0.0
  %6987 = vmatprep.subr.mxu0 0.0
  %6988 = vmatpush1.msra.mxu0 0.0
  %6989 = vmatprep.subr.mxu0 0.0
  %6990 = vmatpush1.msra.mxu0 0.0
  %6991 = vmatprep.subr.mxu0 0.0
  %6992 = vmatpush1.msra.mxu0 0.0
  %6993 = vmatprep.subr.mxu0 0.0
  %6994 = vmatpush1.msra.mxu0 0.0
  %6995 = vmatprep.subr.mxu0 0.0
  %6996 = vmatpush1.msra.mxu0 0.0
  %6997 = vmatprep.subr.mxu0 0.0
  %6998 = vmatpush1.msra.mxu0 0.0
  %6999 = vmatprep.subr.mxu0 0.0
  %7000 = vmatpush1.msra.mxu0 0.0
  %7001 = vmatprep.subr.mxu0 0.0
  %7002 = vmatpush1.msra.mxu0 0.0
  %7003 = vmatprep.subr.mxu0 0.0
  %7004 = vmatpush1.msra.mxu0 0.0
  %7005 = vmatprep.subr.mxu0 0.0
  %7006 = vmatpush1.msra.mxu0 0.0
  %7007 = vmatprep.subr.mxu0 0.0
  %7008 = vmatpush1.msra.mxu0 0.0
  %7009 = vmatprep.subr.mxu0 0.0
  %7010 = vmatpush1.msra.mxu0 0.0
  %7011 = vmatprep.subr.mxu0 0.0
  %7012 = vmatpush1.msra.mxu0 0.0
  %7013 = vmatprep.subr.mxu0 0.0
  %7014 = vmatpush1.msra.mxu0 0.0
  %7015 = vmatprep.subr.mxu0 0.0
  %7016 = vmatpush1.msra.mxu0 0.0
  %7017 = vmatprep.subr.mxu0 0.0
  %7018 = vmatpush1.msra.mxu0 0.0
  %7019 = vmatprep.subr.mxu0 0.0
  %7020 = vmatpush1.msra.mxu0 0.0
  %7021 = vmatprep.subr.mxu0 0.0
  %7022 = vmatpush1.msra.mxu0 0.0
  %7023 = vmatprep.subr.mxu0 0.0
  %7024 = vmatpush1.msra.mxu0 0.0
  %7025 = vmatprep.subr.mxu0 0.0
  %7026 = vmatpush1.msra.mxu0 0.0
  %7027 = vmatprep.subr.mxu0 0.0
  %7028 = vmatpush1.msra.mxu0 0.0
  %7029 = vmatprep.subr.mxu0 0.0
  %7030 = vmatpush1.msra.mxu0 0.0
  %7031 = vmatprep.subr.mxu0 0.0
  %7032 = vmatpush1.msra.mxu0 0.0
  %7033 = vmatprep.subr.mxu0 0.0
  %7034 = vmatpush1.msra.mxu0 0.0
  %7035 = vmatprep.subr.mxu0 0.0
  %7036 = vmatpush1.msra.mxu0 0.0
  %7037 = vmatprep.mubr.f32.mxu0 0.0
  %v7038 = vand.u32 %v6215, 4294901760
  %7039 = vmatmul.mubr.f32.gmra.mrb[0].mxu0 %v7038
  %v7040 = vpop.f32.mrb[0].mxu0
  %v7041 = vadd.f32 %v6967, %v7040
  %v7042 = vpop.f32.mrb[0].mxu0
  %7043 = vdwg.mxu0
  %7044 = vmatprep.subr.mxu0 0.0
  %v7045 = vand.u32 %v6668, 4294901760
  %7046 = vmatpush1.msra.mxu0 %v7045
  %7047 = vmatprep.subr.mxu0 0.0
  %7048 = vmatpush1.msra.mxu0 0.0
  %7049 = vmatprep.subr.mxu0 0.0
  %7050 = vmatpush1.msra.mxu0 0.0
  %7051 = vmatprep.subr.mxu0 0.0
  %7052 = vmatpush1.msra.mxu0 0.0
  %7053 = vmatprep.subr.mxu0 0.0
  %7054 = vmatpush1.msra.mxu0 0.0
  %7055 = vmatprep.subr.mxu0 0.0
  %7056 = vmatpush1.msra.mxu0 0.0
  %7057 = vmatprep.subr.mxu0 0.0
  %7058 = vmatpush1.msra.mxu0 0.0
  %7059 = vmatprep.subr.mxu0 0.0
  %7060 = vmatpush1.msra.mxu0 0.0
  %7061 = vmatprep.subr.mxu0 0.0
  %7062 = vmatpush1.msra.mxu0 0.0
  %7063 = vmatprep.subr.mxu0 0.0
  %7064 = vmatpush1.msra.mxu0 0.0
  %7065 = vmatprep.subr.mxu0 0.0
  %7066 = vmatpush1.msra.mxu0 0.0
  %7067 = vmatprep.subr.mxu0 0.0
  %7068 = vmatpush1.msra.mxu0 0.0
  %7069 = vmatprep.subr.mxu0 0.0
  %7070 = vmatpush1.msra.mxu0 0.0
  %7071 = vmatprep.subr.mxu0 0.0
  %7072 = vmatpush1.msra.mxu0 0.0
  %7073 = vmatprep.subr.mxu0 0.0
  %7074 = vmatpush1.msra.mxu0 0.0
  %7075 = vmatprep.subr.mxu0 0.0
  %7076 = vmatpush1.msra.mxu0 0.0
  %7077 = vmatprep.subr.mxu0 0.0
  %7078 = vmatpush1.msra.mxu0 0.0
  %7079 = vmatprep.subr.mxu0 0.0
  %7080 = vmatpush1.msra.mxu0 0.0
  %7081 = vmatprep.subr.mxu0 0.0
  %7082 = vmatpush1.msra.mxu0 0.0
  %7083 = vmatprep.subr.mxu0 0.0
  %7084 = vmatpush1.msra.mxu0 0.0
  %7085 = vmatprep.subr.mxu0 0.0
  %7086 = vmatpush1.msra.mxu0 0.0
  %7087 = vmatprep.subr.mxu0 0.0
  %7088 = vmatpush1.msra.mxu0 0.0
  %7089 = vmatprep.subr.mxu0 0.0
  %7090 = vmatpush1.msra.mxu0 0.0
  %7091 = vmatprep.subr.mxu0 0.0
  %7092 = vmatpush1.msra.mxu0 0.0
  %7093 = vmatprep.subr.mxu0 0.0
  %7094 = vmatpush1.msra.mxu0 0.0
  %7095 = vmatprep.subr.mxu0 0.0
  %7096 = vmatpush1.msra.mxu0 0.0
  %7097 = vmatprep.subr.mxu0 0.0
  %7098 = vmatpush1.msra.mxu0 0.0
  %7099 = vmatprep.subr.mxu0 0.0
  %7100 = vmatpush1.msra.mxu0 0.0
  %7101 = vmatprep.subr.mxu0 0.0
  %7102 = vmatpush1.msra.mxu0 0.0
  %7103 = vmatprep.subr.mxu0 0.0
  %7104 = vmatpush1.msra.mxu0 0.0
  %7105 = vmatprep.subr.mxu0 0.0
  %7106 = vmatpush1.msra.mxu0 0.0
  %7107 = vmatprep.subr.mxu0 0.0
  %7108 = vmatpush1.msra.mxu0 0.0
  %7109 = vmatprep.mubr.f32.mxu0 0.0
  %v7110 = vand.u32 %v6215, 4294901760
  %7111 = vmatmul.mubr.f32.gmra.mrb[0].mxu0 %v7110
  %v7112 = vpop.f32.mrb[0].mxu0
  %v7113 = vadd.f32 %v7041, %v7112
  %v7114 = vpop.f32.mrb[0].mxu0
  %7115 = vdwg.mxu0
  %v7116 = vld [vmem:[%s1] sm:$0xf]
  %v7117 = vld [vmem:[%s2] sm:$0xf]
  %7119 = vset.pattern.permute.xlu0 10
  %7120 = vperm.xlu0 %7119, %v7116
  %v7121 = vpop.permute.xlu0 %7120
  %v7123 = vmul.f32 %v7121, %v6663
  %7125 = vset.pattern.permute.xlu0 10
  %7126 = vperm.xlu0 %7125, %v7117
  %v7127 = vpop.permute.xlu0 %7126
  %v7129 = vmul.f32 %v7127, %v6663
  %7130 = vset.pattern.permute.xlu0 11
  %7131 = vperm.xlu0 %7130, %v7116
  %v7132 = vpop.permute.xlu0 %7131
  %v7134 = vmul.f32 %v7132, %v7113
  %7135 = vset.pattern.permute.xlu0 11
  %7136 = vperm.xlu0 %7135, %v7117
  %v7137 = vpop.permute.xlu0 %7136
  %v7139 = vmul.f32 %v7137, %v7113
  %v7140 = vadd.f32 %v7123, %v7134
  %v7141 = vadd.f32 %v7129, %v7139
  %7142 = vset.pattern.permute.xlu0 12
  %7143 = vperm.xlu0 %7142, %v7116
  %v7144 = vpop.permute.xlu0 %7143
  %v7146 = vmul.f32 %v7144, %v6663
  %7147 = vset.pattern.permute.xlu0 12
  %7148 = vperm.xlu0 %7147, %v7117
  %v7149 = vpop.permute.xlu0 %7148
  %v7151 = vmul.f32 %v7149, %v6663
  %7153 = vrot.lane.b32.xlu0 %v7146, 127
  %v7154 = vpop.permute.xlu0 %7153
  %v7156 = vadd.f32 %v7140, %v7154
  %7158 = vrot.lane.b32.xlu0 %v7151, 127
  %v7159 = vpop.permute.xlu0 %7158
  %v7161 = vadd.f32 %v7141, %v7159
  %7162 = vset.pattern.permute.xlu0 13
  %7163 = vperm.xlu0 %7162, %v7116
  %v7164 = vpop.permute.xlu0 %7163
  %v7166 = vmul.f32 %v7164, %v7113
  %7167 = vset.pattern.permute.xlu0 13
  %7168 = vperm.xlu0 %7167, %v7117
  %v7169 = vpop.permute.xlu0 %7168
  %v7171 = vmul.f32 %v7169, %v7113
  %7173 = vrot.lane.b32.xlu0 %v7166, 127
  %v7174 = vpop.permute.xlu0 %7173
  %v7176 = vadd.f32 %v7156, %v7174
  %7178 = vrot.lane.b32.xlu0 %v7171, 127
  %v7179 = vpop.permute.xlu0 %7178
  %v7181 = vadd.f32 %v7161, %v7179
  %7182 = vset.pattern.permute.xlu0 14
  %7183 = vperm.xlu0 %7182, %v7116
  %v7184 = vpop.permute.xlu0 %7183
  %v7186 = vmul.f32 %v7184, %v6663
  %7187 = vset.pattern.permute.xlu0 14
  %7188 = vperm.xlu0 %7187, %v7117
  %v7189 = vpop.permute.xlu0 %7188
  %v7191 = vmul.f32 %v7189, %v6663
  %7193 = vrot.lane.b32.xlu0 %v7186, 126
  %v7194 = vpop.permute.xlu0 %7193
  %v7196 = vadd.f32 %v7176, %v7194
  %7198 = vrot.lane.b32.xlu0 %v7191, 126
  %v7199 = vpop.permute.xlu0 %7198
  %v7201 = vadd.f32 %v7181, %v7199
  %7203 = vrot.lane.b32.xlu0 %v7196, 4
  %v7204 = vpop.permute.xlu0 %7203
  %vm7206 = vcmask 44064
  %7207 = vst.msk [vmem:[%s13] sm:$0xf] %vm7206, %v7204
  %7209 = vrot.lane.b32.xlu0 %v7201, 4
  %v7210 = vpop.permute.xlu0 %7209
  %7212 = vst.msk [vmem:[%s14] sm:$0xf] %vm7206, %v7210
  // Predicated region
  $region38: #{wavelet_layer1d_forward.1} parent=0 // pred_check
    _
  $region39: #{wavelet_layer1d_forward.1} parent=0 // pred_check_branch
    %7214 = sbr.rel (0) target = $region41
  $region40: #{wavelet_layer1d_forward.1} parent=0 // pred_region
    _
  $region41: #{wavelet_layer1d_forward.1} parent=0 // pred_fallthru
    _
  // Predicated region
  $region42: #{wavelet_layer1d_forward.1} parent=0 // pred_check
    _
  $region43: #{wavelet_layer1d_forward.1} parent=0 // pred_check_branch
    %7216 = sbr.rel (0) target = $region45
  $region44: #{wavelet_layer1d_forward.1} parent=0 // pred_region
    _
  $region45: #{wavelet_layer1d_forward.1} parent=0 // pred_fallthru
    _
  // Predicated region
  $region46: #{wavelet_layer1d_forward.1} parent=0 // pred_check
    _
  $region47: #{wavelet_layer1d_forward.1} parent=0 // pred_check_branch
    %7218 = sbr.rel (0) target = $region49
  $region48: #{wavelet_layer1d_forward.1} parent=0 // pred_region
    _
  $region49: #{wavelet_layer1d_forward.1} parent=0 // pred_fallthru
    _
  // Predicated region
  $region50: #{wavelet_layer1d_forward.1} parent=0 // pred_check
    _
  $region51: #{wavelet_layer1d_forward.1} parent=0 // pred_check_branch
    %7220 = sbr.rel (0) target = $region53
  $region52: #{wavelet_layer1d_forward.1} parent=0 // pred_region
    _
  $region53: #{wavelet_layer1d_forward.1} parent=0 // pred_fallthru
    _
  // Predicated region
  $region54: #{wavelet_layer1d_forward.1} parent=0 // pred_check
    _
  $region55: #{wavelet_layer1d_forward.1} parent=0 // pred_check_branch
    %7222 = sbr.rel (0) target = $region57
  $region56: #{wavelet_layer1d_forward.1} parent=0 // pred_region
    _
  $region57: #{wavelet_layer1d_forward.1} parent=0 // pred_fallthru
    _
  // Predicated region
  $region58: #{wavelet_layer1d_forward.1} parent=0 // pred_check
    _
  $region59: #{wavelet_layer1d_forward.1} parent=0 // pred_check_branch
    %7224 = sbr.rel (0) target = $region61
  $region60: #{wavelet_layer1d_forward.1} parent=0 // pred_region
    _
  $region61: #{wavelet_layer1d_forward.1} parent=0 // pred_fallthru
    _
  // Predicated region
  $region62: #{wavelet_layer1d_forward.1} parent=0 // pred_check
    _
  $region63: #{wavelet_layer1d_forward.1} parent=0 // pred_check_branch
    %7226 = sbr.rel (0) target = $region65
  $region64: #{wavelet_layer1d_forward.1} parent=0 // pred_region
    _
  $region65: #{wavelet_layer1d_forward.1} parent=0 // pred_fallthru
    _
  // Predicated region
  $region66: #{wavelet_layer1d_forward.1} parent=0 // pred_check
    _
  $region67: #{wavelet_layer1d_forward.1} parent=0 // pred_check_branch
    %7228 = sbr.rel (0) target = $region69
  $region68: #{wavelet_layer1d_forward.1} parent=0 // pred_region
    _
  $region69: #{wavelet_layer1d_forward.1} parent=0 // pred_fallthru
    _
  // Predicated region
  $region70: #{wavelet_layer1d_forward.1} parent=0 // pred_check
    _
  $region71: #{wavelet_layer1d_forward.1} parent=0 // pred_check_branch
    %7230 = sbr.rel (0) target = $region73
  $region72: #{wavelet_layer1d_forward.1} parent=0 // pred_region
    _
  $region73: #{wavelet_layer1d_forward.1} parent=0 // pred_fallthru
    _
  // Predicated region
  $region74: #{wavelet_layer1d_forward.1} parent=0 // pred_check
    _
  $region75: #{wavelet_layer1d_forward.1} parent=0 // pred_check_branch
    %7232 = sbr.rel (0) target = $region77
  $region76: #{wavelet_layer1d_forward.1} parent=0 // pred_region
    _
  $region77: #{wavelet_layer1d_forward.1} parent=0 // pred_fallthru
    _
  // Predicated region
  $region78: #{wavelet_layer1d_forward.1} parent=0 // pred_check
    _
  $region79: #{wavelet_layer1d_forward.1} parent=0 // pred_check_branch
    %7234 = sbr.rel (0) target = $region81
  $region80: #{wavelet_layer1d_forward.1} parent=0 // pred_region
    _
  $region81: #{wavelet_layer1d_forward.1} parent=0 // pred_fallthru
    _
  // Predicated region
  $region82: #{wavelet_layer1d_forward.1} parent=0 // pred_check
    _
  $region83: #{wavelet_layer1d_forward.1} parent=0 // pred_check_branch
    %7236 = sbr.rel (0) target = $region85
  $region84: #{wavelet_layer1d_forward.1} parent=0 // pred_region
    _
  $region85: #{wavelet_layer1d_forward.1} parent=0 // pred_fallthru
    _

</llo_original>
